<compile_context>
chip_gen: v5e
topology: v5e:2x2
jax: 0.10.0
libtpu: 0.0.40
codegen_flags: <defaults>
</compile_context>

<pallas_src>
import functools

import jax
import jax.numpy as jnp
from jax import lax
from jax.experimental import pallas as pl
from jax.experimental.pallas import tpu as pltpu


def _round_up(x, m):
    return (x + m - 1) // m * m


_VMEM_LIMIT_CACHE = None


def _vmem_limit_bytes():
    """~3/4 of physical VMEM: 96 MiB on v5e/v6e, 48 MiB on v7x."""
    global _VMEM_LIMIT_CACHE
    if _VMEM_LIMIT_CACHE is None:
        try:
            cap = pltpu.get_tpu_info().vmem_capacity_bytes
        except Exception:  # conservative fallback
            cap = 128 * 1024 * 1024
        _VMEM_LIMIT_CACHE = int(min(cap * 3 // 4, 100 * 1024 * 1024))
    return _VMEM_LIMIT_CACHE


def _pick_h_block(H_al, W_al, target_m=512, max_m=2048):
    """Rows per strip (multiple of 8, divides H_al); per-step M = Hb*W_al ~512."""
    cands = [hb for hb in range(8, H_al + 1, 8) if H_al % hb == 0]
    for hb in cands:
        if hb * W_al >= target_m:
            return hb
    fitting = [hb for hb in cands if hb * W_al <= max_m]
    return fitting[-1] if fitting else cands[0]


def _pick_batch_block(B, n_h, rows_blk, target_m=512, max_m=4096):
    """Batch block; prefers >= 2 total grid steps (megacore) when B allows."""
    cands = [bb for bb in range(1, B + 1) if B % bb == 0]
    pref = [bb for bb in cands if (B // bb) * n_h >= 2] or cands
    for bb in pref:
        if bb * rows_blk >= target_m:
            return bb
    fitting = [bb for bb in pref if bb * rows_blk <= max_m]
    return fitting[-1] if fitting else pref[0]


# ----------------------------------------------------------------------------
# Pallas kernel: one H-strip of the fused 3x3 conv (3 dots, K=3*Cin_pad) +
# folded BN + LeakyReLU + 1x1 conv.
# ----------------------------------------------------------------------------
def _yolo_head_kernel(x_ref, w1_ref, bias_ref, w2_ref, b2_ref, out_ref, *,
                      hb_rows, act_in_bf16):
    # x_ref   : (Bb, H_al+2, W_al+2, Cp)  bf16 NHWC, spatial halo pre-padded
    # w1_ref  : (3, 3*Cp, Cmid_pad)       bf16 3x3 weights (per-kh, kw-major),
    #                                     BN scale folded in
    # bias_ref: (1, Cmid_pad)             f32 folded BN bias
    # w2_ref  : (Cmid_pad, Cout_pad)      bf16 1x1 weights
    # b2_ref  : (1, Cout_pad)             f32 1x1 bias
    # out_ref : (Bb, Hb*W_al, Cout_pad)   f32 lane-dense output block
    Bb = x_ref.shape[0]
    W_al = x_ref.shape[2] - 2
    Cp = x_ref.shape[3]
    Cout_pad = w2_ref.shape[1]
    Hb = hb_rows
    M = Bb * Hb * W_al

    h = pl.program_id(1)
    row0 = pl.multiple_of(h * Hb, Hb)

    # 3x3 conv as 3 MXU matmuls (one per kh), f32 accumulation across them.
    # The 3-tap slab per kh is built from static-offset loads of the resident
    # image block (halo zeros come from the wrapper pad); the concat is along
    # the 128-aligned lane axis and the flatten is a no-op relayout because
    # Hb and W_al are multiples of 8.
    acc = None
    for kh in range(3):  # static unroll
        taps = [x_ref[:, pl.ds(row0 + kh, Hb), kw:kw + W_al, :]
                for kw in range(3)]
        slab = jnp.concatenate(taps, axis=-1).reshape(M, 3 * Cp)
        part = jnp.dot(slab, w1_ref[kh], preferred_element_type=jnp.float32)
        acc = part if acc is None else acc + part

    # Folded BatchNorm bias (scale already folded into w1) + LeakyReLU(0.1).
    hpre = acc + bias_ref[...]
    if act_in_bf16:
        # bf16 VALU path (v6e / v7x); the cast is needed for the next matmul
        # anyway, and maximum is 2 VPU ops vs 3 for where.
        hact = hpre.astype(jnp.bfloat16)
        hact = jnp.maximum(hact, hact * 0.1)
    else:
        # f32 path for v5e (no bf16 VPU).
        hpre = jnp.maximum(hpre, hpre * 0.1)
        hact = hpre.astype(jnp.bfloat16)

    # 1x1 conv == channel matmul; lane-dense (128-padded) output store.
    out = jnp.dot(hact, w2_ref[...], preferred_element_type=jnp.float32)
    out = out + b2_ref[...]
    out_ref[...] = out.reshape(Bb, Hb * W_al, Cout_pad)


# ----------------------------------------------------------------------------
# Wrapper: one YOLO head level.  x_nchw: (B, Cin, H, W) -> (B, Cout, H, W).
# ----------------------------------------------------------------------------
def yolo_head_level(x_nchw, w1_hwio, gamma, beta, run_mean, run_var, w2, b2,
                    *, bn_eps=1e-5, act_in_bf16=True):
    B, Cin, H, W = x_nchw.shape
    Cmid = w1_hwio.shape[3]
    Cout = w2.shape[1]
    Cin_pad = _round_up(Cin, 128)     # lane-dense taps / matmul K (no-op at 512)
    Cmid_pad = _round_up(Cmid, 256)   # v6e/v7x MXU is 2x256; intermediate only
    Cout_pad = _round_up(Cout, 128)   # keep HBM output slab small (255 -> 256)
    H_al = _round_up(H, 8)
    W_al = _round_up(W, 8)
    assert H_al % 8 == 0 and W_al % 8 == 0

    # NCHW -> NHWC, +1 spatial halo (conv pad=1) + alignment pad + channel pad,
    # all fused by XLA with the mandatory layout transpose; bf16 MXU operand.
    x = jnp.transpose(x_nchw, (0, 2, 3, 1))
    x = jnp.pad(x, ((0, 0), (1, 1 + H_al - H), (1, 1 + W_al - W),
                    (0, Cin_pad - Cin))).astype(jnp.bfloat16)

    # Fold BN (eval mode) into the 3x3 conv (fold in f32, cast to bf16 last).
    scale = gamma / jnp.sqrt(run_var + bn_eps)
    bias = beta - run_mean * scale
    w1f = w1_hwio * scale                                  # (3,3,Cin,Cmid) f32
    w1f = jnp.pad(w1f, ((0, 0), (0, 0), (0, Cin_pad - Cin),
                        (0, Cmid_pad - Cmid)))
    w1f = w1f.reshape(3, 3 * Cin_pad, Cmid_pad).astype(jnp.bfloat16)
    bias_p = jnp.pad(bias, (0, Cmid_pad - Cmid))[None, :].astype(jnp.float32)
    w2p = jnp.pad(w2, ((0, Cmid_pad - Cmid),
                       (0, Cout_pad - Cout))).astype(jnp.bfloat16)
    b2p = jnp.pad(b2, (0, Cout_pad - Cout))[None, :].astype(jnp.float32)

    Hb = _pick_h_block(H_al, W_al)
    n_h = H_al // Hb
    Bb = _pick_batch_block(B, n_h, Hb * W_al)
    grid = (B // Bb, n_h)

    kernel = functools.partial(_yolo_head_kernel, hb_rows=Hb,
                               act_in_bf16=act_in_bf16)

    out3d = pl.pallas_call(
        kernel,
        out_shape=jax.ShapeDtypeStruct((B, H_al * W_al, Cout_pad),
                                       jnp.float32),
        grid_spec=pltpu.PrefetchScalarGridSpec(
            num_scalar_prefetch=0,
            grid=grid,
            in_specs=[
                # Whole (halo-padded) image per batch block; constant index
                # over the inner strip axis => fetched once per batch block.
                pl.BlockSpec((Bb, H_al + 2, W_al + 2, Cin_pad),
                             lambda b, h: (b, 0, 0, 0)),
                # Grid-invariant weights / biases (fetched once).
                pl.BlockSpec((3, 3 * Cin_pad, Cmid_pad),
                             lambda b, h: (0, 0, 0)),
                pl.BlockSpec((1, Cmid_pad), lambda b, h: (0, 0)),
                pl.BlockSpec((Cmid_pad, Cout_pad), lambda b, h: (0, 0)),
                pl.BlockSpec((1, Cout_pad), lambda b, h: (0, 0)),
            ],
            out_specs=pl.BlockSpec((Bb, Hb * W_al, Cout_pad),
                                   lambda b, h: (b, h, 0)),
        ),
        compiler_params=pltpu.CompilerParams(
            dimension_semantics=("parallel", "parallel"),
            vmem_limit_bytes=_vmem_limit_bytes()),
    )(x, w1f, bias_p, w2p, b2p)

    # Drop alignment/channel padding, restore (B, H, W, Cout), return NCHW
    # (module API).  Pure XLA glue (slice + reshape + transpose, one pass).
    out = out3d.reshape(B, H_al, W_al, Cout_pad)[:, :H, :W, :Cout]
    return jnp.transpose(out, (0, 3, 1, 2)).astype(jnp.float32)


yolo_head_level = jax.jit(yolo_head_level,
                          static_argnames=("bn_eps", "act_in_bf16"))


# ----------------------------------------------------------------------------
# YOLOV3Head: parameter construction + forward (multi-level).
# ----------------------------------------------------------------------------
class YOLOV3HeadPallas:
    def __init__(self, num_classes, in_channels, key):
        self.num_classes = num_classes
        self.in_channels = list(in_channels)
        self.num_levels = len(in_channels)
        self.cls_out_channels = num_classes - 1          # use_sigmoid_cls=True
        self.out_channels = (self.cls_out_channels + 5) * 3
        self.params = []
        for i, cin in enumerate(self.in_channels):
            cmid = cin * 2
            k = jax.random.fold_in(key, i)
            k1, k2, k3, k4, k5, k6 = jax.random.split(k, 6)
            w1 = jax.random.normal(k1, (3, 3, cin, cmid), jnp.float32) * 0.05
            gamma = 1.0 + 0.1 * jax.random.normal(k2, (cmid,), jnp.float32)
            beta = 0.1 * jax.random.normal(k3, (cmid,), jnp.float32)
            run_mean = 0.1 * jax.random.normal(k4, (cmid,), jnp.float32)
            run_var = jnp.abs(jax.random.normal(k5, (cmid,), jnp.float32)) + 0.5
            w2 = jax.random.normal(k6, (cmid, self.out_channels),
                                   jnp.float32) * 0.05
            b2 = jnp.zeros((self.out_channels,), jnp.float32)
            self.params.append((w1, gamma, beta, run_mean, run_var, w2, b2))
        # TODO(synk): loss()/get_targets()/get_bboxes()/NMS and anchor
        # generation are training / post-processing paths (dynamic shapes,
        # argmax-gather, NMS) and are not part of forward(); only forward()
        # is implemented here.

    def forward(self, x_list):
        head_outs = []
        for i in range(self.num_levels):
            head_outs.append(yolo_head_level(x_list[i], *self.params[i]))
        return (head_outs,)


# ----------------------------------------------------------------------------
# Pure-JAX f32 reference (same math) for a correctness check.
# ----------------------------------------------------------------------------
def _reference_level(x_nchw, w1, gamma, beta, run_mean, run_var, w2, b2,
                     bn_eps=1e-5):
    x = jnp.transpose(x_nchw, (0, 2, 3, 1)).astype(jnp.float32)
    y = lax.conv_general_dilated(
        x, w1, window_strides=(1, 1), padding="SAME",
        dimension_numbers=("NHWC", "HWIO", "NHWC"))
    scale = gamma / jnp.sqrt(run_var + bn_eps)
    y = y * scale + (beta - run_mean * scale)
    y = jnp.where(y > 0, y, 0.1 * y)
    y = jnp.einsum("bhwc,co->bhwo", y, w2) + b2
    return jnp.transpose(y, (0, 3, 1, 2))


if __name__ == "__main__":
    key = jax.random.PRNGKey(0)
    kx, kp = jax.random.split(key)

    # Small synthetic config: 3 levels, num_classes=4 -> Cout = (3+5)*3 = 24.
    # Spatial sizes chosen to exercise: H-strip grid (level 0, n_h=2),
    # batch blocking Bb=2 (levels 1/2), and the W<8 alignment-pad path (level 2).
    num_classes = 4
    in_channels = [4, 8, 16]
    spatial = [32, 16, 4]
    batch = 4

    head = YOLOV3HeadPallas(num_classes, in_channels, kp)

    x_list = []
    for i, (c, s) in enumerate(zip(in_channels, spatial)):
        x_list.append(jax.random.normal(jax.random.fold_in(kx, i),
                                        (batch, c, s, s), jnp.float32))

    (head_outs,) = head.forward(x_list)
    head_outs = [jax.block_until_ready(o) for o in head_outs]

    # Cross-check against the pure-JAX f32 reference (bf16 MXU operands and a
    # bf16 activation path in the kernel => slightly loosened tolerance).
    for i in range(len(in_channels)):
        ref = _reference_level(x_list[i], *head.params[i])
        assert head_outs[i].shape == (batch, head.out_channels,
                                      spatial[i], spatial[i])
        err = jnp.max(jnp.abs(head_outs[i] - ref))
        assert jnp.allclose(head_outs[i], ref, atol=5e-2, rtol=5e-2), \
            f"level {i} mismatch: max err {err}"

    print("KERNEL_OK")
</pallas_src>

<mosaic_0001>
module attributes {stable_mosaic.version = 11 : i64} {
  func.func @_yolo_head_kernel(%arg0: i32, %arg1: i32, %arg2: memref<1x34x34x128xbf16, #tpu.memory_space<vmem>>, %arg3: memref<3x384x256xbf16, #tpu.memory_space<vmem>>, %arg4: memref<1x256xf32, #tpu.memory_space<vmem>>, %arg5: memref<256x128xbf16, #tpu.memory_space<vmem>>, %arg6: memref<1x128xf32, #tpu.memory_space<vmem>>, %arg7: memref<1x512x128xf32, #tpu.memory_space<vmem>>) attributes {dimension_semantics = [#tpu.dimension_semantics<parallel>, #tpu.dimension_semantics<parallel>], iteration_bounds = array<i64: 4, 2>, scalar_prefetch = 0 : i64, scratch_operands = 0 : i64, tpu.core_type = #tpu.core_type<tc>, window_params = [{transform_indices = @transform_0, window_bounds = array<i64: 1, 34, 34, 128>}, {pipeline_mode = #tpu.pipeline_mode<synchronous>, transform_indices = @transform_1, window_bounds = array<i64: 3, 384, 256>}, {pipeline_mode = #tpu.pipeline_mode<synchronous>, transform_indices = @transform_2, window_bounds = array<i64: 1, 256>}, {pipeline_mode = #tpu.pipeline_mode<synchronous>, transform_indices = @transform_3, window_bounds = array<i64: 256, 128>}, {pipeline_mode = #tpu.pipeline_mode<synchronous>, transform_indices = @transform_4, window_bounds = array<i64: 1, 128>}, {transform_indices = @transform_5, window_bounds = array<i64: 1, 512, 128>}]} {
    %c16_i32 = arith.constant 16 : i32
    %0 = arith.muli %arg1, %c16_i32 : i32
    %1 = tpu.assume_multiple %0, 16 : i32
    %c0_i32 = arith.constant 0 : i32
    %2 = arith.addi %1, %c0_i32 : i32
    %c0 = arith.constant 0 : index
    %3 = arith.index_cast %2 : i32 to index
    %c0_0 = arith.constant 0 : index
    %c0_1 = arith.constant 0 : index
    %4 = vector.load %arg2[%c0, %3, %c0_0, %c0_1] : memref<1x34x34x128xbf16, #tpu.memory_space<vmem>>, vector<1x16x32x128xbf16>
    %c0_i32_2 = arith.constant 0 : i32
    %5 = arith.addi %1, %c0_i32_2 : i32
    %c0_3 = arith.constant 0 : index
    %6 = arith.index_cast %5 : i32 to index
    %c1 = arith.constant 1 : index
    %c0_4 = arith.constant 0 : index
    %7 = vector.load %arg2[%c0_3, %6, %c1, %c0_4] : memref<1x34x34x128xbf16, #tpu.memory_space<vmem>>, vector<1x16x32x128xbf16>
    %c0_i32_5 = arith.constant 0 : i32
    %8 = arith.addi %1, %c0_i32_5 : i32
    %c0_6 = arith.constant 0 : index
    %9 = arith.index_cast %8 : i32 to index
    %c2 = arith.constant 2 : index
    %c0_7 = arith.constant 0 : index
    %10 = vector.load %arg2[%c0_6, %9, %c2, %c0_7] : memref<1x34x34x128xbf16, #tpu.memory_space<vmem>>, vector<1x16x32x128xbf16>
    %11 = tpu.concatenate %4, %7, %10 in 3 : vector<1x16x32x128xbf16>, vector<1x16x32x128xbf16>, vector<1x16x32x128xbf16> -> vector<1x16x32x384xbf16>
    %12 = vector.shape_cast %11 : vector<1x16x32x384xbf16> to vector<512x384xbf16>
    %c0_8 = arith.constant 0 : index
    %c0_9 = arith.constant 0 : index
    %c0_10 = arith.constant 0 : index
    %13 = vector.load %arg3[%c0_8, %c0_9, %c0_10] : memref<3x384x256xbf16, #tpu.memory_space<vmem>>, vector<1x384x256xbf16>
    %14 = vector.shape_cast %13 : vector<1x384x256xbf16> to vector<384x256xbf16>
    %cst = arith.constant dense<0.000000e+00> : vector<512x256xf32>
    %15 = tpu.matmul %12, %14, %cst {dimension_numbers = #tpu.dot_dimension_numbers<[1], [0], [0], [1], [0, 0, 1, 1], [], []>} : vector<512x384xbf16>, vector<384x256xbf16>, vector<512x256xf32> -> vector<512x256xf32>
    %c1_i32 = arith.constant 1 : i32
    %16 = arith.addi %1, %c1_i32 : i32
    %c0_11 = arith.constant 0 : index
    %17 = arith.index_cast %16 : i32 to index
    %c0_12 = arith.constant 0 : index
    %c0_13 = arith.constant 0 : index
    %18 = vector.load %arg2[%c0_11, %17, %c0_12, %c0_13] : memref<1x34x34x128xbf16, #tpu.memory_space<vmem>>, vector<1x16x32x128xbf16>
    %c1_i32_14 = arith.constant 1 : i32
    %19 = arith.addi %1, %c1_i32_14 : i32
    %c0_15 = arith.constant 0 : index
    %20 = arith.index_cast %19 : i32 to index
    %c1_16 = arith.constant 1 : index
    %c0_17 = arith.constant 0 : index
    %21 = vector.load %arg2[%c0_15, %20, %c1_16, %c0_17] : memref<1x34x34x128xbf16, #tpu.memory_space<vmem>>, vector<1x16x32x128xbf16>
    %c1_i32_18 = arith.constant 1 : i32
    %22 = arith.addi %1, %c1_i32_18 : i32
    %c0_19 = arith.constant 0 : index
    %23 = arith.index_cast %22 : i32 to index
    %c2_20 = arith.constant 2 : index
    %c0_21 = arith.constant 0 : index
    %24 = vector.load %arg2[%c0_19, %23, %c2_20, %c0_21] : memref<1x34x34x128xbf16, #tpu.memory_space<vmem>>, vector<1x16x32x128xbf16>
    %25 = tpu.concatenate %18, %21, %24 in 3 : vector<1x16x32x128xbf16>, vector<1x16x32x128xbf16>, vector<1x16x32x128xbf16> -> vector<1x16x32x384xbf16>
    %26 = vector.shape_cast %25 : vector<1x16x32x384xbf16> to vector<512x384xbf16>
    %c1_22 = arith.constant 1 : index
    %c0_23 = arith.constant 0 : index
    %c0_24 = arith.constant 0 : index
    %27 = vector.load %arg3[%c1_22, %c0_23, %c0_24] : memref<3x384x256xbf16, #tpu.memory_space<vmem>>, vector<1x384x256xbf16>
    %28 = vector.shape_cast %27 : vector<1x384x256xbf16> to vector<384x256xbf16>
    %cst_25 = arith.constant dense<0.000000e+00> : vector<512x256xf32>
    %29 = tpu.matmul %26, %28, %cst_25 {dimension_numbers = #tpu.dot_dimension_numbers<[1], [0], [0], [1], [0, 0, 1, 1], [], []>} : vector<512x384xbf16>, vector<384x256xbf16>, vector<512x256xf32> -> vector<512x256xf32>
    %30 = arith.addf %15, %29 : vector<512x256xf32>
    %c2_i32 = arith.constant 2 : i32
    %31 = arith.addi %1, %c2_i32 : i32
    %c0_26 = arith.constant 0 : index
    %32 = arith.index_cast %31 : i32 to index
    %c0_27 = arith.constant 0 : index
    %c0_28 = arith.constant 0 : index
    %33 = vector.load %arg2[%c0_26, %32, %c0_27, %c0_28] : memref<1x34x34x128xbf16, #tpu.memory_space<vmem>>, vector<1x16x32x128xbf16>
    %c2_i32_29 = arith.constant 2 : i32
    %34 = arith.addi %1, %c2_i32_29 : i32
    %c0_30 = arith.constant 0 : index
    %35 = arith.index_cast %34 : i32 to index
    %c1_31 = arith.constant 1 : index
    %c0_32 = arith.constant 0 : index
    %36 = vector.load %arg2[%c0_30, %35, %c1_31, %c0_32] : memref<1x34x34x128xbf16, #tpu.memory_space<vmem>>, vector<1x16x32x128xbf16>
    %c2_i32_33 = arith.constant 2 : i32
    %37 = arith.addi %1, %c2_i32_33 : i32
    %c0_34 = arith.constant 0 : index
    %38 = arith.index_cast %37 : i32 to index
    %c2_35 = arith.constant 2 : index
    %c0_36 = arith.constant 0 : index
    %39 = vector.load %arg2[%c0_34, %38, %c2_35, %c0_36] : memref<1x34x34x128xbf16, #tpu.memory_space<vmem>>, vector<1x16x32x128xbf16>
    %40 = tpu.concatenate %33, %36, %39 in 3 : vector<1x16x32x128xbf16>, vector<1x16x32x128xbf16>, vector<1x16x32x128xbf16> -> vector<1x16x32x384xbf16>
    %41 = vector.shape_cast %40 : vector<1x16x32x384xbf16> to vector<512x384xbf16>
    %c2_37 = arith.constant 2 : index
    %c0_38 = arith.constant 0 : index
    %c0_39 = arith.constant 0 : index
    %42 = vector.load %arg3[%c2_37, %c0_38, %c0_39] : memref<3x384x256xbf16, #tpu.memory_space<vmem>>, vector<1x384x256xbf16>
    %43 = vector.shape_cast %42 : vector<1x384x256xbf16> to vector<384x256xbf16>
    %cst_40 = arith.constant dense<0.000000e+00> : vector<512x256xf32>
    %44 = tpu.matmul %41, %43, %cst_40 {dimension_numbers = #tpu.dot_dimension_numbers<[1], [0], [0], [1], [0, 0, 1, 1], [], []>} : vector<512x384xbf16>, vector<384x256xbf16>, vector<512x256xf32> -> vector<512x256xf32>
    %45 = arith.addf %30, %44 : vector<512x256xf32>
    %c0_41 = arith.constant 0 : index
    %c0_42 = arith.constant 0 : index
    %46 = vector.load %arg4[%c0_41, %c0_42] : memref<1x256xf32, #tpu.memory_space<vmem>>, vector<1x256xf32>
    %47 = vector.broadcast %46 : vector<1x256xf32> to vector<512x256xf32>
    %48 = arith.addf %45, %47 : vector<512x256xf32>
    %49 = arith.truncf %48 : vector<512x256xf32> to vector<512x256xbf16>
    %cst_43 = arith.constant 1.000980e-01 : bf16
    %50 = vector.broadcast %cst_43 : bf16 to vector<512x256xbf16>
    %51 = arith.mulf %49, %50 : vector<512x256xbf16>
    %52 = arith.maximumf %49, %51 : vector<512x256xbf16>
    %c0_44 = arith.constant 0 : index
    %c0_45 = arith.constant 0 : index
    %53 = vector.load %arg5[%c0_44, %c0_45] : memref<256x128xbf16, #tpu.memory_space<vmem>>, vector<256x128xbf16>
    %cst_46 = arith.constant dense<0.000000e+00> : vector<512x128xf32>
    %54 = tpu.matmul %52, %53, %cst_46 {dimension_numbers = #tpu.dot_dimension_numbers<[1], [0], [0], [1], [0, 0, 1, 1], [], []>} : vector<512x256xbf16>, vector<256x128xbf16>, vector<512x128xf32> -> vector<512x128xf32>
    %c0_47 = arith.constant 0 : index
    %c0_48 = arith.constant 0 : index
    %55 = vector.load %arg6[%c0_47, %c0_48] : memref<1x128xf32, #tpu.memory_space<vmem>>, vector<1x128xf32>
    %56 = vector.broadcast %55 : vector<1x128xf32> to vector<512x128xf32>
    %57 = arith.addf %54, %56 : vector<512x128xf32>
    %58 = vector.shape_cast %57 : vector<512x128xf32> to vector<1x512x128xf32>
    %c0_49 = arith.constant 0 : index
    %c0_50 = arith.constant 0 : index
    %c0_51 = arith.constant 0 : index
    %59 = vector.load %arg7[%c0_49, %c0_50, %c0_51] : memref<1x512x128xf32, #tpu.memory_space<vmem>>, vector<1x512x128xf32>
    tpu.vector_store %arg7[%c0_49, %c0_50, %c0_51], %58 {strides = array<i32>} : memref<1x512x128xf32, #tpu.memory_space<vmem>>, vector<1x512x128xf32>,
    return
  }
  func.func @transform_0(%arg0: i32, %arg1: i32) -> (i32, i32, i32, i32) {
    %c0_i32 = arith.constant 0 : i32
    %c0_i32_0 = arith.constant 0 : i32
    %c0_i32_1 = arith.constant 0 : i32
    %c0_i32_2 = arith.constant 0 : i32
    return %arg0, %c0_i32, %c0_i32_0, %c0_i32_1 : i32, i32, i32, i32
  }
  func.func @transform_1(%arg0: i32, %arg1: i32) -> (i32, i32, i32) {
    %c0_i32 = arith.constant 0 : i32
    %c0_i32_0 = arith.constant 0 : i32
    %c0_i32_1 = arith.constant 0 : i32
    %c0_i32_2 = arith.constant 0 : i32
    return %c0_i32, %c0_i32_0, %c0_i32_1 : i32, i32, i32
  }
  func.func @transform_2(%arg0: i32, %arg1: i32) -> (i32, i32) {
    %c0_i32 = arith.constant 0 : i32
    %c0_i32_0 = arith.constant 0 : i32
    %c0_i32_1 = arith.constant 0 : i32
    return %c0_i32, %c0_i32_0 : i32, i32
  }
  func.func @transform_3(%arg0: i32, %arg1: i32) -> (i32, i32) {
    %c0_i32 = arith.constant 0 : i32
    %c0_i32_0 = arith.constant 0 : i32
    %c0_i32_1 = arith.constant 0 : i32
    return %c0_i32, %c0_i32_0 : i32, i32
  }
  func.func @transform_4(%arg0: i32, %arg1: i32) -> (i32, i32) {
    %c0_i32 = arith.constant 0 : i32
    %c0_i32_0 = arith.constant 0 : i32
    %c0_i32_1 = arith.constant 0 : i32
    return %c0_i32, %c0_i32_0 : i32, i32
  }
  func.func @transform_5(%arg0: i32, %arg1: i32) -> (i32, i32, i32) {
    %c0_i32 = arith.constant 0 : i32
    %c0_i32_0 = arith.constant 0 : i32
    return %arg0, %arg1, %c0_i32 : i32, i32, i32
  }
}

</mosaic_0001>

<llo_original>
// kernel: yolo_head_level.1
$region0: #{yolo_head_level.1}
  #allocation0 [shape = 'u32[]', space=smem, size = 0x4, offset = 0x4, fixed_abs, tag = 'smem constant byte address 0x4 - core index']
  #allocation1 [shape = 'u32[72,128]{1,0:T(1,128)}', space=vmem, size = 0x9000, scoped, tag = 'internal scratch']
  %s0 = inlined_call_operand.vmem [shape: bf16[4,34,34,128], index: 0, kind: input, shape index: {}]
  %s1 = inlined_call_operand.vmem [shape: bf16[3,384,256], index: 1, kind: input, shape index: {}]
  %s2 = inlined_call_operand.vmem [shape: f32[1,256], index: 2, kind: input, shape index: {}]
  %s3 = inlined_call_operand.vmem [shape: bf16[256,128], index: 3, kind: input, shape index: {}]
  %s4 = inlined_call_operand.vmem [shape: f32[1,128], index: 4, kind: input, shape index: {}]
  %s5 = inlined_call_operand.vmem [shape: f32[4,1024,128], index: 5, kind: output, shape index: {}]
  %s6 = sld [smem:[#allocation0]]
  $region53: #{yolo_head_level.1} parent=0
    _
  %s8 = ssub.s32 1, %s6
  %s9 = scalar_select 0, %s8, %s6
  loop: start=0, step=1, limit=10
  $region2: #{yolo_head_level.1} parent=0 // loop_pre_header
    _
  $region3: #{yolo_head_level.1} parent=0 // loop_header
    %s11 = sphi 0, %s15
    %p12 = scmp.ge.s32.totalorder %s11, 10
    %s18 = sphi 0, %s30
    %s19 = sphi 0, %s26
    %s20 = sphi 0, %s18
    %s21 = sphi 0, %s19
    %s22 = sphi 0, %s20
    %s23 = sphi 0, %s21
    %s33 = sphi 0, %s35
    %s36 = sphi 0, %s33
    %s37 = sphi 0, %s36
    %s53 = sphi 0, %s37
    %s57 = sphi 0, %s57
    %s59 = sphi 0, %s57
    %s60 = sphi 0, %s59
    %s74 = sphi 0, %s60
    %s78 = sphi 0, %s78
    %s80 = sphi 0, %s78
    %s81 = sphi 0, %s80
    %s95 = sphi 0, %s81
    %s99 = sphi 0, %s99
    %s101 = sphi 0, %s99
    %s102 = sphi 0, %s101
    %s116 = sphi 0, %s102
    %s120 = sphi 0, %s120
    %s122 = sphi 0, %s120
    %s123 = sphi 0, %s122
    %s137 = sphi 0, %s123
    %s145 = sphi 0, %s147
    %s148 = sphi 0, %s145
    %s149 = sphi 0, %s148
    %s165 = sphi 0, %s149
  $region4: #{yolo_head_level.1} parent=0 // loop_header_branch
    %14 = sbr.rel (%p12) target = $region8
  $region5: #{yolo_head_level.1} parent=0 // loop_body
    %s16 = ssub.s32 %s11, 1
    %s17 = ssub.s32 %s11, 2
    %s24 = sadd.s32 1, %s19
    %p25 = scmp.ge.s32.totalorder %s24, 2
    %s26 = scalar_select %p25, 0, %s24
    %s27 = sadd.s32 1, %s18
    %s28 = scalar_select %p25, %s27, %s18
    %p29 = scmp.ge.s32.totalorder %s28, 4
    %s30 = scalar_select %p29, 0, %s28
    %s31 = ssub.s32 %s18, %s30
    %p32 = scmp.eq.s32.totalorder %s31, 0
    %s34 = sadd.s32 %s33, 1
    %s35 = scalar_select %p32, %s33, %s34
    %p38 = pneg %p32
    %p39 = scmp.eq.s32.totalorder %s11, 7
    %p40 = por %p38, %p39
    %p41 = scmp.ne.s32.totalorder %s33, %s36
    %p42 = scmp.eq.s32.totalorder %s11, 0
    %p43 = por %p41, %p42
    %p44 = scmp.ne.s32.totalorder %s33, %s36
    %p45 = scmp.eq.s32.totalorder %s16, 7
    %p46 = por %p44, %p45
    %p47 = scmp.ne.s32.totalorder %s36, %s37
    %p48 = scmp.eq.s32.totalorder %s16, 0
    %p49 = por %p47, %p48
    %p50 = scmp.ne.s32.totalorder %s36, %s37
    %p51 = scmp.eq.s32.totalorder %s17, 7
    %p52 = por %p50, %p51
    %p54 = scmp.ne.s32.totalorder %s37, %s53
    %p55 = scmp.eq.s32.totalorder %s17, 0
    %p56 = por %p54, %p55
    %s58 = sadd.s32 %s57, 1
    %p61 = scmp.eq.s32.totalorder %s11, 7
    %p62 = scmp.ne.s32.totalorder %s57, %s59
    %p63 = scmp.eq.s32.totalorder %s11, 0
    %p64 = por %p62, %p63
    %p65 = scmp.ne.s32.totalorder %s57, %s59
    %p66 = scmp.eq.s32.totalorder %s16, 7
    %p67 = por %p65, %p66
    %p68 = scmp.ne.s32.totalorder %s59, %s60
    %p69 = scmp.eq.s32.totalorder %s16, 0
    %p70 = por %p68, %p69
    %p71 = scmp.ne.s32.totalorder %s59, %s60
    %p72 = scmp.eq.s32.totalorder %s17, 7
    %p73 = por %p71, %p72
    %p75 = scmp.ne.s32.totalorder %s60, %s74
    %p76 = scmp.eq.s32.totalorder %s17, 0
    %p77 = por %p75, %p76
    %s79 = sadd.s32 %s78, 1
    %p82 = scmp.eq.s32.totalorder %s11, 7
    %p83 = scmp.ne.s32.totalorder %s78, %s80
    %p84 = scmp.eq.s32.totalorder %s11, 0
    %p85 = por %p83, %p84
    %p86 = scmp.ne.s32.totalorder %s78, %s80
    %p87 = scmp.eq.s32.totalorder %s16, 7
    %p88 = por %p86, %p87
    %p89 = scmp.ne.s32.totalorder %s80, %s81
    %p90 = scmp.eq.s32.totalorder %s16, 0
    %p91 = por %p89, %p90
    %p92 = scmp.ne.s32.totalorder %s80, %s81
    %p93 = scmp.eq.s32.totalorder %s17, 7
    %p94 = por %p92, %p93
    %p96 = scmp.ne.s32.totalorder %s81, %s95
    %p97 = scmp.eq.s32.totalorder %s17, 0
    %p98 = por %p96, %p97
    %s100 = sadd.s32 %s99, 1
    %p103 = scmp.eq.s32.totalorder %s11, 7
    %p104 = scmp.ne.s32.totalorder %s99, %s101
    %p105 = scmp.eq.s32.totalorder %s11, 0
    %p106 = por %p104, %p105
    %p107 = scmp.ne.s32.totalorder %s99, %s101
    %p108 = scmp.eq.s32.totalorder %s16, 7
    %p109 = por %p107, %p108
    %p110 = scmp.ne.s32.totalorder %s101, %s102
    %p111 = scmp.eq.s32.totalorder %s16, 0
    %p112 = por %p110, %p111
    %p113 = scmp.ne.s32.totalorder %s101, %s102
    %p114 = scmp.eq.s32.totalorder %s17, 7
    %p115 = por %p113, %p114
    %p117 = scmp.ne.s32.totalorder %s102, %s116
    %p118 = scmp.eq.s32.totalorder %s17, 0
    %p119 = por %p117, %p118
    %s121 = sadd.s32 %s120, 1
    %p124 = scmp.eq.s32.totalorder %s11, 7
    %p125 = scmp.ne.s32.totalorder %s120, %s122
    %p126 = scmp.eq.s32.totalorder %s11, 0
    %p127 = por %p125, %p126
    %p128 = scmp.ne.s32.totalorder %s120, %s122
    %p129 = scmp.eq.s32.totalorder %s16, 7
    %p130 = por %p128, %p129
    %p131 = scmp.ne.s32.totalorder %s122, %s123
    %p132 = scmp.eq.s32.totalorder %s16, 0
    %p133 = por %p131, %p132
    %p134 = scmp.ne.s32.totalorder %s122, %s123
    %p135 = scmp.eq.s32.totalorder %s17, 7
    %p136 = por %p134, %p135
    %p138 = scmp.ne.s32.totalorder %s123, %s137
    %p139 = scmp.eq.s32.totalorder %s17, 0
    %p140 = por %p138, %p139
    %s141 = ssub.s32 %s18, %s30
    %s142 = ssub.s32 %s19, %s26
    %s143 = sor.u32 %s141, %s142
    %p144 = scmp.eq.s32.totalorder %s143, 0
    %s146 = sadd.s32 %s145, 1
    %s147 = scalar_select %p144, %s145, %s146
    %p150 = pneg %p144
    %p151 = scmp.eq.s32.totalorder %s11, 7
    %p152 = por %p150, %p151
    %p153 = scmp.ne.s32.totalorder %s145, %s148
    %p154 = scmp.eq.s32.totalorder %s11, 0
    %p155 = por %p153, %p154
    %p156 = scmp.ne.s32.totalorder %s145, %s148
    %p157 = scmp.eq.s32.totalorder %s16, 7
    %p158 = por %p156, %p157
    %p159 = scmp.ne.s32.totalorder %s148, %s149
    %p160 = scmp.eq.s32.totalorder %s16, 0
    %p161 = por %p159, %p160
    %p162 = scmp.ne.s32.totalorder %s148, %s149
    %p163 = scmp.eq.s32.totalorder %s17, 7
    %p164 = por %p162, %p163
    %p166 = scmp.ne.s32.totalorder %s149, %s165
    %p167 = scmp.eq.s32.totalorder %s17, 0
    %p168 = por %p166, %p167
    %p169 = scmp.le.s32.totalorder 1, %s11
    %p170 = scmp.lt.s32.totalorder %s11, 9
    %p171 = pnand %p169, %p170
    %p172 = pneg %p171
    // Predicated region
    $region9: #{yolo_head_level.1} parent=5 // pred_check
      _
    $region10: #{yolo_head_level.1} parent=5 // pred_check_branch
      %174 = sbr.rel (%p171) target = $region12
    $region11: #{yolo_head_level.1} parent=5 // pred_region
      %s175 = ssub.s32 %s11, 1
      // Predicated region
      $region13: #{yolo_head_level.1} parent=11 // pred_check
        %p176 = pneg %p70
      $region14: #{yolo_head_level.1} parent=11 // pred_check_branch
        %178 = sbr.rel (%p176) target = $region16
      $region15: #{yolo_head_level.1} parent=11 // pred_region
        _
      $region16: #{yolo_head_level.1} parent=11 // pred_fallthru
        _
      // Predicated region
      $region17: #{yolo_head_level.1} parent=11 // pred_check
        %p179 = pneg %p91
      $region18: #{yolo_head_level.1} parent=11 // pred_check_branch
        %181 = sbr.rel (%p179) target = $region20
      $region19: #{yolo_head_level.1} parent=11 // pred_region
        _
      $region20: #{yolo_head_level.1} parent=11 // pred_fallthru
        _
      // Predicated region
      $region21: #{yolo_head_level.1} parent=11 // pred_check
        %p182 = pneg %p112
      $region22: #{yolo_head_level.1} parent=11 // pred_check_branch
        %184 = sbr.rel (%p182) target = $region24
      $region23: #{yolo_head_level.1} parent=11 // pred_region
        _
      $region24: #{yolo_head_level.1} parent=11 // pred_fallthru
        _
      // Predicated region
      $region25: #{yolo_head_level.1} parent=11 // pred_check
        %p185 = pneg %p133
      $region26: #{yolo_head_level.1} parent=11 // pred_check_branch
        %187 = sbr.rel (%p185) target = $region28
      $region27: #{yolo_head_level.1} parent=11 // pred_region
        _
      $region28: #{yolo_head_level.1} parent=11 // pred_fallthru
        _
    $region12: #{yolo_head_level.1} parent=5 // pred_fallthru
      _
    %p188 = scmp.lt.s32.totalorder %s11, 8
    // Predicated region
    $region29: #{yolo_head_level.1} parent=5 // pred_check
      %p189 = pneg %p188
    $region30: #{yolo_head_level.1} parent=5 // pred_check_branch
      %191 = sbr.rel (%p189) target = $region32
    $region31: #{yolo_head_level.1} parent=5 // pred_region
      // Predicated region
      $region33: #{yolo_head_level.1} parent=31 // pred_check
        %p192 = pneg %p43
      $region34: #{yolo_head_level.1} parent=31 // pred_check_branch
        %194 = sbr.rel (%p192) target = $region36
      $region35: #{yolo_head_level.1} parent=31 // pred_region
        %p195 = scmp.lt.s32.totalorder %s18, 3
        %s196 = scalar_select %p195, %s18, 3
        %s197 = smul.addr %s196, 170
        %s198 = smul.addr %s197, 4
        %s199 = scalar_lea.vmem %s0, %s198
      $region36: #{yolo_head_level.1} parent=31 // pred_fallthru
        _
    $region32: #{yolo_head_level.1} parent=5 // pred_fallthru
      _
    %p200 = scmp.le.s32.totalorder 1, %s11
    %p201 = scmp.lt.s32.totalorder %s11, 9
    %p202 = pnand %p200, %p201
    %p203 = pneg %p202
    // Predicated region
    $region37: #{yolo_head_level.1} parent=5 // pred_check
      _
    $region38: #{yolo_head_level.1} parent=5 // pred_check_branch
      %205 = sbr.rel (%p202) target = $region40
    $region39: #{yolo_head_level.1} parent=5 // pred_region
      %s206 = ssub.s32 %s11, 1
      %p207 = scmp.lt.s32.totalorder %s20, 3
      %s208 = scalar_select %p207, %s20, 3
      %s209 = smul.addr %s208, 170
      %s210 = smul.addr %s209, 4
      %s211 = scalar_lea.vmem %s0, %s210
      %p212 = pneg %p49
      %p213 = pneg %p46
      %p214 = pneg %p70
      %p215 = pneg %p67
      %p216 = pneg %p91
      %p217 = pneg %p88
      %p218 = pneg %p112
      %p219 = pneg %p109
      %p220 = pneg %p133
      %p221 = pneg %p130
      %p222 = pneg %p161
      %p223 = pneg %p158
      %s224 = smul.u32 64, %s21
      %p225 = scmp.lt.s32.totalorder %s20, 3
      %s226 = scalar_select %p225, %s20, 3
      %p227 = scmp.lt.s32.totalorder %s224, 127
      %s228 = scalar_select %p227, %s224, 127
      %s229 = smul.addr %s226, 128
      %s230 = sadd.s32 %s228, %s229
      %s231 = smul.addr %s230, 8
      %s232 = scalar_lea.vmem %s5, %s231
      %p233 = scmp.lt.s32.totalorder %s20, 3
      %s234 = scalar_select %p233, %s20, 3
      %s235 = smul.addr %s234, 170
      %s236 = smul.addr %s235, 4
      %s237 = scalar_lea.vmem %s0, %s236
      %s238 = smul.u32 64, %s21
      %p239 = scmp.lt.s32.totalorder %s20, 3
      %s240 = scalar_select %p239, %s20, 3
      %p241 = scmp.lt.s32.totalorder %s238, 127
      %s242 = scalar_select %p241, %s238, 127
      %s243 = smul.addr %s240, 128
      %s244 = sadd.s32 %s242, %s243
      %s245 = smul.addr %s244, 8
      %s246 = scalar_lea.vmem %s5, %s245
      %s247 = smul.u32 64, %s21
      %s248 = smul.u32 %s21, 16
      %s249 = smul.u32 %s248, 5
      %s250 = smul.addr %s249, 4
      %s251 = scalar_lea.vmem %s237, %s250
      %v252 = vld [vmem:[%s251] sm:$0xf]
      %v253 = vld [vmem:[%s251 + $0x4] sm:$0xf]
      %v254 = vld [vmem:[%s251 + $0x8] sm:$0xf]
      %v255 = vld [vmem:[%s251 + $0xc] sm:$0xf]
      %v256 = vld [vmem:[%s251 + $0x14] sm:$0xf]
      %v257 = vld [vmem:[%s251 + $0x18] sm:$0xf]
      %v258 = vld [vmem:[%s251 + $0x1c] sm:$0xf]
      %v259 = vld [vmem:[%s251 + $0x20] sm:$0xf]
      %v260 = vld [vmem:[%s251 + $0x28] sm:$0xf]
      %v261 = vld [vmem:[%s251 + $0x2c] sm:$0xf]
      %v262 = vld [vmem:[%s251 + $0x30] sm:$0xf]
      %v263 = vld [vmem:[%s251 + $0x34] sm:$0xf]
      %v264 = vld [vmem:[%s251 + $0x3c] sm:$0xf]
      %v265 = vld [vmem:[%s251 + $0x40] sm:$0xf]
      %v266 = vld [vmem:[%s251 + $0x44] sm:$0xf]
      %v267 = vld [vmem:[%s251 + $0x48] sm:$0xf]
      %v268 = vld [vmem:[%s251 + $0x50] sm:$0xf]
      %v269 = vld [vmem:[%s251 + $0x54] sm:$0xf]
      %v270 = vld [vmem:[%s251 + $0x58] sm:$0xf]
      %v271 = vld [vmem:[%s251 + $0x5c] sm:$0xf]
      %v272 = vld [vmem:[%s251 + $0x64] sm:$0xf]
      %v273 = vld [vmem:[%s251 + $0x68] sm:$0xf]
      %v274 = vld [vmem:[%s251 + $0x6c] sm:$0xf]
      %v275 = vld [vmem:[%s251 + $0x70] sm:$0xf]
      %v276 = vld [vmem:[%s251 + $0x78] sm:$0xf]
      %v277 = vld [vmem:[%s251 + $0x7c] sm:$0xf]
      %v278 = vld [vmem:[%s251 + $0x80] sm:$0xf]
      %v279 = vld [vmem:[%s251 + $0x84] sm:$0xf]
      %v280 = vld [vmem:[%s251 + $0x8c] sm:$0xf]
      %v281 = vld [vmem:[%s251 + $0x90] sm:$0xf]
      %v282 = vld [vmem:[%s251 + $0x94] sm:$0xf]
      %v283 = vld [vmem:[%s251 + $0x98] sm:$0xf]
      %v284 = vld [vmem:[%s251 + $0xa0] sm:$0xf]
      %v285 = vld [vmem:[%s251 + $0xa4] sm:$0xf]
      %v286 = vld [vmem:[%s251 + $0xa8] sm:$0xf]
      %v287 = vld [vmem:[%s251 + $0xac] sm:$0xf]
      %v288 = vld [vmem:[%s251 + $0xb4] sm:$0xf]
      %v289 = vld [vmem:[%s251 + $0xb8] sm:$0xf]
      %v290 = vld [vmem:[%s251 + $0xbc] sm:$0xf]
      %v291 = vld [vmem:[%s251 + $0xc0] sm:$0xf]
      %v292 = vld [vmem:[%s251 + $0xc8] sm:$0xf]
      %v293 = vld [vmem:[%s251 + $0xcc] sm:$0xf]
      %v294 = vld [vmem:[%s251 + $0xd0] sm:$0xf]
      %v295 = vld [vmem:[%s251 + $0xd4] sm:$0xf]
      %v296 = vld [vmem:[%s251 + $0xdc] sm:$0xf]
      %v297 = vld [vmem:[%s251 + $0xe0] sm:$0xf]
      %v298 = vld [vmem:[%s251 + $0xe4] sm:$0xf]
      %v299 = vld [vmem:[%s251 + $0xe8] sm:$0xf]
      %v300 = vld [vmem:[%s251 + $0xf0] sm:$0xf]
      %v301 = vld [vmem:[%s251 + $0xf4] sm:$0xf]
      %v302 = vld [vmem:[%s251 + $0xf8] sm:$0xf]
      %v303 = vld [vmem:[%s251 + $0xfc] sm:$0xf]
      %v304 = vld [vmem:[%s251 + $0x104] sm:$0xf]
      %v305 = vld [vmem:[%s251 + $0x108] sm:$0xf]
      %v306 = vld [vmem:[%s251 + $0x10c] sm:$0xf]
      %v307 = vld [vmem:[%s251 + $0x110] sm:$0xf]
      %v308 = vld [vmem:[%s251 + $0x118] sm:$0xf]
      %v309 = vld [vmem:[%s251 + $0x11c] sm:$0xf]
      %v310 = vld [vmem:[%s251 + $0x120] sm:$0xf]
      %v311 = vld [vmem:[%s251 + $0x124] sm:$0xf]
      %v312 = vld [vmem:[%s251 + $0x12c] sm:$0xf]
      %v313 = vld [vmem:[%s251 + $0x130] sm:$0xf]
      %v314 = vld [vmem:[%s251 + $0x134] sm:$0xf]
      %v315 = vld [vmem:[%s251 + $0x138] sm:$0xf]
      %v316 = vld [vmem:[%s251 + $0x10] sm:$0x1]
      %v317 = vld [vmem:[%s251 + $0x24] sm:$0x1]
      %v318 = vld [vmem:[%s251 + $0x38] sm:$0x1]
      %v319 = vld [vmem:[%s251 + $0x4c] sm:$0x1]
      %v320 = vld [vmem:[%s251 + $0x60] sm:$0x1]
      %v321 = vld [vmem:[%s251 + $0x74] sm:$0x1]
      %v322 = vld [vmem:[%s251 + $0x88] sm:$0x1]
      %v323 = vld [vmem:[%s251 + $0x9c] sm:$0x1]
      %v324 = vld [vmem:[%s251 + $0xb0] sm:$0x1]
      %v325 = vld [vmem:[%s251 + $0xc4] sm:$0x1]
      %v326 = vld [vmem:[%s251 + $0xd8] sm:$0x1]
      %v327 = vld [vmem:[%s251 + $0xec] sm:$0x1]
      %v328 = vld [vmem:[%s251 + $0x100] sm:$0x1]
      %v329 = vld [vmem:[%s251 + $0x114] sm:$0x1]
      %v330 = vld [vmem:[%s251 + $0x128] sm:$0x1]
      %v331 = vld [vmem:[%s251 + $0x13c] sm:$0x1]
      %v332 = vld [vmem:[%s251] sm:$0xe]
      %v333 = vld [vmem:[%s251 + $0x14] sm:$0xe]
      %v334 = vld [vmem:[%s251 + $0x28] sm:$0xe]
      %v335 = vld [vmem:[%s251 + $0x3c] sm:$0xe]
      %v336 = vld [vmem:[%s251 + $0x50] sm:$0xe]
      %v337 = vld [vmem:[%s251 + $0x64] sm:$0xe]
      %v338 = vld [vmem:[%s251 + $0x78] sm:$0xe]
      %v339 = vld [vmem:[%s251 + $0x8c] sm:$0xe]
      %v340 = vld [vmem:[%s251 + $0xa0] sm:$0xe]
      %v341 = vld [vmem:[%s251 + $0xb4] sm:$0xe]
      %v342 = vld [vmem:[%s251 + $0xc8] sm:$0xe]
      %v343 = vld [vmem:[%s251 + $0xdc] sm:$0xe]
      %v344 = vld [vmem:[%s251 + $0xf0] sm:$0xe]
      %v345 = vld [vmem:[%s251 + $0x104] sm:$0xe]
      %v346 = vld [vmem:[%s251 + $0x118] sm:$0xe]
      %v347 = vld [vmem:[%s251 + $0x12c] sm:$0xe]
      %v412 = vunpack.c.l.b16 %v252
      %v413 = vunpack.c.l.b16 %v253
      %v414 = vunpack.c.l.b16 %v254
      %v415 = vunpack.c.l.b16 %v255
      %v416 = vunpack.c.l.b16 %v256
      %v417 = vunpack.c.l.b16 %v257
      %v418 = vunpack.c.l.b16 %v258
      %v419 = vunpack.c.l.b16 %v259
      %v420 = vunpack.c.l.b16 %v260
      %v421 = vunpack.c.l.b16 %v261
      %v422 = vunpack.c.l.b16 %v262
      %v423 = vunpack.c.l.b16 %v263
      %v424 = vunpack.c.l.b16 %v264
      %v425 = vunpack.c.l.b16 %v265
      %v426 = vunpack.c.l.b16 %v266
      %v427 = vunpack.c.l.b16 %v267
      %v428 = vunpack.c.l.b16 %v268
      %v429 = vunpack.c.l.b16 %v269
      %v430 = vunpack.c.l.b16 %v270
      %v431 = vunpack.c.l.b16 %v271
      %v432 = vunpack.c.l.b16 %v272
      %v433 = vunpack.c.l.b16 %v273
      %v434 = vunpack.c.l.b16 %v274
      %v435 = vunpack.c.l.b16 %v275
      %v436 = vunpack.c.l.b16 %v276
      %v437 = vunpack.c.l.b16 %v277
      %v438 = vunpack.c.l.b16 %v278
      %v439 = vunpack.c.l.b16 %v279
      %v440 = vunpack.c.l.b16 %v280
      %v441 = vunpack.c.l.b16 %v281
      %v442 = vunpack.c.l.b16 %v282
      %v443 = vunpack.c.l.b16 %v283
      %v444 = vunpack.c.l.b16 %v284
      %v445 = vunpack.c.l.b16 %v285
      %v446 = vunpack.c.l.b16 %v286
      %v447 = vunpack.c.l.b16 %v287
      %v448 = vunpack.c.l.b16 %v288
      %v449 = vunpack.c.l.b16 %v289
      %v450 = vunpack.c.l.b16 %v290
      %v451 = vunpack.c.l.b16 %v291
      %v452 = vunpack.c.l.b16 %v292
      %v453 = vunpack.c.l.b16 %v293
      %v454 = vunpack.c.l.b16 %v294
      %v455 = vunpack.c.l.b16 %v295
      %v456 = vunpack.c.l.b16 %v296
      %v457 = vunpack.c.l.b16 %v297
      %v458 = vunpack.c.l.b16 %v298
      %v459 = vunpack.c.l.b16 %v299
      %v460 = vunpack.c.l.b16 %v300
      %v461 = vunpack.c.l.b16 %v301
      %v462 = vunpack.c.l.b16 %v302
      %v463 = vunpack.c.l.b16 %v303
      %v464 = vunpack.c.l.b16 %v304
      %v465 = vunpack.c.l.b16 %v305
      %v466 = vunpack.c.l.b16 %v306
      %v467 = vunpack.c.l.b16 %v307
      %v468 = vunpack.c.l.b16 %v308
      %v469 = vunpack.c.l.b16 %v309
      %v470 = vunpack.c.l.b16 %v310
      %v471 = vunpack.c.l.b16 %v311
      %v472 = vunpack.c.l.b16 %v312
      %v473 = vunpack.c.l.b16 %v313
      %v474 = vunpack.c.l.b16 %v314
      %v475 = vunpack.c.l.b16 %v315
      %v476 = vpack.c.b16 %v413, %v412
      %v477 = vpack.c.b16 %v415, %v414
      %v478 = vpack.c.b16 %v417, %v416
      %v479 = vpack.c.b16 %v419, %v418
      %v480 = vpack.c.b16 %v421, %v420
      %v481 = vpack.c.b16 %v423, %v422
      %v482 = vpack.c.b16 %v425, %v424
      %v483 = vpack.c.b16 %v427, %v426
      %v484 = vpack.c.b16 %v429, %v428
      %v485 = vpack.c.b16 %v431, %v430
      %v486 = vpack.c.b16 %v433, %v432
      %v487 = vpack.c.b16 %v435, %v434
      %v488 = vpack.c.b16 %v437, %v436
      %v489 = vpack.c.b16 %v439, %v438
      %v490 = vpack.c.b16 %v441, %v440
      %v491 = vpack.c.b16 %v443, %v442
      %v492 = vpack.c.b16 %v445, %v444
      %v493 = vpack.c.b16 %v447, %v446
      %v494 = vpack.c.b16 %v449, %v448
      %v495 = vpack.c.b16 %v451, %v450
      %v496 = vpack.c.b16 %v453, %v452
      %v497 = vpack.c.b16 %v455, %v454
      %v498 = vpack.c.b16 %v457, %v456
      %v499 = vpack.c.b16 %v459, %v458
      %v500 = vpack.c.b16 %v461, %v460
      %v501 = vpack.c.b16 %v463, %v462
      %v502 = vpack.c.b16 %v465, %v464
      %v503 = vpack.c.b16 %v467, %v466
      %v504 = vpack.c.b16 %v469, %v468
      %v505 = vpack.c.b16 %v471, %v470
      %v506 = vpack.c.b16 %v473, %v472
      %v507 = vpack.c.b16 %v475, %v474
      %v556 = vunpack.c.l.b16 %v316
      %v557 = vunpack.c.l.b16 %v317
      %v558 = vunpack.c.l.b16 %v318
      %v559 = vunpack.c.l.b16 %v319
      %v560 = vunpack.c.l.b16 %v320
      %v561 = vunpack.c.l.b16 %v321
      %v562 = vunpack.c.l.b16 %v322
      %v563 = vunpack.c.l.b16 %v323
      %v564 = vunpack.c.l.b16 %v324
      %v565 = vunpack.c.l.b16 %v325
      %v566 = vunpack.c.l.b16 %v326
      %v567 = vunpack.c.l.b16 %v327
      %v568 = vunpack.c.l.b16 %v328
      %v569 = vunpack.c.l.b16 %v329
      %v570 = vunpack.c.l.b16 %v330
      %v571 = vunpack.c.l.b16 %v331
      %v572 = vpack.c.b16 %v556, %v556
      %v573 = vpack.c.b16 %v557, %v557
      %v574 = vpack.c.b16 %v558, %v558
      %v575 = vpack.c.b16 %v559, %v559
      %v576 = vpack.c.b16 %v560, %v560
      %v577 = vpack.c.b16 %v561, %v561
      %v578 = vpack.c.b16 %v562, %v562
      %v579 = vpack.c.b16 %v563, %v563
      %v580 = vpack.c.b16 %v564, %v564
      %v581 = vpack.c.b16 %v565, %v565
      %v582 = vpack.c.b16 %v566, %v566
      %v583 = vpack.c.b16 %v567, %v567
      %v584 = vpack.c.b16 %v568, %v568
      %v585 = vpack.c.b16 %v569, %v569
      %v586 = vpack.c.b16 %v570, %v570
      %v587 = vpack.c.b16 %v571, %v571
      %vm588 = vsmask.f32 7424
      %v590 = vshrl.u32 %v476, 16
      %v592 = vshll.u32 %v476, 16
      %v594 = vrot.slane %v592, 1
      %v595 = vor.u32 %v590, %v594
      %v597 = vshll.u32 %v477, 16
      %v599 = vrot.slane %v597, 1
      %v600 = vsel %vm588, %v595, %v599
      %v601 = vshrl.u32 %v477, 16
      %v603 = vor.u32 %v601, %v599
      %v605 = vshll.u32 %v572, 16
      %v607 = vrot.slane %v605, 1
      %v608 = vsel %vm588, %v603, %v607
      %v610 = vshrl.u32 %v478, 16
      %v612 = vshll.u32 %v478, 16
      %v614 = vrot.slane %v612, 1
      %v615 = vor.u32 %v610, %v614
      %v617 = vshll.u32 %v479, 16
      %v619 = vrot.slane %v617, 1
      %v620 = vsel %vm588, %v615, %v619
      %v621 = vshrl.u32 %v479, 16
      %v623 = vor.u32 %v621, %v619
      %v625 = vshll.u32 %v573, 16
      %v627 = vrot.slane %v625, 1
      %v628 = vsel %vm588, %v623, %v627
      %v630 = vshrl.u32 %v480, 16
      %v632 = vshll.u32 %v480, 16
      %v634 = vrot.slane %v632, 1
      %v635 = vor.u32 %v630, %v634
      %v637 = vshll.u32 %v481, 16
      %v639 = vrot.slane %v637, 1
      %v640 = vsel %vm588, %v635, %v639
      %v641 = vshrl.u32 %v481, 16
      %v643 = vor.u32 %v641, %v639
      %v645 = vshll.u32 %v574, 16
      %v647 = vrot.slane %v645, 1
      %v648 = vsel %vm588, %v643, %v647
      %v650 = vshrl.u32 %v482, 16
      %v652 = vshll.u32 %v482, 16
      %v654 = vrot.slane %v652, 1
      %v655 = vor.u32 %v650, %v654
      %v657 = vshll.u32 %v483, 16
      %v659 = vrot.slane %v657, 1
      %v660 = vsel %vm588, %v655, %v659
      %v661 = vshrl.u32 %v483, 16
      %v663 = vor.u32 %v661, %v659
      %v665 = vshll.u32 %v575, 16
      %v667 = vrot.slane %v665, 1
      %v668 = vsel %vm588, %v663, %v667
      %v670 = vshrl.u32 %v484, 16
      %v672 = vshll.u32 %v484, 16
      %v674 = vrot.slane %v672, 1
      %v675 = vor.u32 %v670, %v674
      %v677 = vshll.u32 %v485, 16
      %v679 = vrot.slane %v677, 1
      %v680 = vsel %vm588, %v675, %v679
      %v681 = vshrl.u32 %v485, 16
      %v683 = vor.u32 %v681, %v679
      %v685 = vshll.u32 %v576, 16
      %v687 = vrot.slane %v685, 1
      %v688 = vsel %vm588, %v683, %v687
      %v690 = vshrl.u32 %v486, 16
      %v692 = vshll.u32 %v486, 16
      %v694 = vrot.slane %v692, 1
      %v695 = vor.u32 %v690, %v694
      %v697 = vshll.u32 %v487, 16
      %v699 = vrot.slane %v697, 1
      %v700 = vsel %vm588, %v695, %v699
      %v701 = vshrl.u32 %v487, 16
      %v703 = vor.u32 %v701, %v699
      %v705 = vshll.u32 %v577, 16
      %v707 = vrot.slane %v705, 1
      %v708 = vsel %vm588, %v703, %v707
      %v710 = vshrl.u32 %v488, 16
      %v712 = vshll.u32 %v488, 16
      %v714 = vrot.slane %v712, 1
      %v715 = vor.u32 %v710, %v714
      %v717 = vshll.u32 %v489, 16
      %v719 = vrot.slane %v717, 1
      %v720 = vsel %vm588, %v715, %v719
      %v721 = vshrl.u32 %v489, 16
      %v723 = vor.u32 %v721, %v719
      %v725 = vshll.u32 %v578, 16
      %v727 = vrot.slane %v725, 1
      %v728 = vsel %vm588, %v723, %v727
      %v730 = vshrl.u32 %v490, 16
      %v732 = vshll.u32 %v490, 16
      %v734 = vrot.slane %v732, 1
      %v735 = vor.u32 %v730, %v734
      %v737 = vshll.u32 %v491, 16
      %v739 = vrot.slane %v737, 1
      %v740 = vsel %vm588, %v735, %v739
      %v741 = vshrl.u32 %v491, 16
      %v743 = vor.u32 %v741, %v739
      %v745 = vshll.u32 %v579, 16
      %v747 = vrot.slane %v745, 1
      %v748 = vsel %vm588, %v743, %v747
      %v750 = vshrl.u32 %v492, 16
      %v752 = vshll.u32 %v492, 16
      %v754 = vrot.slane %v752, 1
      %v755 = vor.u32 %v750, %v754
      %v757 = vshll.u32 %v493, 16
      %v759 = vrot.slane %v757, 1
      %v760 = vsel %vm588, %v755, %v759
      %v761 = vshrl.u32 %v493, 16
      %v763 = vor.u32 %v761, %v759
      %v765 = vshll.u32 %v580, 16
      %v767 = vrot.slane %v765, 1
      %v768 = vsel %vm588, %v763, %v767
      %v770 = vshrl.u32 %v494, 16
      %v772 = vshll.u32 %v494, 16
      %v774 = vrot.slane %v772, 1
      %v775 = vor.u32 %v770, %v774
      %v777 = vshll.u32 %v495, 16
      %v779 = vrot.slane %v777, 1
      %v780 = vsel %vm588, %v775, %v779
      %v781 = vshrl.u32 %v495, 16
      %v783 = vor.u32 %v781, %v779
      %v785 = vshll.u32 %v581, 16
      %v787 = vrot.slane %v785, 1
      %v788 = vsel %vm588, %v783, %v787
      %v790 = vshrl.u32 %v496, 16
      %v792 = vshll.u32 %v496, 16
      %v794 = vrot.slane %v792, 1
      %v795 = vor.u32 %v790, %v794
      %v797 = vshll.u32 %v497, 16
      %v799 = vrot.slane %v797, 1
      %v800 = vsel %vm588, %v795, %v799
      %v801 = vshrl.u32 %v497, 16
      %v803 = vor.u32 %v801, %v799
      %v805 = vshll.u32 %v582, 16
      %v807 = vrot.slane %v805, 1
      %v808 = vsel %vm588, %v803, %v807
      %v810 = vshrl.u32 %v498, 16
      %v812 = vshll.u32 %v498, 16
      %v814 = vrot.slane %v812, 1
      %v815 = vor.u32 %v810, %v814
      %v817 = vshll.u32 %v499, 16
      %v819 = vrot.slane %v817, 1
      %v820 = vsel %vm588, %v815, %v819
      %v821 = vshrl.u32 %v499, 16
      %v823 = vor.u32 %v821, %v819
      %v825 = vshll.u32 %v583, 16
      %v827 = vrot.slane %v825, 1
      %v828 = vsel %vm588, %v823, %v827
      %v830 = vshrl.u32 %v500, 16
      %v832 = vshll.u32 %v500, 16
      %v834 = vrot.slane %v832, 1
      %v835 = vor.u32 %v830, %v834
      %v837 = vshll.u32 %v501, 16
      %v839 = vrot.slane %v837, 1
      %v840 = vsel %vm588, %v835, %v839
      %v841 = vshrl.u32 %v501, 16
      %v843 = vor.u32 %v841, %v839
      %v845 = vshll.u32 %v584, 16
      %v847 = vrot.slane %v845, 1
      %v848 = vsel %vm588, %v843, %v847
      %v850 = vshrl.u32 %v502, 16
      %v852 = vshll.u32 %v502, 16
      %v854 = vrot.slane %v852, 1
      %v855 = vor.u32 %v850, %v854
      %v857 = vshll.u32 %v503, 16
      %v859 = vrot.slane %v857, 1
      %v860 = vsel %vm588, %v855, %v859
      %v861 = vshrl.u32 %v503, 16
      %v863 = vor.u32 %v861, %v859
      %v865 = vshll.u32 %v585, 16
      %v867 = vrot.slane %v865, 1
      %v868 = vsel %vm588, %v863, %v867
      %v870 = vshrl.u32 %v504, 16
      %v872 = vshll.u32 %v504, 16
      %v874 = vrot.slane %v872, 1
      %v875 = vor.u32 %v870, %v874
      %v877 = vshll.u32 %v505, 16
      %v879 = vrot.slane %v877, 1
      %v880 = vsel %vm588, %v875, %v879
      %v881 = vshrl.u32 %v505, 16
      %v883 = vor.u32 %v881, %v879
      %v885 = vshll.u32 %v586, 16
      %v887 = vrot.slane %v885, 1
      %v888 = vsel %vm588, %v883, %v887
      %v890 = vshrl.u32 %v506, 16
      %v892 = vshll.u32 %v506, 16
      %v894 = vrot.slane %v892, 1
      %v895 = vor.u32 %v890, %v894
      %v897 = vshll.u32 %v507, 16
      %v899 = vrot.slane %v897, 1
      %v900 = vsel %vm588, %v895, %v899
      %v901 = vshrl.u32 %v507, 16
      %v903 = vor.u32 %v901, %v899
      %v905 = vshll.u32 %v587, 16
      %v907 = vrot.slane %v905, 1
      %v908 = vsel %vm588, %v903, %v907
      %v957 = vunpack.c.l.b16 %v332
      %v958 = vunpack.c.l.b16 %v333
      %v959 = vunpack.c.l.b16 %v334
      %v960 = vunpack.c.l.b16 %v335
      %v961 = vunpack.c.l.b16 %v336
      %v962 = vunpack.c.l.b16 %v337
      %v963 = vunpack.c.l.b16 %v338
      %v964 = vunpack.c.l.b16 %v339
      %v965 = vunpack.c.l.b16 %v340
      %v966 = vunpack.c.l.b16 %v341
      %v967 = vunpack.c.l.b16 %v342
      %v968 = vunpack.c.l.b16 %v343
      %v969 = vunpack.c.l.b16 %v344
      %v970 = vunpack.c.l.b16 %v345
      %v971 = vunpack.c.l.b16 %v346
      %v972 = vunpack.c.l.b16 %v347
      %v973 = vpack.c.b16 %v413, %v957
      %v974 = vpack.c.b16 %v417, %v958
      %v975 = vpack.c.b16 %v421, %v959
      %v976 = vpack.c.b16 %v425, %v960
      %v977 = vpack.c.b16 %v429, %v961
      %v978 = vpack.c.b16 %v433, %v962
      %v979 = vpack.c.b16 %v437, %v963
      %v980 = vpack.c.b16 %v441, %v964
      %v981 = vpack.c.b16 %v445, %v965
      %v982 = vpack.c.b16 %v449, %v966
      %v983 = vpack.c.b16 %v453, %v967
      %v984 = vpack.c.b16 %v457, %v968
      %v985 = vpack.c.b16 %v461, %v969
      %v986 = vpack.c.b16 %v465, %v970
      %v987 = vpack.c.b16 %v469, %v971
      %v988 = vpack.c.b16 %v473, %v972
      %vm989 = vcmask 1046528
      %v990 = vrot.slane %v973, 1
      %v991 = vrot.slane %v477, 1
      %v992 = vsel %vm989, %v990, %v991
      %v993 = vrot.slane %v572, 1
      %v994 = vsel %vm989, %v991, %v993
      %v995 = vrot.slane %v974, 1
      %v996 = vrot.slane %v479, 1
      %v997 = vsel %vm989, %v995, %v996
      %v998 = vrot.slane %v573, 1
      %v999 = vsel %vm989, %v996, %v998
      %v1000 = vrot.slane %v975, 1
      %v1001 = vrot.slane %v481, 1
      %v1002 = vsel %vm989, %v1000, %v1001
      %v1003 = vrot.slane %v574, 1
      %v1004 = vsel %vm989, %v1001, %v1003
      %v1005 = vrot.slane %v976, 1
      %v1006 = vrot.slane %v483, 1
      %v1007 = vsel %vm989, %v1005, %v1006
      %v1008 = vrot.slane %v575, 1
      %v1009 = vsel %vm989, %v1006, %v1008
      %v1010 = vrot.slane %v977, 1
      %v1011 = vrot.slane %v485, 1
      %v1012 = vsel %vm989, %v1010, %v1011
      %v1013 = vrot.slane %v576, 1
      %v1014 = vsel %vm989, %v1011, %v1013
      %v1015 = vrot.slane %v978, 1
      %v1016 = vrot.slane %v487, 1
      %v1017 = vsel %vm989, %v1015, %v1016
      %v1018 = vrot.slane %v577, 1
      %v1019 = vsel %vm989, %v1016, %v1018
      %v1020 = vrot.slane %v979, 1
      %v1021 = vrot.slane %v489, 1
      %v1022 = vsel %vm989, %v1020, %v1021
      %v1023 = vrot.slane %v578, 1
      %v1024 = vsel %vm989, %v1021, %v1023
      %v1025 = vrot.slane %v980, 1
      %v1026 = vrot.slane %v491, 1
      %v1027 = vsel %vm989, %v1025, %v1026
      %v1028 = vrot.slane %v579, 1
      %v1029 = vsel %vm989, %v1026, %v1028
      %v1030 = vrot.slane %v981, 1
      %v1031 = vrot.slane %v493, 1
      %v1032 = vsel %vm989, %v1030, %v1031
      %v1033 = vrot.slane %v580, 1
      %v1034 = vsel %vm989, %v1031, %v1033
      %v1035 = vrot.slane %v982, 1
      %v1036 = vrot.slane %v495, 1
      %v1037 = vsel %vm989, %v1035, %v1036
      %v1038 = vrot.slane %v581, 1
      %v1039 = vsel %vm989, %v1036, %v1038
      %v1040 = vrot.slane %v983, 1
      %v1041 = vrot.slane %v497, 1
      %v1042 = vsel %vm989, %v1040, %v1041
      %v1043 = vrot.slane %v582, 1
      %v1044 = vsel %vm989, %v1041, %v1043
      %v1045 = vrot.slane %v984, 1
      %v1046 = vrot.slane %v499, 1
      %v1047 = vsel %vm989, %v1045, %v1046
      %v1048 = vrot.slane %v583, 1
      %v1049 = vsel %vm989, %v1046, %v1048
      %v1050 = vrot.slane %v985, 1
      %v1051 = vrot.slane %v501, 1
      %v1052 = vsel %vm989, %v1050, %v1051
      %v1053 = vrot.slane %v584, 1
      %v1054 = vsel %vm989, %v1051, %v1053
      %v1055 = vrot.slane %v986, 1
      %v1056 = vrot.slane %v503, 1
      %v1057 = vsel %vm989, %v1055, %v1056
      %v1058 = vrot.slane %v585, 1
      %v1059 = vsel %vm989, %v1056, %v1058
      %v1060 = vrot.slane %v987, 1
      %v1061 = vrot.slane %v505, 1
      %v1062 = vsel %vm989, %v1060, %v1061
      %v1063 = vrot.slane %v586, 1
      %v1064 = vsel %vm989, %v1061, %v1063
      %v1065 = vrot.slane %v988, 1
      %v1066 = vrot.slane %v507, 1
      %v1067 = vsel %vm989, %v1065, %v1066
      %v1068 = vrot.slane %v587, 1
      %v1069 = vsel %vm989, %v1066, %v1068
      %v1102 = vld [vmem:[%s1] sm:$0xff]
      %v1103 = vld [vmem:[%s1 + $0x8] sm:$0xff]
      %v1104 = vld [vmem:[%s1 + $0x10] sm:$0xff]
      %v1105 = vld [vmem:[%s1 + $0x18] sm:$0xff]
      %v1106 = vld [vmem:[%s1 + $0x20] sm:$0xff]
      %v1107 = vld [vmem:[%s1 + $0x28] sm:$0xff]
      %v1108 = vld [vmem:[%s1 + $0x30] sm:$0xff]
      %v1109 = vld [vmem:[%s1 + $0x38] sm:$0xff]
      %v1110 = vld [vmem:[%s1 + $0x40] sm:$0xff]
      %v1111 = vld [vmem:[%s1 + $0x48] sm:$0xff]
      %v1112 = vld [vmem:[%s1 + $0x50] sm:$0xff]
      %v1113 = vld [vmem:[%s1 + $0x58] sm:$0xff]
      %v1114 = vld [vmem:[%s1 + $0x60] sm:$0xff]
      %v1115 = vld [vmem:[%s1 + $0x68] sm:$0xff]
      %v1116 = vld [vmem:[%s1 + $0x70] sm:$0xff]
      %v1117 = vld [vmem:[%s1 + $0x78] sm:$0xff]
      %v1118 = vld [vmem:[%s1 + $0x80] sm:$0xff]
      %v1119 = vld [vmem:[%s1 + $0x88] sm:$0xff]
      %v1120 = vld [vmem:[%s1 + $0x90] sm:$0xff]
      %v1121 = vld [vmem:[%s1 + $0x98] sm:$0xff]
      %v1122 = vld [vmem:[%s1 + $0xa0] sm:$0xff]
      %v1123 = vld [vmem:[%s1 + $0xa8] sm:$0xff]
      %v1124 = vld [vmem:[%s1 + $0xb0] sm:$0xff]
      %v1125 = vld [vmem:[%s1 + $0xb8] sm:$0xff]
      %v1126 = vld [vmem:[%s1 + $0xc0] sm:$0xff]
      %v1127 = vld [vmem:[%s1 + $0xc8] sm:$0xff]
      %v1128 = vld [vmem:[%s1 + $0xd0] sm:$0xff]
      %v1129 = vld [vmem:[%s1 + $0xd8] sm:$0xff]
      %v1130 = vld [vmem:[%s1 + $0xe0] sm:$0xff]
      %v1131 = vld [vmem:[%s1 + $0xe8] sm:$0xff]
      %v1132 = vld [vmem:[%s1 + $0xf0] sm:$0xff]
      %v1133 = vld [vmem:[%s1 + $0xf8] sm:$0xff]
      %v1134 = vld [vmem:[%s1 + $0x100] sm:$0xff]
      %v1135 = vld [vmem:[%s1 + $0x108] sm:$0xff]
      %v1136 = vld [vmem:[%s1 + $0x110] sm:$0xff]
      %v1137 = vld [vmem:[%s1 + $0x118] sm:$0xff]
      %v1138 = vld [vmem:[%s1 + $0x120] sm:$0xff]
      %v1139 = vld [vmem:[%s1 + $0x128] sm:$0xff]
      %v1140 = vld [vmem:[%s1 + $0x130] sm:$0xff]
      %v1141 = vld [vmem:[%s1 + $0x138] sm:$0xff]
      %v1142 = vld [vmem:[%s1 + $0x140] sm:$0xff]
      %v1143 = vld [vmem:[%s1 + $0x148] sm:$0xff]
      %v1144 = vld [vmem:[%s1 + $0x150] sm:$0xff]
      %v1145 = vld [vmem:[%s1 + $0x158] sm:$0xff]
      %v1146 = vld [vmem:[%s1 + $0x160] sm:$0xff]
      %v1147 = vld [vmem:[%s1 + $0x168] sm:$0xff]
      %v1148 = vld [vmem:[%s1 + $0x170] sm:$0xff]
      %v1149 = vld [vmem:[%s1 + $0x178] sm:$0xff]
      %s1150 = sadd.s32 %s248, 1
      %s1151 = smul.u32 %s1150, 5
      %s1152 = smul.addr %s1151, 4
      %s1153 = scalar_lea.vmem %s237, %s1152
      %v1154 = vld [vmem:[%s1153] sm:$0xf]
      %v1155 = vld [vmem:[%s1153 + $0x4] sm:$0xf]
      %v1156 = vld [vmem:[%s1153 + $0x8] sm:$0xf]
      %v1157 = vld [vmem:[%s1153 + $0xc] sm:$0xf]
      %v1158 = vld [vmem:[%s1153 + $0x14] sm:$0xf]
      %v1159 = vld [vmem:[%s1153 + $0x18] sm:$0xf]
      %v1160 = vld [vmem:[%s1153 + $0x1c] sm:$0xf]
      %v1161 = vld [vmem:[%s1153 + $0x20] sm:$0xf]
      %v1162 = vld [vmem:[%s1153 + $0x28] sm:$0xf]
      %v1163 = vld [vmem:[%s1153 + $0x2c] sm:$0xf]
      %v1164 = vld [vmem:[%s1153 + $0x30] sm:$0xf]
      %v1165 = vld [vmem:[%s1153 + $0x34] sm:$0xf]
      %v1166 = vld [vmem:[%s1153 + $0x3c] sm:$0xf]
      %v1167 = vld [vmem:[%s1153 + $0x40] sm:$0xf]
      %v1168 = vld [vmem:[%s1153 + $0x44] sm:$0xf]
      %v1169 = vld [vmem:[%s1153 + $0x48] sm:$0xf]
      %v1170 = vld [vmem:[%s1153 + $0x50] sm:$0xf]
      %v1171 = vld [vmem:[%s1153 + $0x54] sm:$0xf]
      %v1172 = vld [vmem:[%s1153 + $0x58] sm:$0xf]
      %v1173 = vld [vmem:[%s1153 + $0x5c] sm:$0xf]
      %v1174 = vld [vmem:[%s1153 + $0x64] sm:$0xf]
      %v1175 = vld [vmem:[%s1153 + $0x68] sm:$0xf]
      %v1176 = vld [vmem:[%s1153 + $0x6c] sm:$0xf]
      %v1177 = vld [vmem:[%s1153 + $0x70] sm:$0xf]
      %v1178 = vld [vmem:[%s1153 + $0x78] sm:$0xf]
      %v1179 = vld [vmem:[%s1153 + $0x7c] sm:$0xf]
      %v1180 = vld [vmem:[%s1153 + $0x80] sm:$0xf]
      %v1181 = vld [vmem:[%s1153 + $0x84] sm:$0xf]
      %v1182 = vld [vmem:[%s1153 + $0x8c] sm:$0xf]
      %v1183 = vld [vmem:[%s1153 + $0x90] sm:$0xf]
      %v1184 = vld [vmem:[%s1153 + $0x94] sm:$0xf]
      %v1185 = vld [vmem:[%s1153 + $0x98] sm:$0xf]
      %v1186 = vld [vmem:[%s1153 + $0xa0] sm:$0xf]
      %v1187 = vld [vmem:[%s1153 + $0xa4] sm:$0xf]
      %v1188 = vld [vmem:[%s1153 + $0xa8] sm:$0xf]
      %v1189 = vld [vmem:[%s1153 + $0xac] sm:$0xf]
      %v1190 = vld [vmem:[%s1153 + $0xb4] sm:$0xf]
      %v1191 = vld [vmem:[%s1153 + $0xb8] sm:$0xf]
      %v1192 = vld [vmem:[%s1153 + $0xbc] sm:$0xf]
      %v1193 = vld [vmem:[%s1153 + $0xc0] sm:$0xf]
      %v1194 = vld [vmem:[%s1153 + $0xc8] sm:$0xf]
      %v1195 = vld [vmem:[%s1153 + $0xcc] sm:$0xf]
      %v1196 = vld [vmem:[%s1153 + $0xd0] sm:$0xf]
      %v1197 = vld [vmem:[%s1153 + $0xd4] sm:$0xf]
      %v1198 = vld [vmem:[%s1153 + $0xdc] sm:$0xf]
      %v1199 = vld [vmem:[%s1153 + $0xe0] sm:$0xf]
      %v1200 = vld [vmem:[%s1153 + $0xe4] sm:$0xf]
      %v1201 = vld [vmem:[%s1153 + $0xe8] sm:$0xf]
      %v1202 = vld [vmem:[%s1153 + $0xf0] sm:$0xf]
      %v1203 = vld [vmem:[%s1153 + $0xf4] sm:$0xf]
      %v1204 = vld [vmem:[%s1153 + $0xf8] sm:$0xf]
      %v1205 = vld [vmem:[%s1153 + $0xfc] sm:$0xf]
      %v1206 = vld [vmem:[%s1153 + $0x104] sm:$0xf]
      %v1207 = vld [vmem:[%s1153 + $0x108] sm:$0xf]
      %v1208 = vld [vmem:[%s1153 + $0x10c] sm:$0xf]
      %v1209 = vld [vmem:[%s1153 + $0x110] sm:$0xf]
      %v1210 = vld [vmem:[%s1153 + $0x118] sm:$0xf]
      %v1211 = vld [vmem:[%s1153 + $0x11c] sm:$0xf]
      %v1212 = vld [vmem:[%s1153 + $0x120] sm:$0xf]
      %v1213 = vld [vmem:[%s1153 + $0x124] sm:$0xf]
      %v1214 = vld [vmem:[%s1153 + $0x12c] sm:$0xf]
      %v1215 = vld [vmem:[%s1153 + $0x130] sm:$0xf]
      %v1216 = vld [vmem:[%s1153 + $0x134] sm:$0xf]
      %v1217 = vld [vmem:[%s1153 + $0x138] sm:$0xf]
      %v1218 = vld [vmem:[%s1153 + $0x10] sm:$0x1]
      %v1219 = vld [vmem:[%s1153 + $0x24] sm:$0x1]
      %v1220 = vld [vmem:[%s1153 + $0x38] sm:$0x1]
      %v1221 = vld [vmem:[%s1153 + $0x4c] sm:$0x1]
      %v1222 = vld [vmem:[%s1153 + $0x60] sm:$0x1]
      %v1223 = vld [vmem:[%s1153 + $0x74] sm:$0x1]
      %v1224 = vld [vmem:[%s1153 + $0x88] sm:$0x1]
      %v1225 = vld [vmem:[%s1153 + $0x9c] sm:$0x1]
      %v1226 = vld [vmem:[%s1153 + $0xb0] sm:$0x1]
      %v1227 = vld [vmem:[%s1153 + $0xc4] sm:$0x1]
      %v1228 = vld [vmem:[%s1153 + $0xd8] sm:$0x1]
      %v1229 = vld [vmem:[%s1153 + $0xec] sm:$0x1]
      %v1230 = vld [vmem:[%s1153 + $0x100] sm:$0x1]
      %v1231 = vld [vmem:[%s1153 + $0x114] sm:$0x1]
      %v1232 = vld [vmem:[%s1153 + $0x128] sm:$0x1]
      %v1233 = vld [vmem:[%s1153 + $0x13c] sm:$0x1]
      %v1234 = vld [vmem:[%s1153] sm:$0xe]
      %v1235 = vld [vmem:[%s1153 + $0x14] sm:$0xe]
      %v1236 = vld [vmem:[%s1153 + $0x28] sm:$0xe]
      %v1237 = vld [vmem:[%s1153 + $0x3c] sm:$0xe]
      %v1238 = vld [vmem:[%s1153 + $0x50] sm:$0xe]
      %v1239 = vld [vmem:[%s1153 + $0x64] sm:$0xe]
      %v1240 = vld [vmem:[%s1153 + $0x78] sm:$0xe]
      %v1241 = vld [vmem:[%s1153 + $0x8c] sm:$0xe]
      %v1242 = vld [vmem:[%s1153 + $0xa0] sm:$0xe]
      %v1243 = vld [vmem:[%s1153 + $0xb4] sm:$0xe]
      %v1244 = vld [vmem:[%s1153 + $0xc8] sm:$0xe]
      %v1245 = vld [vmem:[%s1153 + $0xdc] sm:$0xe]
      %v1246 = vld [vmem:[%s1153 + $0xf0] sm:$0xe]
      %v1247 = vld [vmem:[%s1153 + $0x104] sm:$0xe]
      %v1248 = vld [vmem:[%s1153 + $0x118] sm:$0xe]
      %v1249 = vld [vmem:[%s1153 + $0x12c] sm:$0xe]
      %v1314 = vunpack.c.l.b16 %v1154
      %v1315 = vunpack.c.l.b16 %v1155
      %v1316 = vunpack.c.l.b16 %v1156
      %v1317 = vunpack.c.l.b16 %v1157
      %v1318 = vunpack.c.l.b16 %v1158
      %v1319 = vunpack.c.l.b16 %v1159
      %v1320 = vunpack.c.l.b16 %v1160
      %v1321 = vunpack.c.l.b16 %v1161
      %v1322 = vunpack.c.l.b16 %v1162
      %v1323 = vunpack.c.l.b16 %v1163
      %v1324 = vunpack.c.l.b16 %v1164
      %v1325 = vunpack.c.l.b16 %v1165
      %v1326 = vunpack.c.l.b16 %v1166
      %v1327 = vunpack.c.l.b16 %v1167
      %v1328 = vunpack.c.l.b16 %v1168
      %v1329 = vunpack.c.l.b16 %v1169
      %v1330 = vunpack.c.l.b16 %v1170
      %v1331 = vunpack.c.l.b16 %v1171
      %v1332 = vunpack.c.l.b16 %v1172
      %v1333 = vunpack.c.l.b16 %v1173
      %v1334 = vunpack.c.l.b16 %v1174
      %v1335 = vunpack.c.l.b16 %v1175
      %v1336 = vunpack.c.l.b16 %v1176
      %v1337 = vunpack.c.l.b16 %v1177
      %v1338 = vunpack.c.l.b16 %v1178
      %v1339 = vunpack.c.l.b16 %v1179
      %v1340 = vunpack.c.l.b16 %v1180
      %v1341 = vunpack.c.l.b16 %v1181
      %v1342 = vunpack.c.l.b16 %v1182
      %v1343 = vunpack.c.l.b16 %v1183
      %v1344 = vunpack.c.l.b16 %v1184
      %v1345 = vunpack.c.l.b16 %v1185
      %v1346 = vunpack.c.l.b16 %v1186
      %v1347 = vunpack.c.l.b16 %v1187
      %v1348 = vunpack.c.l.b16 %v1188
      %v1349 = vunpack.c.l.b16 %v1189
      %v1350 = vunpack.c.l.b16 %v1190
      %v1351 = vunpack.c.l.b16 %v1191
      %v1352 = vunpack.c.l.b16 %v1192
      %v1353 = vunpack.c.l.b16 %v1193
      %v1354 = vunpack.c.l.b16 %v1194
      %v1355 = vunpack.c.l.b16 %v1195
      %v1356 = vunpack.c.l.b16 %v1196
      %v1357 = vunpack.c.l.b16 %v1197
      %v1358 = vunpack.c.l.b16 %v1198
      %v1359 = vunpack.c.l.b16 %v1199
      %v1360 = vunpack.c.l.b16 %v1200
      %v1361 = vunpack.c.l.b16 %v1201
      %v1362 = vunpack.c.l.b16 %v1202
      %v1363 = vunpack.c.l.b16 %v1203
      %v1364 = vunpack.c.l.b16 %v1204
      %v1365 = vunpack.c.l.b16 %v1205
      %v1366 = vunpack.c.l.b16 %v1206
      %v1367 = vunpack.c.l.b16 %v1207
      %v1368 = vunpack.c.l.b16 %v1208
      %v1369 = vunpack.c.l.b16 %v1209
      %v1370 = vunpack.c.l.b16 %v1210
      %v1371 = vunpack.c.l.b16 %v1211
      %v1372 = vunpack.c.l.b16 %v1212
      %v1373 = vunpack.c.l.b16 %v1213
      %v1374 = vunpack.c.l.b16 %v1214
      %v1375 = vunpack.c.l.b16 %v1215
      %v1376 = vunpack.c.l.b16 %v1216
      %v1377 = vunpack.c.l.b16 %v1217
      %v1378 = vpack.c.b16 %v1315, %v1314
      %v1379 = vpack.c.b16 %v1317, %v1316
      %v1380 = vpack.c.b16 %v1319, %v1318
      %v1381 = vpack.c.b16 %v1321, %v1320
      %v1382 = vpack.c.b16 %v1323, %v1322
      %v1383 = vpack.c.b16 %v1325, %v1324
      %v1384 = vpack.c.b16 %v1327, %v1326
      %v1385 = vpack.c.b16 %v1329, %v1328
      %v1386 = vpack.c.b16 %v1331, %v1330
      %v1387 = vpack.c.b16 %v1333, %v1332
      %v1388 = vpack.c.b16 %v1335, %v1334
      %v1389 = vpack.c.b16 %v1337, %v1336
      %v1390 = vpack.c.b16 %v1339, %v1338
      %v1391 = vpack.c.b16 %v1341, %v1340
      %v1392 = vpack.c.b16 %v1343, %v1342
      %v1393 = vpack.c.b16 %v1345, %v1344
      %v1394 = vpack.c.b16 %v1347, %v1346
      %v1395 = vpack.c.b16 %v1349, %v1348
      %v1396 = vpack.c.b16 %v1351, %v1350
      %v1397 = vpack.c.b16 %v1353, %v1352
      %v1398 = vpack.c.b16 %v1355, %v1354
      %v1399 = vpack.c.b16 %v1357, %v1356
      %v1400 = vpack.c.b16 %v1359, %v1358
      %v1401 = vpack.c.b16 %v1361, %v1360
      %v1402 = vpack.c.b16 %v1363, %v1362
      %v1403 = vpack.c.b16 %v1365, %v1364
      %v1404 = vpack.c.b16 %v1367, %v1366
      %v1405 = vpack.c.b16 %v1369, %v1368
      %v1406 = vpack.c.b16 %v1371, %v1370
      %v1407 = vpack.c.b16 %v1373, %v1372
      %v1408 = vpack.c.b16 %v1375, %v1374
      %v1409 = vpack.c.b16 %v1377, %v1376
      %v1458 = vunpack.c.l.b16 %v1218
      %v1459 = vunpack.c.l.b16 %v1219
      %v1460 = vunpack.c.l.b16 %v1220
      %v1461 = vunpack.c.l.b16 %v1221
      %v1462 = vunpack.c.l.b16 %v1222
      %v1463 = vunpack.c.l.b16 %v1223
      %v1464 = vunpack.c.l.b16 %v1224
      %v1465 = vunpack.c.l.b16 %v1225
      %v1466 = vunpack.c.l.b16 %v1226
      %v1467 = vunpack.c.l.b16 %v1227
      %v1468 = vunpack.c.l.b16 %v1228
      %v1469 = vunpack.c.l.b16 %v1229
      %v1470 = vunpack.c.l.b16 %v1230
      %v1471 = vunpack.c.l.b16 %v1231
      %v1472 = vunpack.c.l.b16 %v1232
      %v1473 = vunpack.c.l.b16 %v1233
      %v1474 = vpack.c.b16 %v1458, %v1458
      %v1475 = vpack.c.b16 %v1459, %v1459
      %v1476 = vpack.c.b16 %v1460, %v1460
      %v1477 = vpack.c.b16 %v1461, %v1461
      %v1478 = vpack.c.b16 %v1462, %v1462
      %v1479 = vpack.c.b16 %v1463, %v1463
      %v1480 = vpack.c.b16 %v1464, %v1464
      %v1481 = vpack.c.b16 %v1465, %v1465
      %v1482 = vpack.c.b16 %v1466, %v1466
      %v1483 = vpack.c.b16 %v1467, %v1467
      %v1484 = vpack.c.b16 %v1468, %v1468
      %v1485 = vpack.c.b16 %v1469, %v1469
      %v1486 = vpack.c.b16 %v1470, %v1470
      %v1487 = vpack.c.b16 %v1471, %v1471
      %v1488 = vpack.c.b16 %v1472, %v1472
      %v1489 = vpack.c.b16 %v1473, %v1473
      %v1491 = vshrl.u32 %v1378, 16
      %v1493 = vshll.u32 %v1378, 16
      %v1495 = vrot.slane %v1493, 1
      %v1496 = vor.u32 %v1491, %v1495
      %v1498 = vshll.u32 %v1379, 16
      %v1500 = vrot.slane %v1498, 1
      %v1501 = vsel %vm588, %v1496, %v1500
      %v1502 = vshrl.u32 %v1379, 16
      %v1504 = vor.u32 %v1502, %v1500
      %v1506 = vshll.u32 %v1474, 16
      %v1508 = vrot.slane %v1506, 1
      %v1509 = vsel %vm588, %v1504, %v1508
      %v1511 = vshrl.u32 %v1380, 16
      %v1513 = vshll.u32 %v1380, 16
      %v1515 = vrot.slane %v1513, 1
      %v1516 = vor.u32 %v1511, %v1515
      %v1518 = vshll.u32 %v1381, 16
      %v1520 = vrot.slane %v1518, 1
      %v1521 = vsel %vm588, %v1516, %v1520
      %v1522 = vshrl.u32 %v1381, 16
      %v1524 = vor.u32 %v1522, %v1520
      %v1526 = vshll.u32 %v1475, 16
      %v1528 = vrot.slane %v1526, 1
      %v1529 = vsel %vm588, %v1524, %v1528
      %v1531 = vshrl.u32 %v1382, 16
      %v1533 = vshll.u32 %v1382, 16
      %v1535 = vrot.slane %v1533, 1
      %v1536 = vor.u32 %v1531, %v1535
      %v1538 = vshll.u32 %v1383, 16
      %v1540 = vrot.slane %v1538, 1
      %v1541 = vsel %vm588, %v1536, %v1540
      %v1542 = vshrl.u32 %v1383, 16
      %v1544 = vor.u32 %v1542, %v1540
      %v1546 = vshll.u32 %v1476, 16
      %v1548 = vrot.slane %v1546, 1
      %v1549 = vsel %vm588, %v1544, %v1548
      %v1551 = vshrl.u32 %v1384, 16
      %v1553 = vshll.u32 %v1384, 16
      %v1555 = vrot.slane %v1553, 1
      %v1556 = vor.u32 %v1551, %v1555
      %v1558 = vshll.u32 %v1385, 16
      %v1560 = vrot.slane %v1558, 1
      %v1561 = vsel %vm588, %v1556, %v1560
      %v1562 = vshrl.u32 %v1385, 16
      %v1564 = vor.u32 %v1562, %v1560
      %v1566 = vshll.u32 %v1477, 16
      %v1568 = vrot.slane %v1566, 1
      %v1569 = vsel %vm588, %v1564, %v1568
      %v1571 = vshrl.u32 %v1386, 16
      %v1573 = vshll.u32 %v1386, 16
      %v1575 = vrot.slane %v1573, 1
      %v1576 = vor.u32 %v1571, %v1575
      %v1578 = vshll.u32 %v1387, 16
      %v1580 = vrot.slane %v1578, 1
      %v1581 = vsel %vm588, %v1576, %v1580
      %v1582 = vshrl.u32 %v1387, 16
      %v1584 = vor.u32 %v1582, %v1580
      %v1586 = vshll.u32 %v1478, 16
      %v1588 = vrot.slane %v1586, 1
      %v1589 = vsel %vm588, %v1584, %v1588
      %v1591 = vshrl.u32 %v1388, 16
      %v1593 = vshll.u32 %v1388, 16
      %v1595 = vrot.slane %v1593, 1
      %v1596 = vor.u32 %v1591, %v1595
      %v1598 = vshll.u32 %v1389, 16
      %v1600 = vrot.slane %v1598, 1
      %v1601 = vsel %vm588, %v1596, %v1600
      %v1602 = vshrl.u32 %v1389, 16
      %v1604 = vor.u32 %v1602, %v1600
      %v1606 = vshll.u32 %v1479, 16
      %v1608 = vrot.slane %v1606, 1
      %v1609 = vsel %vm588, %v1604, %v1608
      %v1611 = vshrl.u32 %v1390, 16
      %v1613 = vshll.u32 %v1390, 16
      %v1615 = vrot.slane %v1613, 1
      %v1616 = vor.u32 %v1611, %v1615
      %v1618 = vshll.u32 %v1391, 16
      %v1620 = vrot.slane %v1618, 1
      %v1621 = vsel %vm588, %v1616, %v1620
      %v1622 = vshrl.u32 %v1391, 16
      %v1624 = vor.u32 %v1622, %v1620
      %v1626 = vshll.u32 %v1480, 16
      %v1628 = vrot.slane %v1626, 1
      %v1629 = vsel %vm588, %v1624, %v1628
      %v1631 = vshrl.u32 %v1392, 16
      %v1633 = vshll.u32 %v1392, 16
      %v1635 = vrot.slane %v1633, 1
      %v1636 = vor.u32 %v1631, %v1635
      %v1638 = vshll.u32 %v1393, 16
      %v1640 = vrot.slane %v1638, 1
      %v1641 = vsel %vm588, %v1636, %v1640
      %v1642 = vshrl.u32 %v1393, 16
      %v1644 = vor.u32 %v1642, %v1640
      %v1646 = vshll.u32 %v1481, 16
      %v1648 = vrot.slane %v1646, 1
      %v1649 = vsel %vm588, %v1644, %v1648
      %v1651 = vshrl.u32 %v1394, 16
      %v1653 = vshll.u32 %v1394, 16
      %v1655 = vrot.slane %v1653, 1
      %v1656 = vor.u32 %v1651, %v1655
      %v1658 = vshll.u32 %v1395, 16
      %v1660 = vrot.slane %v1658, 1
      %v1661 = vsel %vm588, %v1656, %v1660
      %v1662 = vshrl.u32 %v1395, 16
      %v1664 = vor.u32 %v1662, %v1660
      %v1666 = vshll.u32 %v1482, 16
      %v1668 = vrot.slane %v1666, 1
      %v1669 = vsel %vm588, %v1664, %v1668
      %v1671 = vshrl.u32 %v1396, 16
      %v1673 = vshll.u32 %v1396, 16
      %v1675 = vrot.slane %v1673, 1
      %v1676 = vor.u32 %v1671, %v1675
      %v1678 = vshll.u32 %v1397, 16
      %v1680 = vrot.slane %v1678, 1
      %v1681 = vsel %vm588, %v1676, %v1680
      %v1682 = vshrl.u32 %v1397, 16
      %v1684 = vor.u32 %v1682, %v1680
      %v1686 = vshll.u32 %v1483, 16
      %v1688 = vrot.slane %v1686, 1
      %v1689 = vsel %vm588, %v1684, %v1688
      %v1691 = vshrl.u32 %v1398, 16
      %v1693 = vshll.u32 %v1398, 16
      %v1695 = vrot.slane %v1693, 1
      %v1696 = vor.u32 %v1691, %v1695
      %v1698 = vshll.u32 %v1399, 16
      %v1700 = vrot.slane %v1698, 1
      %v1701 = vsel %vm588, %v1696, %v1700
      %v1702 = vshrl.u32 %v1399, 16
      %v1704 = vor.u32 %v1702, %v1700
      %v1706 = vshll.u32 %v1484, 16
      %v1708 = vrot.slane %v1706, 1
      %v1709 = vsel %vm588, %v1704, %v1708
      %v1711 = vshrl.u32 %v1400, 16
      %v1713 = vshll.u32 %v1400, 16
      %v1715 = vrot.slane %v1713, 1
      %v1716 = vor.u32 %v1711, %v1715
      %v1718 = vshll.u32 %v1401, 16
      %v1720 = vrot.slane %v1718, 1
      %v1721 = vsel %vm588, %v1716, %v1720
      %v1722 = vshrl.u32 %v1401, 16
      %v1724 = vor.u32 %v1722, %v1720
      %v1726 = vshll.u32 %v1485, 16
      %v1728 = vrot.slane %v1726, 1
      %v1729 = vsel %vm588, %v1724, %v1728
      %v1731 = vshrl.u32 %v1402, 16
      %v1733 = vshll.u32 %v1402, 16
      %v1735 = vrot.slane %v1733, 1
      %v1736 = vor.u32 %v1731, %v1735
      %v1738 = vshll.u32 %v1403, 16
      %v1740 = vrot.slane %v1738, 1
      %v1741 = vsel %vm588, %v1736, %v1740
      %v1742 = vshrl.u32 %v1403, 16
      %v1744 = vor.u32 %v1742, %v1740
      %v1746 = vshll.u32 %v1486, 16
      %v1748 = vrot.slane %v1746, 1
      %v1749 = vsel %vm588, %v1744, %v1748
      %v1751 = vshrl.u32 %v1404, 16
      %v1753 = vshll.u32 %v1404, 16
      %v1755 = vrot.slane %v1753, 1
      %v1756 = vor.u32 %v1751, %v1755
      %v1758 = vshll.u32 %v1405, 16
      %v1760 = vrot.slane %v1758, 1
      %v1761 = vsel %vm588, %v1756, %v1760
      %v1762 = vshrl.u32 %v1405, 16
      %v1764 = vor.u32 %v1762, %v1760
      %v1766 = vshll.u32 %v1487, 16
      %v1768 = vrot.slane %v1766, 1
      %v1769 = vsel %vm588, %v1764, %v1768
      %v1771 = vshrl.u32 %v1406, 16
      %v1773 = vshll.u32 %v1406, 16
      %v1775 = vrot.slane %v1773, 1
      %v1776 = vor.u32 %v1771, %v1775
      %v1778 = vshll.u32 %v1407, 16
      %v1780 = vrot.slane %v1778, 1
      %v1781 = vsel %vm588, %v1776, %v1780
      %v1782 = vshrl.u32 %v1407, 16
      %v1784 = vor.u32 %v1782, %v1780
      %v1786 = vshll.u32 %v1488, 16
      %v1788 = vrot.slane %v1786, 1
      %v1789 = vsel %vm588, %v1784, %v1788
      %v1791 = vshrl.u32 %v1408, 16
      %v1793 = vshll.u32 %v1408, 16
      %v1795 = vrot.slane %v1793, 1
      %v1796 = vor.u32 %v1791, %v1795
      %v1798 = vshll.u32 %v1409, 16
      %v1800 = vrot.slane %v1798, 1
      %v1801 = vsel %vm588, %v1796, %v1800
      %v1802 = vshrl.u32 %v1409, 16
      %v1804 = vor.u32 %v1802, %v1800
      %v1806 = vshll.u32 %v1489, 16
      %v1808 = vrot.slane %v1806, 1
      %v1809 = vsel %vm588, %v1804, %v1808
      %v1858 = vunpack.c.l.b16 %v1234
      %v1859 = vunpack.c.l.b16 %v1235
      %v1860 = vunpack.c.l.b16 %v1236
      %v1861 = vunpack.c.l.b16 %v1237
      %v1862 = vunpack.c.l.b16 %v1238
      %v1863 = vunpack.c.l.b16 %v1239
      %v1864 = vunpack.c.l.b16 %v1240
      %v1865 = vunpack.c.l.b16 %v1241
      %v1866 = vunpack.c.l.b16 %v1242
      %v1867 = vunpack.c.l.b16 %v1243
      %v1868 = vunpack.c.l.b16 %v1244
      %v1869 = vunpack.c.l.b16 %v1245
      %v1870 = vunpack.c.l.b16 %v1246
      %v1871 = vunpack.c.l.b16 %v1247
      %v1872 = vunpack.c.l.b16 %v1248
      %v1873 = vunpack.c.l.b16 %v1249
      %v1874 = vpack.c.b16 %v1315, %v1858
      %v1875 = vpack.c.b16 %v1319, %v1859
      %v1876 = vpack.c.b16 %v1323, %v1860
      %v1877 = vpack.c.b16 %v1327, %v1861
      %v1878 = vpack.c.b16 %v1331, %v1862
      %v1879 = vpack.c.b16 %v1335, %v1863
      %v1880 = vpack.c.b16 %v1339, %v1864
      %v1881 = vpack.c.b16 %v1343, %v1865
      %v1882 = vpack.c.b16 %v1347, %v1866
      %v1883 = vpack.c.b16 %v1351, %v1867
      %v1884 = vpack.c.b16 %v1355, %v1868
      %v1885 = vpack.c.b16 %v1359, %v1869
      %v1886 = vpack.c.b16 %v1363, %v1870
      %v1887 = vpack.c.b16 %v1367, %v1871
      %v1888 = vpack.c.b16 %v1371, %v1872
      %v1889 = vpack.c.b16 %v1375, %v1873
      %v1890 = vrot.slane %v1874, 1
      %v1891 = vrot.slane %v1379, 1
      %v1892 = vsel %vm989, %v1890, %v1891
      %v1893 = vrot.slane %v1474, 1
      %v1894 = vsel %vm989, %v1891, %v1893
      %v1895 = vrot.slane %v1875, 1
      %v1896 = vrot.slane %v1381, 1
      %v1897 = vsel %vm989, %v1895, %v1896
      %v1898 = vrot.slane %v1475, 1
      %v1899 = vsel %vm989, %v1896, %v1898
      %v1900 = vrot.slane %v1876, 1
      %v1901 = vrot.slane %v1383, 1
      %v1902 = vsel %vm989, %v1900, %v1901
      %v1903 = vrot.slane %v1476, 1
      %v1904 = vsel %vm989, %v1901, %v1903
      %v1905 = vrot.slane %v1877, 1
      %v1906 = vrot.slane %v1385, 1
      %v1907 = vsel %vm989, %v1905, %v1906
      %v1908 = vrot.slane %v1477, 1
      %v1909 = vsel %vm989, %v1906, %v1908
      %v1910 = vrot.slane %v1878, 1
      %v1911 = vrot.slane %v1387, 1
      %v1912 = vsel %vm989, %v1910, %v1911
      %v1913 = vrot.slane %v1478, 1
      %v1914 = vsel %vm989, %v1911, %v1913
      %v1915 = vrot.slane %v1879, 1
      %v1916 = vrot.slane %v1389, 1
      %v1917 = vsel %vm989, %v1915, %v1916
      %v1918 = vrot.slane %v1479, 1
      %v1919 = vsel %vm989, %v1916, %v1918
      %v1920 = vrot.slane %v1880, 1
      %v1921 = vrot.slane %v1391, 1
      %v1922 = vsel %vm989, %v1920, %v1921
      %v1923 = vrot.slane %v1480, 1
      %v1924 = vsel %vm989, %v1921, %v1923
      %v1925 = vrot.slane %v1881, 1
      %v1926 = vrot.slane %v1393, 1
      %v1927 = vsel %vm989, %v1925, %v1926
      %v1928 = vrot.slane %v1481, 1
      %v1929 = vsel %vm989, %v1926, %v1928
      %v1930 = vrot.slane %v1882, 1
      %v1931 = vrot.slane %v1395, 1
      %v1932 = vsel %vm989, %v1930, %v1931
      %v1933 = vrot.slane %v1482, 1
      %v1934 = vsel %vm989, %v1931, %v1933
      %v1935 = vrot.slane %v1883, 1
      %v1936 = vrot.slane %v1397, 1
      %v1937 = vsel %vm989, %v1935, %v1936
      %v1938 = vrot.slane %v1483, 1
      %v1939 = vsel %vm989, %v1936, %v1938
      %v1940 = vrot.slane %v1884, 1
      %v1941 = vrot.slane %v1399, 1
      %v1942 = vsel %vm989, %v1940, %v1941
      %v1943 = vrot.slane %v1484, 1
      %v1944 = vsel %vm989, %v1941, %v1943
      %v1945 = vrot.slane %v1885, 1
      %v1946 = vrot.slane %v1401, 1
      %v1947 = vsel %vm989, %v1945, %v1946
      %v1948 = vrot.slane %v1485, 1
      %v1949 = vsel %vm989, %v1946, %v1948
      %v1950 = vrot.slane %v1886, 1
      %v1951 = vrot.slane %v1403, 1
      %v1952 = vsel %vm989, %v1950, %v1951
      %v1953 = vrot.slane %v1486, 1
      %v1954 = vsel %vm989, %v1951, %v1953
      %v1955 = vrot.slane %v1887, 1
      %v1956 = vrot.slane %v1405, 1
      %v1957 = vsel %vm989, %v1955, %v1956
      %v1958 = vrot.slane %v1487, 1
      %v1959 = vsel %vm989, %v1956, %v1958
      %v1960 = vrot.slane %v1888, 1
      %v1961 = vrot.slane %v1407, 1
      %v1962 = vsel %vm989, %v1960, %v1961
      %v1963 = vrot.slane %v1488, 1
      %v1964 = vsel %vm989, %v1961, %v1963
      %v1965 = vrot.slane %v1889, 1
      %v1966 = vrot.slane %v1409, 1
      %v1967 = vsel %vm989, %v1965, %v1966
      %v1968 = vrot.slane %v1489, 1
      %v1969 = vsel %vm989, %v1966, %v1968
      %s2002 = scalar_lea.vmem %s1, 384
      %v2003 = vld [vmem:[%s2002] sm:$0xff]
      %v2004 = vld [vmem:[%s2002 + $0x8] sm:$0xff]
      %v2005 = vld [vmem:[%s2002 + $0x10] sm:$0xff]
      %v2006 = vld [vmem:[%s2002 + $0x18] sm:$0xff]
      %v2007 = vld [vmem:[%s2002 + $0x20] sm:$0xff]
      %v2008 = vld [vmem:[%s2002 + $0x28] sm:$0xff]
      %v2009 = vld [vmem:[%s2002 + $0x30] sm:$0xff]
      %v2010 = vld [vmem:[%s2002 + $0x38] sm:$0xff]
      %v2011 = vld [vmem:[%s2002 + $0x40] sm:$0xff]
      %v2012 = vld [vmem:[%s2002 + $0x48] sm:$0xff]
      %v2013 = vld [vmem:[%s2002 + $0x50] sm:$0xff]
      %v2014 = vld [vmem:[%s2002 + $0x58] sm:$0xff]
      %v2015 = vld [vmem:[%s2002 + $0x60] sm:$0xff]
      %v2016 = vld [vmem:[%s2002 + $0x68] sm:$0xff]
      %v2017 = vld [vmem:[%s2002 + $0x70] sm:$0xff]
      %v2018 = vld [vmem:[%s2002 + $0x78] sm:$0xff]
      %v2019 = vld [vmem:[%s2002 + $0x80] sm:$0xff]
      %v2020 = vld [vmem:[%s2002 + $0x88] sm:$0xff]
      %v2021 = vld [vmem:[%s2002 + $0x90] sm:$0xff]
      %v2022 = vld [vmem:[%s2002 + $0x98] sm:$0xff]
      %v2023 = vld [vmem:[%s2002 + $0xa0] sm:$0xff]
      %v2024 = vld [vmem:[%s2002 + $0xa8] sm:$0xff]
      %v2025 = vld [vmem:[%s2002 + $0xb0] sm:$0xff]
      %v2026 = vld [vmem:[%s2002 + $0xb8] sm:$0xff]
      %v2027 = vld [vmem:[%s2002 + $0xc0] sm:$0xff]
      %v2028 = vld [vmem:[%s2002 + $0xc8] sm:$0xff]
      %v2029 = vld [vmem:[%s2002 + $0xd0] sm:$0xff]
      %v2030 = vld [vmem:[%s2002 + $0xd8] sm:$0xff]
      %v2031 = vld [vmem:[%s2002 + $0xe0] sm:$0xff]
      %v2032 = vld [vmem:[%s2002 + $0xe8] sm:$0xff]
      %v2033 = vld [vmem:[%s2002 + $0xf0] sm:$0xff]
      %v2034 = vld [vmem:[%s2002 + $0xf8] sm:$0xff]
      %v2035 = vld [vmem:[%s2002 + $0x100] sm:$0xff]
      %v2036 = vld [vmem:[%s2002 + $0x108] sm:$0xff]
      %v2037 = vld [vmem:[%s2002 + $0x110] sm:$0xff]
      %v2038 = vld [vmem:[%s2002 + $0x118] sm:$0xff]
      %v2039 = vld [vmem:[%s2002 + $0x120] sm:$0xff]
      %v2040 = vld [vmem:[%s2002 + $0x128] sm:$0xff]
      %v2041 = vld [vmem:[%s2002 + $0x130] sm:$0xff]
      %v2042 = vld [vmem:[%s2002 + $0x138] sm:$0xff]
      %v2043 = vld [vmem:[%s2002 + $0x140] sm:$0xff]
      %v2044 = vld [vmem:[%s2002 + $0x148] sm:$0xff]
      %v2045 = vld [vmem:[%s2002 + $0x150] sm:$0xff]
      %v2046 = vld [vmem:[%s2002 + $0x158] sm:$0xff]
      %v2047 = vld [vmem:[%s2002 + $0x160] sm:$0xff]
      %v2048 = vld [vmem:[%s2002 + $0x168] sm:$0xff]
      %v2049 = vld [vmem:[%s2002 + $0x170] sm:$0xff]
      %v2050 = vld [vmem:[%s2002 + $0x178] sm:$0xff]
      %v2099 = vunpack.c.l.b16 %v2003
      %v2100 = vunpack.c.h.b16 %v2003
      %v2101 = vunpack.c.l.b16 %v2004
      %v2102 = vunpack.c.h.b16 %v2004
      %v2103 = vunpack.c.l.b16 %v2005
      %v2104 = vunpack.c.h.b16 %v2005
      %v2105 = vunpack.c.l.b16 %v2006
      %v2106 = vunpack.c.h.b16 %v2006
      %v2107 = vunpack.c.l.b16 %v2007
      %v2108 = vunpack.c.h.b16 %v2007
      %v2109 = vunpack.c.l.b16 %v2008
      %v2110 = vunpack.c.h.b16 %v2008
      %v2111 = vunpack.c.l.b16 %v2009
      %v2112 = vunpack.c.h.b16 %v2009
      %v2113 = vunpack.c.l.b16 %v2010
      %v2114 = vunpack.c.h.b16 %v2010
      %v2115 = vunpack.c.l.b16 %v2011
      %v2116 = vunpack.c.h.b16 %v2011
      %v2117 = vunpack.c.l.b16 %v2012
      %v2118 = vunpack.c.h.b16 %v2012
      %v2119 = vunpack.c.l.b16 %v2013
      %v2120 = vunpack.c.h.b16 %v2013
      %v2121 = vunpack.c.l.b16 %v2014
      %v2122 = vunpack.c.h.b16 %v2014
      %v2123 = vunpack.c.l.b16 %v2015
      %v2124 = vunpack.c.h.b16 %v2015
      %v2125 = vunpack.c.l.b16 %v2016
      %v2126 = vunpack.c.h.b16 %v2016
      %v2127 = vunpack.c.l.b16 %v2017
      %v2128 = vunpack.c.h.b16 %v2017
      %v2129 = vunpack.c.l.b16 %v2018
      %v2130 = vunpack.c.h.b16 %v2018
      %v2131 = vunpack.c.l.b16 %v2019
      %v2132 = vunpack.c.h.b16 %v2019
      %v2133 = vunpack.c.l.b16 %v2020
      %v2134 = vunpack.c.h.b16 %v2020
      %v2135 = vunpack.c.l.b16 %v2021
      %v2136 = vunpack.c.h.b16 %v2021
      %v2137 = vunpack.c.l.b16 %v2022
      %v2138 = vunpack.c.h.b16 %v2022
      %v2139 = vunpack.c.l.b16 %v2023
      %v2140 = vunpack.c.h.b16 %v2023
      %v2141 = vunpack.c.l.b16 %v2024
      %v2142 = vunpack.c.h.b16 %v2024
      %v2143 = vunpack.c.l.b16 %v2025
      %v2144 = vunpack.c.h.b16 %v2025
      %v2145 = vunpack.c.l.b16 %v2026
      %v2146 = vunpack.c.h.b16 %v2026
      %v2147 = vunpack.c.l.b16 %v2027
      %v2148 = vunpack.c.h.b16 %v2027
      %v2149 = vunpack.c.l.b16 %v2028
      %v2150 = vunpack.c.h.b16 %v2028
      %v2151 = vunpack.c.l.b16 %v2029
      %v2152 = vunpack.c.h.b16 %v2029
      %v2153 = vunpack.c.l.b16 %v2030
      %v2154 = vunpack.c.h.b16 %v2030
      %v2155 = vunpack.c.l.b16 %v2031
      %v2156 = vunpack.c.h.b16 %v2031
      %v2157 = vunpack.c.l.b16 %v2032
      %v2158 = vunpack.c.h.b16 %v2032
      %v2159 = vunpack.c.l.b16 %v2033
      %v2160 = vunpack.c.h.b16 %v2033
      %v2161 = vunpack.c.l.b16 %v2034
      %v2162 = vunpack.c.h.b16 %v2034
      %v2163 = vunpack.c.l.b16 %v2035
      %v2164 = vunpack.c.h.b16 %v2035
      %v2165 = vunpack.c.l.b16 %v2036
      %v2166 = vunpack.c.h.b16 %v2036
      %v2167 = vunpack.c.l.b16 %v2037
      %v2168 = vunpack.c.h.b16 %v2037
      %v2169 = vunpack.c.l.b16 %v2038
      %v2170 = vunpack.c.h.b16 %v2038
      %v2171 = vunpack.c.l.b16 %v2039
      %v2172 = vunpack.c.h.b16 %v2039
      %v2173 = vunpack.c.l.b16 %v2040
      %v2174 = vunpack.c.h.b16 %v2040
      %v2175 = vunpack.c.l.b16 %v2041
      %v2176 = vunpack.c.h.b16 %v2041
      %v2177 = vunpack.c.l.b16 %v2042
      %v2178 = vunpack.c.h.b16 %v2042
      %v2179 = vunpack.c.l.b16 %v2043
      %v2180 = vunpack.c.h.b16 %v2043
      %v2181 = vunpack.c.l.b16 %v2044
      %v2182 = vunpack.c.h.b16 %v2044
      %v2183 = vunpack.c.l.b16 %v2045
      %v2184 = vunpack.c.h.b16 %v2045
      %v2185 = vunpack.c.l.b16 %v2046
      %v2186 = vunpack.c.h.b16 %v2046
      %v2187 = vunpack.c.l.b16 %v2047
      %v2188 = vunpack.c.h.b16 %v2047
      %v2189 = vunpack.c.l.b16 %v2048
      %v2190 = vunpack.c.h.b16 %v2048
      %v2191 = vunpack.c.l.b16 %v2049
      %v2192 = vunpack.c.h.b16 %v2049
      %v2193 = vunpack.c.l.b16 %v2050
      %v2194 = vunpack.c.h.b16 %v2050
      %v2195 = vpack.c.b16 %v2101, %v2099
      %v2196 = vpack.c.b16 %v2102, %v2100
      %v2197 = vpack.c.b16 %v2105, %v2103
      %v2198 = vpack.c.b16 %v2106, %v2104
      %v2199 = vpack.c.b16 %v2109, %v2107
      %v2200 = vpack.c.b16 %v2110, %v2108
      %v2201 = vpack.c.b16 %v2113, %v2111
      %v2202 = vpack.c.b16 %v2114, %v2112
      %v2203 = vpack.c.b16 %v2117, %v2115
      %v2204 = vpack.c.b16 %v2118, %v2116
      %v2205 = vpack.c.b16 %v2121, %v2119
      %v2206 = vpack.c.b16 %v2122, %v2120
      %v2207 = vpack.c.b16 %v2125, %v2123
      %v2208 = vpack.c.b16 %v2126, %v2124
      %v2209 = vpack.c.b16 %v2129, %v2127
      %v2210 = vpack.c.b16 %v2130, %v2128
      %v2211 = vpack.c.b16 %v2133, %v2131
      %v2212 = vpack.c.b16 %v2134, %v2132
      %v2213 = vpack.c.b16 %v2137, %v2135
      %v2214 = vpack.c.b16 %v2138, %v2136
      %v2215 = vpack.c.b16 %v2141, %v2139
      %v2216 = vpack.c.b16 %v2142, %v2140
      %v2217 = vpack.c.b16 %v2145, %v2143
      %v2218 = vpack.c.b16 %v2146, %v2144
      %v2219 = vpack.c.b16 %v2149, %v2147
      %v2220 = vpack.c.b16 %v2150, %v2148
      %v2221 = vpack.c.b16 %v2153, %v2151
      %v2222 = vpack.c.b16 %v2154, %v2152
      %v2223 = vpack.c.b16 %v2157, %v2155
      %v2224 = vpack.c.b16 %v2158, %v2156
      %v2225 = vpack.c.b16 %v2161, %v2159
      %v2226 = vpack.c.b16 %v2162, %v2160
      %v2227 = vpack.c.b16 %v2165, %v2163
      %v2228 = vpack.c.b16 %v2166, %v2164
      %v2229 = vpack.c.b16 %v2169, %v2167
      %v2230 = vpack.c.b16 %v2170, %v2168
      %v2231 = vpack.c.b16 %v2173, %v2171
      %v2232 = vpack.c.b16 %v2174, %v2172
      %v2233 = vpack.c.b16 %v2177, %v2175
      %v2234 = vpack.c.b16 %v2178, %v2176
      %v2235 = vpack.c.b16 %v2181, %v2179
      %v2236 = vpack.c.b16 %v2182, %v2180
      %v2237 = vpack.c.b16 %v2185, %v2183
      %v2238 = vpack.c.b16 %v2186, %v2184
      %v2239 = vpack.c.b16 %v2189, %v2187
      %v2240 = vpack.c.b16 %v2190, %v2188
      %v2241 = vpack.c.b16 %v2193, %v2191
      %v2242 = vpack.c.b16 %v2194, %v2192
      %2291 = vmatpush.bf16.msra.mxu0 %v2209
      %2292 = vmatpush.bf16.msra.mxu0 %v2207
      %2293 = vmatpush.bf16.msra.mxu0 %v2205
      %2294 = vmatpush.bf16.msra.mxu0 %v2203
      %2295 = vmatpush.bf16.msra.mxu0 %v2201
      %2296 = vmatpush.bf16.msra.mxu0 %v2199
      %2297 = vmatpush.bf16.msra.mxu0 %v2197
      %2298 = vmatpush.bf16.msra.mxu0 %v2195
      %2299 = vmatmul.bf16.gmra.mxu0 %v1378
      %v2300 = vpop.f32.mrf.mxu0
      %v2301 = vadd.f32 0.0, %v2300
      %v2302 = vpop.f32.mrf.mxu0
      %v2303 = vadd.f32 0.0, %v2302
      %2304 = vmatmul.bf16.gmra.mxu0 %v1379
      %v2305 = vpop.f32.mrf.mxu0
      %v2306 = vadd.f32 0.0, %v2305
      %v2307 = vpop.f32.mrf.mxu0
      %v2308 = vadd.f32 0.0, %v2307
      %2309 = vmatmul.bf16.gmra.mxu0 %v1380
      %v2310 = vpop.f32.mrf.mxu0
      %v2311 = vadd.f32 0.0, %v2310
      %v2312 = vpop.f32.mrf.mxu0
      %v2313 = vadd.f32 0.0, %v2312
      %2314 = vmatmul.bf16.gmra.mxu0 %v1381
      %v2315 = vpop.f32.mrf.mxu0
      %v2316 = vadd.f32 0.0, %v2315
      %v2317 = vpop.f32.mrf.mxu0
      %v2318 = vadd.f32 0.0, %v2317
      %2319 = vmatmul.bf16.gmra.mxu0 %v1382
      %v2320 = vpop.f32.mrf.mxu0
      %v2321 = vadd.f32 0.0, %v2320
      %v2322 = vpop.f32.mrf.mxu0
      %v2323 = vadd.f32 0.0, %v2322
      %2324 = vmatmul.bf16.gmra.mxu0 %v1383
      %v2325 = vpop.f32.mrf.mxu0
      %v2326 = vadd.f32 0.0, %v2325
      %v2327 = vpop.f32.mrf.mxu0
      %v2328 = vadd.f32 0.0, %v2327
      %2329 = vmatmul.bf16.gmra.mxu0 %v1384
      %v2330 = vpop.f32.mrf.mxu0
      %v2331 = vadd.f32 0.0, %v2330
      %v2332 = vpop.f32.mrf.mxu0
      %v2333 = vadd.f32 0.0, %v2332
      %2334 = vmatmul.bf16.gmra.mxu0 %v1385
      %v2335 = vpop.f32.mrf.mxu0
      %v2336 = vadd.f32 0.0, %v2335
      %v2337 = vpop.f32.mrf.mxu0
      %v2338 = vadd.f32 0.0, %v2337
      %2339 = vmatmul.bf16.gmra.mxu0 %v1386
      %v2340 = vpop.f32.mrf.mxu0
      %v2341 = vadd.f32 0.0, %v2340
      %v2342 = vpop.f32.mrf.mxu0
      %v2343 = vadd.f32 0.0, %v2342
      %2344 = vmatmul.bf16.gmra.mxu0 %v1387
      %v2345 = vpop.f32.mrf.mxu0
      %v2346 = vadd.f32 0.0, %v2345
      %v2347 = vpop.f32.mrf.mxu0
      %v2348 = vadd.f32 0.0, %v2347
      %2349 = vmatmul.bf16.gmra.mxu0 %v1388
      %v2350 = vpop.f32.mrf.mxu0
      %v2351 = vadd.f32 0.0, %v2350
      %v2352 = vpop.f32.mrf.mxu0
      %v2353 = vadd.f32 0.0, %v2352
      %2354 = vmatmul.bf16.gmra.mxu0 %v1389
      %v2355 = vpop.f32.mrf.mxu0
      %v2356 = vadd.f32 0.0, %v2355
      %v2357 = vpop.f32.mrf.mxu0
      %v2358 = vadd.f32 0.0, %v2357
      %2359 = vmatmul.bf16.gmra.mxu0 %v1390
      %v2360 = vpop.f32.mrf.mxu0
      %v2361 = vadd.f32 0.0, %v2360
      %v2362 = vpop.f32.mrf.mxu0
      %v2363 = vadd.f32 0.0, %v2362
      %2364 = vmatmul.bf16.gmra.mxu0 %v1391
      %v2365 = vpop.f32.mrf.mxu0
      %v2366 = vadd.f32 0.0, %v2365
      %v2367 = vpop.f32.mrf.mxu0
      %v2368 = vadd.f32 0.0, %v2367
      %2369 = vmatmul.bf16.gmra.mxu0 %v1392
      %v2370 = vpop.f32.mrf.mxu0
      %v2371 = vadd.f32 0.0, %v2370
      %v2372 = vpop.f32.mrf.mxu0
      %v2373 = vadd.f32 0.0, %v2372
      %2374 = vmatmul.bf16.gmra.mxu0 %v1393
      %v2375 = vpop.f32.mrf.mxu0
      %v2376 = vadd.f32 0.0, %v2375
      %v2377 = vpop.f32.mrf.mxu0
      %v2378 = vadd.f32 0.0, %v2377
      %2379 = vmatmul.bf16.gmra.mxu0 %v1394
      %v2380 = vpop.f32.mrf.mxu0
      %v2381 = vadd.f32 0.0, %v2380
      %v2382 = vpop.f32.mrf.mxu0
      %v2383 = vadd.f32 0.0, %v2382
      %2384 = vmatmul.bf16.gmra.mxu0 %v1395
      %v2385 = vpop.f32.mrf.mxu0
      %v2386 = vadd.f32 0.0, %v2385
      %v2387 = vpop.f32.mrf.mxu0
      %v2388 = vadd.f32 0.0, %v2387
      %2389 = vmatmul.bf16.gmra.mxu0 %v1396
      %v2390 = vpop.f32.mrf.mxu0
      %v2391 = vadd.f32 0.0, %v2390
      %v2392 = vpop.f32.mrf.mxu0
      %v2393 = vadd.f32 0.0, %v2392
      %2394 = vmatmul.bf16.gmra.mxu0 %v1397
      %v2395 = vpop.f32.mrf.mxu0
      %v2396 = vadd.f32 0.0, %v2395
      %v2397 = vpop.f32.mrf.mxu0
      %v2398 = vadd.f32 0.0, %v2397
      %2399 = vmatmul.bf16.gmra.mxu0 %v1398
      %v2400 = vpop.f32.mrf.mxu0
      %v2401 = vadd.f32 0.0, %v2400
      %v2402 = vpop.f32.mrf.mxu0
      %v2403 = vadd.f32 0.0, %v2402
      %2404 = vmatmul.bf16.gmra.mxu0 %v1399
      %v2405 = vpop.f32.mrf.mxu0
      %v2406 = vadd.f32 0.0, %v2405
      %v2407 = vpop.f32.mrf.mxu0
      %v2408 = vadd.f32 0.0, %v2407
      %2409 = vmatmul.bf16.gmra.mxu0 %v1400
      %v2410 = vpop.f32.mrf.mxu0
      %v2411 = vadd.f32 0.0, %v2410
      %v2412 = vpop.f32.mrf.mxu0
      %v2413 = vadd.f32 0.0, %v2412
      %2414 = vmatmul.bf16.gmra.mxu0 %v1401
      %v2415 = vpop.f32.mrf.mxu0
      %v2416 = vadd.f32 0.0, %v2415
      %v2417 = vpop.f32.mrf.mxu0
      %v2418 = vadd.f32 0.0, %v2417
      %2419 = vmatmul.bf16.gmra.mxu0 %v1402
      %v2420 = vpop.f32.mrf.mxu0
      %v2421 = vadd.f32 0.0, %v2420
      %v2422 = vpop.f32.mrf.mxu0
      %v2423 = vadd.f32 0.0, %v2422
      %2424 = vmatmul.bf16.gmra.mxu0 %v1403
      %v2425 = vpop.f32.mrf.mxu0
      %v2426 = vadd.f32 0.0, %v2425
      %v2427 = vpop.f32.mrf.mxu0
      %v2428 = vadd.f32 0.0, %v2427
      %2429 = vmatmul.bf16.gmra.mxu0 %v1404
      %v2430 = vpop.f32.mrf.mxu0
      %v2431 = vadd.f32 0.0, %v2430
      %v2432 = vpop.f32.mrf.mxu0
      %v2433 = vadd.f32 0.0, %v2432
      %2434 = vmatmul.bf16.gmra.mxu0 %v1405
      %v2435 = vpop.f32.mrf.mxu0
      %v2436 = vadd.f32 0.0, %v2435
      %v2437 = vpop.f32.mrf.mxu0
      %v2438 = vadd.f32 0.0, %v2437
      %2439 = vmatmul.bf16.gmra.mxu0 %v1406
      %v2440 = vpop.f32.mrf.mxu0
      %v2441 = vadd.f32 0.0, %v2440
      %v2442 = vpop.f32.mrf.mxu0
      %v2443 = vadd.f32 0.0, %v2442
      %2444 = vmatmul.bf16.gmra.mxu0 %v1407
      %v2445 = vpop.f32.mrf.mxu0
      %v2446 = vadd.f32 0.0, %v2445
      %v2447 = vpop.f32.mrf.mxu0
      %v2448 = vadd.f32 0.0, %v2447
      %2449 = vmatmul.bf16.gmra.mxu0 %v1408
      %v2450 = vpop.f32.mrf.mxu0
      %v2451 = vadd.f32 0.0, %v2450
      %v2452 = vpop.f32.mrf.mxu0
      %v2453 = vadd.f32 0.0, %v2452
      %2454 = vmatmul.bf16.gmra.mxu0 %v1409
      %v2455 = vpop.f32.mrf.mxu0
      %v2456 = vadd.f32 0.0, %v2455
      %v2457 = vpop.f32.mrf.mxu0
      %v2458 = vadd.f32 0.0, %v2457
      %2459 = vdwg.mxu0
      %2460 = vmatpush.bf16.msra.mxu0 %v2225
      %2461 = vmatpush.bf16.msra.mxu0 %v2223
      %2462 = vmatpush.bf16.msra.mxu0 %v2221
      %2463 = vmatpush.bf16.msra.mxu0 %v2219
      %2464 = vmatpush.bf16.msra.mxu0 %v2217
      %2465 = vmatpush.bf16.msra.mxu0 %v2215
      %2466 = vmatpush.bf16.msra.mxu0 %v2213
      %2467 = vmatpush.bf16.msra.mxu0 %v2211
      %2468 = vmatmul.bf16.gmra.mxu0 %v1501
      %v2469 = vpop.f32.mrf.mxu0
      %v2470 = vadd.f32 %v2301, %v2469
      %v2471 = vpop.f32.mrf.mxu0
      %v2472 = vadd.f32 %v2303, %v2471
      %2473 = vmatmul.bf16.gmra.mxu0 %v1509
      %v2474 = vpop.f32.mrf.mxu0
      %v2475 = vadd.f32 %v2306, %v2474
      %v2476 = vpop.f32.mrf.mxu0
      %v2477 = vadd.f32 %v2308, %v2476
      %2478 = vmatmul.bf16.gmra.mxu0 %v1521
      %v2479 = vpop.f32.mrf.mxu0
      %v2480 = vadd.f32 %v2311, %v2479
      %v2481 = vpop.f32.mrf.mxu0
      %v2482 = vadd.f32 %v2313, %v2481
      %2483 = vmatmul.bf16.gmra.mxu0 %v1529
      %v2484 = vpop.f32.mrf.mxu0
      %v2485 = vadd.f32 %v2316, %v2484
      %v2486 = vpop.f32.mrf.mxu0
      %v2487 = vadd.f32 %v2318, %v2486
      %2488 = vmatmul.bf16.gmra.mxu0 %v1541
      %v2489 = vpop.f32.mrf.mxu0
      %v2490 = vadd.f32 %v2321, %v2489
      %v2491 = vpop.f32.mrf.mxu0
      %v2492 = vadd.f32 %v2323, %v2491
      %2493 = vmatmul.bf16.gmra.mxu0 %v1549
      %v2494 = vpop.f32.mrf.mxu0
      %v2495 = vadd.f32 %v2326, %v2494
      %v2496 = vpop.f32.mrf.mxu0
      %v2497 = vadd.f32 %v2328, %v2496
      %2498 = vmatmul.bf16.gmra.mxu0 %v1561
      %v2499 = vpop.f32.mrf.mxu0
      %v2500 = vadd.f32 %v2331, %v2499
      %v2501 = vpop.f32.mrf.mxu0
      %v2502 = vadd.f32 %v2333, %v2501
      %2503 = vmatmul.bf16.gmra.mxu0 %v1569
      %v2504 = vpop.f32.mrf.mxu0
      %v2505 = vadd.f32 %v2336, %v2504
      %v2506 = vpop.f32.mrf.mxu0
      %v2507 = vadd.f32 %v2338, %v2506
      %2508 = vmatmul.bf16.gmra.mxu0 %v1581
      %v2509 = vpop.f32.mrf.mxu0
      %v2510 = vadd.f32 %v2341, %v2509
      %v2511 = vpop.f32.mrf.mxu0
      %v2512 = vadd.f32 %v2343, %v2511
      %2513 = vmatmul.bf16.gmra.mxu0 %v1589
      %v2514 = vpop.f32.mrf.mxu0
      %v2515 = vadd.f32 %v2346, %v2514
      %v2516 = vpop.f32.mrf.mxu0
      %v2517 = vadd.f32 %v2348, %v2516
      %2518 = vmatmul.bf16.gmra.mxu0 %v1601
      %v2519 = vpop.f32.mrf.mxu0
      %v2520 = vadd.f32 %v2351, %v2519
      %v2521 = vpop.f32.mrf.mxu0
      %v2522 = vadd.f32 %v2353, %v2521
      %2523 = vmatmul.bf16.gmra.mxu0 %v1609
      %v2524 = vpop.f32.mrf.mxu0
      %v2525 = vadd.f32 %v2356, %v2524
      %v2526 = vpop.f32.mrf.mxu0
      %v2527 = vadd.f32 %v2358, %v2526
      %2528 = vmatmul.bf16.gmra.mxu0 %v1621
      %v2529 = vpop.f32.mrf.mxu0
      %v2530 = vadd.f32 %v2361, %v2529
      %v2531 = vpop.f32.mrf.mxu0
      %v2532 = vadd.f32 %v2363, %v2531
      %2533 = vmatmul.bf16.gmra.mxu0 %v1629
      %v2534 = vpop.f32.mrf.mxu0
      %v2535 = vadd.f32 %v2366, %v2534
      %v2536 = vpop.f32.mrf.mxu0
      %v2537 = vadd.f32 %v2368, %v2536
      %2538 = vmatmul.bf16.gmra.mxu0 %v1641
      %v2539 = vpop.f32.mrf.mxu0
      %v2540 = vadd.f32 %v2371, %v2539
      %v2541 = vpop.f32.mrf.mxu0
      %v2542 = vadd.f32 %v2373, %v2541
      %2543 = vmatmul.bf16.gmra.mxu0 %v1649
      %v2544 = vpop.f32.mrf.mxu0
      %v2545 = vadd.f32 %v2376, %v2544
      %v2546 = vpop.f32.mrf.mxu0
      %v2547 = vadd.f32 %v2378, %v2546
      %2548 = vmatmul.bf16.gmra.mxu0 %v1661
      %v2549 = vpop.f32.mrf.mxu0
      %v2550 = vadd.f32 %v2381, %v2549
      %v2551 = vpop.f32.mrf.mxu0
      %v2552 = vadd.f32 %v2383, %v2551
      %2553 = vmatmul.bf16.gmra.mxu0 %v1669
      %v2554 = vpop.f32.mrf.mxu0
      %v2555 = vadd.f32 %v2386, %v2554
      %v2556 = vpop.f32.mrf.mxu0
      %v2557 = vadd.f32 %v2388, %v2556
      %2558 = vmatmul.bf16.gmra.mxu0 %v1681
      %v2559 = vpop.f32.mrf.mxu0
      %v2560 = vadd.f32 %v2391, %v2559
      %v2561 = vpop.f32.mrf.mxu0
      %v2562 = vadd.f32 %v2393, %v2561
      %2563 = vmatmul.bf16.gmra.mxu0 %v1689
      %v2564 = vpop.f32.mrf.mxu0
      %v2565 = vadd.f32 %v2396, %v2564
      %v2566 = vpop.f32.mrf.mxu0
      %v2567 = vadd.f32 %v2398, %v2566
      %2568 = vmatmul.bf16.gmra.mxu0 %v1701
      %v2569 = vpop.f32.mrf.mxu0
      %v2570 = vadd.f32 %v2401, %v2569
      %v2571 = vpop.f32.mrf.mxu0
      %v2572 = vadd.f32 %v2403, %v2571
      %2573 = vmatmul.bf16.gmra.mxu0 %v1709
      %v2574 = vpop.f32.mrf.mxu0
      %v2575 = vadd.f32 %v2406, %v2574
      %v2576 = vpop.f32.mrf.mxu0
      %v2577 = vadd.f32 %v2408, %v2576
      %2578 = vmatmul.bf16.gmra.mxu0 %v1721
      %v2579 = vpop.f32.mrf.mxu0
      %v2580 = vadd.f32 %v2411, %v2579
      %v2581 = vpop.f32.mrf.mxu0
      %v2582 = vadd.f32 %v2413, %v2581
      %2583 = vmatmul.bf16.gmra.mxu0 %v1729
      %v2584 = vpop.f32.mrf.mxu0
      %v2585 = vadd.f32 %v2416, %v2584
      %v2586 = vpop.f32.mrf.mxu0
      %v2587 = vadd.f32 %v2418, %v2586
      %2588 = vmatmul.bf16.gmra.mxu0 %v1741
      %v2589 = vpop.f32.mrf.mxu0
      %v2590 = vadd.f32 %v2421, %v2589
      %v2591 = vpop.f32.mrf.mxu0
      %v2592 = vadd.f32 %v2423, %v2591
      %2593 = vmatmul.bf16.gmra.mxu0 %v1749
      %v2594 = vpop.f32.mrf.mxu0
      %v2595 = vadd.f32 %v2426, %v2594
      %v2596 = vpop.f32.mrf.mxu0
      %v2597 = vadd.f32 %v2428, %v2596
      %2598 = vmatmul.bf16.gmra.mxu0 %v1761
      %v2599 = vpop.f32.mrf.mxu0
      %v2600 = vadd.f32 %v2431, %v2599
      %v2601 = vpop.f32.mrf.mxu0
      %v2602 = vadd.f32 %v2433, %v2601
      %2603 = vmatmul.bf16.gmra.mxu0 %v1769
      %v2604 = vpop.f32.mrf.mxu0
      %v2605 = vadd.f32 %v2436, %v2604
      %v2606 = vpop.f32.mrf.mxu0
      %v2607 = vadd.f32 %v2438, %v2606
      %2608 = vmatmul.bf16.gmra.mxu0 %v1781
      %v2609 = vpop.f32.mrf.mxu0
      %v2610 = vadd.f32 %v2441, %v2609
      %v2611 = vpop.f32.mrf.mxu0
      %v2612 = vadd.f32 %v2443, %v2611
      %2613 = vmatmul.bf16.gmra.mxu0 %v1789
      %v2614 = vpop.f32.mrf.mxu0
      %v2615 = vadd.f32 %v2446, %v2614
      %v2616 = vpop.f32.mrf.mxu0
      %v2617 = vadd.f32 %v2448, %v2616
      %2618 = vmatmul.bf16.gmra.mxu0 %v1801
      %v2619 = vpop.f32.mrf.mxu0
      %v2620 = vadd.f32 %v2451, %v2619
      %v2621 = vpop.f32.mrf.mxu0
      %v2622 = vadd.f32 %v2453, %v2621
      %2623 = vmatmul.bf16.gmra.mxu0 %v1809
      %v2624 = vpop.f32.mrf.mxu0
      %v2625 = vadd.f32 %v2456, %v2624
      %v2626 = vpop.f32.mrf.mxu0
      %v2627 = vadd.f32 %v2458, %v2626
      %2628 = vdwg.mxu0
      %2629 = vmatpush.bf16.msra.mxu0 %v2241
      %2630 = vmatpush.bf16.msra.mxu0 %v2239
      %2631 = vmatpush.bf16.msra.mxu0 %v2237
      %2632 = vmatpush.bf16.msra.mxu0 %v2235
      %2633 = vmatpush.bf16.msra.mxu0 %v2233
      %2634 = vmatpush.bf16.msra.mxu0 %v2231
      %2635 = vmatpush.bf16.msra.mxu0 %v2229
      %2636 = vmatpush.bf16.msra.mxu0 %v2227
      %2637 = vmatmul.bf16.gmra.mxu0 %v1892
      %v2638 = vpop.f32.mrf.mxu0
      %v2639 = vadd.f32 %v2470, %v2638
      %v2640 = vpop.f32.mrf.mxu0
      %v2641 = vadd.f32 %v2472, %v2640
      %2642 = vmatmul.bf16.gmra.mxu0 %v1894
      %v2643 = vpop.f32.mrf.mxu0
      %v2644 = vadd.f32 %v2475, %v2643
      %v2645 = vpop.f32.mrf.mxu0
      %v2646 = vadd.f32 %v2477, %v2645
      %2647 = vmatmul.bf16.gmra.mxu0 %v1897
      %v2648 = vpop.f32.mrf.mxu0
      %v2649 = vadd.f32 %v2480, %v2648
      %v2650 = vpop.f32.mrf.mxu0
      %v2651 = vadd.f32 %v2482, %v2650
      %2652 = vmatmul.bf16.gmra.mxu0 %v1899
      %v2653 = vpop.f32.mrf.mxu0
      %v2654 = vadd.f32 %v2485, %v2653
      %v2655 = vpop.f32.mrf.mxu0
      %v2656 = vadd.f32 %v2487, %v2655
      %2657 = vmatmul.bf16.gmra.mxu0 %v1902
      %v2658 = vpop.f32.mrf.mxu0
      %v2659 = vadd.f32 %v2490, %v2658
      %v2660 = vpop.f32.mrf.mxu0
      %v2661 = vadd.f32 %v2492, %v2660
      %2662 = vmatmul.bf16.gmra.mxu0 %v1904
      %v2663 = vpop.f32.mrf.mxu0
      %v2664 = vadd.f32 %v2495, %v2663
      %v2665 = vpop.f32.mrf.mxu0
      %v2666 = vadd.f32 %v2497, %v2665
      %2667 = vmatmul.bf16.gmra.mxu0 %v1907
      %v2668 = vpop.f32.mrf.mxu0
      %v2669 = vadd.f32 %v2500, %v2668
      %v2670 = vpop.f32.mrf.mxu0
      %v2671 = vadd.f32 %v2502, %v2670
      %2672 = vmatmul.bf16.gmra.mxu0 %v1909
      %v2673 = vpop.f32.mrf.mxu0
      %v2674 = vadd.f32 %v2505, %v2673
      %v2675 = vpop.f32.mrf.mxu0
      %v2676 = vadd.f32 %v2507, %v2675
      %2677 = vmatmul.bf16.gmra.mxu0 %v1912
      %v2678 = vpop.f32.mrf.mxu0
      %v2679 = vadd.f32 %v2510, %v2678
      %v2680 = vpop.f32.mrf.mxu0
      %v2681 = vadd.f32 %v2512, %v2680
      %2682 = vmatmul.bf16.gmra.mxu0 %v1914
      %v2683 = vpop.f32.mrf.mxu0
      %v2684 = vadd.f32 %v2515, %v2683
      %v2685 = vpop.f32.mrf.mxu0
      %v2686 = vadd.f32 %v2517, %v2685
      %2687 = vmatmul.bf16.gmra.mxu0 %v1917
      %v2688 = vpop.f32.mrf.mxu0
      %v2689 = vadd.f32 %v2520, %v2688
      %v2690 = vpop.f32.mrf.mxu0
      %v2691 = vadd.f32 %v2522, %v2690
      %2692 = vmatmul.bf16.gmra.mxu0 %v1919
      %v2693 = vpop.f32.mrf.mxu0
      %v2694 = vadd.f32 %v2525, %v2693
      %v2695 = vpop.f32.mrf.mxu0
      %v2696 = vadd.f32 %v2527, %v2695
      %2697 = vmatmul.bf16.gmra.mxu0 %v1922
      %v2698 = vpop.f32.mrf.mxu0
      %v2699 = vadd.f32 %v2530, %v2698
      %v2700 = vpop.f32.mrf.mxu0
      %v2701 = vadd.f32 %v2532, %v2700
      %2702 = vmatmul.bf16.gmra.mxu0 %v1924
      %v2703 = vpop.f32.mrf.mxu0
      %v2704 = vadd.f32 %v2535, %v2703
      %v2705 = vpop.f32.mrf.mxu0
      %v2706 = vadd.f32 %v2537, %v2705
      %2707 = vmatmul.bf16.gmra.mxu0 %v1927
      %v2708 = vpop.f32.mrf.mxu0
      %v2709 = vadd.f32 %v2540, %v2708
      %v2710 = vpop.f32.mrf.mxu0
      %v2711 = vadd.f32 %v2542, %v2710
      %2712 = vmatmul.bf16.gmra.mxu0 %v1929
      %v2713 = vpop.f32.mrf.mxu0
      %v2714 = vadd.f32 %v2545, %v2713
      %v2715 = vpop.f32.mrf.mxu0
      %v2716 = vadd.f32 %v2547, %v2715
      %2717 = vmatmul.bf16.gmra.mxu0 %v1932
      %v2718 = vpop.f32.mrf.mxu0
      %v2719 = vadd.f32 %v2550, %v2718
      %v2720 = vpop.f32.mrf.mxu0
      %v2721 = vadd.f32 %v2552, %v2720
      %2722 = vmatmul.bf16.gmra.mxu0 %v1934
      %v2723 = vpop.f32.mrf.mxu0
      %v2724 = vadd.f32 %v2555, %v2723
      %v2725 = vpop.f32.mrf.mxu0
      %v2726 = vadd.f32 %v2557, %v2725
      %2727 = vmatmul.bf16.gmra.mxu0 %v1937
      %v2728 = vpop.f32.mrf.mxu0
      %v2729 = vadd.f32 %v2560, %v2728
      %v2730 = vpop.f32.mrf.mxu0
      %v2731 = vadd.f32 %v2562, %v2730
      %2732 = vmatmul.bf16.gmra.mxu0 %v1939
      %v2733 = vpop.f32.mrf.mxu0
      %v2734 = vadd.f32 %v2565, %v2733
      %v2735 = vpop.f32.mrf.mxu0
      %v2736 = vadd.f32 %v2567, %v2735
      %2737 = vmatmul.bf16.gmra.mxu0 %v1942
      %v2738 = vpop.f32.mrf.mxu0
      %v2739 = vadd.f32 %v2570, %v2738
      %v2740 = vpop.f32.mrf.mxu0
      %v2741 = vadd.f32 %v2572, %v2740
      %2742 = vmatmul.bf16.gmra.mxu0 %v1944
      %v2743 = vpop.f32.mrf.mxu0
      %v2744 = vadd.f32 %v2575, %v2743
      %v2745 = vpop.f32.mrf.mxu0
      %v2746 = vadd.f32 %v2577, %v2745
      %2747 = vmatmul.bf16.gmra.mxu0 %v1947
      %v2748 = vpop.f32.mrf.mxu0
      %v2749 = vadd.f32 %v2580, %v2748
      %v2750 = vpop.f32.mrf.mxu0
      %v2751 = vadd.f32 %v2582, %v2750
      %2752 = vmatmul.bf16.gmra.mxu0 %v1949
      %v2753 = vpop.f32.mrf.mxu0
      %v2754 = vadd.f32 %v2585, %v2753
      %v2755 = vpop.f32.mrf.mxu0
      %v2756 = vadd.f32 %v2587, %v2755
      %2757 = vmatmul.bf16.gmra.mxu0 %v1952
      %v2758 = vpop.f32.mrf.mxu0
      %v2759 = vadd.f32 %v2590, %v2758
      %v2760 = vpop.f32.mrf.mxu0
      %v2761 = vadd.f32 %v2592, %v2760
      %2762 = vmatmul.bf16.gmra.mxu0 %v1954
      %v2763 = vpop.f32.mrf.mxu0
      %v2764 = vadd.f32 %v2595, %v2763
      %v2765 = vpop.f32.mrf.mxu0
      %v2766 = vadd.f32 %v2597, %v2765
      %2767 = vmatmul.bf16.gmra.mxu0 %v1957
      %v2768 = vpop.f32.mrf.mxu0
      %v2769 = vadd.f32 %v2600, %v2768
      %v2770 = vpop.f32.mrf.mxu0
      %v2771 = vadd.f32 %v2602, %v2770
      %2772 = vmatmul.bf16.gmra.mxu0 %v1959
      %v2773 = vpop.f32.mrf.mxu0
      %v2774 = vadd.f32 %v2605, %v2773
      %v2775 = vpop.f32.mrf.mxu0
      %v2776 = vadd.f32 %v2607, %v2775
      %2777 = vmatmul.bf16.gmra.mxu0 %v1962
      %v2778 = vpop.f32.mrf.mxu0
      %v2779 = vadd.f32 %v2610, %v2778
      %v2780 = vpop.f32.mrf.mxu0
      %v2781 = vadd.f32 %v2612, %v2780
      %2782 = vmatmul.bf16.gmra.mxu0 %v1964
      %v2783 = vpop.f32.mrf.mxu0
      %v2784 = vadd.f32 %v2615, %v2783
      %v2785 = vpop.f32.mrf.mxu0
      %v2786 = vadd.f32 %v2617, %v2785
      %2787 = vmatmul.bf16.gmra.mxu0 %v1967
      %v2788 = vpop.f32.mrf.mxu0
      %v2789 = vadd.f32 %v2620, %v2788
      %v2790 = vpop.f32.mrf.mxu0
      %v2791 = vadd.f32 %v2622, %v2790
      %2792 = vmatmul.bf16.gmra.mxu0 %v1969
      %v2793 = vpop.f32.mrf.mxu0
      %v2794 = vadd.f32 %v2625, %v2793
      %v2795 = vpop.f32.mrf.mxu0
      %v2796 = vadd.f32 %v2627, %v2795
      %2797 = vdwg.mxu0
      %2798 = vmatpush.bf16.msra.mxu0 %v2210
      %2799 = vmatpush.bf16.msra.mxu0 %v2208
      %2800 = vmatpush.bf16.msra.mxu0 %v2206
      %2801 = vmatpush.bf16.msra.mxu0 %v2204
      %2802 = vmatpush.bf16.msra.mxu0 %v2202
      %2803 = vmatpush.bf16.msra.mxu0 %v2200
      %2804 = vmatpush.bf16.msra.mxu0 %v2198
      %2805 = vmatpush.bf16.msra.mxu0 %v2196
      %2806 = vmatmul.bf16.gmra.mxu0 %v1378
      %v2807 = vpop.f32.mrf.mxu0
      %v2808 = vadd.f32 0.0, %v2807
      %v2809 = vpop.f32.mrf.mxu0
      %v2810 = vadd.f32 0.0, %v2809
      %2811 = vmatmul.bf16.gmra.mxu0 %v1379
      %v2812 = vpop.f32.mrf.mxu0
      %v2813 = vadd.f32 0.0, %v2812
      %v2814 = vpop.f32.mrf.mxu0
      %v2815 = vadd.f32 0.0, %v2814
      %2816 = vmatmul.bf16.gmra.mxu0 %v1380
      %v2817 = vpop.f32.mrf.mxu0
      %v2818 = vadd.f32 0.0, %v2817
      %v2819 = vpop.f32.mrf.mxu0
      %v2820 = vadd.f32 0.0, %v2819
      %2821 = vmatmul.bf16.gmra.mxu0 %v1381
      %v2822 = vpop.f32.mrf.mxu0
      %v2823 = vadd.f32 0.0, %v2822
      %v2824 = vpop.f32.mrf.mxu0
      %v2825 = vadd.f32 0.0, %v2824
      %2826 = vmatmul.bf16.gmra.mxu0 %v1382
      %v2827 = vpop.f32.mrf.mxu0
      %v2828 = vadd.f32 0.0, %v2827
      %v2829 = vpop.f32.mrf.mxu0
      %v2830 = vadd.f32 0.0, %v2829
      %2831 = vmatmul.bf16.gmra.mxu0 %v1383
      %v2832 = vpop.f32.mrf.mxu0
      %v2833 = vadd.f32 0.0, %v2832
      %v2834 = vpop.f32.mrf.mxu0
      %v2835 = vadd.f32 0.0, %v2834
      %2836 = vmatmul.bf16.gmra.mxu0 %v1384
      %v2837 = vpop.f32.mrf.mxu0
      %v2838 = vadd.f32 0.0, %v2837
      %v2839 = vpop.f32.mrf.mxu0
      %v2840 = vadd.f32 0.0, %v2839
      %2841 = vmatmul.bf16.gmra.mxu0 %v1385
      %v2842 = vpop.f32.mrf.mxu0
      %v2843 = vadd.f32 0.0, %v2842
      %v2844 = vpop.f32.mrf.mxu0
      %v2845 = vadd.f32 0.0, %v2844
      %2846 = vmatmul.bf16.gmra.mxu0 %v1386
      %v2847 = vpop.f32.mrf.mxu0
      %v2848 = vadd.f32 0.0, %v2847
      %v2849 = vpop.f32.mrf.mxu0
      %v2850 = vadd.f32 0.0, %v2849
      %2851 = vmatmul.bf16.gmra.mxu0 %v1387
      %v2852 = vpop.f32.mrf.mxu0
      %v2853 = vadd.f32 0.0, %v2852
      %v2854 = vpop.f32.mrf.mxu0
      %v2855 = vadd.f32 0.0, %v2854
      %2856 = vmatmul.bf16.gmra.mxu0 %v1388
      %v2857 = vpop.f32.mrf.mxu0
      %v2858 = vadd.f32 0.0, %v2857
      %v2859 = vpop.f32.mrf.mxu0
      %v2860 = vadd.f32 0.0, %v2859
      %2861 = vmatmul.bf16.gmra.mxu0 %v1389
      %v2862 = vpop.f32.mrf.mxu0
      %v2863 = vadd.f32 0.0, %v2862
      %v2864 = vpop.f32.mrf.mxu0
      %v2865 = vadd.f32 0.0, %v2864
      %2866 = vmatmul.bf16.gmra.mxu0 %v1390
      %v2867 = vpop.f32.mrf.mxu0
      %v2868 = vadd.f32 0.0, %v2867
      %v2869 = vpop.f32.mrf.mxu0
      %v2870 = vadd.f32 0.0, %v2869
      %2871 = vmatmul.bf16.gmra.mxu0 %v1391
      %v2872 = vpop.f32.mrf.mxu0
      %v2873 = vadd.f32 0.0, %v2872
      %v2874 = vpop.f32.mrf.mxu0
      %v2875 = vadd.f32 0.0, %v2874
      %2876 = vmatmul.bf16.gmra.mxu0 %v1392
      %v2877 = vpop.f32.mrf.mxu0
      %v2878 = vadd.f32 0.0, %v2877
      %v2879 = vpop.f32.mrf.mxu0
      %v2880 = vadd.f32 0.0, %v2879
      %2881 = vmatmul.bf16.gmra.mxu0 %v1393
      %v2882 = vpop.f32.mrf.mxu0
      %v2883 = vadd.f32 0.0, %v2882
      %v2884 = vpop.f32.mrf.mxu0
      %v2885 = vadd.f32 0.0, %v2884
      %2886 = vmatmul.bf16.gmra.mxu0 %v1394
      %v2887 = vpop.f32.mrf.mxu0
      %v2888 = vadd.f32 0.0, %v2887
      %v2889 = vpop.f32.mrf.mxu0
      %v2890 = vadd.f32 0.0, %v2889
      %2891 = vmatmul.bf16.gmra.mxu0 %v1395
      %v2892 = vpop.f32.mrf.mxu0
      %v2893 = vadd.f32 0.0, %v2892
      %v2894 = vpop.f32.mrf.mxu0
      %v2895 = vadd.f32 0.0, %v2894
      %2896 = vmatmul.bf16.gmra.mxu0 %v1396
      %v2897 = vpop.f32.mrf.mxu0
      %v2898 = vadd.f32 0.0, %v2897
      %v2899 = vpop.f32.mrf.mxu0
      %v2900 = vadd.f32 0.0, %v2899
      %2901 = vmatmul.bf16.gmra.mxu0 %v1397
      %v2902 = vpop.f32.mrf.mxu0
      %v2903 = vadd.f32 0.0, %v2902
      %v2904 = vpop.f32.mrf.mxu0
      %v2905 = vadd.f32 0.0, %v2904
      %2906 = vmatmul.bf16.gmra.mxu0 %v1398
      %v2907 = vpop.f32.mrf.mxu0
      %v2908 = vadd.f32 0.0, %v2907
      %v2909 = vpop.f32.mrf.mxu0
      %v2910 = vadd.f32 0.0, %v2909
      %2911 = vmatmul.bf16.gmra.mxu0 %v1399
      %v2912 = vpop.f32.mrf.mxu0
      %v2913 = vadd.f32 0.0, %v2912
      %v2914 = vpop.f32.mrf.mxu0
      %v2915 = vadd.f32 0.0, %v2914
      %2916 = vmatmul.bf16.gmra.mxu0 %v1400
      %v2917 = vpop.f32.mrf.mxu0
      %v2918 = vadd.f32 0.0, %v2917
      %v2919 = vpop.f32.mrf.mxu0
      %v2920 = vadd.f32 0.0, %v2919
      %2921 = vmatmul.bf16.gmra.mxu0 %v1401
      %v2922 = vpop.f32.mrf.mxu0
      %v2923 = vadd.f32 0.0, %v2922
      %v2924 = vpop.f32.mrf.mxu0
      %v2925 = vadd.f32 0.0, %v2924
      %2926 = vmatmul.bf16.gmra.mxu0 %v1402
      %v2927 = vpop.f32.mrf.mxu0
      %v2928 = vadd.f32 0.0, %v2927
      %v2929 = vpop.f32.mrf.mxu0
      %v2930 = vadd.f32 0.0, %v2929
      %2931 = vmatmul.bf16.gmra.mxu0 %v1403
      %v2932 = vpop.f32.mrf.mxu0
      %v2933 = vadd.f32 0.0, %v2932
      %v2934 = vpop.f32.mrf.mxu0
      %v2935 = vadd.f32 0.0, %v2934
      %2936 = vmatmul.bf16.gmra.mxu0 %v1404
      %v2937 = vpop.f32.mrf.mxu0
      %v2938 = vadd.f32 0.0, %v2937
      %v2939 = vpop.f32.mrf.mxu0
      %v2940 = vadd.f32 0.0, %v2939
      %2941 = vmatmul.bf16.gmra.mxu0 %v1405
      %v2942 = vpop.f32.mrf.mxu0
      %v2943 = vadd.f32 0.0, %v2942
      %v2944 = vpop.f32.mrf.mxu0
      %v2945 = vadd.f32 0.0, %v2944
      %2946 = vmatmul.bf16.gmra.mxu0 %v1406
      %v2947 = vpop.f32.mrf.mxu0
      %v2948 = vadd.f32 0.0, %v2947
      %v2949 = vpop.f32.mrf.mxu0
      %v2950 = vadd.f32 0.0, %v2949
      %2951 = vmatmul.bf16.gmra.mxu0 %v1407
      %v2952 = vpop.f32.mrf.mxu0
      %v2953 = vadd.f32 0.0, %v2952
      %v2954 = vpop.f32.mrf.mxu0
      %v2955 = vadd.f32 0.0, %v2954
      %2956 = vmatmul.bf16.gmra.mxu0 %v1408
      %v2957 = vpop.f32.mrf.mxu0
      %v2958 = vadd.f32 0.0, %v2957
      %v2959 = vpop.f32.mrf.mxu0
      %v2960 = vadd.f32 0.0, %v2959
      %2961 = vmatmul.bf16.gmra.mxu0 %v1409
      %v2962 = vpop.f32.mrf.mxu0
      %v2963 = vadd.f32 0.0, %v2962
      %v2964 = vpop.f32.mrf.mxu0
      %v2965 = vadd.f32 0.0, %v2964
      %2966 = vdwg.mxu0
      %2967 = vmatpush.bf16.msra.mxu0 %v2226
      %2968 = vmatpush.bf16.msra.mxu0 %v2224
      %2969 = vmatpush.bf16.msra.mxu0 %v2222
      %2970 = vmatpush.bf16.msra.mxu0 %v2220
      %2971 = vmatpush.bf16.msra.mxu0 %v2218
      %2972 = vmatpush.bf16.msra.mxu0 %v2216
      %2973 = vmatpush.bf16.msra.mxu0 %v2214
      %2974 = vmatpush.bf16.msra.mxu0 %v2212
      %2975 = vmatmul.bf16.gmra.mxu0 %v1501
      %v2976 = vpop.f32.mrf.mxu0
      %v2977 = vadd.f32 %v2808, %v2976
      %v2978 = vpop.f32.mrf.mxu0
      %v2979 = vadd.f32 %v2810, %v2978
      %2980 = vmatmul.bf16.gmra.mxu0 %v1509
      %v2981 = vpop.f32.mrf.mxu0
      %v2982 = vadd.f32 %v2813, %v2981
      %v2983 = vpop.f32.mrf.mxu0
      %v2984 = vadd.f32 %v2815, %v2983
      %2985 = vmatmul.bf16.gmra.mxu0 %v1521
      %v2986 = vpop.f32.mrf.mxu0
      %v2987 = vadd.f32 %v2818, %v2986
      %v2988 = vpop.f32.mrf.mxu0
      %v2989 = vadd.f32 %v2820, %v2988
      %2990 = vmatmul.bf16.gmra.mxu0 %v1529
      %v2991 = vpop.f32.mrf.mxu0
      %v2992 = vadd.f32 %v2823, %v2991
      %v2993 = vpop.f32.mrf.mxu0
      %v2994 = vadd.f32 %v2825, %v2993
      %2995 = vmatmul.bf16.gmra.mxu0 %v1541
      %v2996 = vpop.f32.mrf.mxu0
      %v2997 = vadd.f32 %v2828, %v2996
      %v2998 = vpop.f32.mrf.mxu0
      %v2999 = vadd.f32 %v2830, %v2998
      %3000 = vmatmul.bf16.gmra.mxu0 %v1549
      %v3001 = vpop.f32.mrf.mxu0
      %v3002 = vadd.f32 %v2833, %v3001
      %v3003 = vpop.f32.mrf.mxu0
      %v3004 = vadd.f32 %v2835, %v3003
      %3005 = vmatmul.bf16.gmra.mxu0 %v1561
      %v3006 = vpop.f32.mrf.mxu0
      %v3007 = vadd.f32 %v2838, %v3006
      %v3008 = vpop.f32.mrf.mxu0
      %v3009 = vadd.f32 %v2840, %v3008
      %3010 = vmatmul.bf16.gmra.mxu0 %v1569
      %v3011 = vpop.f32.mrf.mxu0
      %v3012 = vadd.f32 %v2843, %v3011
      %v3013 = vpop.f32.mrf.mxu0
      %v3014 = vadd.f32 %v2845, %v3013
      %3015 = vmatmul.bf16.gmra.mxu0 %v1581
      %v3016 = vpop.f32.mrf.mxu0
      %v3017 = vadd.f32 %v2848, %v3016
      %v3018 = vpop.f32.mrf.mxu0
      %v3019 = vadd.f32 %v2850, %v3018
      %3020 = vmatmul.bf16.gmra.mxu0 %v1589
      %v3021 = vpop.f32.mrf.mxu0
      %v3022 = vadd.f32 %v2853, %v3021
      %v3023 = vpop.f32.mrf.mxu0
      %v3024 = vadd.f32 %v2855, %v3023
      %3025 = vmatmul.bf16.gmra.mxu0 %v1601
      %v3026 = vpop.f32.mrf.mxu0
      %v3027 = vadd.f32 %v2858, %v3026
      %v3028 = vpop.f32.mrf.mxu0
      %v3029 = vadd.f32 %v2860, %v3028
      %3030 = vmatmul.bf16.gmra.mxu0 %v1609
      %v3031 = vpop.f32.mrf.mxu0
      %v3032 = vadd.f32 %v2863, %v3031
      %v3033 = vpop.f32.mrf.mxu0
      %v3034 = vadd.f32 %v2865, %v3033
      %3035 = vmatmul.bf16.gmra.mxu0 %v1621
      %v3036 = vpop.f32.mrf.mxu0
      %v3037 = vadd.f32 %v2868, %v3036
      %v3038 = vpop.f32.mrf.mxu0
      %v3039 = vadd.f32 %v2870, %v3038
      %3040 = vmatmul.bf16.gmra.mxu0 %v1629
      %v3041 = vpop.f32.mrf.mxu0
      %v3042 = vadd.f32 %v2873, %v3041
      %v3043 = vpop.f32.mrf.mxu0
      %v3044 = vadd.f32 %v2875, %v3043
      %3045 = vmatmul.bf16.gmra.mxu0 %v1641
      %v3046 = vpop.f32.mrf.mxu0
      %v3047 = vadd.f32 %v2878, %v3046
      %v3048 = vpop.f32.mrf.mxu0
      %v3049 = vadd.f32 %v2880, %v3048
      %3050 = vmatmul.bf16.gmra.mxu0 %v1649
      %v3051 = vpop.f32.mrf.mxu0
      %v3052 = vadd.f32 %v2883, %v3051
      %v3053 = vpop.f32.mrf.mxu0
      %v3054 = vadd.f32 %v2885, %v3053
      %3055 = vmatmul.bf16.gmra.mxu0 %v1661
      %v3056 = vpop.f32.mrf.mxu0
      %v3057 = vadd.f32 %v2888, %v3056
      %v3058 = vpop.f32.mrf.mxu0
      %v3059 = vadd.f32 %v2890, %v3058
      %3060 = vmatmul.bf16.gmra.mxu0 %v1669
      %v3061 = vpop.f32.mrf.mxu0
      %v3062 = vadd.f32 %v2893, %v3061
      %v3063 = vpop.f32.mrf.mxu0
      %v3064 = vadd.f32 %v2895, %v3063
      %3065 = vmatmul.bf16.gmra.mxu0 %v1681
      %v3066 = vpop.f32.mrf.mxu0
      %v3067 = vadd.f32 %v2898, %v3066
      %v3068 = vpop.f32.mrf.mxu0
      %v3069 = vadd.f32 %v2900, %v3068
      %3070 = vmatmul.bf16.gmra.mxu0 %v1689
      %v3071 = vpop.f32.mrf.mxu0
      %v3072 = vadd.f32 %v2903, %v3071
      %v3073 = vpop.f32.mrf.mxu0
      %v3074 = vadd.f32 %v2905, %v3073
      %3075 = vmatmul.bf16.gmra.mxu0 %v1701
      %v3076 = vpop.f32.mrf.mxu0
      %v3077 = vadd.f32 %v2908, %v3076
      %v3078 = vpop.f32.mrf.mxu0
      %v3079 = vadd.f32 %v2910, %v3078
      %3080 = vmatmul.bf16.gmra.mxu0 %v1709
      %v3081 = vpop.f32.mrf.mxu0
      %v3082 = vadd.f32 %v2913, %v3081
      %v3083 = vpop.f32.mrf.mxu0
      %v3084 = vadd.f32 %v2915, %v3083
      %3085 = vmatmul.bf16.gmra.mxu0 %v1721
      %v3086 = vpop.f32.mrf.mxu0
      %v3087 = vadd.f32 %v2918, %v3086
      %v3088 = vpop.f32.mrf.mxu0
      %v3089 = vadd.f32 %v2920, %v3088
      %3090 = vmatmul.bf16.gmra.mxu0 %v1729
      %v3091 = vpop.f32.mrf.mxu0
      %v3092 = vadd.f32 %v2923, %v3091
      %v3093 = vpop.f32.mrf.mxu0
      %v3094 = vadd.f32 %v2925, %v3093
      %3095 = vmatmul.bf16.gmra.mxu0 %v1741
      %v3096 = vpop.f32.mrf.mxu0
      %v3097 = vadd.f32 %v2928, %v3096
      %v3098 = vpop.f32.mrf.mxu0
      %v3099 = vadd.f32 %v2930, %v3098
      %3100 = vmatmul.bf16.gmra.mxu0 %v1749
      %v3101 = vpop.f32.mrf.mxu0
      %v3102 = vadd.f32 %v2933, %v3101
      %v3103 = vpop.f32.mrf.mxu0
      %v3104 = vadd.f32 %v2935, %v3103
      %3105 = vmatmul.bf16.gmra.mxu0 %v1761
      %v3106 = vpop.f32.mrf.mxu0
      %v3107 = vadd.f32 %v2938, %v3106
      %v3108 = vpop.f32.mrf.mxu0
      %v3109 = vadd.f32 %v2940, %v3108
      %3110 = vmatmul.bf16.gmra.mxu0 %v1769
      %v3111 = vpop.f32.mrf.mxu0
      %v3112 = vadd.f32 %v2943, %v3111
      %v3113 = vpop.f32.mrf.mxu0
      %v3114 = vadd.f32 %v2945, %v3113
      %3115 = vmatmul.bf16.gmra.mxu0 %v1781
      %v3116 = vpop.f32.mrf.mxu0
      %v3117 = vadd.f32 %v2948, %v3116
      %v3118 = vpop.f32.mrf.mxu0
      %v3119 = vadd.f32 %v2950, %v3118
      %3120 = vmatmul.bf16.gmra.mxu0 %v1789
      %v3121 = vpop.f32.mrf.mxu0
      %v3122 = vadd.f32 %v2953, %v3121
      %v3123 = vpop.f32.mrf.mxu0
      %v3124 = vadd.f32 %v2955, %v3123
      %3125 = vmatmul.bf16.gmra.mxu0 %v1801
      %v3126 = vpop.f32.mrf.mxu0
      %v3127 = vadd.f32 %v2958, %v3126
      %v3128 = vpop.f32.mrf.mxu0
      %v3129 = vadd.f32 %v2960, %v3128
      %3130 = vmatmul.bf16.gmra.mxu0 %v1809
      %v3131 = vpop.f32.mrf.mxu0
      %v3132 = vadd.f32 %v2963, %v3131
      %v3133 = vpop.f32.mrf.mxu0
      %v3134 = vadd.f32 %v2965, %v3133
      %3135 = vdwg.mxu0
      %3136 = vmatpush.bf16.msra.mxu0 %v2242
      %3137 = vmatpush.bf16.msra.mxu0 %v2240
      %3138 = vmatpush.bf16.msra.mxu0 %v2238
      %3139 = vmatpush.bf16.msra.mxu0 %v2236
      %3140 = vmatpush.bf16.msra.mxu0 %v2234
      %3141 = vmatpush.bf16.msra.mxu0 %v2232
      %3142 = vmatpush.bf16.msra.mxu0 %v2230
      %3143 = vmatpush.bf16.msra.mxu0 %v2228
      %3144 = vmatmul.bf16.gmra.mxu0 %v1892
      %v3145 = vpop.f32.mrf.mxu0
      %v3146 = vadd.f32 %v2977, %v3145
      %v3147 = vpop.f32.mrf.mxu0
      %v3148 = vadd.f32 %v2979, %v3147
      %3149 = vmatmul.bf16.gmra.mxu0 %v1894
      %v3150 = vpop.f32.mrf.mxu0
      %v3151 = vadd.f32 %v2982, %v3150
      %v3152 = vpop.f32.mrf.mxu0
      %v3153 = vadd.f32 %v2984, %v3152
      %3154 = vmatmul.bf16.gmra.mxu0 %v1897
      %v3155 = vpop.f32.mrf.mxu0
      %v3156 = vadd.f32 %v2987, %v3155
      %v3157 = vpop.f32.mrf.mxu0
      %v3158 = vadd.f32 %v2989, %v3157
      %3159 = vmatmul.bf16.gmra.mxu0 %v1899
      %v3160 = vpop.f32.mrf.mxu0
      %v3161 = vadd.f32 %v2992, %v3160
      %v3162 = vpop.f32.mrf.mxu0
      %v3163 = vadd.f32 %v2994, %v3162
      %3164 = vmatmul.bf16.gmra.mxu0 %v1902
      %v3165 = vpop.f32.mrf.mxu0
      %v3166 = vadd.f32 %v2997, %v3165
      %v3167 = vpop.f32.mrf.mxu0
      %v3168 = vadd.f32 %v2999, %v3167
      %3169 = vmatmul.bf16.gmra.mxu0 %v1904
      %v3170 = vpop.f32.mrf.mxu0
      %v3171 = vadd.f32 %v3002, %v3170
      %v3172 = vpop.f32.mrf.mxu0
      %v3173 = vadd.f32 %v3004, %v3172
      %3174 = vmatmul.bf16.gmra.mxu0 %v1907
      %v3175 = vpop.f32.mrf.mxu0
      %v3176 = vadd.f32 %v3007, %v3175
      %v3177 = vpop.f32.mrf.mxu0
      %v3178 = vadd.f32 %v3009, %v3177
      %3179 = vmatmul.bf16.gmra.mxu0 %v1909
      %v3180 = vpop.f32.mrf.mxu0
      %v3181 = vadd.f32 %v3012, %v3180
      %v3182 = vpop.f32.mrf.mxu0
      %v3183 = vadd.f32 %v3014, %v3182
      %3184 = vmatmul.bf16.gmra.mxu0 %v1912
      %v3185 = vpop.f32.mrf.mxu0
      %v3186 = vadd.f32 %v3017, %v3185
      %v3187 = vpop.f32.mrf.mxu0
      %v3188 = vadd.f32 %v3019, %v3187
      %3189 = vmatmul.bf16.gmra.mxu0 %v1914
      %v3190 = vpop.f32.mrf.mxu0
      %v3191 = vadd.f32 %v3022, %v3190
      %v3192 = vpop.f32.mrf.mxu0
      %v3193 = vadd.f32 %v3024, %v3192
      %3194 = vmatmul.bf16.gmra.mxu0 %v1917
      %v3195 = vpop.f32.mrf.mxu0
      %v3196 = vadd.f32 %v3027, %v3195
      %v3197 = vpop.f32.mrf.mxu0
      %v3198 = vadd.f32 %v3029, %v3197
      %3199 = vmatmul.bf16.gmra.mxu0 %v1919
      %v3200 = vpop.f32.mrf.mxu0
      %v3201 = vadd.f32 %v3032, %v3200
      %v3202 = vpop.f32.mrf.mxu0
      %v3203 = vadd.f32 %v3034, %v3202
      %3204 = vmatmul.bf16.gmra.mxu0 %v1922
      %v3205 = vpop.f32.mrf.mxu0
      %v3206 = vadd.f32 %v3037, %v3205
      %v3207 = vpop.f32.mrf.mxu0
      %v3208 = vadd.f32 %v3039, %v3207
      %3209 = vmatmul.bf16.gmra.mxu0 %v1924
      %v3210 = vpop.f32.mrf.mxu0
      %v3211 = vadd.f32 %v3042, %v3210
      %v3212 = vpop.f32.mrf.mxu0
      %v3213 = vadd.f32 %v3044, %v3212
      %3214 = vmatmul.bf16.gmra.mxu0 %v1927
      %v3215 = vpop.f32.mrf.mxu0
      %v3216 = vadd.f32 %v3047, %v3215
      %v3217 = vpop.f32.mrf.mxu0
      %v3218 = vadd.f32 %v3049, %v3217
      %3219 = vmatmul.bf16.gmra.mxu0 %v1929
      %v3220 = vpop.f32.mrf.mxu0
      %v3221 = vadd.f32 %v3052, %v3220
      %v3222 = vpop.f32.mrf.mxu0
      %v3223 = vadd.f32 %v3054, %v3222
      %3224 = vmatmul.bf16.gmra.mxu0 %v1932
      %v3225 = vpop.f32.mrf.mxu0
      %v3226 = vadd.f32 %v3057, %v3225
      %v3227 = vpop.f32.mrf.mxu0
      %v3228 = vadd.f32 %v3059, %v3227
      %3229 = vmatmul.bf16.gmra.mxu0 %v1934
      %v3230 = vpop.f32.mrf.mxu0
      %v3231 = vadd.f32 %v3062, %v3230
      %v3232 = vpop.f32.mrf.mxu0
      %v3233 = vadd.f32 %v3064, %v3232
      %3234 = vmatmul.bf16.gmra.mxu0 %v1937
      %v3235 = vpop.f32.mrf.mxu0
      %v3236 = vadd.f32 %v3067, %v3235
      %v3237 = vpop.f32.mrf.mxu0
      %v3238 = vadd.f32 %v3069, %v3237
      %3239 = vmatmul.bf16.gmra.mxu0 %v1939
      %v3240 = vpop.f32.mrf.mxu0
      %v3241 = vadd.f32 %v3072, %v3240
      %v3242 = vpop.f32.mrf.mxu0
      %v3243 = vadd.f32 %v3074, %v3242
      %3244 = vmatmul.bf16.gmra.mxu0 %v1942
      %v3245 = vpop.f32.mrf.mxu0
      %v3246 = vadd.f32 %v3077, %v3245
      %v3247 = vpop.f32.mrf.mxu0
      %v3248 = vadd.f32 %v3079, %v3247
      %3249 = vmatmul.bf16.gmra.mxu0 %v1944
      %v3250 = vpop.f32.mrf.mxu0
      %v3251 = vadd.f32 %v3082, %v3250
      %v3252 = vpop.f32.mrf.mxu0
      %v3253 = vadd.f32 %v3084, %v3252
      %3254 = vmatmul.bf16.gmra.mxu0 %v1947
      %v3255 = vpop.f32.mrf.mxu0
      %v3256 = vadd.f32 %v3087, %v3255
      %v3257 = vpop.f32.mrf.mxu0
      %v3258 = vadd.f32 %v3089, %v3257
      %3259 = vmatmul.bf16.gmra.mxu0 %v1949
      %v3260 = vpop.f32.mrf.mxu0
      %v3261 = vadd.f32 %v3092, %v3260
      %v3262 = vpop.f32.mrf.mxu0
      %v3263 = vadd.f32 %v3094, %v3262
      %3264 = vmatmul.bf16.gmra.mxu0 %v1952
      %v3265 = vpop.f32.mrf.mxu0
      %v3266 = vadd.f32 %v3097, %v3265
      %v3267 = vpop.f32.mrf.mxu0
      %v3268 = vadd.f32 %v3099, %v3267
      %3269 = vmatmul.bf16.gmra.mxu0 %v1954
      %v3270 = vpop.f32.mrf.mxu0
      %v3271 = vadd.f32 %v3102, %v3270
      %v3272 = vpop.f32.mrf.mxu0
      %v3273 = vadd.f32 %v3104, %v3272
      %3274 = vmatmul.bf16.gmra.mxu0 %v1957
      %v3275 = vpop.f32.mrf.mxu0
      %v3276 = vadd.f32 %v3107, %v3275
      %v3277 = vpop.f32.mrf.mxu0
      %v3278 = vadd.f32 %v3109, %v3277
      %3279 = vmatmul.bf16.gmra.mxu0 %v1959
      %v3280 = vpop.f32.mrf.mxu0
      %v3281 = vadd.f32 %v3112, %v3280
      %v3282 = vpop.f32.mrf.mxu0
      %v3283 = vadd.f32 %v3114, %v3282
      %3284 = vmatmul.bf16.gmra.mxu0 %v1962
      %v3285 = vpop.f32.mrf.mxu0
      %v3286 = vadd.f32 %v3117, %v3285
      %v3287 = vpop.f32.mrf.mxu0
      %v3288 = vadd.f32 %v3119, %v3287
      %3289 = vmatmul.bf16.gmra.mxu0 %v1964
      %v3290 = vpop.f32.mrf.mxu0
      %v3291 = vadd.f32 %v3122, %v3290
      %v3292 = vpop.f32.mrf.mxu0
      %v3293 = vadd.f32 %v3124, %v3292
      %3294 = vmatmul.bf16.gmra.mxu0 %v1967
      %v3295 = vpop.f32.mrf.mxu0
      %v3296 = vadd.f32 %v3127, %v3295
      %v3297 = vpop.f32.mrf.mxu0
      %v3298 = vadd.f32 %v3129, %v3297
      %3299 = vmatmul.bf16.gmra.mxu0 %v1969
      %v3300 = vpop.f32.mrf.mxu0
      %v3301 = vadd.f32 %v3132, %v3300
      %v3302 = vpop.f32.mrf.mxu0
      %v3303 = vadd.f32 %v3134, %v3302
      %3304 = vdwg.mxu0
      %v3353 = vunpack.c.l.b16 %v1102
      %v3354 = vunpack.c.h.b16 %v1102
      %v3355 = vunpack.c.l.b16 %v1103
      %v3356 = vunpack.c.h.b16 %v1103
      %v3357 = vunpack.c.l.b16 %v1104
      %v3358 = vunpack.c.h.b16 %v1104
      %v3359 = vunpack.c.l.b16 %v1105
      %v3360 = vunpack.c.h.b16 %v1105
      %v3361 = vunpack.c.l.b16 %v1106
      %v3362 = vunpack.c.h.b16 %v1106
      %v3363 = vunpack.c.l.b16 %v1107
      %v3364 = vunpack.c.h.b16 %v1107
      %v3365 = vunpack.c.l.b16 %v1108
      %v3366 = vunpack.c.h.b16 %v1108
      %v3367 = vunpack.c.l.b16 %v1109
      %v3368 = vunpack.c.h.b16 %v1109
      %v3369 = vunpack.c.l.b16 %v1110
      %v3370 = vunpack.c.h.b16 %v1110
      %v3371 = vunpack.c.l.b16 %v1111
      %v3372 = vunpack.c.h.b16 %v1111
      %v3373 = vunpack.c.l.b16 %v1112
      %v3374 = vunpack.c.h.b16 %v1112
      %v3375 = vunpack.c.l.b16 %v1113
      %v3376 = vunpack.c.h.b16 %v1113
      %v3377 = vunpack.c.l.b16 %v1114
      %v3378 = vunpack.c.h.b16 %v1114
      %v3379 = vunpack.c.l.b16 %v1115
      %v3380 = vunpack.c.h.b16 %v1115
      %v3381 = vunpack.c.l.b16 %v1116
      %v3382 = vunpack.c.h.b16 %v1116
      %v3383 = vunpack.c.l.b16 %v1117
      %v3384 = vunpack.c.h.b16 %v1117
      %v3385 = vunpack.c.l.b16 %v1118
      %v3386 = vunpack.c.h.b16 %v1118
      %v3387 = vunpack.c.l.b16 %v1119
      %v3388 = vunpack.c.h.b16 %v1119
      %v3389 = vunpack.c.l.b16 %v1120
      %v3390 = vunpack.c.h.b16 %v1120
      %v3391 = vunpack.c.l.b16 %v1121
      %v3392 = vunpack.c.h.b16 %v1121
      %v3393 = vunpack.c.l.b16 %v1122
      %v3394 = vunpack.c.h.b16 %v1122
      %v3395 = vunpack.c.l.b16 %v1123
      %v3396 = vunpack.c.h.b16 %v1123
      %v3397 = vunpack.c.l.b16 %v1124
      %v3398 = vunpack.c.h.b16 %v1124
      %v3399 = vunpack.c.l.b16 %v1125
      %v3400 = vunpack.c.h.b16 %v1125
      %v3401 = vunpack.c.l.b16 %v1126
      %v3402 = vunpack.c.h.b16 %v1126
      %v3403 = vunpack.c.l.b16 %v1127
      %v3404 = vunpack.c.h.b16 %v1127
      %v3405 = vunpack.c.l.b16 %v1128
      %v3406 = vunpack.c.h.b16 %v1128
      %v3407 = vunpack.c.l.b16 %v1129
      %v3408 = vunpack.c.h.b16 %v1129
      %v3409 = vunpack.c.l.b16 %v1130
      %v3410 = vunpack.c.h.b16 %v1130
      %v3411 = vunpack.c.l.b16 %v1131
      %v3412 = vunpack.c.h.b16 %v1131
      %v3413 = vunpack.c.l.b16 %v1132
      %v3414 = vunpack.c.h.b16 %v1132
      %v3415 = vunpack.c.l.b16 %v1133
      %v3416 = vunpack.c.h.b16 %v1133
      %v3417 = vunpack.c.l.b16 %v1134
      %v3418 = vunpack.c.h.b16 %v1134
      %v3419 = vunpack.c.l.b16 %v1135
      %v3420 = vunpack.c.h.b16 %v1135
      %v3421 = vunpack.c.l.b16 %v1136
      %v3422 = vunpack.c.h.b16 %v1136
      %v3423 = vunpack.c.l.b16 %v1137
      %v3424 = vunpack.c.h.b16 %v1137
      %v3425 = vunpack.c.l.b16 %v1138
      %v3426 = vunpack.c.h.b16 %v1138
      %v3427 = vunpack.c.l.b16 %v1139
      %v3428 = vunpack.c.h.b16 %v1139
      %v3429 = vunpack.c.l.b16 %v1140
      %v3430 = vunpack.c.h.b16 %v1140
      %v3431 = vunpack.c.l.b16 %v1141
      %v3432 = vunpack.c.h.b16 %v1141
      %v3433 = vunpack.c.l.b16 %v1142
      %v3434 = vunpack.c.h.b16 %v1142
      %v3435 = vunpack.c.l.b16 %v1143
      %v3436 = vunpack.c.h.b16 %v1143
      %v3437 = vunpack.c.l.b16 %v1144
      %v3438 = vunpack.c.h.b16 %v1144
      %v3439 = vunpack.c.l.b16 %v1145
      %v3440 = vunpack.c.h.b16 %v1145
      %v3441 = vunpack.c.l.b16 %v1146
      %v3442 = vunpack.c.h.b16 %v1146
      %v3443 = vunpack.c.l.b16 %v1147
      %v3444 = vunpack.c.h.b16 %v1147
      %v3445 = vunpack.c.l.b16 %v1148
      %v3446 = vunpack.c.h.b16 %v1148
      %v3447 = vunpack.c.l.b16 %v1149
      %v3448 = vunpack.c.h.b16 %v1149
      %v3449 = vpack.c.b16 %v3355, %v3353
      %v3450 = vpack.c.b16 %v3356, %v3354
      %v3451 = vpack.c.b16 %v3359, %v3357
      %v3452 = vpack.c.b16 %v3360, %v3358
      %v3453 = vpack.c.b16 %v3363, %v3361
      %v3454 = vpack.c.b16 %v3364, %v3362
      %v3455 = vpack.c.b16 %v3367, %v3365
      %v3456 = vpack.c.b16 %v3368, %v3366
      %v3457 = vpack.c.b16 %v3371, %v3369
      %v3458 = vpack.c.b16 %v3372, %v3370
      %v3459 = vpack.c.b16 %v3375, %v3373
      %v3460 = vpack.c.b16 %v3376, %v3374
      %v3461 = vpack.c.b16 %v3379, %v3377
      %v3462 = vpack.c.b16 %v3380, %v3378
      %v3463 = vpack.c.b16 %v3383, %v3381
      %v3464 = vpack.c.b16 %v3384, %v3382
      %v3465 = vpack.c.b16 %v3387, %v3385
      %v3466 = vpack.c.b16 %v3388, %v3386
      %v3467 = vpack.c.b16 %v3391, %v3389
      %v3468 = vpack.c.b16 %v3392, %v3390
      %v3469 = vpack.c.b16 %v3395, %v3393
      %v3470 = vpack.c.b16 %v3396, %v3394
      %v3471 = vpack.c.b16 %v3399, %v3397
      %v3472 = vpack.c.b16 %v3400, %v3398
      %v3473 = vpack.c.b16 %v3403, %v3401
      %v3474 = vpack.c.b16 %v3404, %v3402
      %v3475 = vpack.c.b16 %v3407, %v3405
      %v3476 = vpack.c.b16 %v3408, %v3406
      %v3477 = vpack.c.b16 %v3411, %v3409
      %v3478 = vpack.c.b16 %v3412, %v3410
      %v3479 = vpack.c.b16 %v3415, %v3413
      %v3480 = vpack.c.b16 %v3416, %v3414
      %v3481 = vpack.c.b16 %v3419, %v3417
      %v3482 = vpack.c.b16 %v3420, %v3418
      %v3483 = vpack.c.b16 %v3423, %v3421
      %v3484 = vpack.c.b16 %v3424, %v3422
      %v3485 = vpack.c.b16 %v3427, %v3425
      %v3486 = vpack.c.b16 %v3428, %v3426
      %v3487 = vpack.c.b16 %v3431, %v3429
      %v3488 = vpack.c.b16 %v3432, %v3430
      %v3489 = vpack.c.b16 %v3435, %v3433
      %v3490 = vpack.c.b16 %v3436, %v3434
      %v3491 = vpack.c.b16 %v3439, %v3437
      %v3492 = vpack.c.b16 %v3440, %v3438
      %v3493 = vpack.c.b16 %v3443, %v3441
      %v3494 = vpack.c.b16 %v3444, %v3442
      %v3495 = vpack.c.b16 %v3447, %v3445
      %v3496 = vpack.c.b16 %v3448, %v3446
      %3545 = vmatpush.bf16.msra.mxu0 %v3463
      %3546 = vmatpush.bf16.msra.mxu0 %v3461
      %3547 = vmatpush.bf16.msra.mxu0 %v3459
      %3548 = vmatpush.bf16.msra.mxu0 %v3457
      %3549 = vmatpush.bf16.msra.mxu0 %v3455
      %3550 = vmatpush.bf16.msra.mxu0 %v3453
      %3551 = vmatpush.bf16.msra.mxu0 %v3451
      %3552 = vmatpush.bf16.msra.mxu0 %v3449
      %3553 = vmatmul.bf16.gmra.mxu0 %v476
      %v3554 = vpop.f32.mrf.mxu0
      %v3555 = vadd.f32 %v2639, %v3554
      %v3556 = vpop.f32.mrf.mxu0
      %v3557 = vadd.f32 %v2641, %v3556
      %3558 = vmatmul.bf16.gmra.mxu0 %v477
      %v3559 = vpop.f32.mrf.mxu0
      %v3560 = vadd.f32 %v2644, %v3559
      %v3561 = vpop.f32.mrf.mxu0
      %v3562 = vadd.f32 %v2646, %v3561
      %3563 = vmatmul.bf16.gmra.mxu0 %v478
      %v3564 = vpop.f32.mrf.mxu0
      %v3565 = vadd.f32 %v2649, %v3564
      %v3566 = vpop.f32.mrf.mxu0
      %v3567 = vadd.f32 %v2651, %v3566
      %3568 = vmatmul.bf16.gmra.mxu0 %v479
      %v3569 = vpop.f32.mrf.mxu0
      %v3570 = vadd.f32 %v2654, %v3569
      %v3571 = vpop.f32.mrf.mxu0
      %v3572 = vadd.f32 %v2656, %v3571
      %3573 = vmatmul.bf16.gmra.mxu0 %v480
      %v3574 = vpop.f32.mrf.mxu0
      %v3575 = vadd.f32 %v2659, %v3574
      %v3576 = vpop.f32.mrf.mxu0
      %v3577 = vadd.f32 %v2661, %v3576
      %3578 = vmatmul.bf16.gmra.mxu0 %v481
      %v3579 = vpop.f32.mrf.mxu0
      %v3580 = vadd.f32 %v2664, %v3579
      %v3581 = vpop.f32.mrf.mxu0
      %v3582 = vadd.f32 %v2666, %v3581
      %3583 = vmatmul.bf16.gmra.mxu0 %v482
      %v3584 = vpop.f32.mrf.mxu0
      %v3585 = vadd.f32 %v2669, %v3584
      %v3586 = vpop.f32.mrf.mxu0
      %v3587 = vadd.f32 %v2671, %v3586
      %3588 = vmatmul.bf16.gmra.mxu0 %v483
      %v3589 = vpop.f32.mrf.mxu0
      %v3590 = vadd.f32 %v2674, %v3589
      %v3591 = vpop.f32.mrf.mxu0
      %v3592 = vadd.f32 %v2676, %v3591
      %3593 = vmatmul.bf16.gmra.mxu0 %v484
      %v3594 = vpop.f32.mrf.mxu0
      %v3595 = vadd.f32 %v2679, %v3594
      %v3596 = vpop.f32.mrf.mxu0
      %v3597 = vadd.f32 %v2681, %v3596
      %3598 = vmatmul.bf16.gmra.mxu0 %v485
      %v3599 = vpop.f32.mrf.mxu0
      %v3600 = vadd.f32 %v2684, %v3599
      %v3601 = vpop.f32.mrf.mxu0
      %v3602 = vadd.f32 %v2686, %v3601
      %3603 = vmatmul.bf16.gmra.mxu0 %v486
      %v3604 = vpop.f32.mrf.mxu0
      %v3605 = vadd.f32 %v2689, %v3604
      %v3606 = vpop.f32.mrf.mxu0
      %v3607 = vadd.f32 %v2691, %v3606
      %3608 = vmatmul.bf16.gmra.mxu0 %v487
      %v3609 = vpop.f32.mrf.mxu0
      %v3610 = vadd.f32 %v2694, %v3609
      %v3611 = vpop.f32.mrf.mxu0
      %v3612 = vadd.f32 %v2696, %v3611
      %3613 = vmatmul.bf16.gmra.mxu0 %v488
      %v3614 = vpop.f32.mrf.mxu0
      %v3615 = vadd.f32 %v2699, %v3614
      %v3616 = vpop.f32.mrf.mxu0
      %v3617 = vadd.f32 %v2701, %v3616
      %3618 = vmatmul.bf16.gmra.mxu0 %v489
      %v3619 = vpop.f32.mrf.mxu0
      %v3620 = vadd.f32 %v2704, %v3619
      %v3621 = vpop.f32.mrf.mxu0
      %v3622 = vadd.f32 %v2706, %v3621
      %3623 = vmatmul.bf16.gmra.mxu0 %v490
      %v3624 = vpop.f32.mrf.mxu0
      %v3625 = vadd.f32 %v2709, %v3624
      %v3626 = vpop.f32.mrf.mxu0
      %v3627 = vadd.f32 %v2711, %v3626
      %3628 = vmatmul.bf16.gmra.mxu0 %v491
      %v3629 = vpop.f32.mrf.mxu0
      %v3630 = vadd.f32 %v2714, %v3629
      %v3631 = vpop.f32.mrf.mxu0
      %v3632 = vadd.f32 %v2716, %v3631
      %3633 = vmatmul.bf16.gmra.mxu0 %v492
      %v3634 = vpop.f32.mrf.mxu0
      %v3635 = vadd.f32 %v2719, %v3634
      %v3636 = vpop.f32.mrf.mxu0
      %v3637 = vadd.f32 %v2721, %v3636
      %3638 = vmatmul.bf16.gmra.mxu0 %v493
      %v3639 = vpop.f32.mrf.mxu0
      %v3640 = vadd.f32 %v2724, %v3639
      %v3641 = vpop.f32.mrf.mxu0
      %v3642 = vadd.f32 %v2726, %v3641
      %3643 = vmatmul.bf16.gmra.mxu0 %v494
      %v3644 = vpop.f32.mrf.mxu0
      %v3645 = vadd.f32 %v2729, %v3644
      %v3646 = vpop.f32.mrf.mxu0
      %v3647 = vadd.f32 %v2731, %v3646
      %3648 = vmatmul.bf16.gmra.mxu0 %v495
      %v3649 = vpop.f32.mrf.mxu0
      %v3650 = vadd.f32 %v2734, %v3649
      %v3651 = vpop.f32.mrf.mxu0
      %v3652 = vadd.f32 %v2736, %v3651
      %3653 = vmatmul.bf16.gmra.mxu0 %v496
      %v3654 = vpop.f32.mrf.mxu0
      %v3655 = vadd.f32 %v2739, %v3654
      %v3656 = vpop.f32.mrf.mxu0
      %v3657 = vadd.f32 %v2741, %v3656
      %3658 = vmatmul.bf16.gmra.mxu0 %v497
      %v3659 = vpop.f32.mrf.mxu0
      %v3660 = vadd.f32 %v2744, %v3659
      %v3661 = vpop.f32.mrf.mxu0
      %v3662 = vadd.f32 %v2746, %v3661
      %3663 = vmatmul.bf16.gmra.mxu0 %v498
      %v3664 = vpop.f32.mrf.mxu0
      %v3665 = vadd.f32 %v2749, %v3664
      %v3666 = vpop.f32.mrf.mxu0
      %v3667 = vadd.f32 %v2751, %v3666
      %3668 = vmatmul.bf16.gmra.mxu0 %v499
      %v3669 = vpop.f32.mrf.mxu0
      %v3670 = vadd.f32 %v2754, %v3669
      %v3671 = vpop.f32.mrf.mxu0
      %v3672 = vadd.f32 %v2756, %v3671
      %3673 = vmatmul.bf16.gmra.mxu0 %v500
      %v3674 = vpop.f32.mrf.mxu0
      %v3675 = vadd.f32 %v2759, %v3674
      %v3676 = vpop.f32.mrf.mxu0
      %v3677 = vadd.f32 %v2761, %v3676
      %3678 = vmatmul.bf16.gmra.mxu0 %v501
      %v3679 = vpop.f32.mrf.mxu0
      %v3680 = vadd.f32 %v2764, %v3679
      %v3681 = vpop.f32.mrf.mxu0
      %v3682 = vadd.f32 %v2766, %v3681
      %3683 = vmatmul.bf16.gmra.mxu0 %v502
      %v3684 = vpop.f32.mrf.mxu0
      %v3685 = vadd.f32 %v2769, %v3684
      %v3686 = vpop.f32.mrf.mxu0
      %v3687 = vadd.f32 %v2771, %v3686
      %3688 = vmatmul.bf16.gmra.mxu0 %v503
      %v3689 = vpop.f32.mrf.mxu0
      %v3690 = vadd.f32 %v2774, %v3689
      %v3691 = vpop.f32.mrf.mxu0
      %v3692 = vadd.f32 %v2776, %v3691
      %3693 = vmatmul.bf16.gmra.mxu0 %v504
      %v3694 = vpop.f32.mrf.mxu0
      %v3695 = vadd.f32 %v2779, %v3694
      %v3696 = vpop.f32.mrf.mxu0
      %v3697 = vadd.f32 %v2781, %v3696
      %3698 = vmatmul.bf16.gmra.mxu0 %v505
      %v3699 = vpop.f32.mrf.mxu0
      %v3700 = vadd.f32 %v2784, %v3699
      %v3701 = vpop.f32.mrf.mxu0
      %v3702 = vadd.f32 %v2786, %v3701
      %3703 = vmatmul.bf16.gmra.mxu0 %v506
      %v3704 = vpop.f32.mrf.mxu0
      %v3705 = vadd.f32 %v2789, %v3704
      %v3706 = vpop.f32.mrf.mxu0
      %v3707 = vadd.f32 %v2791, %v3706
      %3708 = vmatmul.bf16.gmra.mxu0 %v507
      %v3709 = vpop.f32.mrf.mxu0
      %v3710 = vadd.f32 %v2794, %v3709
      %v3711 = vpop.f32.mrf.mxu0
      %v3712 = vadd.f32 %v2796, %v3711
      %3713 = vdwg.mxu0
      %3714 = vmatpush.bf16.msra.mxu0 %v3479
      %3715 = vmatpush.bf16.msra.mxu0 %v3477
      %3716 = vmatpush.bf16.msra.mxu0 %v3475
      %3717 = vmatpush.bf16.msra.mxu0 %v3473
      %3718 = vmatpush.bf16.msra.mxu0 %v3471
      %3719 = vmatpush.bf16.msra.mxu0 %v3469
      %3720 = vmatpush.bf16.msra.mxu0 %v3467
      %3721 = vmatpush.bf16.msra.mxu0 %v3465
      %3722 = vmatmul.bf16.gmra.mxu0 %v600
      %v3723 = vpop.f32.mrf.mxu0
      %v3724 = vadd.f32 %v3555, %v3723
      %v3725 = vpop.f32.mrf.mxu0
      %v3726 = vadd.f32 %v3557, %v3725
      %3727 = vmatmul.bf16.gmra.mxu0 %v608
      %v3728 = vpop.f32.mrf.mxu0
      %v3729 = vadd.f32 %v3560, %v3728
      %v3730 = vpop.f32.mrf.mxu0
      %v3731 = vadd.f32 %v3562, %v3730
      %3732 = vmatmul.bf16.gmra.mxu0 %v620
      %v3733 = vpop.f32.mrf.mxu0
      %v3734 = vadd.f32 %v3565, %v3733
      %v3735 = vpop.f32.mrf.mxu0
      %v3736 = vadd.f32 %v3567, %v3735
      %3737 = vmatmul.bf16.gmra.mxu0 %v628
      %v3738 = vpop.f32.mrf.mxu0
      %v3739 = vadd.f32 %v3570, %v3738
      %v3740 = vpop.f32.mrf.mxu0
      %v3741 = vadd.f32 %v3572, %v3740
      %3742 = vmatmul.bf16.gmra.mxu0 %v640
      %v3743 = vpop.f32.mrf.mxu0
      %v3744 = vadd.f32 %v3575, %v3743
      %v3745 = vpop.f32.mrf.mxu0
      %v3746 = vadd.f32 %v3577, %v3745
      %3747 = vmatmul.bf16.gmra.mxu0 %v648
      %v3748 = vpop.f32.mrf.mxu0
      %v3749 = vadd.f32 %v3580, %v3748
      %v3750 = vpop.f32.mrf.mxu0
      %v3751 = vadd.f32 %v3582, %v3750
      %3752 = vmatmul.bf16.gmra.mxu0 %v660
      %v3753 = vpop.f32.mrf.mxu0
      %v3754 = vadd.f32 %v3585, %v3753
      %v3755 = vpop.f32.mrf.mxu0
      %v3756 = vadd.f32 %v3587, %v3755
      %3757 = vmatmul.bf16.gmra.mxu0 %v668
      %v3758 = vpop.f32.mrf.mxu0
      %v3759 = vadd.f32 %v3590, %v3758
      %v3760 = vpop.f32.mrf.mxu0
      %v3761 = vadd.f32 %v3592, %v3760
      %3762 = vmatmul.bf16.gmra.mxu0 %v680
      %v3763 = vpop.f32.mrf.mxu0
      %v3764 = vadd.f32 %v3595, %v3763
      %v3765 = vpop.f32.mrf.mxu0
      %v3766 = vadd.f32 %v3597, %v3765
      %3767 = vmatmul.bf16.gmra.mxu0 %v688
      %v3768 = vpop.f32.mrf.mxu0
      %v3769 = vadd.f32 %v3600, %v3768
      %v3770 = vpop.f32.mrf.mxu0
      %v3771 = vadd.f32 %v3602, %v3770
      %3772 = vmatmul.bf16.gmra.mxu0 %v700
      %v3773 = vpop.f32.mrf.mxu0
      %v3774 = vadd.f32 %v3605, %v3773
      %v3775 = vpop.f32.mrf.mxu0
      %v3776 = vadd.f32 %v3607, %v3775
      %3777 = vmatmul.bf16.gmra.mxu0 %v708
      %v3778 = vpop.f32.mrf.mxu0
      %v3779 = vadd.f32 %v3610, %v3778
      %v3780 = vpop.f32.mrf.mxu0
      %v3781 = vadd.f32 %v3612, %v3780
      %3782 = vmatmul.bf16.gmra.mxu0 %v720
      %v3783 = vpop.f32.mrf.mxu0
      %v3784 = vadd.f32 %v3615, %v3783
      %v3785 = vpop.f32.mrf.mxu0
      %v3786 = vadd.f32 %v3617, %v3785
      %3787 = vmatmul.bf16.gmra.mxu0 %v728
      %v3788 = vpop.f32.mrf.mxu0
      %v3789 = vadd.f32 %v3620, %v3788
      %v3790 = vpop.f32.mrf.mxu0
      %v3791 = vadd.f32 %v3622, %v3790
      %3792 = vmatmul.bf16.gmra.mxu0 %v740
      %v3793 = vpop.f32.mrf.mxu0
      %v3794 = vadd.f32 %v3625, %v3793
      %v3795 = vpop.f32.mrf.mxu0
      %v3796 = vadd.f32 %v3627, %v3795
      %3797 = vmatmul.bf16.gmra.mxu0 %v748
      %v3798 = vpop.f32.mrf.mxu0
      %v3799 = vadd.f32 %v3630, %v3798
      %v3800 = vpop.f32.mrf.mxu0
      %v3801 = vadd.f32 %v3632, %v3800
      %3802 = vmatmul.bf16.gmra.mxu0 %v760
      %v3803 = vpop.f32.mrf.mxu0
      %v3804 = vadd.f32 %v3635, %v3803
      %v3805 = vpop.f32.mrf.mxu0
      %v3806 = vadd.f32 %v3637, %v3805
      %3807 = vmatmul.bf16.gmra.mxu0 %v768
      %v3808 = vpop.f32.mrf.mxu0
      %v3809 = vadd.f32 %v3640, %v3808
      %v3810 = vpop.f32.mrf.mxu0
      %v3811 = vadd.f32 %v3642, %v3810
      %3812 = vmatmul.bf16.gmra.mxu0 %v780
      %v3813 = vpop.f32.mrf.mxu0
      %v3814 = vadd.f32 %v3645, %v3813
      %v3815 = vpop.f32.mrf.mxu0
      %v3816 = vadd.f32 %v3647, %v3815
      %3817 = vmatmul.bf16.gmra.mxu0 %v788
      %v3818 = vpop.f32.mrf.mxu0
      %v3819 = vadd.f32 %v3650, %v3818
      %v3820 = vpop.f32.mrf.mxu0
      %v3821 = vadd.f32 %v3652, %v3820
      %3822 = vmatmul.bf16.gmra.mxu0 %v800
      %v3823 = vpop.f32.mrf.mxu0
      %v3824 = vadd.f32 %v3655, %v3823
      %v3825 = vpop.f32.mrf.mxu0
      %v3826 = vadd.f32 %v3657, %v3825
      %3827 = vmatmul.bf16.gmra.mxu0 %v808
      %v3828 = vpop.f32.mrf.mxu0
      %v3829 = vadd.f32 %v3660, %v3828
      %v3830 = vpop.f32.mrf.mxu0
      %v3831 = vadd.f32 %v3662, %v3830
      %3832 = vmatmul.bf16.gmra.mxu0 %v820
      %v3833 = vpop.f32.mrf.mxu0
      %v3834 = vadd.f32 %v3665, %v3833
      %v3835 = vpop.f32.mrf.mxu0
      %v3836 = vadd.f32 %v3667, %v3835
      %3837 = vmatmul.bf16.gmra.mxu0 %v828
      %v3838 = vpop.f32.mrf.mxu0
      %v3839 = vadd.f32 %v3670, %v3838
      %v3840 = vpop.f32.mrf.mxu0
      %v3841 = vadd.f32 %v3672, %v3840
      %3842 = vmatmul.bf16.gmra.mxu0 %v840
      %v3843 = vpop.f32.mrf.mxu0
      %v3844 = vadd.f32 %v3675, %v3843
      %v3845 = vpop.f32.mrf.mxu0
      %v3846 = vadd.f32 %v3677, %v3845
      %3847 = vmatmul.bf16.gmra.mxu0 %v848
      %v3848 = vpop.f32.mrf.mxu0
      %v3849 = vadd.f32 %v3680, %v3848
      %v3850 = vpop.f32.mrf.mxu0
      %v3851 = vadd.f32 %v3682, %v3850
      %3852 = vmatmul.bf16.gmra.mxu0 %v860
      %v3853 = vpop.f32.mrf.mxu0
      %v3854 = vadd.f32 %v3685, %v3853
      %v3855 = vpop.f32.mrf.mxu0
      %v3856 = vadd.f32 %v3687, %v3855
      %3857 = vmatmul.bf16.gmra.mxu0 %v868
      %v3858 = vpop.f32.mrf.mxu0
      %v3859 = vadd.f32 %v3690, %v3858
      %v3860 = vpop.f32.mrf.mxu0
      %v3861 = vadd.f32 %v3692, %v3860
      %3862 = vmatmul.bf16.gmra.mxu0 %v880
      %v3863 = vpop.f32.mrf.mxu0
      %v3864 = vadd.f32 %v3695, %v3863
      %v3865 = vpop.f32.mrf.mxu0
      %v3866 = vadd.f32 %v3697, %v3865
      %3867 = vmatmul.bf16.gmra.mxu0 %v888
      %v3868 = vpop.f32.mrf.mxu0
      %v3869 = vadd.f32 %v3700, %v3868
      %v3870 = vpop.f32.mrf.mxu0
      %v3871 = vadd.f32 %v3702, %v3870
      %3872 = vmatmul.bf16.gmra.mxu0 %v900
      %v3873 = vpop.f32.mrf.mxu0
      %v3874 = vadd.f32 %v3705, %v3873
      %v3875 = vpop.f32.mrf.mxu0
      %v3876 = vadd.f32 %v3707, %v3875
      %3877 = vmatmul.bf16.gmra.mxu0 %v908
      %v3878 = vpop.f32.mrf.mxu0
      %v3879 = vadd.f32 %v3710, %v3878
      %v3880 = vpop.f32.mrf.mxu0
      %v3881 = vadd.f32 %v3712, %v3880
      %3882 = vdwg.mxu0
      %3883 = vmatpush.bf16.msra.mxu0 %v3495
      %3884 = vmatpush.bf16.msra.mxu0 %v3493
      %3885 = vmatpush.bf16.msra.mxu0 %v3491
      %3886 = vmatpush.bf16.msra.mxu0 %v3489
      %3887 = vmatpush.bf16.msra.mxu0 %v3487
      %3888 = vmatpush.bf16.msra.mxu0 %v3485
      %3889 = vmatpush.bf16.msra.mxu0 %v3483
      %3890 = vmatpush.bf16.msra.mxu0 %v3481
      %3891 = vmatmul.bf16.gmra.mxu0 %v992
      %v3892 = vpop.f32.mrf.mxu0
      %v3893 = vadd.f32 %v3724, %v3892
      %v3894 = vpop.f32.mrf.mxu0
      %v3895 = vadd.f32 %v3726, %v3894
      %3896 = vmatmul.bf16.gmra.mxu0 %v994
      %v3897 = vpop.f32.mrf.mxu0
      %v3898 = vadd.f32 %v3729, %v3897
      %v3899 = vpop.f32.mrf.mxu0
      %v3900 = vadd.f32 %v3731, %v3899
      %3901 = vmatmul.bf16.gmra.mxu0 %v997
      %v3902 = vpop.f32.mrf.mxu0
      %v3903 = vadd.f32 %v3734, %v3902
      %v3904 = vpop.f32.mrf.mxu0
      %v3905 = vadd.f32 %v3736, %v3904
      %3906 = vmatmul.bf16.gmra.mxu0 %v999
      %v3907 = vpop.f32.mrf.mxu0
      %v3908 = vadd.f32 %v3739, %v3907
      %v3909 = vpop.f32.mrf.mxu0
      %v3910 = vadd.f32 %v3741, %v3909
      %3911 = vmatmul.bf16.gmra.mxu0 %v1002
      %v3912 = vpop.f32.mrf.mxu0
      %v3913 = vadd.f32 %v3744, %v3912
      %v3914 = vpop.f32.mrf.mxu0
      %v3915 = vadd.f32 %v3746, %v3914
      %3916 = vmatmul.bf16.gmra.mxu0 %v1004
      %v3917 = vpop.f32.mrf.mxu0
      %v3918 = vadd.f32 %v3749, %v3917
      %v3919 = vpop.f32.mrf.mxu0
      %v3920 = vadd.f32 %v3751, %v3919
      %3921 = vmatmul.bf16.gmra.mxu0 %v1007
      %v3922 = vpop.f32.mrf.mxu0
      %v3923 = vadd.f32 %v3754, %v3922
      %v3924 = vpop.f32.mrf.mxu0
      %v3925 = vadd.f32 %v3756, %v3924
      %3926 = vmatmul.bf16.gmra.mxu0 %v1009
      %v3927 = vpop.f32.mrf.mxu0
      %v3928 = vadd.f32 %v3759, %v3927
      %v3929 = vpop.f32.mrf.mxu0
      %v3930 = vadd.f32 %v3761, %v3929
      %3931 = vmatmul.bf16.gmra.mxu0 %v1012
      %v3932 = vpop.f32.mrf.mxu0
      %v3933 = vadd.f32 %v3764, %v3932
      %v3934 = vpop.f32.mrf.mxu0
      %v3935 = vadd.f32 %v3766, %v3934
      %3936 = vmatmul.bf16.gmra.mxu0 %v1014
      %v3937 = vpop.f32.mrf.mxu0
      %v3938 = vadd.f32 %v3769, %v3937
      %v3939 = vpop.f32.mrf.mxu0
      %v3940 = vadd.f32 %v3771, %v3939
      %3941 = vmatmul.bf16.gmra.mxu0 %v1017
      %v3942 = vpop.f32.mrf.mxu0
      %v3943 = vadd.f32 %v3774, %v3942
      %v3944 = vpop.f32.mrf.mxu0
      %v3945 = vadd.f32 %v3776, %v3944
      %3946 = vmatmul.bf16.gmra.mxu0 %v1019
      %v3947 = vpop.f32.mrf.mxu0
      %v3948 = vadd.f32 %v3779, %v3947
      %v3949 = vpop.f32.mrf.mxu0
      %v3950 = vadd.f32 %v3781, %v3949
      %3951 = vmatmul.bf16.gmra.mxu0 %v1022
      %v3952 = vpop.f32.mrf.mxu0
      %v3953 = vadd.f32 %v3784, %v3952
      %v3954 = vpop.f32.mrf.mxu0
      %v3955 = vadd.f32 %v3786, %v3954
      %3956 = vmatmul.bf16.gmra.mxu0 %v1024
      %v3957 = vpop.f32.mrf.mxu0
      %v3958 = vadd.f32 %v3789, %v3957
      %v3959 = vpop.f32.mrf.mxu0
      %v3960 = vadd.f32 %v3791, %v3959
      %3961 = vmatmul.bf16.gmra.mxu0 %v1027
      %v3962 = vpop.f32.mrf.mxu0
      %v3963 = vadd.f32 %v3794, %v3962
      %v3964 = vpop.f32.mrf.mxu0
      %v3965 = vadd.f32 %v3796, %v3964
      %3966 = vmatmul.bf16.gmra.mxu0 %v1029
      %v3967 = vpop.f32.mrf.mxu0
      %v3968 = vadd.f32 %v3799, %v3967
      %v3969 = vpop.f32.mrf.mxu0
      %v3970 = vadd.f32 %v3801, %v3969
      %3971 = vmatmul.bf16.gmra.mxu0 %v1032
      %v3972 = vpop.f32.mrf.mxu0
      %v3973 = vadd.f32 %v3804, %v3972
      %v3974 = vpop.f32.mrf.mxu0
      %v3975 = vadd.f32 %v3806, %v3974
      %3976 = vmatmul.bf16.gmra.mxu0 %v1034
      %v3977 = vpop.f32.mrf.mxu0
      %v3978 = vadd.f32 %v3809, %v3977
      %v3979 = vpop.f32.mrf.mxu0
      %v3980 = vadd.f32 %v3811, %v3979
      %3981 = vmatmul.bf16.gmra.mxu0 %v1037
      %v3982 = vpop.f32.mrf.mxu0
      %v3983 = vadd.f32 %v3814, %v3982
      %v3984 = vpop.f32.mrf.mxu0
      %v3985 = vadd.f32 %v3816, %v3984
      %3986 = vmatmul.bf16.gmra.mxu0 %v1039
      %v3987 = vpop.f32.mrf.mxu0
      %v3988 = vadd.f32 %v3819, %v3987
      %v3989 = vpop.f32.mrf.mxu0
      %v3990 = vadd.f32 %v3821, %v3989
      %3991 = vmatmul.bf16.gmra.mxu0 %v1042
      %v3992 = vpop.f32.mrf.mxu0
      %v3993 = vadd.f32 %v3824, %v3992
      %v3994 = vpop.f32.mrf.mxu0
      %v3995 = vadd.f32 %v3826, %v3994
      %3996 = vmatmul.bf16.gmra.mxu0 %v1044
      %v3997 = vpop.f32.mrf.mxu0
      %v3998 = vadd.f32 %v3829, %v3997
      %v3999 = vpop.f32.mrf.mxu0
      %v4000 = vadd.f32 %v3831, %v3999
      %4001 = vmatmul.bf16.gmra.mxu0 %v1047
      %v4002 = vpop.f32.mrf.mxu0
      %v4003 = vadd.f32 %v3834, %v4002
      %v4004 = vpop.f32.mrf.mxu0
      %v4005 = vadd.f32 %v3836, %v4004
      %4006 = vmatmul.bf16.gmra.mxu0 %v1049
      %v4007 = vpop.f32.mrf.mxu0
      %v4008 = vadd.f32 %v3839, %v4007
      %v4009 = vpop.f32.mrf.mxu0
      %v4010 = vadd.f32 %v3841, %v4009
      %4011 = vmatmul.bf16.gmra.mxu0 %v1052
      %v4012 = vpop.f32.mrf.mxu0
      %v4013 = vadd.f32 %v3844, %v4012
      %v4014 = vpop.f32.mrf.mxu0
      %v4015 = vadd.f32 %v3846, %v4014
      %4016 = vmatmul.bf16.gmra.mxu0 %v1054
      %v4017 = vpop.f32.mrf.mxu0
      %v4018 = vadd.f32 %v3849, %v4017
      %v4019 = vpop.f32.mrf.mxu0
      %v4020 = vadd.f32 %v3851, %v4019
      %4021 = vmatmul.bf16.gmra.mxu0 %v1057
      %v4022 = vpop.f32.mrf.mxu0
      %v4023 = vadd.f32 %v3854, %v4022
      %v4024 = vpop.f32.mrf.mxu0
      %v4025 = vadd.f32 %v3856, %v4024
      %4026 = vmatmul.bf16.gmra.mxu0 %v1059
      %v4027 = vpop.f32.mrf.mxu0
      %v4028 = vadd.f32 %v3859, %v4027
      %v4029 = vpop.f32.mrf.mxu0
      %v4030 = vadd.f32 %v3861, %v4029
      %4031 = vmatmul.bf16.gmra.mxu0 %v1062
      %v4032 = vpop.f32.mrf.mxu0
      %v4033 = vadd.f32 %v3864, %v4032
      %v4034 = vpop.f32.mrf.mxu0
      %v4035 = vadd.f32 %v3866, %v4034
      %4036 = vmatmul.bf16.gmra.mxu0 %v1064
      %v4037 = vpop.f32.mrf.mxu0
      %v4038 = vadd.f32 %v3869, %v4037
      %v4039 = vpop.f32.mrf.mxu0
      %v4040 = vadd.f32 %v3871, %v4039
      %4041 = vmatmul.bf16.gmra.mxu0 %v1067
      %v4042 = vpop.f32.mrf.mxu0
      %v4043 = vadd.f32 %v3874, %v4042
      %v4044 = vpop.f32.mrf.mxu0
      %v4045 = vadd.f32 %v3876, %v4044
      %4046 = vmatmul.bf16.gmra.mxu0 %v1069
      %v4047 = vpop.f32.mrf.mxu0
      %v4048 = vadd.f32 %v3879, %v4047
      %v4049 = vpop.f32.mrf.mxu0
      %v4050 = vadd.f32 %v3881, %v4049
      %4051 = vdwg.mxu0
      %4052 = vmatpush.bf16.msra.mxu0 %v3464
      %4053 = vmatpush.bf16.msra.mxu0 %v3462
      %4054 = vmatpush.bf16.msra.mxu0 %v3460
      %4055 = vmatpush.bf16.msra.mxu0 %v3458
      %4056 = vmatpush.bf16.msra.mxu0 %v3456
      %4057 = vmatpush.bf16.msra.mxu0 %v3454
      %4058 = vmatpush.bf16.msra.mxu0 %v3452
      %4059 = vmatpush.bf16.msra.mxu0 %v3450
      %4060 = vmatmul.bf16.gmra.mxu0 %v476
      %v4061 = vpop.f32.mrf.mxu0
      %v4062 = vadd.f32 %v3146, %v4061
      %v4063 = vpop.f32.mrf.mxu0
      %v4064 = vadd.f32 %v3148, %v4063
      %4065 = vmatmul.bf16.gmra.mxu0 %v477
      %v4066 = vpop.f32.mrf.mxu0
      %v4067 = vadd.f32 %v3151, %v4066
      %v4068 = vpop.f32.mrf.mxu0
      %v4069 = vadd.f32 %v3153, %v4068
      %4070 = vmatmul.bf16.gmra.mxu0 %v478
      %v4071 = vpop.f32.mrf.mxu0
      %v4072 = vadd.f32 %v3156, %v4071
      %v4073 = vpop.f32.mrf.mxu0
      %v4074 = vadd.f32 %v3158, %v4073
      %4075 = vmatmul.bf16.gmra.mxu0 %v479
      %v4076 = vpop.f32.mrf.mxu0
      %v4077 = vadd.f32 %v3161, %v4076
      %v4078 = vpop.f32.mrf.mxu0
      %v4079 = vadd.f32 %v3163, %v4078
      %4080 = vmatmul.bf16.gmra.mxu0 %v480
      %v4081 = vpop.f32.mrf.mxu0
      %v4082 = vadd.f32 %v3166, %v4081
      %v4083 = vpop.f32.mrf.mxu0
      %v4084 = vadd.f32 %v3168, %v4083
      %4085 = vmatmul.bf16.gmra.mxu0 %v481
      %v4086 = vpop.f32.mrf.mxu0
      %v4087 = vadd.f32 %v3171, %v4086
      %v4088 = vpop.f32.mrf.mxu0
      %v4089 = vadd.f32 %v3173, %v4088
      %4090 = vmatmul.bf16.gmra.mxu0 %v482
      %v4091 = vpop.f32.mrf.mxu0
      %v4092 = vadd.f32 %v3176, %v4091
      %v4093 = vpop.f32.mrf.mxu0
      %v4094 = vadd.f32 %v3178, %v4093
      %4095 = vmatmul.bf16.gmra.mxu0 %v483
      %v4096 = vpop.f32.mrf.mxu0
      %v4097 = vadd.f32 %v3181, %v4096
      %v4098 = vpop.f32.mrf.mxu0
      %v4099 = vadd.f32 %v3183, %v4098
      %4100 = vmatmul.bf16.gmra.mxu0 %v484
      %v4101 = vpop.f32.mrf.mxu0
      %v4102 = vadd.f32 %v3186, %v4101
      %v4103 = vpop.f32.mrf.mxu0
      %v4104 = vadd.f32 %v3188, %v4103
      %4105 = vmatmul.bf16.gmra.mxu0 %v485
      %v4106 = vpop.f32.mrf.mxu0
      %v4107 = vadd.f32 %v3191, %v4106
      %v4108 = vpop.f32.mrf.mxu0
      %v4109 = vadd.f32 %v3193, %v4108
      %4110 = vmatmul.bf16.gmra.mxu0 %v486
      %v4111 = vpop.f32.mrf.mxu0
      %v4112 = vadd.f32 %v3196, %v4111
      %v4113 = vpop.f32.mrf.mxu0
      %v4114 = vadd.f32 %v3198, %v4113
      %4115 = vmatmul.bf16.gmra.mxu0 %v487
      %v4116 = vpop.f32.mrf.mxu0
      %v4117 = vadd.f32 %v3201, %v4116
      %v4118 = vpop.f32.mrf.mxu0
      %v4119 = vadd.f32 %v3203, %v4118
      %4120 = vmatmul.bf16.gmra.mxu0 %v488
      %v4121 = vpop.f32.mrf.mxu0
      %v4122 = vadd.f32 %v3206, %v4121
      %v4123 = vpop.f32.mrf.mxu0
      %v4124 = vadd.f32 %v3208, %v4123
      %4125 = vmatmul.bf16.gmra.mxu0 %v489
      %v4126 = vpop.f32.mrf.mxu0
      %v4127 = vadd.f32 %v3211, %v4126
      %v4128 = vpop.f32.mrf.mxu0
      %v4129 = vadd.f32 %v3213, %v4128
      %4130 = vmatmul.bf16.gmra.mxu0 %v490
      %v4131 = vpop.f32.mrf.mxu0
      %v4132 = vadd.f32 %v3216, %v4131
      %v4133 = vpop.f32.mrf.mxu0
      %v4134 = vadd.f32 %v3218, %v4133
      %4135 = vmatmul.bf16.gmra.mxu0 %v491
      %v4136 = vpop.f32.mrf.mxu0
      %v4137 = vadd.f32 %v3221, %v4136
      %v4138 = vpop.f32.mrf.mxu0
      %v4139 = vadd.f32 %v3223, %v4138
      %4140 = vmatmul.bf16.gmra.mxu0 %v492
      %v4141 = vpop.f32.mrf.mxu0
      %v4142 = vadd.f32 %v3226, %v4141
      %v4143 = vpop.f32.mrf.mxu0
      %v4144 = vadd.f32 %v3228, %v4143
      %4145 = vmatmul.bf16.gmra.mxu0 %v493
      %v4146 = vpop.f32.mrf.mxu0
      %v4147 = vadd.f32 %v3231, %v4146
      %v4148 = vpop.f32.mrf.mxu0
      %v4149 = vadd.f32 %v3233, %v4148
      %4150 = vmatmul.bf16.gmra.mxu0 %v494
      %v4151 = vpop.f32.mrf.mxu0
      %v4152 = vadd.f32 %v3236, %v4151
      %v4153 = vpop.f32.mrf.mxu0
      %v4154 = vadd.f32 %v3238, %v4153
      %4155 = vmatmul.bf16.gmra.mxu0 %v495
      %v4156 = vpop.f32.mrf.mxu0
      %v4157 = vadd.f32 %v3241, %v4156
      %v4158 = vpop.f32.mrf.mxu0
      %v4159 = vadd.f32 %v3243, %v4158
      %4160 = vmatmul.bf16.gmra.mxu0 %v496
      %v4161 = vpop.f32.mrf.mxu0
      %v4162 = vadd.f32 %v3246, %v4161
      %v4163 = vpop.f32.mrf.mxu0
      %v4164 = vadd.f32 %v3248, %v4163
      %4165 = vmatmul.bf16.gmra.mxu0 %v497
      %v4166 = vpop.f32.mrf.mxu0
      %v4167 = vadd.f32 %v3251, %v4166
      %v4168 = vpop.f32.mrf.mxu0
      %v4169 = vadd.f32 %v3253, %v4168
      %4170 = vmatmul.bf16.gmra.mxu0 %v498
      %v4171 = vpop.f32.mrf.mxu0
      %v4172 = vadd.f32 %v3256, %v4171
      %v4173 = vpop.f32.mrf.mxu0
      %v4174 = vadd.f32 %v3258, %v4173
      %4175 = vmatmul.bf16.gmra.mxu0 %v499
      %v4176 = vpop.f32.mrf.mxu0
      %v4177 = vadd.f32 %v3261, %v4176
      %v4178 = vpop.f32.mrf.mxu0
      %v4179 = vadd.f32 %v3263, %v4178
      %4180 = vmatmul.bf16.gmra.mxu0 %v500
      %v4181 = vpop.f32.mrf.mxu0
      %v4182 = vadd.f32 %v3266, %v4181
      %v4183 = vpop.f32.mrf.mxu0
      %v4184 = vadd.f32 %v3268, %v4183
      %4185 = vmatmul.bf16.gmra.mxu0 %v501
      %v4186 = vpop.f32.mrf.mxu0
      %v4187 = vadd.f32 %v3271, %v4186
      %v4188 = vpop.f32.mrf.mxu0
      %v4189 = vadd.f32 %v3273, %v4188
      %4190 = vmatmul.bf16.gmra.mxu0 %v502
      %v4191 = vpop.f32.mrf.mxu0
      %v4192 = vadd.f32 %v3276, %v4191
      %v4193 = vpop.f32.mrf.mxu0
      %v4194 = vadd.f32 %v3278, %v4193
      %4195 = vmatmul.bf16.gmra.mxu0 %v503
      %v4196 = vpop.f32.mrf.mxu0
      %v4197 = vadd.f32 %v3281, %v4196
      %v4198 = vpop.f32.mrf.mxu0
      %v4199 = vadd.f32 %v3283, %v4198
      %4200 = vmatmul.bf16.gmra.mxu0 %v504
      %v4201 = vpop.f32.mrf.mxu0
      %v4202 = vadd.f32 %v3286, %v4201
      %v4203 = vpop.f32.mrf.mxu0
      %v4204 = vadd.f32 %v3288, %v4203
      %4205 = vmatmul.bf16.gmra.mxu0 %v505
      %v4206 = vpop.f32.mrf.mxu0
      %v4207 = vadd.f32 %v3291, %v4206
      %v4208 = vpop.f32.mrf.mxu0
      %v4209 = vadd.f32 %v3293, %v4208
      %4210 = vmatmul.bf16.gmra.mxu0 %v506
      %v4211 = vpop.f32.mrf.mxu0
      %v4212 = vadd.f32 %v3296, %v4211
      %v4213 = vpop.f32.mrf.mxu0
      %v4214 = vadd.f32 %v3298, %v4213
      %4215 = vmatmul.bf16.gmra.mxu0 %v507
      %v4216 = vpop.f32.mrf.mxu0
      %v4217 = vadd.f32 %v3301, %v4216
      %v4218 = vpop.f32.mrf.mxu0
      %v4219 = vadd.f32 %v3303, %v4218
      %4220 = vdwg.mxu0
      %4221 = vmatpush.bf16.msra.mxu0 %v3480
      %4222 = vmatpush.bf16.msra.mxu0 %v3478
      %4223 = vmatpush.bf16.msra.mxu0 %v3476
      %4224 = vmatpush.bf16.msra.mxu0 %v3474
      %4225 = vmatpush.bf16.msra.mxu0 %v3472
      %4226 = vmatpush.bf16.msra.mxu0 %v3470
      %4227 = vmatpush.bf16.msra.mxu0 %v3468
      %4228 = vmatpush.bf16.msra.mxu0 %v3466
      %4229 = vmatmul.bf16.gmra.mxu0 %v600
      %v4230 = vpop.f32.mrf.mxu0
      %v4231 = vadd.f32 %v4062, %v4230
      %v4232 = vpop.f32.mrf.mxu0
      %v4233 = vadd.f32 %v4064, %v4232
      %4234 = vmatmul.bf16.gmra.mxu0 %v608
      %v4235 = vpop.f32.mrf.mxu0
      %v4236 = vadd.f32 %v4067, %v4235
      %v4237 = vpop.f32.mrf.mxu0
      %v4238 = vadd.f32 %v4069, %v4237
      %4239 = vmatmul.bf16.gmra.mxu0 %v620
      %v4240 = vpop.f32.mrf.mxu0
      %v4241 = vadd.f32 %v4072, %v4240
      %v4242 = vpop.f32.mrf.mxu0
      %v4243 = vadd.f32 %v4074, %v4242
      %4244 = vmatmul.bf16.gmra.mxu0 %v628
      %v4245 = vpop.f32.mrf.mxu0
      %v4246 = vadd.f32 %v4077, %v4245
      %v4247 = vpop.f32.mrf.mxu0
      %v4248 = vadd.f32 %v4079, %v4247
      %4249 = vmatmul.bf16.gmra.mxu0 %v640
      %v4250 = vpop.f32.mrf.mxu0
      %v4251 = vadd.f32 %v4082, %v4250
      %v4252 = vpop.f32.mrf.mxu0
      %v4253 = vadd.f32 %v4084, %v4252
      %4254 = vmatmul.bf16.gmra.mxu0 %v648
      %v4255 = vpop.f32.mrf.mxu0
      %v4256 = vadd.f32 %v4087, %v4255
      %v4257 = vpop.f32.mrf.mxu0
      %v4258 = vadd.f32 %v4089, %v4257
      %4259 = vmatmul.bf16.gmra.mxu0 %v660
      %v4260 = vpop.f32.mrf.mxu0
      %v4261 = vadd.f32 %v4092, %v4260
      %v4262 = vpop.f32.mrf.mxu0
      %v4263 = vadd.f32 %v4094, %v4262
      %4264 = vmatmul.bf16.gmra.mxu0 %v668
      %v4265 = vpop.f32.mrf.mxu0
      %v4266 = vadd.f32 %v4097, %v4265
      %v4267 = vpop.f32.mrf.mxu0
      %v4268 = vadd.f32 %v4099, %v4267
      %4269 = vmatmul.bf16.gmra.mxu0 %v680
      %v4270 = vpop.f32.mrf.mxu0
      %v4271 = vadd.f32 %v4102, %v4270
      %v4272 = vpop.f32.mrf.mxu0
      %v4273 = vadd.f32 %v4104, %v4272
      %4274 = vmatmul.bf16.gmra.mxu0 %v688
      %v4275 = vpop.f32.mrf.mxu0
      %v4276 = vadd.f32 %v4107, %v4275
      %v4277 = vpop.f32.mrf.mxu0
      %v4278 = vadd.f32 %v4109, %v4277
      %4279 = vmatmul.bf16.gmra.mxu0 %v700
      %v4280 = vpop.f32.mrf.mxu0
      %v4281 = vadd.f32 %v4112, %v4280
      %v4282 = vpop.f32.mrf.mxu0
      %v4283 = vadd.f32 %v4114, %v4282
      %4284 = vmatmul.bf16.gmra.mxu0 %v708
      %v4285 = vpop.f32.mrf.mxu0
      %v4286 = vadd.f32 %v4117, %v4285
      %v4287 = vpop.f32.mrf.mxu0
      %v4288 = vadd.f32 %v4119, %v4287
      %4289 = vmatmul.bf16.gmra.mxu0 %v720
      %v4290 = vpop.f32.mrf.mxu0
      %v4291 = vadd.f32 %v4122, %v4290
      %v4292 = vpop.f32.mrf.mxu0
      %v4293 = vadd.f32 %v4124, %v4292
      %4294 = vmatmul.bf16.gmra.mxu0 %v728
      %v4295 = vpop.f32.mrf.mxu0
      %v4296 = vadd.f32 %v4127, %v4295
      %v4297 = vpop.f32.mrf.mxu0
      %v4298 = vadd.f32 %v4129, %v4297
      %4299 = vmatmul.bf16.gmra.mxu0 %v740
      %v4300 = vpop.f32.mrf.mxu0
      %v4301 = vadd.f32 %v4132, %v4300
      %v4302 = vpop.f32.mrf.mxu0
      %v4303 = vadd.f32 %v4134, %v4302
      %4304 = vmatmul.bf16.gmra.mxu0 %v748
      %v4305 = vpop.f32.mrf.mxu0
      %v4306 = vadd.f32 %v4137, %v4305
      %v4307 = vpop.f32.mrf.mxu0
      %v4308 = vadd.f32 %v4139, %v4307
      %4309 = vmatmul.bf16.gmra.mxu0 %v760
      %v4310 = vpop.f32.mrf.mxu0
      %v4311 = vadd.f32 %v4142, %v4310
      %v4312 = vpop.f32.mrf.mxu0
      %v4313 = vadd.f32 %v4144, %v4312
      %4314 = vmatmul.bf16.gmra.mxu0 %v768
      %v4315 = vpop.f32.mrf.mxu0
      %v4316 = vadd.f32 %v4147, %v4315
      %v4317 = vpop.f32.mrf.mxu0
      %v4318 = vadd.f32 %v4149, %v4317
      %4319 = vmatmul.bf16.gmra.mxu0 %v780
      %v4320 = vpop.f32.mrf.mxu0
      %v4321 = vadd.f32 %v4152, %v4320
      %v4322 = vpop.f32.mrf.mxu0
      %v4323 = vadd.f32 %v4154, %v4322
      %4324 = vmatmul.bf16.gmra.mxu0 %v788
      %v4325 = vpop.f32.mrf.mxu0
      %v4326 = vadd.f32 %v4157, %v4325
      %v4327 = vpop.f32.mrf.mxu0
      %v4328 = vadd.f32 %v4159, %v4327
      %4329 = vmatmul.bf16.gmra.mxu0 %v800
      %v4330 = vpop.f32.mrf.mxu0
      %v4331 = vadd.f32 %v4162, %v4330
      %v4332 = vpop.f32.mrf.mxu0
      %v4333 = vadd.f32 %v4164, %v4332
      %4334 = vmatmul.bf16.gmra.mxu0 %v808
      %v4335 = vpop.f32.mrf.mxu0
      %v4336 = vadd.f32 %v4167, %v4335
      %v4337 = vpop.f32.mrf.mxu0
      %v4338 = vadd.f32 %v4169, %v4337
      %4339 = vmatmul.bf16.gmra.mxu0 %v820
      %v4340 = vpop.f32.mrf.mxu0
      %v4341 = vadd.f32 %v4172, %v4340
      %v4342 = vpop.f32.mrf.mxu0
      %v4343 = vadd.f32 %v4174, %v4342
      %4344 = vmatmul.bf16.gmra.mxu0 %v828
      %v4345 = vpop.f32.mrf.mxu0
      %v4346 = vadd.f32 %v4177, %v4345
      %v4347 = vpop.f32.mrf.mxu0
      %v4348 = vadd.f32 %v4179, %v4347
      %4349 = vmatmul.bf16.gmra.mxu0 %v840
      %v4350 = vpop.f32.mrf.mxu0
      %v4351 = vadd.f32 %v4182, %v4350
      %v4352 = vpop.f32.mrf.mxu0
      %v4353 = vadd.f32 %v4184, %v4352
      %4354 = vmatmul.bf16.gmra.mxu0 %v848
      %v4355 = vpop.f32.mrf.mxu0
      %v4356 = vadd.f32 %v4187, %v4355
      %v4357 = vpop.f32.mrf.mxu0
      %v4358 = vadd.f32 %v4189, %v4357
      %4359 = vmatmul.bf16.gmra.mxu0 %v860
      %v4360 = vpop.f32.mrf.mxu0
      %v4361 = vadd.f32 %v4192, %v4360
      %v4362 = vpop.f32.mrf.mxu0
      %v4363 = vadd.f32 %v4194, %v4362
      %4364 = vmatmul.bf16.gmra.mxu0 %v868
      %v4365 = vpop.f32.mrf.mxu0
      %v4366 = vadd.f32 %v4197, %v4365
      %v4367 = vpop.f32.mrf.mxu0
      %v4368 = vadd.f32 %v4199, %v4367
      %4369 = vmatmul.bf16.gmra.mxu0 %v880
      %v4370 = vpop.f32.mrf.mxu0
      %v4371 = vadd.f32 %v4202, %v4370
      %v4372 = vpop.f32.mrf.mxu0
      %v4373 = vadd.f32 %v4204, %v4372
      %4374 = vmatmul.bf16.gmra.mxu0 %v888
      %v4375 = vpop.f32.mrf.mxu0
      %v4376 = vadd.f32 %v4207, %v4375
      %v4377 = vpop.f32.mrf.mxu0
      %v4378 = vadd.f32 %v4209, %v4377
      %4379 = vmatmul.bf16.gmra.mxu0 %v900
      %v4380 = vpop.f32.mrf.mxu0
      %v4381 = vadd.f32 %v4212, %v4380
      %v4382 = vpop.f32.mrf.mxu0
      %v4383 = vadd.f32 %v4214, %v4382
      %4384 = vmatmul.bf16.gmra.mxu0 %v908
      %v4385 = vpop.f32.mrf.mxu0
      %v4386 = vadd.f32 %v4217, %v4385
      %v4387 = vpop.f32.mrf.mxu0
      %v4388 = vadd.f32 %v4219, %v4387
      %4389 = vdwg.mxu0
      %4390 = vmatpush.bf16.msra.mxu0 %v3496
      %4391 = vmatpush.bf16.msra.mxu0 %v3494
      %4392 = vmatpush.bf16.msra.mxu0 %v3492
      %4393 = vmatpush.bf16.msra.mxu0 %v3490
      %4394 = vmatpush.bf16.msra.mxu0 %v3488
      %4395 = vmatpush.bf16.msra.mxu0 %v3486
      %4396 = vmatpush.bf16.msra.mxu0 %v3484
      %4397 = vmatpush.bf16.msra.mxu0 %v3482
      %4398 = vmatmul.bf16.gmra.mxu0 %v992
      %v4399 = vpop.f32.mrf.mxu0
      %v4400 = vadd.f32 %v4231, %v4399
      %v4401 = vpop.f32.mrf.mxu0
      %v4402 = vadd.f32 %v4233, %v4401
      %4403 = vmatmul.bf16.gmra.mxu0 %v994
      %v4404 = vpop.f32.mrf.mxu0
      %v4405 = vadd.f32 %v4236, %v4404
      %v4406 = vpop.f32.mrf.mxu0
      %v4407 = vadd.f32 %v4238, %v4406
      %4408 = vmatmul.bf16.gmra.mxu0 %v997
      %v4409 = vpop.f32.mrf.mxu0
      %v4410 = vadd.f32 %v4241, %v4409
      %v4411 = vpop.f32.mrf.mxu0
      %v4412 = vadd.f32 %v4243, %v4411
      %4413 = vmatmul.bf16.gmra.mxu0 %v999
      %v4414 = vpop.f32.mrf.mxu0
      %v4415 = vadd.f32 %v4246, %v4414
      %v4416 = vpop.f32.mrf.mxu0
      %v4417 = vadd.f32 %v4248, %v4416
      %4418 = vmatmul.bf16.gmra.mxu0 %v1002
      %v4419 = vpop.f32.mrf.mxu0
      %v4420 = vadd.f32 %v4251, %v4419
      %v4421 = vpop.f32.mrf.mxu0
      %v4422 = vadd.f32 %v4253, %v4421
      %4423 = vmatmul.bf16.gmra.mxu0 %v1004
      %v4424 = vpop.f32.mrf.mxu0
      %v4425 = vadd.f32 %v4256, %v4424
      %v4426 = vpop.f32.mrf.mxu0
      %v4427 = vadd.f32 %v4258, %v4426
      %4428 = vmatmul.bf16.gmra.mxu0 %v1007
      %v4429 = vpop.f32.mrf.mxu0
      %v4430 = vadd.f32 %v4261, %v4429
      %v4431 = vpop.f32.mrf.mxu0
      %v4432 = vadd.f32 %v4263, %v4431
      %4433 = vmatmul.bf16.gmra.mxu0 %v1009
      %v4434 = vpop.f32.mrf.mxu0
      %v4435 = vadd.f32 %v4266, %v4434
      %v4436 = vpop.f32.mrf.mxu0
      %v4437 = vadd.f32 %v4268, %v4436
      %4438 = vmatmul.bf16.gmra.mxu0 %v1012
      %v4439 = vpop.f32.mrf.mxu0
      %v4440 = vadd.f32 %v4271, %v4439
      %v4441 = vpop.f32.mrf.mxu0
      %v4442 = vadd.f32 %v4273, %v4441
      %4443 = vmatmul.bf16.gmra.mxu0 %v1014
      %v4444 = vpop.f32.mrf.mxu0
      %v4445 = vadd.f32 %v4276, %v4444
      %v4446 = vpop.f32.mrf.mxu0
      %v4447 = vadd.f32 %v4278, %v4446
      %4448 = vmatmul.bf16.gmra.mxu0 %v1017
      %v4449 = vpop.f32.mrf.mxu0
      %v4450 = vadd.f32 %v4281, %v4449
      %v4451 = vpop.f32.mrf.mxu0
      %v4452 = vadd.f32 %v4283, %v4451
      %4453 = vmatmul.bf16.gmra.mxu0 %v1019
      %v4454 = vpop.f32.mrf.mxu0
      %v4455 = vadd.f32 %v4286, %v4454
      %v4456 = vpop.f32.mrf.mxu0
      %v4457 = vadd.f32 %v4288, %v4456
      %4458 = vmatmul.bf16.gmra.mxu0 %v1022
      %v4459 = vpop.f32.mrf.mxu0
      %v4460 = vadd.f32 %v4291, %v4459
      %v4461 = vpop.f32.mrf.mxu0
      %v4462 = vadd.f32 %v4293, %v4461
      %4463 = vmatmul.bf16.gmra.mxu0 %v1024
      %v4464 = vpop.f32.mrf.mxu0
      %v4465 = vadd.f32 %v4296, %v4464
      %v4466 = vpop.f32.mrf.mxu0
      %v4467 = vadd.f32 %v4298, %v4466
      %4468 = vmatmul.bf16.gmra.mxu0 %v1027
      %v4469 = vpop.f32.mrf.mxu0
      %v4470 = vadd.f32 %v4301, %v4469
      %v4471 = vpop.f32.mrf.mxu0
      %v4472 = vadd.f32 %v4303, %v4471
      %4473 = vmatmul.bf16.gmra.mxu0 %v1029
      %v4474 = vpop.f32.mrf.mxu0
      %v4475 = vadd.f32 %v4306, %v4474
      %v4476 = vpop.f32.mrf.mxu0
      %v4477 = vadd.f32 %v4308, %v4476
      %4478 = vmatmul.bf16.gmra.mxu0 %v1032
      %v4479 = vpop.f32.mrf.mxu0
      %v4480 = vadd.f32 %v4311, %v4479
      %v4481 = vpop.f32.mrf.mxu0
      %v4482 = vadd.f32 %v4313, %v4481
      %4483 = vmatmul.bf16.gmra.mxu0 %v1034
      %v4484 = vpop.f32.mrf.mxu0
      %v4485 = vadd.f32 %v4316, %v4484
      %v4486 = vpop.f32.mrf.mxu0
      %v4487 = vadd.f32 %v4318, %v4486
      %4488 = vmatmul.bf16.gmra.mxu0 %v1037
      %v4489 = vpop.f32.mrf.mxu0
      %v4490 = vadd.f32 %v4321, %v4489
      %v4491 = vpop.f32.mrf.mxu0
      %v4492 = vadd.f32 %v4323, %v4491
      %4493 = vmatmul.bf16.gmra.mxu0 %v1039
      %v4494 = vpop.f32.mrf.mxu0
      %v4495 = vadd.f32 %v4326, %v4494
      %v4496 = vpop.f32.mrf.mxu0
      %v4497 = vadd.f32 %v4328, %v4496
      %4498 = vmatmul.bf16.gmra.mxu0 %v1042
      %v4499 = vpop.f32.mrf.mxu0
      %v4500 = vadd.f32 %v4331, %v4499
      %v4501 = vpop.f32.mrf.mxu0
      %v4502 = vadd.f32 %v4333, %v4501
      %4503 = vmatmul.bf16.gmra.mxu0 %v1044
      %v4504 = vpop.f32.mrf.mxu0
      %v4505 = vadd.f32 %v4336, %v4504
      %v4506 = vpop.f32.mrf.mxu0
      %v4507 = vadd.f32 %v4338, %v4506
      %4508 = vmatmul.bf16.gmra.mxu0 %v1047
      %v4509 = vpop.f32.mrf.mxu0
      %v4510 = vadd.f32 %v4341, %v4509
      %v4511 = vpop.f32.mrf.mxu0
      %v4512 = vadd.f32 %v4343, %v4511
      %4513 = vmatmul.bf16.gmra.mxu0 %v1049
      %v4514 = vpop.f32.mrf.mxu0
      %v4515 = vadd.f32 %v4346, %v4514
      %v4516 = vpop.f32.mrf.mxu0
      %v4517 = vadd.f32 %v4348, %v4516
      %4518 = vmatmul.bf16.gmra.mxu0 %v1052
      %v4519 = vpop.f32.mrf.mxu0
      %v4520 = vadd.f32 %v4351, %v4519
      %v4521 = vpop.f32.mrf.mxu0
      %v4522 = vadd.f32 %v4353, %v4521
      %4523 = vmatmul.bf16.gmra.mxu0 %v1054
      %v4524 = vpop.f32.mrf.mxu0
      %v4525 = vadd.f32 %v4356, %v4524
      %v4526 = vpop.f32.mrf.mxu0
      %v4527 = vadd.f32 %v4358, %v4526
      %4528 = vmatmul.bf16.gmra.mxu0 %v1057
      %v4529 = vpop.f32.mrf.mxu0
      %v4530 = vadd.f32 %v4361, %v4529
      %v4531 = vpop.f32.mrf.mxu0
      %v4532 = vadd.f32 %v4363, %v4531
      %4533 = vmatmul.bf16.gmra.mxu0 %v1059
      %v4534 = vpop.f32.mrf.mxu0
      %v4535 = vadd.f32 %v4366, %v4534
      %v4536 = vpop.f32.mrf.mxu0
      %v4537 = vadd.f32 %v4368, %v4536
      %4538 = vmatmul.bf16.gmra.mxu0 %v1062
      %v4539 = vpop.f32.mrf.mxu0
      %v4540 = vadd.f32 %v4371, %v4539
      %v4541 = vpop.f32.mrf.mxu0
      %v4542 = vadd.f32 %v4373, %v4541
      %4543 = vmatmul.bf16.gmra.mxu0 %v1064
      %v4544 = vpop.f32.mrf.mxu0
      %v4545 = vadd.f32 %v4376, %v4544
      %v4546 = vpop.f32.mrf.mxu0
      %v4547 = vadd.f32 %v4378, %v4546
      %4548 = vmatmul.bf16.gmra.mxu0 %v1067
      %v4549 = vpop.f32.mrf.mxu0
      %v4550 = vadd.f32 %v4381, %v4549
      %v4551 = vpop.f32.mrf.mxu0
      %v4552 = vadd.f32 %v4383, %v4551
      %4553 = vmatmul.bf16.gmra.mxu0 %v1069
      %v4554 = vpop.f32.mrf.mxu0
      %v4555 = vadd.f32 %v4386, %v4554
      %v4556 = vpop.f32.mrf.mxu0
      %v4557 = vadd.f32 %v4388, %v4556
      %4558 = vdwg.mxu0
      %s4559 = sadd.s32 %s248, 2
      %s4560 = smul.u32 %s4559, 5
      %s4561 = smul.addr %s4560, 4
      %s4562 = scalar_lea.vmem %s237, %s4561
      %v4563 = vld [vmem:[%s4562] sm:$0xf]
      %v4564 = vld [vmem:[%s4562 + $0x4] sm:$0xf]
      %v4565 = vld [vmem:[%s4562 + $0x8] sm:$0xf]
      %v4566 = vld [vmem:[%s4562 + $0xc] sm:$0xf]
      %v4567 = vld [vmem:[%s4562 + $0x14] sm:$0xf]
      %v4568 = vld [vmem:[%s4562 + $0x18] sm:$0xf]
      %v4569 = vld [vmem:[%s4562 + $0x1c] sm:$0xf]
      %v4570 = vld [vmem:[%s4562 + $0x20] sm:$0xf]
      %v4571 = vld [vmem:[%s4562 + $0x28] sm:$0xf]
      %v4572 = vld [vmem:[%s4562 + $0x2c] sm:$0xf]
      %v4573 = vld [vmem:[%s4562 + $0x30] sm:$0xf]
      %v4574 = vld [vmem:[%s4562 + $0x34] sm:$0xf]
      %v4575 = vld [vmem:[%s4562 + $0x3c] sm:$0xf]
      %v4576 = vld [vmem:[%s4562 + $0x40] sm:$0xf]
      %v4577 = vld [vmem:[%s4562 + $0x44] sm:$0xf]
      %v4578 = vld [vmem:[%s4562 + $0x48] sm:$0xf]
      %v4579 = vld [vmem:[%s4562 + $0x50] sm:$0xf]
      %v4580 = vld [vmem:[%s4562 + $0x54] sm:$0xf]
      %v4581 = vld [vmem:[%s4562 + $0x58] sm:$0xf]
      %v4582 = vld [vmem:[%s4562 + $0x5c] sm:$0xf]
      %v4583 = vld [vmem:[%s4562 + $0x64] sm:$0xf]
      %v4584 = vld [vmem:[%s4562 + $0x68] sm:$0xf]
      %v4585 = vld [vmem:[%s4562 + $0x6c] sm:$0xf]
      %v4586 = vld [vmem:[%s4562 + $0x70] sm:$0xf]
      %v4587 = vld [vmem:[%s4562 + $0x78] sm:$0xf]
      %v4588 = vld [vmem:[%s4562 + $0x7c] sm:$0xf]
      %v4589 = vld [vmem:[%s4562 + $0x80] sm:$0xf]
      %v4590 = vld [vmem:[%s4562 + $0x84] sm:$0xf]
      %v4591 = vld [vmem:[%s4562 + $0x8c] sm:$0xf]
      %v4592 = vld [vmem:[%s4562 + $0x90] sm:$0xf]
      %v4593 = vld [vmem:[%s4562 + $0x94] sm:$0xf]
      %v4594 = vld [vmem:[%s4562 + $0x98] sm:$0xf]
      %v4595 = vld [vmem:[%s4562 + $0xa0] sm:$0xf]
      %v4596 = vld [vmem:[%s4562 + $0xa4] sm:$0xf]
      %v4597 = vld [vmem:[%s4562 + $0xa8] sm:$0xf]
      %v4598 = vld [vmem:[%s4562 + $0xac] sm:$0xf]
      %v4599 = vld [vmem:[%s4562 + $0xb4] sm:$0xf]
      %v4600 = vld [vmem:[%s4562 + $0xb8] sm:$0xf]
      %v4601 = vld [vmem:[%s4562 + $0xbc] sm:$0xf]
      %v4602 = vld [vmem:[%s4562 + $0xc0] sm:$0xf]
      %v4603 = vld [vmem:[%s4562 + $0xc8] sm:$0xf]
      %v4604 = vld [vmem:[%s4562 + $0xcc] sm:$0xf]
      %v4605 = vld [vmem:[%s4562 + $0xd0] sm:$0xf]
      %v4606 = vld [vmem:[%s4562 + $0xd4] sm:$0xf]
      %v4607 = vld [vmem:[%s4562 + $0xdc] sm:$0xf]
      %v4608 = vld [vmem:[%s4562 + $0xe0] sm:$0xf]
      %v4609 = vld [vmem:[%s4562 + $0xe4] sm:$0xf]
      %v4610 = vld [vmem:[%s4562 + $0xe8] sm:$0xf]
      %v4611 = vld [vmem:[%s4562 + $0xf0] sm:$0xf]
      %v4612 = vld [vmem:[%s4562 + $0xf4] sm:$0xf]
      %v4613 = vld [vmem:[%s4562 + $0xf8] sm:$0xf]
      %v4614 = vld [vmem:[%s4562 + $0xfc] sm:$0xf]
      %v4615 = vld [vmem:[%s4562 + $0x104] sm:$0xf]
      %v4616 = vld [vmem:[%s4562 + $0x108] sm:$0xf]
      %v4617 = vld [vmem:[%s4562 + $0x10c] sm:$0xf]
      %v4618 = vld [vmem:[%s4562 + $0x110] sm:$0xf]
      %v4619 = vld [vmem:[%s4562 + $0x118] sm:$0xf]
      %v4620 = vld [vmem:[%s4562 + $0x11c] sm:$0xf]
      %v4621 = vld [vmem:[%s4562 + $0x120] sm:$0xf]
      %v4622 = vld [vmem:[%s4562 + $0x124] sm:$0xf]
      %v4623 = vld [vmem:[%s4562 + $0x12c] sm:$0xf]
      %v4624 = vld [vmem:[%s4562 + $0x130] sm:$0xf]
      %v4625 = vld [vmem:[%s4562 + $0x134] sm:$0xf]
      %v4626 = vld [vmem:[%s4562 + $0x138] sm:$0xf]
      %v4627 = vld [vmem:[%s4562 + $0x10] sm:$0x1]
      %v4628 = vld [vmem:[%s4562 + $0x24] sm:$0x1]
      %v4629 = vld [vmem:[%s4562 + $0x38] sm:$0x1]
      %v4630 = vld [vmem:[%s4562 + $0x4c] sm:$0x1]
      %v4631 = vld [vmem:[%s4562 + $0x60] sm:$0x1]
      %v4632 = vld [vmem:[%s4562 + $0x74] sm:$0x1]
      %v4633 = vld [vmem:[%s4562 + $0x88] sm:$0x1]
      %v4634 = vld [vmem:[%s4562 + $0x9c] sm:$0x1]
      %v4635 = vld [vmem:[%s4562 + $0xb0] sm:$0x1]
      %v4636 = vld [vmem:[%s4562 + $0xc4] sm:$0x1]
      %v4637 = vld [vmem:[%s4562 + $0xd8] sm:$0x1]
      %v4638 = vld [vmem:[%s4562 + $0xec] sm:$0x1]
      %v4639 = vld [vmem:[%s4562 + $0x100] sm:$0x1]
      %v4640 = vld [vmem:[%s4562 + $0x114] sm:$0x1]
      %v4641 = vld [vmem:[%s4562 + $0x128] sm:$0x1]
      %v4642 = vld [vmem:[%s4562 + $0x13c] sm:$0x1]
      %v4643 = vld [vmem:[%s4562] sm:$0xe]
      %v4644 = vld [vmem:[%s4562 + $0x14] sm:$0xe]
      %v4645 = vld [vmem:[%s4562 + $0x28] sm:$0xe]
      %v4646 = vld [vmem:[%s4562 + $0x3c] sm:$0xe]
      %v4647 = vld [vmem:[%s4562 + $0x50] sm:$0xe]
      %v4648 = vld [vmem:[%s4562 + $0x64] sm:$0xe]
      %v4649 = vld [vmem:[%s4562 + $0x78] sm:$0xe]
      %v4650 = vld [vmem:[%s4562 + $0x8c] sm:$0xe]
      %v4651 = vld [vmem:[%s4562 + $0xa0] sm:$0xe]
      %v4652 = vld [vmem:[%s4562 + $0xb4] sm:$0xe]
      %v4653 = vld [vmem:[%s4562 + $0xc8] sm:$0xe]
      %v4654 = vld [vmem:[%s4562 + $0xdc] sm:$0xe]
      %v4655 = vld [vmem:[%s4562 + $0xf0] sm:$0xe]
      %v4656 = vld [vmem:[%s4562 + $0x104] sm:$0xe]
      %v4657 = vld [vmem:[%s4562 + $0x118] sm:$0xe]
      %v4658 = vld [vmem:[%s4562 + $0x12c] sm:$0xe]
      %v4723 = vunpack.c.l.b16 %v4563
      %v4724 = vunpack.c.l.b16 %v4564
      %v4725 = vunpack.c.l.b16 %v4565
      %v4726 = vunpack.c.l.b16 %v4566
      %v4727 = vunpack.c.l.b16 %v4567
      %v4728 = vunpack.c.l.b16 %v4568
      %v4729 = vunpack.c.l.b16 %v4569
      %v4730 = vunpack.c.l.b16 %v4570
      %v4731 = vunpack.c.l.b16 %v4571
      %v4732 = vunpack.c.l.b16 %v4572
      %v4733 = vunpack.c.l.b16 %v4573
      %v4734 = vunpack.c.l.b16 %v4574
      %v4735 = vunpack.c.l.b16 %v4575
      %v4736 = vunpack.c.l.b16 %v4576
      %v4737 = vunpack.c.l.b16 %v4577
      %v4738 = vunpack.c.l.b16 %v4578
      %v4739 = vunpack.c.l.b16 %v4579
      %v4740 = vunpack.c.l.b16 %v4580
      %v4741 = vunpack.c.l.b16 %v4581
      %v4742 = vunpack.c.l.b16 %v4582
      %v4743 = vunpack.c.l.b16 %v4583
      %v4744 = vunpack.c.l.b16 %v4584
      %v4745 = vunpack.c.l.b16 %v4585
      %v4746 = vunpack.c.l.b16 %v4586
      %v4747 = vunpack.c.l.b16 %v4587
      %v4748 = vunpack.c.l.b16 %v4588
      %v4749 = vunpack.c.l.b16 %v4589
      %v4750 = vunpack.c.l.b16 %v4590
      %v4751 = vunpack.c.l.b16 %v4591
      %v4752 = vunpack.c.l.b16 %v4592
      %v4753 = vunpack.c.l.b16 %v4593
      %v4754 = vunpack.c.l.b16 %v4594
      %v4755 = vunpack.c.l.b16 %v4595
      %v4756 = vunpack.c.l.b16 %v4596
      %v4757 = vunpack.c.l.b16 %v4597
      %v4758 = vunpack.c.l.b16 %v4598
      %v4759 = vunpack.c.l.b16 %v4599
      %v4760 = vunpack.c.l.b16 %v4600
      %v4761 = vunpack.c.l.b16 %v4601
      %v4762 = vunpack.c.l.b16 %v4602
      %v4763 = vunpack.c.l.b16 %v4603
      %v4764 = vunpack.c.l.b16 %v4604
      %v4765 = vunpack.c.l.b16 %v4605
      %v4766 = vunpack.c.l.b16 %v4606
      %v4767 = vunpack.c.l.b16 %v4607
      %v4768 = vunpack.c.l.b16 %v4608
      %v4769 = vunpack.c.l.b16 %v4609
      %v4770 = vunpack.c.l.b16 %v4610
      %v4771 = vunpack.c.l.b16 %v4611
      %v4772 = vunpack.c.l.b16 %v4612
      %v4773 = vunpack.c.l.b16 %v4613
      %v4774 = vunpack.c.l.b16 %v4614
      %v4775 = vunpack.c.l.b16 %v4615
      %v4776 = vunpack.c.l.b16 %v4616
      %v4777 = vunpack.c.l.b16 %v4617
      %v4778 = vunpack.c.l.b16 %v4618
      %v4779 = vunpack.c.l.b16 %v4619
      %v4780 = vunpack.c.l.b16 %v4620
      %v4781 = vunpack.c.l.b16 %v4621
      %v4782 = vunpack.c.l.b16 %v4622
      %v4783 = vunpack.c.l.b16 %v4623
      %v4784 = vunpack.c.l.b16 %v4624
      %v4785 = vunpack.c.l.b16 %v4625
      %v4786 = vunpack.c.l.b16 %v4626
      %v4787 = vpack.c.b16 %v4724, %v4723
      %v4788 = vpack.c.b16 %v4726, %v4725
      %v4789 = vpack.c.b16 %v4728, %v4727
      %v4790 = vpack.c.b16 %v4730, %v4729
      %v4791 = vpack.c.b16 %v4732, %v4731
      %v4792 = vpack.c.b16 %v4734, %v4733
      %v4793 = vpack.c.b16 %v4736, %v4735
      %v4794 = vpack.c.b16 %v4738, %v4737
      %v4795 = vpack.c.b16 %v4740, %v4739
      %v4796 = vpack.c.b16 %v4742, %v4741
      %v4797 = vpack.c.b16 %v4744, %v4743
      %v4798 = vpack.c.b16 %v4746, %v4745
      %v4799 = vpack.c.b16 %v4748, %v4747
      %v4800 = vpack.c.b16 %v4750, %v4749
      %v4801 = vpack.c.b16 %v4752, %v4751
      %v4802 = vpack.c.b16 %v4754, %v4753
      %v4803 = vpack.c.b16 %v4756, %v4755
      %v4804 = vpack.c.b16 %v4758, %v4757
      %v4805 = vpack.c.b16 %v4760, %v4759
      %v4806 = vpack.c.b16 %v4762, %v4761
      %v4807 = vpack.c.b16 %v4764, %v4763
      %v4808 = vpack.c.b16 %v4766, %v4765
      %v4809 = vpack.c.b16 %v4768, %v4767
      %v4810 = vpack.c.b16 %v4770, %v4769
      %v4811 = vpack.c.b16 %v4772, %v4771
      %v4812 = vpack.c.b16 %v4774, %v4773
      %v4813 = vpack.c.b16 %v4776, %v4775
      %v4814 = vpack.c.b16 %v4778, %v4777
      %v4815 = vpack.c.b16 %v4780, %v4779
      %v4816 = vpack.c.b16 %v4782, %v4781
      %v4817 = vpack.c.b16 %v4784, %v4783
      %v4818 = vpack.c.b16 %v4786, %v4785
      %v4867 = vunpack.c.l.b16 %v4627
      %v4868 = vunpack.c.l.b16 %v4628
      %v4869 = vunpack.c.l.b16 %v4629
      %v4870 = vunpack.c.l.b16 %v4630
      %v4871 = vunpack.c.l.b16 %v4631
      %v4872 = vunpack.c.l.b16 %v4632
      %v4873 = vunpack.c.l.b16 %v4633
      %v4874 = vunpack.c.l.b16 %v4634
      %v4875 = vunpack.c.l.b16 %v4635
      %v4876 = vunpack.c.l.b16 %v4636
      %v4877 = vunpack.c.l.b16 %v4637
      %v4878 = vunpack.c.l.b16 %v4638
      %v4879 = vunpack.c.l.b16 %v4639
      %v4880 = vunpack.c.l.b16 %v4640
      %v4881 = vunpack.c.l.b16 %v4641
      %v4882 = vunpack.c.l.b16 %v4642
      %v4883 = vpack.c.b16 %v4867, %v4867
      %v4884 = vpack.c.b16 %v4868, %v4868
      %v4885 = vpack.c.b16 %v4869, %v4869
      %v4886 = vpack.c.b16 %v4870, %v4870
      %v4887 = vpack.c.b16 %v4871, %v4871
      %v4888 = vpack.c.b16 %v4872, %v4872
      %v4889 = vpack.c.b16 %v4873, %v4873
      %v4890 = vpack.c.b16 %v4874, %v4874
      %v4891 = vpack.c.b16 %v4875, %v4875
      %v4892 = vpack.c.b16 %v4876, %v4876
      %v4893 = vpack.c.b16 %v4877, %v4877
      %v4894 = vpack.c.b16 %v4878, %v4878
      %v4895 = vpack.c.b16 %v4879, %v4879
      %v4896 = vpack.c.b16 %v4880, %v4880
      %v4897 = vpack.c.b16 %v4881, %v4881
      %v4898 = vpack.c.b16 %v4882, %v4882
      %v4900 = vshrl.u32 %v4787, 16
      %v4902 = vshll.u32 %v4787, 16
      %v4904 = vrot.slane %v4902, 1
      %v4905 = vor.u32 %v4900, %v4904
      %v4907 = vshll.u32 %v4788, 16
      %v4909 = vrot.slane %v4907, 1
      %v4910 = vsel %vm588, %v4905, %v4909
      %v4911 = vshrl.u32 %v4788, 16
      %v4913 = vor.u32 %v4911, %v4909
      %v4915 = vshll.u32 %v4883, 16
      %v4917 = vrot.slane %v4915, 1
      %v4918 = vsel %vm588, %v4913, %v4917
      %v4920 = vshrl.u32 %v4789, 16
      %v4922 = vshll.u32 %v4789, 16
      %v4924 = vrot.slane %v4922, 1
      %v4925 = vor.u32 %v4920, %v4924
      %v4927 = vshll.u32 %v4790, 16
      %v4929 = vrot.slane %v4927, 1
      %v4930 = vsel %vm588, %v4925, %v4929
      %v4931 = vshrl.u32 %v4790, 16
      %v4933 = vor.u32 %v4931, %v4929
      %v4935 = vshll.u32 %v4884, 16
      %v4937 = vrot.slane %v4935, 1
      %v4938 = vsel %vm588, %v4933, %v4937
      %v4940 = vshrl.u32 %v4791, 16
      %v4942 = vshll.u32 %v4791, 16
      %v4944 = vrot.slane %v4942, 1
      %v4945 = vor.u32 %v4940, %v4944
      %v4947 = vshll.u32 %v4792, 16
      %v4949 = vrot.slane %v4947, 1
      %v4950 = vsel %vm588, %v4945, %v4949
      %v4951 = vshrl.u32 %v4792, 16
      %v4953 = vor.u32 %v4951, %v4949
      %v4955 = vshll.u32 %v4885, 16
      %v4957 = vrot.slane %v4955, 1
      %v4958 = vsel %vm588, %v4953, %v4957
      %v4960 = vshrl.u32 %v4793, 16
      %v4962 = vshll.u32 %v4793, 16
      %v4964 = vrot.slane %v4962, 1
      %v4965 = vor.u32 %v4960, %v4964
      %v4967 = vshll.u32 %v4794, 16
      %v4969 = vrot.slane %v4967, 1
      %v4970 = vsel %vm588, %v4965, %v4969
      %v4971 = vshrl.u32 %v4794, 16
      %v4973 = vor.u32 %v4971, %v4969
      %v4975 = vshll.u32 %v4886, 16
      %v4977 = vrot.slane %v4975, 1
      %v4978 = vsel %vm588, %v4973, %v4977
      %v4980 = vshrl.u32 %v4795, 16
      %v4982 = vshll.u32 %v4795, 16
      %v4984 = vrot.slane %v4982, 1
      %v4985 = vor.u32 %v4980, %v4984
      %v4987 = vshll.u32 %v4796, 16
      %v4989 = vrot.slane %v4987, 1
      %v4990 = vsel %vm588, %v4985, %v4989
      %v4991 = vshrl.u32 %v4796, 16
      %v4993 = vor.u32 %v4991, %v4989
      %v4995 = vshll.u32 %v4887, 16
      %v4997 = vrot.slane %v4995, 1
      %v4998 = vsel %vm588, %v4993, %v4997
      %v5000 = vshrl.u32 %v4797, 16
      %v5002 = vshll.u32 %v4797, 16
      %v5004 = vrot.slane %v5002, 1
      %v5005 = vor.u32 %v5000, %v5004
      %v5007 = vshll.u32 %v4798, 16
      %v5009 = vrot.slane %v5007, 1
      %v5010 = vsel %vm588, %v5005, %v5009
      %v5011 = vshrl.u32 %v4798, 16
      %v5013 = vor.u32 %v5011, %v5009
      %v5015 = vshll.u32 %v4888, 16
      %v5017 = vrot.slane %v5015, 1
      %v5018 = vsel %vm588, %v5013, %v5017
      %v5020 = vshrl.u32 %v4799, 16
      %v5022 = vshll.u32 %v4799, 16
      %v5024 = vrot.slane %v5022, 1
      %v5025 = vor.u32 %v5020, %v5024
      %v5027 = vshll.u32 %v4800, 16
      %v5029 = vrot.slane %v5027, 1
      %v5030 = vsel %vm588, %v5025, %v5029
      %v5031 = vshrl.u32 %v4800, 16
      %v5033 = vor.u32 %v5031, %v5029
      %v5035 = vshll.u32 %v4889, 16
      %v5037 = vrot.slane %v5035, 1
      %v5038 = vsel %vm588, %v5033, %v5037
      %v5040 = vshrl.u32 %v4801, 16
      %v5042 = vshll.u32 %v4801, 16
      %v5044 = vrot.slane %v5042, 1
      %v5045 = vor.u32 %v5040, %v5044
      %v5047 = vshll.u32 %v4802, 16
      %v5049 = vrot.slane %v5047, 1
      %v5050 = vsel %vm588, %v5045, %v5049
      %v5051 = vshrl.u32 %v4802, 16
      %v5053 = vor.u32 %v5051, %v5049
      %v5055 = vshll.u32 %v4890, 16
      %v5057 = vrot.slane %v5055, 1
      %v5058 = vsel %vm588, %v5053, %v5057
      %v5060 = vshrl.u32 %v4803, 16
      %v5062 = vshll.u32 %v4803, 16
      %v5064 = vrot.slane %v5062, 1
      %v5065 = vor.u32 %v5060, %v5064
      %v5067 = vshll.u32 %v4804, 16
      %v5069 = vrot.slane %v5067, 1
      %v5070 = vsel %vm588, %v5065, %v5069
      %v5071 = vshrl.u32 %v4804, 16
      %v5073 = vor.u32 %v5071, %v5069
      %v5075 = vshll.u32 %v4891, 16
      %v5077 = vrot.slane %v5075, 1
      %v5078 = vsel %vm588, %v5073, %v5077
      %v5080 = vshrl.u32 %v4805, 16
      %v5082 = vshll.u32 %v4805, 16
      %v5084 = vrot.slane %v5082, 1
      %v5085 = vor.u32 %v5080, %v5084
      %v5087 = vshll.u32 %v4806, 16
      %v5089 = vrot.slane %v5087, 1
      %v5090 = vsel %vm588, %v5085, %v5089
      %v5091 = vshrl.u32 %v4806, 16
      %v5093 = vor.u32 %v5091, %v5089
      %v5095 = vshll.u32 %v4892, 16
      %v5097 = vrot.slane %v5095, 1
      %v5098 = vsel %vm588, %v5093, %v5097
      %v5100 = vshrl.u32 %v4807, 16
      %v5102 = vshll.u32 %v4807, 16
      %v5104 = vrot.slane %v5102, 1
      %v5105 = vor.u32 %v5100, %v5104
      %v5107 = vshll.u32 %v4808, 16
      %v5109 = vrot.slane %v5107, 1
      %v5110 = vsel %vm588, %v5105, %v5109
      %v5111 = vshrl.u32 %v4808, 16
      %v5113 = vor.u32 %v5111, %v5109
      %v5115 = vshll.u32 %v4893, 16
      %v5117 = vrot.slane %v5115, 1
      %v5118 = vsel %vm588, %v5113, %v5117
      %v5120 = vshrl.u32 %v4809, 16
      %v5122 = vshll.u32 %v4809, 16
      %v5124 = vrot.slane %v5122, 1
      %v5125 = vor.u32 %v5120, %v5124
      %v5127 = vshll.u32 %v4810, 16
      %v5129 = vrot.slane %v5127, 1
      %v5130 = vsel %vm588, %v5125, %v5129
      %v5131 = vshrl.u32 %v4810, 16
      %v5133 = vor.u32 %v5131, %v5129
      %v5135 = vshll.u32 %v4894, 16
      %v5137 = vrot.slane %v5135, 1
      %v5138 = vsel %vm588, %v5133, %v5137
      %v5140 = vshrl.u32 %v4811, 16
      %v5142 = vshll.u32 %v4811, 16
      %v5144 = vrot.slane %v5142, 1
      %v5145 = vor.u32 %v5140, %v5144
      %v5147 = vshll.u32 %v4812, 16
      %v5149 = vrot.slane %v5147, 1
      %v5150 = vsel %vm588, %v5145, %v5149
      %v5151 = vshrl.u32 %v4812, 16
      %v5153 = vor.u32 %v5151, %v5149
      %v5155 = vshll.u32 %v4895, 16
      %v5157 = vrot.slane %v5155, 1
      %v5158 = vsel %vm588, %v5153, %v5157
      %v5160 = vshrl.u32 %v4813, 16
      %v5162 = vshll.u32 %v4813, 16
      %v5164 = vrot.slane %v5162, 1
      %v5165 = vor.u32 %v5160, %v5164
      %v5167 = vshll.u32 %v4814, 16
      %v5169 = vrot.slane %v5167, 1
      %v5170 = vsel %vm588, %v5165, %v5169
      %v5171 = vshrl.u32 %v4814, 16
      %v5173 = vor.u32 %v5171, %v5169
      %v5175 = vshll.u32 %v4896, 16
      %v5177 = vrot.slane %v5175, 1
      %v5178 = vsel %vm588, %v5173, %v5177
      %v5180 = vshrl.u32 %v4815, 16
      %v5182 = vshll.u32 %v4815, 16
      %v5184 = vrot.slane %v5182, 1
      %v5185 = vor.u32 %v5180, %v5184
      %v5187 = vshll.u32 %v4816, 16
      %v5189 = vrot.slane %v5187, 1
      %v5190 = vsel %vm588, %v5185, %v5189
      %v5191 = vshrl.u32 %v4816, 16
      %v5193 = vor.u32 %v5191, %v5189
      %v5195 = vshll.u32 %v4897, 16
      %v5197 = vrot.slane %v5195, 1
      %v5198 = vsel %vm588, %v5193, %v5197
      %v5200 = vshrl.u32 %v4817, 16
      %v5202 = vshll.u32 %v4817, 16
      %v5204 = vrot.slane %v5202, 1
      %v5205 = vor.u32 %v5200, %v5204
      %v5207 = vshll.u32 %v4818, 16
      %v5209 = vrot.slane %v5207, 1
      %v5210 = vsel %vm588, %v5205, %v5209
      %v5211 = vshrl.u32 %v4818, 16
      %v5213 = vor.u32 %v5211, %v5209
      %v5215 = vshll.u32 %v4898, 16
      %v5217 = vrot.slane %v5215, 1
      %v5218 = vsel %vm588, %v5213, %v5217
      %v5267 = vunpack.c.l.b16 %v4643
      %v5268 = vunpack.c.l.b16 %v4644
      %v5269 = vunpack.c.l.b16 %v4645
      %v5270 = vunpack.c.l.b16 %v4646
      %v5271 = vunpack.c.l.b16 %v4647
      %v5272 = vunpack.c.l.b16 %v4648
      %v5273 = vunpack.c.l.b16 %v4649
      %v5274 = vunpack.c.l.b16 %v4650
      %v5275 = vunpack.c.l.b16 %v4651
      %v5276 = vunpack.c.l.b16 %v4652
      %v5277 = vunpack.c.l.b16 %v4653
      %v5278 = vunpack.c.l.b16 %v4654
      %v5279 = vunpack.c.l.b16 %v4655
      %v5280 = vunpack.c.l.b16 %v4656
      %v5281 = vunpack.c.l.b16 %v4657
      %v5282 = vunpack.c.l.b16 %v4658
      %v5283 = vpack.c.b16 %v4724, %v5267
      %v5284 = vpack.c.b16 %v4728, %v5268
      %v5285 = vpack.c.b16 %v4732, %v5269
      %v5286 = vpack.c.b16 %v4736, %v5270
      %v5287 = vpack.c.b16 %v4740, %v5271
      %v5288 = vpack.c.b16 %v4744, %v5272
      %v5289 = vpack.c.b16 %v4748, %v5273
      %v5290 = vpack.c.b16 %v4752, %v5274
      %v5291 = vpack.c.b16 %v4756, %v5275
      %v5292 = vpack.c.b16 %v4760, %v5276
      %v5293 = vpack.c.b16 %v4764, %v5277
      %v5294 = vpack.c.b16 %v4768, %v5278
      %v5295 = vpack.c.b16 %v4772, %v5279
      %v5296 = vpack.c.b16 %v4776, %v5280
      %v5297 = vpack.c.b16 %v4780, %v5281
      %v5298 = vpack.c.b16 %v4784, %v5282
      %v5299 = vrot.slane %v5283, 1
      %v5300 = vrot.slane %v4788, 1
      %v5301 = vsel %vm989, %v5299, %v5300
      %v5302 = vrot.slane %v4883, 1
      %v5303 = vsel %vm989, %v5300, %v5302
      %v5304 = vrot.slane %v5284, 1
      %v5305 = vrot.slane %v4790, 1
      %v5306 = vsel %vm989, %v5304, %v5305
      %v5307 = vrot.slane %v4884, 1
      %v5308 = vsel %vm989, %v5305, %v5307
      %v5309 = vrot.slane %v5285, 1
      %v5310 = vrot.slane %v4792, 1
      %v5311 = vsel %vm989, %v5309, %v5310
      %v5312 = vrot.slane %v4885, 1
      %v5313 = vsel %vm989, %v5310, %v5312
      %v5314 = vrot.slane %v5286, 1
      %v5315 = vrot.slane %v4794, 1
      %v5316 = vsel %vm989, %v5314, %v5315
      %v5317 = vrot.slane %v4886, 1
      %v5318 = vsel %vm989, %v5315, %v5317
      %v5319 = vrot.slane %v5287, 1
      %v5320 = vrot.slane %v4796, 1
      %v5321 = vsel %vm989, %v5319, %v5320
      %v5322 = vrot.slane %v4887, 1
      %v5323 = vsel %vm989, %v5320, %v5322
      %v5324 = vrot.slane %v5288, 1
      %v5325 = vrot.slane %v4798, 1
      %v5326 = vsel %vm989, %v5324, %v5325
      %v5327 = vrot.slane %v4888, 1
      %v5328 = vsel %vm989, %v5325, %v5327
      %v5329 = vrot.slane %v5289, 1
      %v5330 = vrot.slane %v4800, 1
      %v5331 = vsel %vm989, %v5329, %v5330
      %v5332 = vrot.slane %v4889, 1
      %v5333 = vsel %vm989, %v5330, %v5332
      %v5334 = vrot.slane %v5290, 1
      %v5335 = vrot.slane %v4802, 1
      %v5336 = vsel %vm989, %v5334, %v5335
      %v5337 = vrot.slane %v4890, 1
      %v5338 = vsel %vm989, %v5335, %v5337
      %v5339 = vrot.slane %v5291, 1
      %v5340 = vrot.slane %v4804, 1
      %v5341 = vsel %vm989, %v5339, %v5340
      %v5342 = vrot.slane %v4891, 1
      %v5343 = vsel %vm989, %v5340, %v5342
      %v5344 = vrot.slane %v5292, 1
      %v5345 = vrot.slane %v4806, 1
      %v5346 = vsel %vm989, %v5344, %v5345
      %v5347 = vrot.slane %v4892, 1
      %v5348 = vsel %vm989, %v5345, %v5347
      %v5349 = vrot.slane %v5293, 1
      %v5350 = vrot.slane %v4808, 1
      %v5351 = vsel %vm989, %v5349, %v5350
      %v5352 = vrot.slane %v4893, 1
      %v5353 = vsel %vm989, %v5350, %v5352
      %v5354 = vrot.slane %v5294, 1
      %v5355 = vrot.slane %v4810, 1
      %v5356 = vsel %vm989, %v5354, %v5355
      %v5357 = vrot.slane %v4894, 1
      %v5358 = vsel %vm989, %v5355, %v5357
      %v5359 = vrot.slane %v5295, 1
      %v5360 = vrot.slane %v4812, 1
      %v5361 = vsel %vm989, %v5359, %v5360
      %v5362 = vrot.slane %v4895, 1
      %v5363 = vsel %vm989, %v5360, %v5362
      %v5364 = vrot.slane %v5296, 1
      %v5365 = vrot.slane %v4814, 1
      %v5366 = vsel %vm989, %v5364, %v5365
      %v5367 = vrot.slane %v4896, 1
      %v5368 = vsel %vm989, %v5365, %v5367
      %v5369 = vrot.slane %v5297, 1
      %v5370 = vrot.slane %v4816, 1
      %v5371 = vsel %vm989, %v5369, %v5370
      %v5372 = vrot.slane %v4897, 1
      %v5373 = vsel %vm989, %v5370, %v5372
      %v5374 = vrot.slane %v5298, 1
      %v5375 = vrot.slane %v4818, 1
      %v5376 = vsel %vm989, %v5374, %v5375
      %v5377 = vrot.slane %v4898, 1
      %v5378 = vsel %vm989, %v5375, %v5377
      %s5411 = scalar_lea.vmem %s1, 768
      %v5412 = vld [vmem:[%s5411] sm:$0xff]
      %v5413 = vld [vmem:[%s5411 + $0x8] sm:$0xff]
      %v5414 = vld [vmem:[%s5411 + $0x10] sm:$0xff]
      %v5415 = vld [vmem:[%s5411 + $0x18] sm:$0xff]
      %v5416 = vld [vmem:[%s5411 + $0x20] sm:$0xff]
      %v5417 = vld [vmem:[%s5411 + $0x28] sm:$0xff]
      %v5418 = vld [vmem:[%s5411 + $0x30] sm:$0xff]
      %v5419 = vld [vmem:[%s5411 + $0x38] sm:$0xff]
      %v5420 = vld [vmem:[%s5411 + $0x40] sm:$0xff]
      %v5421 = vld [vmem:[%s5411 + $0x48] sm:$0xff]
      %v5422 = vld [vmem:[%s5411 + $0x50] sm:$0xff]
      %v5423 = vld [vmem:[%s5411 + $0x58] sm:$0xff]
      %v5424 = vld [vmem:[%s5411 + $0x60] sm:$0xff]
      %v5425 = vld [vmem:[%s5411 + $0x68] sm:$0xff]
      %v5426 = vld [vmem:[%s5411 + $0x70] sm:$0xff]
      %v5427 = vld [vmem:[%s5411 + $0x78] sm:$0xff]
      %v5428 = vld [vmem:[%s5411 + $0x80] sm:$0xff]
      %v5429 = vld [vmem:[%s5411 + $0x88] sm:$0xff]
      %v5430 = vld [vmem:[%s5411 + $0x90] sm:$0xff]
      %v5431 = vld [vmem:[%s5411 + $0x98] sm:$0xff]
      %v5432 = vld [vmem:[%s5411 + $0xa0] sm:$0xff]
      %v5433 = vld [vmem:[%s5411 + $0xa8] sm:$0xff]
      %v5434 = vld [vmem:[%s5411 + $0xb0] sm:$0xff]
      %v5435 = vld [vmem:[%s5411 + $0xb8] sm:$0xff]
      %v5436 = vld [vmem:[%s5411 + $0xc0] sm:$0xff]
      %v5437 = vld [vmem:[%s5411 + $0xc8] sm:$0xff]
      %v5438 = vld [vmem:[%s5411 + $0xd0] sm:$0xff]
      %v5439 = vld [vmem:[%s5411 + $0xd8] sm:$0xff]
      %v5440 = vld [vmem:[%s5411 + $0xe0] sm:$0xff]
      %v5441 = vld [vmem:[%s5411 + $0xe8] sm:$0xff]
      %v5442 = vld [vmem:[%s5411 + $0xf0] sm:$0xff]
      %v5443 = vld [vmem:[%s5411 + $0xf8] sm:$0xff]
      %v5444 = vld [vmem:[%s5411 + $0x100] sm:$0xff]
      %v5445 = vld [vmem:[%s5411 + $0x108] sm:$0xff]
      %v5446 = vld [vmem:[%s5411 + $0x110] sm:$0xff]
      %v5447 = vld [vmem:[%s5411 + $0x118] sm:$0xff]
      %v5448 = vld [vmem:[%s5411 + $0x120] sm:$0xff]
      %v5449 = vld [vmem:[%s5411 + $0x128] sm:$0xff]
      %v5450 = vld [vmem:[%s5411 + $0x130] sm:$0xff]
      %v5451 = vld [vmem:[%s5411 + $0x138] sm:$0xff]
      %v5452 = vld [vmem:[%s5411 + $0x140] sm:$0xff]
      %v5453 = vld [vmem:[%s5411 + $0x148] sm:$0xff]
      %v5454 = vld [vmem:[%s5411 + $0x150] sm:$0xff]
      %v5455 = vld [vmem:[%s5411 + $0x158] sm:$0xff]
      %v5456 = vld [vmem:[%s5411 + $0x160] sm:$0xff]
      %v5457 = vld [vmem:[%s5411 + $0x168] sm:$0xff]
      %v5458 = vld [vmem:[%s5411 + $0x170] sm:$0xff]
      %v5459 = vld [vmem:[%s5411 + $0x178] sm:$0xff]
      %v5508 = vunpack.c.l.b16 %v5412
      %v5509 = vunpack.c.h.b16 %v5412
      %v5510 = vunpack.c.l.b16 %v5413
      %v5511 = vunpack.c.h.b16 %v5413
      %v5512 = vunpack.c.l.b16 %v5414
      %v5513 = vunpack.c.h.b16 %v5414
      %v5514 = vunpack.c.l.b16 %v5415
      %v5515 = vunpack.c.h.b16 %v5415
      %v5516 = vunpack.c.l.b16 %v5416
      %v5517 = vunpack.c.h.b16 %v5416
      %v5518 = vunpack.c.l.b16 %v5417
      %v5519 = vunpack.c.h.b16 %v5417
      %v5520 = vunpack.c.l.b16 %v5418
      %v5521 = vunpack.c.h.b16 %v5418
      %v5522 = vunpack.c.l.b16 %v5419
      %v5523 = vunpack.c.h.b16 %v5419
      %v5524 = vunpack.c.l.b16 %v5420
      %v5525 = vunpack.c.h.b16 %v5420
      %v5526 = vunpack.c.l.b16 %v5421
      %v5527 = vunpack.c.h.b16 %v5421
      %v5528 = vunpack.c.l.b16 %v5422
      %v5529 = vunpack.c.h.b16 %v5422
      %v5530 = vunpack.c.l.b16 %v5423
      %v5531 = vunpack.c.h.b16 %v5423
      %v5532 = vunpack.c.l.b16 %v5424
      %v5533 = vunpack.c.h.b16 %v5424
      %v5534 = vunpack.c.l.b16 %v5425
      %v5535 = vunpack.c.h.b16 %v5425
      %v5536 = vunpack.c.l.b16 %v5426
      %v5537 = vunpack.c.h.b16 %v5426
      %v5538 = vunpack.c.l.b16 %v5427
      %v5539 = vunpack.c.h.b16 %v5427
      %v5540 = vunpack.c.l.b16 %v5428
      %v5541 = vunpack.c.h.b16 %v5428
      %v5542 = vunpack.c.l.b16 %v5429
      %v5543 = vunpack.c.h.b16 %v5429
      %v5544 = vunpack.c.l.b16 %v5430
      %v5545 = vunpack.c.h.b16 %v5430
      %v5546 = vunpack.c.l.b16 %v5431
      %v5547 = vunpack.c.h.b16 %v5431
      %v5548 = vunpack.c.l.b16 %v5432
      %v5549 = vunpack.c.h.b16 %v5432
      %v5550 = vunpack.c.l.b16 %v5433
      %v5551 = vunpack.c.h.b16 %v5433
      %v5552 = vunpack.c.l.b16 %v5434
      %v5553 = vunpack.c.h.b16 %v5434
      %v5554 = vunpack.c.l.b16 %v5435
      %v5555 = vunpack.c.h.b16 %v5435
      %v5556 = vunpack.c.l.b16 %v5436
      %v5557 = vunpack.c.h.b16 %v5436
      %v5558 = vunpack.c.l.b16 %v5437
      %v5559 = vunpack.c.h.b16 %v5437
      %v5560 = vunpack.c.l.b16 %v5438
      %v5561 = vunpack.c.h.b16 %v5438
      %v5562 = vunpack.c.l.b16 %v5439
      %v5563 = vunpack.c.h.b16 %v5439
      %v5564 = vunpack.c.l.b16 %v5440
      %v5565 = vunpack.c.h.b16 %v5440
      %v5566 = vunpack.c.l.b16 %v5441
      %v5567 = vunpack.c.h.b16 %v5441
      %v5568 = vunpack.c.l.b16 %v5442
      %v5569 = vunpack.c.h.b16 %v5442
      %v5570 = vunpack.c.l.b16 %v5443
      %v5571 = vunpack.c.h.b16 %v5443
      %v5572 = vunpack.c.l.b16 %v5444
      %v5573 = vunpack.c.h.b16 %v5444
      %v5574 = vunpack.c.l.b16 %v5445
      %v5575 = vunpack.c.h.b16 %v5445
      %v5576 = vunpack.c.l.b16 %v5446
      %v5577 = vunpack.c.h.b16 %v5446
      %v5578 = vunpack.c.l.b16 %v5447
      %v5579 = vunpack.c.h.b16 %v5447
      %v5580 = vunpack.c.l.b16 %v5448
      %v5581 = vunpack.c.h.b16 %v5448
      %v5582 = vunpack.c.l.b16 %v5449
      %v5583 = vunpack.c.h.b16 %v5449
      %v5584 = vunpack.c.l.b16 %v5450
      %v5585 = vunpack.c.h.b16 %v5450
      %v5586 = vunpack.c.l.b16 %v5451
      %v5587 = vunpack.c.h.b16 %v5451
      %v5588 = vunpack.c.l.b16 %v5452
      %v5589 = vunpack.c.h.b16 %v5452
      %v5590 = vunpack.c.l.b16 %v5453
      %v5591 = vunpack.c.h.b16 %v5453
      %v5592 = vunpack.c.l.b16 %v5454
      %v5593 = vunpack.c.h.b16 %v5454
      %v5594 = vunpack.c.l.b16 %v5455
      %v5595 = vunpack.c.h.b16 %v5455
      %v5596 = vunpack.c.l.b16 %v5456
      %v5597 = vunpack.c.h.b16 %v5456
      %v5598 = vunpack.c.l.b16 %v5457
      %v5599 = vunpack.c.h.b16 %v5457
      %v5600 = vunpack.c.l.b16 %v5458
      %v5601 = vunpack.c.h.b16 %v5458
      %v5602 = vunpack.c.l.b16 %v5459
      %v5603 = vunpack.c.h.b16 %v5459
      %v5604 = vpack.c.b16 %v5510, %v5508
      %v5605 = vpack.c.b16 %v5511, %v5509
      %v5606 = vpack.c.b16 %v5514, %v5512
      %v5607 = vpack.c.b16 %v5515, %v5513
      %v5608 = vpack.c.b16 %v5518, %v5516
      %v5609 = vpack.c.b16 %v5519, %v5517
      %v5610 = vpack.c.b16 %v5522, %v5520
      %v5611 = vpack.c.b16 %v5523, %v5521
      %v5612 = vpack.c.b16 %v5526, %v5524
      %v5613 = vpack.c.b16 %v5527, %v5525
      %v5614 = vpack.c.b16 %v5530, %v5528
      %v5615 = vpack.c.b16 %v5531, %v5529
      %v5616 = vpack.c.b16 %v5534, %v5532
      %v5617 = vpack.c.b16 %v5535, %v5533
      %v5618 = vpack.c.b16 %v5538, %v5536
      %v5619 = vpack.c.b16 %v5539, %v5537
      %v5620 = vpack.c.b16 %v5542, %v5540
      %v5621 = vpack.c.b16 %v5543, %v5541
      %v5622 = vpack.c.b16 %v5546, %v5544
      %v5623 = vpack.c.b16 %v5547, %v5545
      %v5624 = vpack.c.b16 %v5550, %v5548
      %v5625 = vpack.c.b16 %v5551, %v5549
      %v5626 = vpack.c.b16 %v5554, %v5552
      %v5627 = vpack.c.b16 %v5555, %v5553
      %v5628 = vpack.c.b16 %v5558, %v5556
      %v5629 = vpack.c.b16 %v5559, %v5557
      %v5630 = vpack.c.b16 %v5562, %v5560
      %v5631 = vpack.c.b16 %v5563, %v5561
      %v5632 = vpack.c.b16 %v5566, %v5564
      %v5633 = vpack.c.b16 %v5567, %v5565
      %v5634 = vpack.c.b16 %v5570, %v5568
      %v5635 = vpack.c.b16 %v5571, %v5569
      %v5636 = vpack.c.b16 %v5574, %v5572
      %v5637 = vpack.c.b16 %v5575, %v5573
      %v5638 = vpack.c.b16 %v5578, %v5576
      %v5639 = vpack.c.b16 %v5579, %v5577
      %v5640 = vpack.c.b16 %v5582, %v5580
      %v5641 = vpack.c.b16 %v5583, %v5581
      %v5642 = vpack.c.b16 %v5586, %v5584
      %v5643 = vpack.c.b16 %v5587, %v5585
      %v5644 = vpack.c.b16 %v5590, %v5588
      %v5645 = vpack.c.b16 %v5591, %v5589
      %v5646 = vpack.c.b16 %v5594, %v5592
      %v5647 = vpack.c.b16 %v5595, %v5593
      %v5648 = vpack.c.b16 %v5598, %v5596
      %v5649 = vpack.c.b16 %v5599, %v5597
      %v5650 = vpack.c.b16 %v5602, %v5600
      %v5651 = vpack.c.b16 %v5603, %v5601
      %5700 = vmatpush.bf16.msra.mxu0 %v5618
      %5701 = vmatpush.bf16.msra.mxu0 %v5616
      %5702 = vmatpush.bf16.msra.mxu0 %v5614
      %5703 = vmatpush.bf16.msra.mxu0 %v5612
      %5704 = vmatpush.bf16.msra.mxu0 %v5610
      %5705 = vmatpush.bf16.msra.mxu0 %v5608
      %5706 = vmatpush.bf16.msra.mxu0 %v5606
      %5707 = vmatpush.bf16.msra.mxu0 %v5604
      %5708 = vmatmul.bf16.gmra.mxu0 %v4787
      %v5709 = vpop.f32.mrf.mxu0
      %v5710 = vadd.f32 0.0, %v5709
      %v5711 = vpop.f32.mrf.mxu0
      %v5712 = vadd.f32 0.0, %v5711
      %5713 = vmatmul.bf16.gmra.mxu0 %v4788
      %v5714 = vpop.f32.mrf.mxu0
      %v5715 = vadd.f32 0.0, %v5714
      %v5716 = vpop.f32.mrf.mxu0
      %v5717 = vadd.f32 0.0, %v5716
      %5718 = vmatmul.bf16.gmra.mxu0 %v4789
      %v5719 = vpop.f32.mrf.mxu0
      %v5720 = vadd.f32 0.0, %v5719
      %v5721 = vpop.f32.mrf.mxu0
      %v5722 = vadd.f32 0.0, %v5721
      %5723 = vmatmul.bf16.gmra.mxu0 %v4790
      %v5724 = vpop.f32.mrf.mxu0
      %v5725 = vadd.f32 0.0, %v5724
      %v5726 = vpop.f32.mrf.mxu0
      %v5727 = vadd.f32 0.0, %v5726
      %5728 = vmatmul.bf16.gmra.mxu0 %v4791
      %v5729 = vpop.f32.mrf.mxu0
      %v5730 = vadd.f32 0.0, %v5729
      %v5731 = vpop.f32.mrf.mxu0
      %v5732 = vadd.f32 0.0, %v5731
      %5733 = vmatmul.bf16.gmra.mxu0 %v4792
      %v5734 = vpop.f32.mrf.mxu0
      %v5735 = vadd.f32 0.0, %v5734
      %v5736 = vpop.f32.mrf.mxu0
      %v5737 = vadd.f32 0.0, %v5736
      %5738 = vmatmul.bf16.gmra.mxu0 %v4793
      %v5739 = vpop.f32.mrf.mxu0
      %v5740 = vadd.f32 0.0, %v5739
      %v5741 = vpop.f32.mrf.mxu0
      %v5742 = vadd.f32 0.0, %v5741
      %5743 = vmatmul.bf16.gmra.mxu0 %v4794
      %v5744 = vpop.f32.mrf.mxu0
      %v5745 = vadd.f32 0.0, %v5744
      %v5746 = vpop.f32.mrf.mxu0
      %v5747 = vadd.f32 0.0, %v5746
      %5748 = vmatmul.bf16.gmra.mxu0 %v4795
      %v5749 = vpop.f32.mrf.mxu0
      %v5750 = vadd.f32 0.0, %v5749
      %v5751 = vpop.f32.mrf.mxu0
      %v5752 = vadd.f32 0.0, %v5751
      %5753 = vmatmul.bf16.gmra.mxu0 %v4796
      %v5754 = vpop.f32.mrf.mxu0
      %v5755 = vadd.f32 0.0, %v5754
      %v5756 = vpop.f32.mrf.mxu0
      %v5757 = vadd.f32 0.0, %v5756
      %5758 = vmatmul.bf16.gmra.mxu0 %v4797
      %v5759 = vpop.f32.mrf.mxu0
      %v5760 = vadd.f32 0.0, %v5759
      %v5761 = vpop.f32.mrf.mxu0
      %v5762 = vadd.f32 0.0, %v5761
      %5763 = vmatmul.bf16.gmra.mxu0 %v4798
      %v5764 = vpop.f32.mrf.mxu0
      %v5765 = vadd.f32 0.0, %v5764
      %v5766 = vpop.f32.mrf.mxu0
      %v5767 = vadd.f32 0.0, %v5766
      %5768 = vmatmul.bf16.gmra.mxu0 %v4799
      %v5769 = vpop.f32.mrf.mxu0
      %v5770 = vadd.f32 0.0, %v5769
      %v5771 = vpop.f32.mrf.mxu0
      %v5772 = vadd.f32 0.0, %v5771
      %5773 = vmatmul.bf16.gmra.mxu0 %v4800
      %v5774 = vpop.f32.mrf.mxu0
      %v5775 = vadd.f32 0.0, %v5774
      %v5776 = vpop.f32.mrf.mxu0
      %v5777 = vadd.f32 0.0, %v5776
      %5778 = vmatmul.bf16.gmra.mxu0 %v4801
      %v5779 = vpop.f32.mrf.mxu0
      %v5780 = vadd.f32 0.0, %v5779
      %v5781 = vpop.f32.mrf.mxu0
      %v5782 = vadd.f32 0.0, %v5781
      %5783 = vmatmul.bf16.gmra.mxu0 %v4802
      %v5784 = vpop.f32.mrf.mxu0
      %v5785 = vadd.f32 0.0, %v5784
      %v5786 = vpop.f32.mrf.mxu0
      %v5787 = vadd.f32 0.0, %v5786
      %5788 = vmatmul.bf16.gmra.mxu0 %v4803
      %v5789 = vpop.f32.mrf.mxu0
      %v5790 = vadd.f32 0.0, %v5789
      %v5791 = vpop.f32.mrf.mxu0
      %v5792 = vadd.f32 0.0, %v5791
      %5793 = vmatmul.bf16.gmra.mxu0 %v4804
      %v5794 = vpop.f32.mrf.mxu0
      %v5795 = vadd.f32 0.0, %v5794
      %v5796 = vpop.f32.mrf.mxu0
      %v5797 = vadd.f32 0.0, %v5796
      %5798 = vmatmul.bf16.gmra.mxu0 %v4805
      %v5799 = vpop.f32.mrf.mxu0
      %v5800 = vadd.f32 0.0, %v5799
      %v5801 = vpop.f32.mrf.mxu0
      %v5802 = vadd.f32 0.0, %v5801
      %5803 = vmatmul.bf16.gmra.mxu0 %v4806
      %v5804 = vpop.f32.mrf.mxu0
      %v5805 = vadd.f32 0.0, %v5804
      %v5806 = vpop.f32.mrf.mxu0
      %v5807 = vadd.f32 0.0, %v5806
      %5808 = vmatmul.bf16.gmra.mxu0 %v4807
      %v5809 = vpop.f32.mrf.mxu0
      %v5810 = vadd.f32 0.0, %v5809
      %v5811 = vpop.f32.mrf.mxu0
      %v5812 = vadd.f32 0.0, %v5811
      %5813 = vmatmul.bf16.gmra.mxu0 %v4808
      %v5814 = vpop.f32.mrf.mxu0
      %v5815 = vadd.f32 0.0, %v5814
      %v5816 = vpop.f32.mrf.mxu0
      %v5817 = vadd.f32 0.0, %v5816
      %5818 = vmatmul.bf16.gmra.mxu0 %v4809
      %v5819 = vpop.f32.mrf.mxu0
      %v5820 = vadd.f32 0.0, %v5819
      %v5821 = vpop.f32.mrf.mxu0
      %v5822 = vadd.f32 0.0, %v5821
      %5823 = vmatmul.bf16.gmra.mxu0 %v4810
      %v5824 = vpop.f32.mrf.mxu0
      %v5825 = vadd.f32 0.0, %v5824
      %v5826 = vpop.f32.mrf.mxu0
      %v5827 = vadd.f32 0.0, %v5826
      %5828 = vmatmul.bf16.gmra.mxu0 %v4811
      %v5829 = vpop.f32.mrf.mxu0
      %v5830 = vadd.f32 0.0, %v5829
      %v5831 = vpop.f32.mrf.mxu0
      %v5832 = vadd.f32 0.0, %v5831
      %5833 = vmatmul.bf16.gmra.mxu0 %v4812
      %v5834 = vpop.f32.mrf.mxu0
      %v5835 = vadd.f32 0.0, %v5834
      %v5836 = vpop.f32.mrf.mxu0
      %v5837 = vadd.f32 0.0, %v5836
      %5838 = vmatmul.bf16.gmra.mxu0 %v4813
      %v5839 = vpop.f32.mrf.mxu0
      %v5840 = vadd.f32 0.0, %v5839
      %v5841 = vpop.f32.mrf.mxu0
      %v5842 = vadd.f32 0.0, %v5841
      %5843 = vmatmul.bf16.gmra.mxu0 %v4814
      %v5844 = vpop.f32.mrf.mxu0
      %v5845 = vadd.f32 0.0, %v5844
      %v5846 = vpop.f32.mrf.mxu0
      %v5847 = vadd.f32 0.0, %v5846
      %5848 = vmatmul.bf16.gmra.mxu0 %v4815
      %v5849 = vpop.f32.mrf.mxu0
      %v5850 = vadd.f32 0.0, %v5849
      %v5851 = vpop.f32.mrf.mxu0
      %v5852 = vadd.f32 0.0, %v5851
      %5853 = vmatmul.bf16.gmra.mxu0 %v4816
      %v5854 = vpop.f32.mrf.mxu0
      %v5855 = vadd.f32 0.0, %v5854
      %v5856 = vpop.f32.mrf.mxu0
      %v5857 = vadd.f32 0.0, %v5856
      %5858 = vmatmul.bf16.gmra.mxu0 %v4817
      %v5859 = vpop.f32.mrf.mxu0
      %v5860 = vadd.f32 0.0, %v5859
      %v5861 = vpop.f32.mrf.mxu0
      %v5862 = vadd.f32 0.0, %v5861
      %5863 = vmatmul.bf16.gmra.mxu0 %v4818
      %v5864 = vpop.f32.mrf.mxu0
      %v5865 = vadd.f32 0.0, %v5864
      %v5866 = vpop.f32.mrf.mxu0
      %v5867 = vadd.f32 0.0, %v5866
      %5868 = vdwg.mxu0
      %5869 = vmatpush.bf16.msra.mxu0 %v5634
      %5870 = vmatpush.bf16.msra.mxu0 %v5632
      %5871 = vmatpush.bf16.msra.mxu0 %v5630
      %5872 = vmatpush.bf16.msra.mxu0 %v5628
      %5873 = vmatpush.bf16.msra.mxu0 %v5626
      %5874 = vmatpush.bf16.msra.mxu0 %v5624
      %5875 = vmatpush.bf16.msra.mxu0 %v5622
      %5876 = vmatpush.bf16.msra.mxu0 %v5620
      %5877 = vmatmul.bf16.gmra.mxu0 %v4910
      %v5878 = vpop.f32.mrf.mxu0
      %v5879 = vadd.f32 %v5710, %v5878
      %v5880 = vpop.f32.mrf.mxu0
      %v5881 = vadd.f32 %v5712, %v5880
      %5882 = vmatmul.bf16.gmra.mxu0 %v4918
      %v5883 = vpop.f32.mrf.mxu0
      %v5884 = vadd.f32 %v5715, %v5883
      %v5885 = vpop.f32.mrf.mxu0
      %v5886 = vadd.f32 %v5717, %v5885
      %5887 = vmatmul.bf16.gmra.mxu0 %v4930
      %v5888 = vpop.f32.mrf.mxu0
      %v5889 = vadd.f32 %v5720, %v5888
      %v5890 = vpop.f32.mrf.mxu0
      %v5891 = vadd.f32 %v5722, %v5890
      %5892 = vmatmul.bf16.gmra.mxu0 %v4938
      %v5893 = vpop.f32.mrf.mxu0
      %v5894 = vadd.f32 %v5725, %v5893
      %v5895 = vpop.f32.mrf.mxu0
      %v5896 = vadd.f32 %v5727, %v5895
      %5897 = vmatmul.bf16.gmra.mxu0 %v4950
      %v5898 = vpop.f32.mrf.mxu0
      %v5899 = vadd.f32 %v5730, %v5898
      %v5900 = vpop.f32.mrf.mxu0
      %v5901 = vadd.f32 %v5732, %v5900
      %5902 = vmatmul.bf16.gmra.mxu0 %v4958
      %v5903 = vpop.f32.mrf.mxu0
      %v5904 = vadd.f32 %v5735, %v5903
      %v5905 = vpop.f32.mrf.mxu0
      %v5906 = vadd.f32 %v5737, %v5905
      %5907 = vmatmul.bf16.gmra.mxu0 %v4970
      %v5908 = vpop.f32.mrf.mxu0
      %v5909 = vadd.f32 %v5740, %v5908
      %v5910 = vpop.f32.mrf.mxu0
      %v5911 = vadd.f32 %v5742, %v5910
      %5912 = vmatmul.bf16.gmra.mxu0 %v4978
      %v5913 = vpop.f32.mrf.mxu0
      %v5914 = vadd.f32 %v5745, %v5913
      %v5915 = vpop.f32.mrf.mxu0
      %v5916 = vadd.f32 %v5747, %v5915
      %5917 = vmatmul.bf16.gmra.mxu0 %v4990
      %v5918 = vpop.f32.mrf.mxu0
      %v5919 = vadd.f32 %v5750, %v5918
      %v5920 = vpop.f32.mrf.mxu0
      %v5921 = vadd.f32 %v5752, %v5920
      %5922 = vmatmul.bf16.gmra.mxu0 %v4998
      %v5923 = vpop.f32.mrf.mxu0
      %v5924 = vadd.f32 %v5755, %v5923
      %v5925 = vpop.f32.mrf.mxu0
      %v5926 = vadd.f32 %v5757, %v5925
      %5927 = vmatmul.bf16.gmra.mxu0 %v5010
      %v5928 = vpop.f32.mrf.mxu0
      %v5929 = vadd.f32 %v5760, %v5928
      %v5930 = vpop.f32.mrf.mxu0
      %v5931 = vadd.f32 %v5762, %v5930
      %5932 = vmatmul.bf16.gmra.mxu0 %v5018
      %v5933 = vpop.f32.mrf.mxu0
      %v5934 = vadd.f32 %v5765, %v5933
      %v5935 = vpop.f32.mrf.mxu0
      %v5936 = vadd.f32 %v5767, %v5935
      %5937 = vmatmul.bf16.gmra.mxu0 %v5030
      %v5938 = vpop.f32.mrf.mxu0
      %v5939 = vadd.f32 %v5770, %v5938
      %v5940 = vpop.f32.mrf.mxu0
      %v5941 = vadd.f32 %v5772, %v5940
      %5942 = vmatmul.bf16.gmra.mxu0 %v5038
      %v5943 = vpop.f32.mrf.mxu0
      %v5944 = vadd.f32 %v5775, %v5943
      %v5945 = vpop.f32.mrf.mxu0
      %v5946 = vadd.f32 %v5777, %v5945
      %5947 = vmatmul.bf16.gmra.mxu0 %v5050
      %v5948 = vpop.f32.mrf.mxu0
      %v5949 = vadd.f32 %v5780, %v5948
      %v5950 = vpop.f32.mrf.mxu0
      %v5951 = vadd.f32 %v5782, %v5950
      %5952 = vmatmul.bf16.gmra.mxu0 %v5058
      %v5953 = vpop.f32.mrf.mxu0
      %v5954 = vadd.f32 %v5785, %v5953
      %v5955 = vpop.f32.mrf.mxu0
      %v5956 = vadd.f32 %v5787, %v5955
      %5957 = vmatmul.bf16.gmra.mxu0 %v5070
      %v5958 = vpop.f32.mrf.mxu0
      %v5959 = vadd.f32 %v5790, %v5958
      %v5960 = vpop.f32.mrf.mxu0
      %v5961 = vadd.f32 %v5792, %v5960
      %5962 = vmatmul.bf16.gmra.mxu0 %v5078
      %v5963 = vpop.f32.mrf.mxu0
      %v5964 = vadd.f32 %v5795, %v5963
      %v5965 = vpop.f32.mrf.mxu0
      %v5966 = vadd.f32 %v5797, %v5965
      %5967 = vmatmul.bf16.gmra.mxu0 %v5090
      %v5968 = vpop.f32.mrf.mxu0
      %v5969 = vadd.f32 %v5800, %v5968
      %v5970 = vpop.f32.mrf.mxu0
      %v5971 = vadd.f32 %v5802, %v5970
      %5972 = vmatmul.bf16.gmra.mxu0 %v5098
      %v5973 = vpop.f32.mrf.mxu0
      %v5974 = vadd.f32 %v5805, %v5973
      %v5975 = vpop.f32.mrf.mxu0
      %v5976 = vadd.f32 %v5807, %v5975
      %5977 = vmatmul.bf16.gmra.mxu0 %v5110
      %v5978 = vpop.f32.mrf.mxu0
      %v5979 = vadd.f32 %v5810, %v5978
      %v5980 = vpop.f32.mrf.mxu0
      %v5981 = vadd.f32 %v5812, %v5980
      %5982 = vmatmul.bf16.gmra.mxu0 %v5118
      %v5983 = vpop.f32.mrf.mxu0
      %v5984 = vadd.f32 %v5815, %v5983
      %v5985 = vpop.f32.mrf.mxu0
      %v5986 = vadd.f32 %v5817, %v5985
      %5987 = vmatmul.bf16.gmra.mxu0 %v5130
      %v5988 = vpop.f32.mrf.mxu0
      %v5989 = vadd.f32 %v5820, %v5988
      %v5990 = vpop.f32.mrf.mxu0
      %v5991 = vadd.f32 %v5822, %v5990
      %5992 = vmatmul.bf16.gmra.mxu0 %v5138
      %v5993 = vpop.f32.mrf.mxu0
      %v5994 = vadd.f32 %v5825, %v5993
      %v5995 = vpop.f32.mrf.mxu0
      %v5996 = vadd.f32 %v5827, %v5995
      %5997 = vmatmul.bf16.gmra.mxu0 %v5150
      %v5998 = vpop.f32.mrf.mxu0
      %v5999 = vadd.f32 %v5830, %v5998
      %v6000 = vpop.f32.mrf.mxu0
      %v6001 = vadd.f32 %v5832, %v6000
      %6002 = vmatmul.bf16.gmra.mxu0 %v5158
      %v6003 = vpop.f32.mrf.mxu0
      %v6004 = vadd.f32 %v5835, %v6003
      %v6005 = vpop.f32.mrf.mxu0
      %v6006 = vadd.f32 %v5837, %v6005
      %6007 = vmatmul.bf16.gmra.mxu0 %v5170
      %v6008 = vpop.f32.mrf.mxu0
      %v6009 = vadd.f32 %v5840, %v6008
      %v6010 = vpop.f32.mrf.mxu0
      %v6011 = vadd.f32 %v5842, %v6010
      %6012 = vmatmul.bf16.gmra.mxu0 %v5178
      %v6013 = vpop.f32.mrf.mxu0
      %v6014 = vadd.f32 %v5845, %v6013
      %v6015 = vpop.f32.mrf.mxu0
      %v6016 = vadd.f32 %v5847, %v6015
      %6017 = vmatmul.bf16.gmra.mxu0 %v5190
      %v6018 = vpop.f32.mrf.mxu0
      %v6019 = vadd.f32 %v5850, %v6018
      %v6020 = vpop.f32.mrf.mxu0
      %v6021 = vadd.f32 %v5852, %v6020
      %6022 = vmatmul.bf16.gmra.mxu0 %v5198
      %v6023 = vpop.f32.mrf.mxu0
      %v6024 = vadd.f32 %v5855, %v6023
      %v6025 = vpop.f32.mrf.mxu0
      %v6026 = vadd.f32 %v5857, %v6025
      %6027 = vmatmul.bf16.gmra.mxu0 %v5210
      %v6028 = vpop.f32.mrf.mxu0
      %v6029 = vadd.f32 %v5860, %v6028
      %v6030 = vpop.f32.mrf.mxu0
      %v6031 = vadd.f32 %v5862, %v6030
      %6032 = vmatmul.bf16.gmra.mxu0 %v5218
      %v6033 = vpop.f32.mrf.mxu0
      %v6034 = vadd.f32 %v5865, %v6033
      %v6035 = vpop.f32.mrf.mxu0
      %v6036 = vadd.f32 %v5867, %v6035
      %6037 = vdwg.mxu0
      %6038 = vmatpush.bf16.msra.mxu0 %v5650
      %6039 = vmatpush.bf16.msra.mxu0 %v5648
      %6040 = vmatpush.bf16.msra.mxu0 %v5646
      %6041 = vmatpush.bf16.msra.mxu0 %v5644
      %6042 = vmatpush.bf16.msra.mxu0 %v5642
      %6043 = vmatpush.bf16.msra.mxu0 %v5640
      %6044 = vmatpush.bf16.msra.mxu0 %v5638
      %6045 = vmatpush.bf16.msra.mxu0 %v5636
      %6046 = vmatmul.bf16.gmra.mxu0 %v5301
      %v6047 = vpop.f32.mrf.mxu0
      %v6048 = vadd.f32 %v5879, %v6047
      %v6049 = vpop.f32.mrf.mxu0
      %v6050 = vadd.f32 %v5881, %v6049
      %6051 = vmatmul.bf16.gmra.mxu0 %v5303
      %v6052 = vpop.f32.mrf.mxu0
      %v6053 = vadd.f32 %v5884, %v6052
      %v6054 = vpop.f32.mrf.mxu0
      %v6055 = vadd.f32 %v5886, %v6054
      %6056 = vmatmul.bf16.gmra.mxu0 %v5306
      %v6057 = vpop.f32.mrf.mxu0
      %v6058 = vadd.f32 %v5889, %v6057
      %v6059 = vpop.f32.mrf.mxu0
      %v6060 = vadd.f32 %v5891, %v6059
      %6061 = vmatmul.bf16.gmra.mxu0 %v5308
      %v6062 = vpop.f32.mrf.mxu0
      %v6063 = vadd.f32 %v5894, %v6062
      %v6064 = vpop.f32.mrf.mxu0
      %v6065 = vadd.f32 %v5896, %v6064
      %6066 = vmatmul.bf16.gmra.mxu0 %v5311
      %v6067 = vpop.f32.mrf.mxu0
      %v6068 = vadd.f32 %v5899, %v6067
      %v6069 = vpop.f32.mrf.mxu0
      %v6070 = vadd.f32 %v5901, %v6069
      %6071 = vmatmul.bf16.gmra.mxu0 %v5313
      %v6072 = vpop.f32.mrf.mxu0
      %v6073 = vadd.f32 %v5904, %v6072
      %v6074 = vpop.f32.mrf.mxu0
      %v6075 = vadd.f32 %v5906, %v6074
      %6076 = vmatmul.bf16.gmra.mxu0 %v5316
      %v6077 = vpop.f32.mrf.mxu0
      %v6078 = vadd.f32 %v5909, %v6077
      %v6079 = vpop.f32.mrf.mxu0
      %v6080 = vadd.f32 %v5911, %v6079
      %6081 = vmatmul.bf16.gmra.mxu0 %v5318
      %v6082 = vpop.f32.mrf.mxu0
      %v6083 = vadd.f32 %v5914, %v6082
      %v6084 = vpop.f32.mrf.mxu0
      %v6085 = vadd.f32 %v5916, %v6084
      %6086 = vmatmul.bf16.gmra.mxu0 %v5321
      %v6087 = vpop.f32.mrf.mxu0
      %v6088 = vadd.f32 %v5919, %v6087
      %v6089 = vpop.f32.mrf.mxu0
      %v6090 = vadd.f32 %v5921, %v6089
      %6091 = vmatmul.bf16.gmra.mxu0 %v5323
      %v6092 = vpop.f32.mrf.mxu0
      %v6093 = vadd.f32 %v5924, %v6092
      %v6094 = vpop.f32.mrf.mxu0
      %v6095 = vadd.f32 %v5926, %v6094
      %6096 = vmatmul.bf16.gmra.mxu0 %v5326
      %v6097 = vpop.f32.mrf.mxu0
      %v6098 = vadd.f32 %v5929, %v6097
      %v6099 = vpop.f32.mrf.mxu0
      %v6100 = vadd.f32 %v5931, %v6099
      %6101 = vmatmul.bf16.gmra.mxu0 %v5328
      %v6102 = vpop.f32.mrf.mxu0
      %v6103 = vadd.f32 %v5934, %v6102
      %v6104 = vpop.f32.mrf.mxu0
      %v6105 = vadd.f32 %v5936, %v6104
      %6106 = vmatmul.bf16.gmra.mxu0 %v5331
      %v6107 = vpop.f32.mrf.mxu0
      %v6108 = vadd.f32 %v5939, %v6107
      %v6109 = vpop.f32.mrf.mxu0
      %v6110 = vadd.f32 %v5941, %v6109
      %6111 = vmatmul.bf16.gmra.mxu0 %v5333
      %v6112 = vpop.f32.mrf.mxu0
      %v6113 = vadd.f32 %v5944, %v6112
      %v6114 = vpop.f32.mrf.mxu0
      %v6115 = vadd.f32 %v5946, %v6114
      %6116 = vmatmul.bf16.gmra.mxu0 %v5336
      %v6117 = vpop.f32.mrf.mxu0
      %v6118 = vadd.f32 %v5949, %v6117
      %v6119 = vpop.f32.mrf.mxu0
      %v6120 = vadd.f32 %v5951, %v6119
      %6121 = vmatmul.bf16.gmra.mxu0 %v5338
      %v6122 = vpop.f32.mrf.mxu0
      %v6123 = vadd.f32 %v5954, %v6122
      %v6124 = vpop.f32.mrf.mxu0
      %v6125 = vadd.f32 %v5956, %v6124
      %6126 = vmatmul.bf16.gmra.mxu0 %v5341
      %v6127 = vpop.f32.mrf.mxu0
      %v6128 = vadd.f32 %v5959, %v6127
      %v6129 = vpop.f32.mrf.mxu0
      %v6130 = vadd.f32 %v5961, %v6129
      %6131 = vmatmul.bf16.gmra.mxu0 %v5343
      %v6132 = vpop.f32.mrf.mxu0
      %v6133 = vadd.f32 %v5964, %v6132
      %v6134 = vpop.f32.mrf.mxu0
      %v6135 = vadd.f32 %v5966, %v6134
      %6136 = vmatmul.bf16.gmra.mxu0 %v5346
      %v6137 = vpop.f32.mrf.mxu0
      %v6138 = vadd.f32 %v5969, %v6137
      %v6139 = vpop.f32.mrf.mxu0
      %v6140 = vadd.f32 %v5971, %v6139
      %6141 = vmatmul.bf16.gmra.mxu0 %v5348
      %v6142 = vpop.f32.mrf.mxu0
      %v6143 = vadd.f32 %v5974, %v6142
      %v6144 = vpop.f32.mrf.mxu0
      %v6145 = vadd.f32 %v5976, %v6144
      %6146 = vmatmul.bf16.gmra.mxu0 %v5351
      %v6147 = vpop.f32.mrf.mxu0
      %v6148 = vadd.f32 %v5979, %v6147
      %v6149 = vpop.f32.mrf.mxu0
      %v6150 = vadd.f32 %v5981, %v6149
      %6151 = vmatmul.bf16.gmra.mxu0 %v5353
      %v6152 = vpop.f32.mrf.mxu0
      %v6153 = vadd.f32 %v5984, %v6152
      %v6154 = vpop.f32.mrf.mxu0
      %v6155 = vadd.f32 %v5986, %v6154
      %6156 = vmatmul.bf16.gmra.mxu0 %v5356
      %v6157 = vpop.f32.mrf.mxu0
      %v6158 = vadd.f32 %v5989, %v6157
      %v6159 = vpop.f32.mrf.mxu0
      %v6160 = vadd.f32 %v5991, %v6159
      %6161 = vmatmul.bf16.gmra.mxu0 %v5358
      %v6162 = vpop.f32.mrf.mxu0
      %v6163 = vadd.f32 %v5994, %v6162
      %v6164 = vpop.f32.mrf.mxu0
      %v6165 = vadd.f32 %v5996, %v6164
      %6166 = vmatmul.bf16.gmra.mxu0 %v5361
      %v6167 = vpop.f32.mrf.mxu0
      %v6168 = vadd.f32 %v5999, %v6167
      %v6169 = vpop.f32.mrf.mxu0
      %v6170 = vadd.f32 %v6001, %v6169
      %6171 = vmatmul.bf16.gmra.mxu0 %v5363
      %v6172 = vpop.f32.mrf.mxu0
      %v6173 = vadd.f32 %v6004, %v6172
      %v6174 = vpop.f32.mrf.mxu0
      %v6175 = vadd.f32 %v6006, %v6174
      %6176 = vmatmul.bf16.gmra.mxu0 %v5366
      %v6177 = vpop.f32.mrf.mxu0
      %v6178 = vadd.f32 %v6009, %v6177
      %v6179 = vpop.f32.mrf.mxu0
      %v6180 = vadd.f32 %v6011, %v6179
      %6181 = vmatmul.bf16.gmra.mxu0 %v5368
      %v6182 = vpop.f32.mrf.mxu0
      %v6183 = vadd.f32 %v6014, %v6182
      %v6184 = vpop.f32.mrf.mxu0
      %v6185 = vadd.f32 %v6016, %v6184
      %6186 = vmatmul.bf16.gmra.mxu0 %v5371
      %v6187 = vpop.f32.mrf.mxu0
      %v6188 = vadd.f32 %v6019, %v6187
      %v6189 = vpop.f32.mrf.mxu0
      %v6190 = vadd.f32 %v6021, %v6189
      %6191 = vmatmul.bf16.gmra.mxu0 %v5373
      %v6192 = vpop.f32.mrf.mxu0
      %v6193 = vadd.f32 %v6024, %v6192
      %v6194 = vpop.f32.mrf.mxu0
      %v6195 = vadd.f32 %v6026, %v6194
      %6196 = vmatmul.bf16.gmra.mxu0 %v5376
      %v6197 = vpop.f32.mrf.mxu0
      %v6198 = vadd.f32 %v6029, %v6197
      %v6199 = vpop.f32.mrf.mxu0
      %v6200 = vadd.f32 %v6031, %v6199
      %6201 = vmatmul.bf16.gmra.mxu0 %v5378
      %v6202 = vpop.f32.mrf.mxu0
      %v6203 = vadd.f32 %v6034, %v6202
      %v6204 = vpop.f32.mrf.mxu0
      %v6205 = vadd.f32 %v6036, %v6204
      %6206 = vdwg.mxu0
      %6207 = vmatpush.bf16.msra.mxu0 %v5619
      %6208 = vmatpush.bf16.msra.mxu0 %v5617
      %6209 = vmatpush.bf16.msra.mxu0 %v5615
      %6210 = vmatpush.bf16.msra.mxu0 %v5613
      %6211 = vmatpush.bf16.msra.mxu0 %v5611
      %6212 = vmatpush.bf16.msra.mxu0 %v5609
      %6213 = vmatpush.bf16.msra.mxu0 %v5607
      %6214 = vmatpush.bf16.msra.mxu0 %v5605
      %6215 = vmatmul.bf16.gmra.mxu0 %v4787
      %v6216 = vpop.f32.mrf.mxu0
      %v6217 = vadd.f32 0.0, %v6216
      %v6218 = vpop.f32.mrf.mxu0
      %v6219 = vadd.f32 0.0, %v6218
      %6220 = vmatmul.bf16.gmra.mxu0 %v4788
      %v6221 = vpop.f32.mrf.mxu0
      %v6222 = vadd.f32 0.0, %v6221
      %v6223 = vpop.f32.mrf.mxu0
      %v6224 = vadd.f32 0.0, %v6223
      %6225 = vmatmul.bf16.gmra.mxu0 %v4789
      %v6226 = vpop.f32.mrf.mxu0
      %v6227 = vadd.f32 0.0, %v6226
      %v6228 = vpop.f32.mrf.mxu0
      %v6229 = vadd.f32 0.0, %v6228
      %6230 = vmatmul.bf16.gmra.mxu0 %v4790
      %v6231 = vpop.f32.mrf.mxu0
      %v6232 = vadd.f32 0.0, %v6231
      %v6233 = vpop.f32.mrf.mxu0
      %v6234 = vadd.f32 0.0, %v6233
      %6235 = vmatmul.bf16.gmra.mxu0 %v4791
      %v6236 = vpop.f32.mrf.mxu0
      %v6237 = vadd.f32 0.0, %v6236
      %v6238 = vpop.f32.mrf.mxu0
      %v6239 = vadd.f32 0.0, %v6238
      %6240 = vmatmul.bf16.gmra.mxu0 %v4792
      %v6241 = vpop.f32.mrf.mxu0
      %v6242 = vadd.f32 0.0, %v6241
      %v6243 = vpop.f32.mrf.mxu0
      %v6244 = vadd.f32 0.0, %v6243
      %6245 = vmatmul.bf16.gmra.mxu0 %v4793
      %v6246 = vpop.f32.mrf.mxu0
      %v6247 = vadd.f32 0.0, %v6246
      %v6248 = vpop.f32.mrf.mxu0
      %v6249 = vadd.f32 0.0, %v6248
      %6250 = vmatmul.bf16.gmra.mxu0 %v4794
      %v6251 = vpop.f32.mrf.mxu0
      %v6252 = vadd.f32 0.0, %v6251
      %v6253 = vpop.f32.mrf.mxu0
      %v6254 = vadd.f32 0.0, %v6253
      %6255 = vmatmul.bf16.gmra.mxu0 %v4795
      %v6256 = vpop.f32.mrf.mxu0
      %v6257 = vadd.f32 0.0, %v6256
      %v6258 = vpop.f32.mrf.mxu0
      %v6259 = vadd.f32 0.0, %v6258
      %6260 = vmatmul.bf16.gmra.mxu0 %v4796
      %v6261 = vpop.f32.mrf.mxu0
      %v6262 = vadd.f32 0.0, %v6261
      %v6263 = vpop.f32.mrf.mxu0
      %v6264 = vadd.f32 0.0, %v6263
      %6265 = vmatmul.bf16.gmra.mxu0 %v4797
      %v6266 = vpop.f32.mrf.mxu0
      %v6267 = vadd.f32 0.0, %v6266
      %v6268 = vpop.f32.mrf.mxu0
      %v6269 = vadd.f32 0.0, %v6268
      %6270 = vmatmul.bf16.gmra.mxu0 %v4798
      %v6271 = vpop.f32.mrf.mxu0
      %v6272 = vadd.f32 0.0, %v6271
      %v6273 = vpop.f32.mrf.mxu0
      %v6274 = vadd.f32 0.0, %v6273
      %6275 = vmatmul.bf16.gmra.mxu0 %v4799
      %v6276 = vpop.f32.mrf.mxu0
      %v6277 = vadd.f32 0.0, %v6276
      %v6278 = vpop.f32.mrf.mxu0
      %v6279 = vadd.f32 0.0, %v6278
      %6280 = vmatmul.bf16.gmra.mxu0 %v4800
      %v6281 = vpop.f32.mrf.mxu0
      %v6282 = vadd.f32 0.0, %v6281
      %v6283 = vpop.f32.mrf.mxu0
      %v6284 = vadd.f32 0.0, %v6283
      %6285 = vmatmul.bf16.gmra.mxu0 %v4801
      %v6286 = vpop.f32.mrf.mxu0
      %v6287 = vadd.f32 0.0, %v6286
      %v6288 = vpop.f32.mrf.mxu0
      %v6289 = vadd.f32 0.0, %v6288
      %6290 = vmatmul.bf16.gmra.mxu0 %v4802
      %v6291 = vpop.f32.mrf.mxu0
      %v6292 = vadd.f32 0.0, %v6291
      %v6293 = vpop.f32.mrf.mxu0
      %v6294 = vadd.f32 0.0, %v6293
      %6295 = vmatmul.bf16.gmra.mxu0 %v4803
      %v6296 = vpop.f32.mrf.mxu0
      %v6297 = vadd.f32 0.0, %v6296
      %v6298 = vpop.f32.mrf.mxu0
      %v6299 = vadd.f32 0.0, %v6298
      %6300 = vmatmul.bf16.gmra.mxu0 %v4804
      %v6301 = vpop.f32.mrf.mxu0
      %v6302 = vadd.f32 0.0, %v6301
      %v6303 = vpop.f32.mrf.mxu0
      %v6304 = vadd.f32 0.0, %v6303
      %6305 = vmatmul.bf16.gmra.mxu0 %v4805
      %v6306 = vpop.f32.mrf.mxu0
      %v6307 = vadd.f32 0.0, %v6306
      %v6308 = vpop.f32.mrf.mxu0
      %v6309 = vadd.f32 0.0, %v6308
      %6310 = vmatmul.bf16.gmra.mxu0 %v4806
      %v6311 = vpop.f32.mrf.mxu0
      %v6312 = vadd.f32 0.0, %v6311
      %v6313 = vpop.f32.mrf.mxu0
      %v6314 = vadd.f32 0.0, %v6313
      %6315 = vmatmul.bf16.gmra.mxu0 %v4807
      %v6316 = vpop.f32.mrf.mxu0
      %v6317 = vadd.f32 0.0, %v6316
      %v6318 = vpop.f32.mrf.mxu0
      %v6319 = vadd.f32 0.0, %v6318
      %6320 = vmatmul.bf16.gmra.mxu0 %v4808
      %v6321 = vpop.f32.mrf.mxu0
      %v6322 = vadd.f32 0.0, %v6321
      %v6323 = vpop.f32.mrf.mxu0
      %v6324 = vadd.f32 0.0, %v6323
      %6325 = vmatmul.bf16.gmra.mxu0 %v4809
      %v6326 = vpop.f32.mrf.mxu0
      %v6327 = vadd.f32 0.0, %v6326
      %v6328 = vpop.f32.mrf.mxu0
      %v6329 = vadd.f32 0.0, %v6328
      %6330 = vmatmul.bf16.gmra.mxu0 %v4810
      %v6331 = vpop.f32.mrf.mxu0
      %v6332 = vadd.f32 0.0, %v6331
      %v6333 = vpop.f32.mrf.mxu0
      %v6334 = vadd.f32 0.0, %v6333
      %6335 = vmatmul.bf16.gmra.mxu0 %v4811
      %v6336 = vpop.f32.mrf.mxu0
      %v6337 = vadd.f32 0.0, %v6336
      %v6338 = vpop.f32.mrf.mxu0
      %v6339 = vadd.f32 0.0, %v6338
      %6340 = vmatmul.bf16.gmra.mxu0 %v4812
      %v6341 = vpop.f32.mrf.mxu0
      %v6342 = vadd.f32 0.0, %v6341
      %v6343 = vpop.f32.mrf.mxu0
      %v6344 = vadd.f32 0.0, %v6343
      %6345 = vmatmul.bf16.gmra.mxu0 %v4813
      %v6346 = vpop.f32.mrf.mxu0
      %v6347 = vadd.f32 0.0, %v6346
      %v6348 = vpop.f32.mrf.mxu0
      %v6349 = vadd.f32 0.0, %v6348
      %6350 = vmatmul.bf16.gmra.mxu0 %v4814
      %v6351 = vpop.f32.mrf.mxu0
      %v6352 = vadd.f32 0.0, %v6351
      %v6353 = vpop.f32.mrf.mxu0
      %v6354 = vadd.f32 0.0, %v6353
      %6355 = vmatmul.bf16.gmra.mxu0 %v4815
      %v6356 = vpop.f32.mrf.mxu0
      %v6357 = vadd.f32 0.0, %v6356
      %v6358 = vpop.f32.mrf.mxu0
      %v6359 = vadd.f32 0.0, %v6358
      %6360 = vmatmul.bf16.gmra.mxu0 %v4816
      %v6361 = vpop.f32.mrf.mxu0
      %v6362 = vadd.f32 0.0, %v6361
      %v6363 = vpop.f32.mrf.mxu0
      %v6364 = vadd.f32 0.0, %v6363
      %6365 = vmatmul.bf16.gmra.mxu0 %v4817
      %v6366 = vpop.f32.mrf.mxu0
      %v6367 = vadd.f32 0.0, %v6366
      %v6368 = vpop.f32.mrf.mxu0
      %v6369 = vadd.f32 0.0, %v6368
      %6370 = vmatmul.bf16.gmra.mxu0 %v4818
      %v6371 = vpop.f32.mrf.mxu0
      %v6372 = vadd.f32 0.0, %v6371
      %v6373 = vpop.f32.mrf.mxu0
      %v6374 = vadd.f32 0.0, %v6373
      %6375 = vdwg.mxu0
      %6376 = vmatpush.bf16.msra.mxu0 %v5635
      %6377 = vmatpush.bf16.msra.mxu0 %v5633
      %6378 = vmatpush.bf16.msra.mxu0 %v5631
      %6379 = vmatpush.bf16.msra.mxu0 %v5629
      %6380 = vmatpush.bf16.msra.mxu0 %v5627
      %6381 = vmatpush.bf16.msra.mxu0 %v5625
      %6382 = vmatpush.bf16.msra.mxu0 %v5623
      %6383 = vmatpush.bf16.msra.mxu0 %v5621
      %6384 = vmatmul.bf16.gmra.mxu0 %v4910
      %v6385 = vpop.f32.mrf.mxu0
      %v6386 = vadd.f32 %v6217, %v6385
      %v6387 = vpop.f32.mrf.mxu0
      %v6388 = vadd.f32 %v6219, %v6387
      %6389 = vmatmul.bf16.gmra.mxu0 %v4918
      %v6390 = vpop.f32.mrf.mxu0
      %v6391 = vadd.f32 %v6222, %v6390
      %v6392 = vpop.f32.mrf.mxu0
      %v6393 = vadd.f32 %v6224, %v6392
      %6394 = vmatmul.bf16.gmra.mxu0 %v4930
      %v6395 = vpop.f32.mrf.mxu0
      %v6396 = vadd.f32 %v6227, %v6395
      %v6397 = vpop.f32.mrf.mxu0
      %v6398 = vadd.f32 %v6229, %v6397
      %6399 = vmatmul.bf16.gmra.mxu0 %v4938
      %v6400 = vpop.f32.mrf.mxu0
      %v6401 = vadd.f32 %v6232, %v6400
      %v6402 = vpop.f32.mrf.mxu0
      %v6403 = vadd.f32 %v6234, %v6402
      %6404 = vmatmul.bf16.gmra.mxu0 %v4950
      %v6405 = vpop.f32.mrf.mxu0
      %v6406 = vadd.f32 %v6237, %v6405
      %v6407 = vpop.f32.mrf.mxu0
      %v6408 = vadd.f32 %v6239, %v6407
      %6409 = vmatmul.bf16.gmra.mxu0 %v4958
      %v6410 = vpop.f32.mrf.mxu0
      %v6411 = vadd.f32 %v6242, %v6410
      %v6412 = vpop.f32.mrf.mxu0
      %v6413 = vadd.f32 %v6244, %v6412
      %6414 = vmatmul.bf16.gmra.mxu0 %v4970
      %v6415 = vpop.f32.mrf.mxu0
      %v6416 = vadd.f32 %v6247, %v6415
      %v6417 = vpop.f32.mrf.mxu0
      %v6418 = vadd.f32 %v6249, %v6417
      %6419 = vmatmul.bf16.gmra.mxu0 %v4978
      %v6420 = vpop.f32.mrf.mxu0
      %v6421 = vadd.f32 %v6252, %v6420
      %v6422 = vpop.f32.mrf.mxu0
      %v6423 = vadd.f32 %v6254, %v6422
      %6424 = vmatmul.bf16.gmra.mxu0 %v4990
      %v6425 = vpop.f32.mrf.mxu0
      %v6426 = vadd.f32 %v6257, %v6425
      %v6427 = vpop.f32.mrf.mxu0
      %v6428 = vadd.f32 %v6259, %v6427
      %6429 = vmatmul.bf16.gmra.mxu0 %v4998
      %v6430 = vpop.f32.mrf.mxu0
      %v6431 = vadd.f32 %v6262, %v6430
      %v6432 = vpop.f32.mrf.mxu0
      %v6433 = vadd.f32 %v6264, %v6432
      %6434 = vmatmul.bf16.gmra.mxu0 %v5010
      %v6435 = vpop.f32.mrf.mxu0
      %v6436 = vadd.f32 %v6267, %v6435
      %v6437 = vpop.f32.mrf.mxu0
      %v6438 = vadd.f32 %v6269, %v6437
      %6439 = vmatmul.bf16.gmra.mxu0 %v5018
      %v6440 = vpop.f32.mrf.mxu0
      %v6441 = vadd.f32 %v6272, %v6440
      %v6442 = vpop.f32.mrf.mxu0
      %v6443 = vadd.f32 %v6274, %v6442
      %6444 = vmatmul.bf16.gmra.mxu0 %v5030
      %v6445 = vpop.f32.mrf.mxu0
      %v6446 = vadd.f32 %v6277, %v6445
      %v6447 = vpop.f32.mrf.mxu0
      %v6448 = vadd.f32 %v6279, %v6447
      %6449 = vmatmul.bf16.gmra.mxu0 %v5038
      %v6450 = vpop.f32.mrf.mxu0
      %v6451 = vadd.f32 %v6282, %v6450
      %v6452 = vpop.f32.mrf.mxu0
      %v6453 = vadd.f32 %v6284, %v6452
      %6454 = vmatmul.bf16.gmra.mxu0 %v5050
      %v6455 = vpop.f32.mrf.mxu0
      %v6456 = vadd.f32 %v6287, %v6455
      %v6457 = vpop.f32.mrf.mxu0
      %v6458 = vadd.f32 %v6289, %v6457
      %6459 = vmatmul.bf16.gmra.mxu0 %v5058
      %v6460 = vpop.f32.mrf.mxu0
      %v6461 = vadd.f32 %v6292, %v6460
      %v6462 = vpop.f32.mrf.mxu0
      %v6463 = vadd.f32 %v6294, %v6462
      %6464 = vmatmul.bf16.gmra.mxu0 %v5070
      %v6465 = vpop.f32.mrf.mxu0
      %v6466 = vadd.f32 %v6297, %v6465
      %v6467 = vpop.f32.mrf.mxu0
      %v6468 = vadd.f32 %v6299, %v6467
      %6469 = vmatmul.bf16.gmra.mxu0 %v5078
      %v6470 = vpop.f32.mrf.mxu0
      %v6471 = vadd.f32 %v6302, %v6470
      %v6472 = vpop.f32.mrf.mxu0
      %v6473 = vadd.f32 %v6304, %v6472
      %6474 = vmatmul.bf16.gmra.mxu0 %v5090
      %v6475 = vpop.f32.mrf.mxu0
      %v6476 = vadd.f32 %v6307, %v6475
      %v6477 = vpop.f32.mrf.mxu0
      %v6478 = vadd.f32 %v6309, %v6477
      %6479 = vmatmul.bf16.gmra.mxu0 %v5098
      %v6480 = vpop.f32.mrf.mxu0
      %v6481 = vadd.f32 %v6312, %v6480
      %v6482 = vpop.f32.mrf.mxu0
      %v6483 = vadd.f32 %v6314, %v6482
      %6484 = vmatmul.bf16.gmra.mxu0 %v5110
      %v6485 = vpop.f32.mrf.mxu0
      %v6486 = vadd.f32 %v6317, %v6485
      %v6487 = vpop.f32.mrf.mxu0
      %v6488 = vadd.f32 %v6319, %v6487
      %6489 = vmatmul.bf16.gmra.mxu0 %v5118
      %v6490 = vpop.f32.mrf.mxu0
      %v6491 = vadd.f32 %v6322, %v6490
      %v6492 = vpop.f32.mrf.mxu0
      %v6493 = vadd.f32 %v6324, %v6492
      %6494 = vmatmul.bf16.gmra.mxu0 %v5130
      %v6495 = vpop.f32.mrf.mxu0
      %v6496 = vadd.f32 %v6327, %v6495
      %v6497 = vpop.f32.mrf.mxu0
      %v6498 = vadd.f32 %v6329, %v6497
      %6499 = vmatmul.bf16.gmra.mxu0 %v5138
      %v6500 = vpop.f32.mrf.mxu0
      %v6501 = vadd.f32 %v6332, %v6500
      %v6502 = vpop.f32.mrf.mxu0
      %v6503 = vadd.f32 %v6334, %v6502
      %6504 = vmatmul.bf16.gmra.mxu0 %v5150
      %v6505 = vpop.f32.mrf.mxu0
      %v6506 = vadd.f32 %v6337, %v6505
      %v6507 = vpop.f32.mrf.mxu0
      %v6508 = vadd.f32 %v6339, %v6507
      %6509 = vmatmul.bf16.gmra.mxu0 %v5158
      %v6510 = vpop.f32.mrf.mxu0
      %v6511 = vadd.f32 %v6342, %v6510
      %v6512 = vpop.f32.mrf.mxu0
      %v6513 = vadd.f32 %v6344, %v6512
      %6514 = vmatmul.bf16.gmra.mxu0 %v5170
      %v6515 = vpop.f32.mrf.mxu0
      %v6516 = vadd.f32 %v6347, %v6515
      %v6517 = vpop.f32.mrf.mxu0
      %v6518 = vadd.f32 %v6349, %v6517
      %6519 = vmatmul.bf16.gmra.mxu0 %v5178
      %v6520 = vpop.f32.mrf.mxu0
      %v6521 = vadd.f32 %v6352, %v6520
      %v6522 = vpop.f32.mrf.mxu0
      %v6523 = vadd.f32 %v6354, %v6522
      %6524 = vmatmul.bf16.gmra.mxu0 %v5190
      %v6525 = vpop.f32.mrf.mxu0
      %v6526 = vadd.f32 %v6357, %v6525
      %v6527 = vpop.f32.mrf.mxu0
      %v6528 = vadd.f32 %v6359, %v6527
      %6529 = vmatmul.bf16.gmra.mxu0 %v5198
      %v6530 = vpop.f32.mrf.mxu0
      %v6531 = vadd.f32 %v6362, %v6530
      %v6532 = vpop.f32.mrf.mxu0
      %v6533 = vadd.f32 %v6364, %v6532
      %6534 = vmatmul.bf16.gmra.mxu0 %v5210
      %v6535 = vpop.f32.mrf.mxu0
      %v6536 = vadd.f32 %v6367, %v6535
      %v6537 = vpop.f32.mrf.mxu0
      %v6538 = vadd.f32 %v6369, %v6537
      %6539 = vmatmul.bf16.gmra.mxu0 %v5218
      %v6540 = vpop.f32.mrf.mxu0
      %v6541 = vadd.f32 %v6372, %v6540
      %v6542 = vpop.f32.mrf.mxu0
      %v6543 = vadd.f32 %v6374, %v6542
      %6544 = vdwg.mxu0
      %6545 = vmatpush.bf16.msra.mxu0 %v5651
      %6546 = vmatpush.bf16.msra.mxu0 %v5649
      %6547 = vmatpush.bf16.msra.mxu0 %v5647
      %6548 = vmatpush.bf16.msra.mxu0 %v5645
      %6549 = vmatpush.bf16.msra.mxu0 %v5643
      %6550 = vmatpush.bf16.msra.mxu0 %v5641
      %6551 = vmatpush.bf16.msra.mxu0 %v5639
      %6552 = vmatpush.bf16.msra.mxu0 %v5637
      %6553 = vmatmul.bf16.gmra.mxu0 %v5301
      %v6554 = vpop.f32.mrf.mxu0
      %v6555 = vadd.f32 %v6386, %v6554
      %v6556 = vpop.f32.mrf.mxu0
      %v6557 = vadd.f32 %v6388, %v6556
      %6558 = vmatmul.bf16.gmra.mxu0 %v5303
      %v6559 = vpop.f32.mrf.mxu0
      %v6560 = vadd.f32 %v6391, %v6559
      %v6561 = vpop.f32.mrf.mxu0
      %v6562 = vadd.f32 %v6393, %v6561
      %6563 = vmatmul.bf16.gmra.mxu0 %v5306
      %v6564 = vpop.f32.mrf.mxu0
      %v6565 = vadd.f32 %v6396, %v6564
      %v6566 = vpop.f32.mrf.mxu0
      %v6567 = vadd.f32 %v6398, %v6566
      %6568 = vmatmul.bf16.gmra.mxu0 %v5308
      %v6569 = vpop.f32.mrf.mxu0
      %v6570 = vadd.f32 %v6401, %v6569
      %v6571 = vpop.f32.mrf.mxu0
      %v6572 = vadd.f32 %v6403, %v6571
      %6573 = vmatmul.bf16.gmra.mxu0 %v5311
      %v6574 = vpop.f32.mrf.mxu0
      %v6575 = vadd.f32 %v6406, %v6574
      %v6576 = vpop.f32.mrf.mxu0
      %v6577 = vadd.f32 %v6408, %v6576
      %6578 = vmatmul.bf16.gmra.mxu0 %v5313
      %v6579 = vpop.f32.mrf.mxu0
      %v6580 = vadd.f32 %v6411, %v6579
      %v6581 = vpop.f32.mrf.mxu0
      %v6582 = vadd.f32 %v6413, %v6581
      %6583 = vmatmul.bf16.gmra.mxu0 %v5316
      %v6584 = vpop.f32.mrf.mxu0
      %v6585 = vadd.f32 %v6416, %v6584
      %v6586 = vpop.f32.mrf.mxu0
      %v6587 = vadd.f32 %v6418, %v6586
      %6588 = vmatmul.bf16.gmra.mxu0 %v5318
      %v6589 = vpop.f32.mrf.mxu0
      %v6590 = vadd.f32 %v6421, %v6589
      %v6591 = vpop.f32.mrf.mxu0
      %v6592 = vadd.f32 %v6423, %v6591
      %6593 = vmatmul.bf16.gmra.mxu0 %v5321
      %v6594 = vpop.f32.mrf.mxu0
      %v6595 = vadd.f32 %v6426, %v6594
      %v6596 = vpop.f32.mrf.mxu0
      %v6597 = vadd.f32 %v6428, %v6596
      %6598 = vmatmul.bf16.gmra.mxu0 %v5323
      %v6599 = vpop.f32.mrf.mxu0
      %v6600 = vadd.f32 %v6431, %v6599
      %v6601 = vpop.f32.mrf.mxu0
      %v6602 = vadd.f32 %v6433, %v6601
      %6603 = vmatmul.bf16.gmra.mxu0 %v5326
      %v6604 = vpop.f32.mrf.mxu0
      %v6605 = vadd.f32 %v6436, %v6604
      %v6606 = vpop.f32.mrf.mxu0
      %v6607 = vadd.f32 %v6438, %v6606
      %6608 = vmatmul.bf16.gmra.mxu0 %v5328
      %v6609 = vpop.f32.mrf.mxu0
      %v6610 = vadd.f32 %v6441, %v6609
      %v6611 = vpop.f32.mrf.mxu0
      %v6612 = vadd.f32 %v6443, %v6611
      %6613 = vmatmul.bf16.gmra.mxu0 %v5331
      %v6614 = vpop.f32.mrf.mxu0
      %v6615 = vadd.f32 %v6446, %v6614
      %v6616 = vpop.f32.mrf.mxu0
      %v6617 = vadd.f32 %v6448, %v6616
      %6618 = vmatmul.bf16.gmra.mxu0 %v5333
      %v6619 = vpop.f32.mrf.mxu0
      %v6620 = vadd.f32 %v6451, %v6619
      %v6621 = vpop.f32.mrf.mxu0
      %v6622 = vadd.f32 %v6453, %v6621
      %6623 = vmatmul.bf16.gmra.mxu0 %v5336
      %v6624 = vpop.f32.mrf.mxu0
      %v6625 = vadd.f32 %v6456, %v6624
      %v6626 = vpop.f32.mrf.mxu0
      %v6627 = vadd.f32 %v6458, %v6626
      %6628 = vmatmul.bf16.gmra.mxu0 %v5338
      %v6629 = vpop.f32.mrf.mxu0
      %v6630 = vadd.f32 %v6461, %v6629
      %v6631 = vpop.f32.mrf.mxu0
      %v6632 = vadd.f32 %v6463, %v6631
      %6633 = vmatmul.bf16.gmra.mxu0 %v5341
      %v6634 = vpop.f32.mrf.mxu0
      %v6635 = vadd.f32 %v6466, %v6634
      %v6636 = vpop.f32.mrf.mxu0
      %v6637 = vadd.f32 %v6468, %v6636
      %6638 = vmatmul.bf16.gmra.mxu0 %v5343
      %v6639 = vpop.f32.mrf.mxu0
      %v6640 = vadd.f32 %v6471, %v6639
      %v6641 = vpop.f32.mrf.mxu0
      %v6642 = vadd.f32 %v6473, %v6641
      %6643 = vmatmul.bf16.gmra.mxu0 %v5346
      %v6644 = vpop.f32.mrf.mxu0
      %v6645 = vadd.f32 %v6476, %v6644
      %v6646 = vpop.f32.mrf.mxu0
      %v6647 = vadd.f32 %v6478, %v6646
      %6648 = vmatmul.bf16.gmra.mxu0 %v5348
      %v6649 = vpop.f32.mrf.mxu0
      %v6650 = vadd.f32 %v6481, %v6649
      %v6651 = vpop.f32.mrf.mxu0
      %v6652 = vadd.f32 %v6483, %v6651
      %6653 = vmatmul.bf16.gmra.mxu0 %v5351
      %v6654 = vpop.f32.mrf.mxu0
      %v6655 = vadd.f32 %v6486, %v6654
      %v6656 = vpop.f32.mrf.mxu0
      %v6657 = vadd.f32 %v6488, %v6656
      %6658 = vmatmul.bf16.gmra.mxu0 %v5353
      %v6659 = vpop.f32.mrf.mxu0
      %v6660 = vadd.f32 %v6491, %v6659
      %v6661 = vpop.f32.mrf.mxu0
      %v6662 = vadd.f32 %v6493, %v6661
      %6663 = vmatmul.bf16.gmra.mxu0 %v5356
      %v6664 = vpop.f32.mrf.mxu0
      %v6665 = vadd.f32 %v6496, %v6664
      %v6666 = vpop.f32.mrf.mxu0
      %v6667 = vadd.f32 %v6498, %v6666
      %6668 = vmatmul.bf16.gmra.mxu0 %v5358
      %v6669 = vpop.f32.mrf.mxu0
      %v6670 = vadd.f32 %v6501, %v6669
      %v6671 = vpop.f32.mrf.mxu0
      %v6672 = vadd.f32 %v6503, %v6671
      %6673 = vmatmul.bf16.gmra.mxu0 %v5361
      %v6674 = vpop.f32.mrf.mxu0
      %v6675 = vadd.f32 %v6506, %v6674
      %v6676 = vpop.f32.mrf.mxu0
      %v6677 = vadd.f32 %v6508, %v6676
      %6678 = vmatmul.bf16.gmra.mxu0 %v5363
      %v6679 = vpop.f32.mrf.mxu0
      %v6680 = vadd.f32 %v6511, %v6679
      %v6681 = vpop.f32.mrf.mxu0
      %v6682 = vadd.f32 %v6513, %v6681
      %6683 = vmatmul.bf16.gmra.mxu0 %v5366
      %v6684 = vpop.f32.mrf.mxu0
      %v6685 = vadd.f32 %v6516, %v6684
      %v6686 = vpop.f32.mrf.mxu0
      %v6687 = vadd.f32 %v6518, %v6686
      %6688 = vmatmul.bf16.gmra.mxu0 %v5368
      %v6689 = vpop.f32.mrf.mxu0
      %v6690 = vadd.f32 %v6521, %v6689
      %v6691 = vpop.f32.mrf.mxu0
      %v6692 = vadd.f32 %v6523, %v6691
      %6693 = vmatmul.bf16.gmra.mxu0 %v5371
      %v6694 = vpop.f32.mrf.mxu0
      %v6695 = vadd.f32 %v6526, %v6694
      %v6696 = vpop.f32.mrf.mxu0
      %v6697 = vadd.f32 %v6528, %v6696
      %6698 = vmatmul.bf16.gmra.mxu0 %v5373
      %v6699 = vpop.f32.mrf.mxu0
      %v6700 = vadd.f32 %v6531, %v6699
      %v6701 = vpop.f32.mrf.mxu0
      %v6702 = vadd.f32 %v6533, %v6701
      %6703 = vmatmul.bf16.gmra.mxu0 %v5376
      %v6704 = vpop.f32.mrf.mxu0
      %v6705 = vadd.f32 %v6536, %v6704
      %v6706 = vpop.f32.mrf.mxu0
      %v6707 = vadd.f32 %v6538, %v6706
      %6708 = vmatmul.bf16.gmra.mxu0 %v5378
      %v6709 = vpop.f32.mrf.mxu0
      %v6710 = vadd.f32 %v6541, %v6709
      %v6711 = vpop.f32.mrf.mxu0
      %v6712 = vadd.f32 %v6543, %v6711
      %6713 = vdwg.mxu0
      %v6714 = vadd.f32 %v3893, %v6048
      %v6715 = vadd.f32 %v4400, %v6555
      %v6716 = vadd.f32 %v3895, %v6050
      %v6717 = vadd.f32 %v4402, %v6557
      %v6718 = vadd.f32 %v3898, %v6053
      %v6719 = vadd.f32 %v4405, %v6560
      %v6720 = vadd.f32 %v3900, %v6055
      %v6721 = vadd.f32 %v4407, %v6562
      %v6722 = vadd.f32 %v3903, %v6058
      %v6723 = vadd.f32 %v4410, %v6565
      %v6724 = vadd.f32 %v3905, %v6060
      %v6725 = vadd.f32 %v4412, %v6567
      %v6726 = vadd.f32 %v3908, %v6063
      %v6727 = vadd.f32 %v4415, %v6570
      %v6728 = vadd.f32 %v3910, %v6065
      %v6729 = vadd.f32 %v4417, %v6572
      %v6730 = vadd.f32 %v3913, %v6068
      %v6731 = vadd.f32 %v4420, %v6575
      %v6732 = vadd.f32 %v3915, %v6070
      %v6733 = vadd.f32 %v4422, %v6577
      %v6734 = vadd.f32 %v3918, %v6073
      %v6735 = vadd.f32 %v4425, %v6580
      %v6736 = vadd.f32 %v3920, %v6075
      %v6737 = vadd.f32 %v4427, %v6582
      %v6738 = vadd.f32 %v3923, %v6078
      %v6739 = vadd.f32 %v4430, %v6585
      %v6740 = vadd.f32 %v3925, %v6080
      %v6741 = vadd.f32 %v4432, %v6587
      %v6742 = vadd.f32 %v3928, %v6083
      %v6743 = vadd.f32 %v4435, %v6590
      %v6744 = vadd.f32 %v3930, %v6085
      %v6745 = vadd.f32 %v4437, %v6592
      %v6746 = vadd.f32 %v3933, %v6088
      %v6747 = vadd.f32 %v4440, %v6595
      %v6748 = vadd.f32 %v3935, %v6090
      %v6749 = vadd.f32 %v4442, %v6597
      %v6750 = vadd.f32 %v3938, %v6093
      %v6751 = vadd.f32 %v4445, %v6600
      %v6752 = vadd.f32 %v3940, %v6095
      %v6753 = vadd.f32 %v4447, %v6602
      %v6754 = vadd.f32 %v3943, %v6098
      %v6755 = vadd.f32 %v4450, %v6605
      %v6756 = vadd.f32 %v3945, %v6100
      %v6757 = vadd.f32 %v4452, %v6607
      %v6758 = vadd.f32 %v3948, %v6103
      %v6759 = vadd.f32 %v4455, %v6610
      %v6760 = vadd.f32 %v3950, %v6105
      %v6761 = vadd.f32 %v4457, %v6612
      %v6762 = vadd.f32 %v3953, %v6108
      %v6763 = vadd.f32 %v4460, %v6615
      %v6764 = vadd.f32 %v3955, %v6110
      %v6765 = vadd.f32 %v4462, %v6617
      %v6766 = vadd.f32 %v3958, %v6113
      %v6767 = vadd.f32 %v4465, %v6620
      %v6768 = vadd.f32 %v3960, %v6115
      %v6769 = vadd.f32 %v4467, %v6622
      %v6770 = vadd.f32 %v3963, %v6118
      %v6771 = vadd.f32 %v4470, %v6625
      %v6772 = vadd.f32 %v3965, %v6120
      %v6773 = vadd.f32 %v4472, %v6627
      %v6774 = vadd.f32 %v3968, %v6123
      %v6775 = vadd.f32 %v4475, %v6630
      %v6776 = vadd.f32 %v3970, %v6125
      %v6777 = vadd.f32 %v4477, %v6632
      %v6778 = vadd.f32 %v3973, %v6128
      %v6779 = vadd.f32 %v4480, %v6635
      %v6780 = vadd.f32 %v3975, %v6130
      %v6781 = vadd.f32 %v4482, %v6637
      %v6782 = vadd.f32 %v3978, %v6133
      %v6783 = vadd.f32 %v4485, %v6640
      %v6784 = vadd.f32 %v3980, %v6135
      %v6785 = vadd.f32 %v4487, %v6642
      %v6786 = vadd.f32 %v3983, %v6138
      %v6787 = vadd.f32 %v4490, %v6645
      %v6788 = vadd.f32 %v3985, %v6140
      %v6789 = vadd.f32 %v4492, %v6647
      %v6790 = vadd.f32 %v3988, %v6143
      %v6791 = vadd.f32 %v4495, %v6650
      %v6792 = vadd.f32 %v3990, %v6145
      %v6793 = vadd.f32 %v4497, %v6652
      %v6794 = vadd.f32 %v3993, %v6148
      %v6795 = vadd.f32 %v4500, %v6655
      %v6796 = vadd.f32 %v3995, %v6150
      %v6797 = vadd.f32 %v4502, %v6657
      %v6798 = vadd.f32 %v3998, %v6153
      %v6799 = vadd.f32 %v4505, %v6660
      %v6800 = vadd.f32 %v4000, %v6155
      %v6801 = vadd.f32 %v4507, %v6662
      %v6802 = vadd.f32 %v4003, %v6158
      %v6803 = vadd.f32 %v4510, %v6665
      %v6804 = vadd.f32 %v4005, %v6160
      %v6805 = vadd.f32 %v4512, %v6667
      %v6806 = vadd.f32 %v4008, %v6163
      %v6807 = vadd.f32 %v4515, %v6670
      %v6808 = vadd.f32 %v4010, %v6165
      %v6809 = vadd.f32 %v4517, %v6672
      %v6810 = vadd.f32 %v4013, %v6168
      %v6811 = vadd.f32 %v4520, %v6675
      %v6812 = vadd.f32 %v4015, %v6170
      %v6813 = vadd.f32 %v4522, %v6677
      %v6814 = vadd.f32 %v4018, %v6173
      %v6815 = vadd.f32 %v4525, %v6680
      %v6816 = vadd.f32 %v4020, %v6175
      %v6817 = vadd.f32 %v4527, %v6682
      %v6818 = vadd.f32 %v4023, %v6178
      %v6819 = vadd.f32 %v4530, %v6685
      %v6820 = vadd.f32 %v4025, %v6180
      %v6821 = vadd.f32 %v4532, %v6687
      %v6822 = vadd.f32 %v4028, %v6183
      %v6823 = vadd.f32 %v4535, %v6690
      %v6824 = vadd.f32 %v4030, %v6185
      %v6825 = vadd.f32 %v4537, %v6692
      %v6826 = vadd.f32 %v4033, %v6188
      %v6827 = vadd.f32 %v4540, %v6695
      %v6828 = vadd.f32 %v4035, %v6190
      %v6829 = vadd.f32 %v4542, %v6697
      %v6830 = vadd.f32 %v4038, %v6193
      %v6831 = vadd.f32 %v4545, %v6700
      %v6832 = vadd.f32 %v4040, %v6195
      %v6833 = vadd.f32 %v4547, %v6702
      %v6834 = vadd.f32 %v4043, %v6198
      %v6835 = vadd.f32 %v4550, %v6705
      %v6836 = vadd.f32 %v4045, %v6200
      %v6837 = vadd.f32 %v4552, %v6707
      %v6838 = vadd.f32 %v4048, %v6203
      %v6839 = vadd.f32 %v4555, %v6710
      %v6840 = vadd.f32 %v4050, %v6205
      %v6841 = vadd.f32 %v4557, %v6712
      %v6842 = vld [vmem:[%s2] sm:$0x3]
      %v6844 = vperm.slane %v6842, 0
      %v6845 = vperm.slane %v6842, 1
      %v6848 = vadd.f32 %v6714, %v6844
      %v6849 = vadd.f32 %v6715, %v6845
      %v6850 = vadd.f32 %v6716, %v6844
      %v6851 = vadd.f32 %v6717, %v6845
      %v6852 = vadd.f32 %v6718, %v6844
      %v6853 = vadd.f32 %v6719, %v6845
      %v6854 = vadd.f32 %v6720, %v6844
      %v6855 = vadd.f32 %v6721, %v6845
      %v6856 = vadd.f32 %v6722, %v6844
      %v6857 = vadd.f32 %v6723, %v6845
      %v6858 = vadd.f32 %v6724, %v6844
      %v6859 = vadd.f32 %v6725, %v6845
      %v6860 = vadd.f32 %v6726, %v6844
      %v6861 = vadd.f32 %v6727, %v6845
      %v6862 = vadd.f32 %v6728, %v6844
      %v6863 = vadd.f32 %v6729, %v6845
      %v6864 = vadd.f32 %v6730, %v6844
      %v6865 = vadd.f32 %v6731, %v6845
      %v6866 = vadd.f32 %v6732, %v6844
      %v6867 = vadd.f32 %v6733, %v6845
      %v6868 = vadd.f32 %v6734, %v6844
      %v6869 = vadd.f32 %v6735, %v6845
      %v6870 = vadd.f32 %v6736, %v6844
      %v6871 = vadd.f32 %v6737, %v6845
      %v6872 = vadd.f32 %v6738, %v6844
      %v6873 = vadd.f32 %v6739, %v6845
      %v6874 = vadd.f32 %v6740, %v6844
      %v6875 = vadd.f32 %v6741, %v6845
      %v6876 = vadd.f32 %v6742, %v6844
      %v6877 = vadd.f32 %v6743, %v6845
      %v6878 = vadd.f32 %v6744, %v6844
      %v6879 = vadd.f32 %v6745, %v6845
      %v6880 = vadd.f32 %v6746, %v6844
      %v6881 = vadd.f32 %v6747, %v6845
      %v6882 = vadd.f32 %v6748, %v6844
      %v6883 = vadd.f32 %v6749, %v6845
      %v6884 = vadd.f32 %v6750, %v6844
      %v6885 = vadd.f32 %v6751, %v6845
      %v6886 = vadd.f32 %v6752, %v6844
      %v6887 = vadd.f32 %v6753, %v6845
      %v6888 = vadd.f32 %v6754, %v6844
      %v6889 = vadd.f32 %v6755, %v6845
      %v6890 = vadd.f32 %v6756, %v6844
      %v6891 = vadd.f32 %v6757, %v6845
      %v6892 = vadd.f32 %v6758, %v6844
      %v6893 = vadd.f32 %v6759, %v6845
      %v6894 = vadd.f32 %v6760, %v6844
      %v6895 = vadd.f32 %v6761, %v6845
      %v6896 = vadd.f32 %v6762, %v6844
      %v6897 = vadd.f32 %v6763, %v6845
      %v6898 = vadd.f32 %v6764, %v6844
      %v6899 = vadd.f32 %v6765, %v6845
      %v6900 = vadd.f32 %v6766, %v6844
      %v6901 = vadd.f32 %v6767, %v6845
      %v6902 = vadd.f32 %v6768, %v6844
      %v6903 = vadd.f32 %v6769, %v6845
      %v6904 = vadd.f32 %v6770, %v6844
      %v6905 = vadd.f32 %v6771, %v6845
      %v6906 = vadd.f32 %v6772, %v6844
      %v6907 = vadd.f32 %v6773, %v6845
      %v6908 = vadd.f32 %v6774, %v6844
      %v6909 = vadd.f32 %v6775, %v6845
      %v6910 = vadd.f32 %v6776, %v6844
      %v6911 = vadd.f32 %v6777, %v6845
      %v6912 = vadd.f32 %v6778, %v6844
      %v6913 = vadd.f32 %v6779, %v6845
      %v6914 = vadd.f32 %v6780, %v6844
      %v6915 = vadd.f32 %v6781, %v6845
      %v6916 = vadd.f32 %v6782, %v6844
      %v6917 = vadd.f32 %v6783, %v6845
      %v6918 = vadd.f32 %v6784, %v6844
      %v6919 = vadd.f32 %v6785, %v6845
      %v6920 = vadd.f32 %v6786, %v6844
      %v6921 = vadd.f32 %v6787, %v6845
      %v6922 = vadd.f32 %v6788, %v6844
      %v6923 = vadd.f32 %v6789, %v6845
      %v6924 = vadd.f32 %v6790, %v6844
      %v6925 = vadd.f32 %v6791, %v6845
      %v6926 = vadd.f32 %v6792, %v6844
      %v6927 = vadd.f32 %v6793, %v6845
      %v6928 = vadd.f32 %v6794, %v6844
      %v6929 = vadd.f32 %v6795, %v6845
      %v6930 = vadd.f32 %v6796, %v6844
      %v6931 = vadd.f32 %v6797, %v6845
      %v6932 = vadd.f32 %v6798, %v6844
      %v6933 = vadd.f32 %v6799, %v6845
      %v6934 = vadd.f32 %v6800, %v6844
      %v6935 = vadd.f32 %v6801, %v6845
      %v6936 = vadd.f32 %v6802, %v6844
      %v6937 = vadd.f32 %v6803, %v6845
      %v6938 = vadd.f32 %v6804, %v6844
      %v6939 = vadd.f32 %v6805, %v6845
      %v6940 = vadd.f32 %v6806, %v6844
      %v6941 = vadd.f32 %v6807, %v6845
      %v6942 = vadd.f32 %v6808, %v6844
      %v6943 = vadd.f32 %v6809, %v6845
      %v6944 = vadd.f32 %v6810, %v6844
      %v6945 = vadd.f32 %v6811, %v6845
      %v6946 = vadd.f32 %v6812, %v6844
      %v6947 = vadd.f32 %v6813, %v6845
      %v6948 = vadd.f32 %v6814, %v6844
      %v6949 = vadd.f32 %v6815, %v6845
      %v6950 = vadd.f32 %v6816, %v6844
      %v6951 = vadd.f32 %v6817, %v6845
      %v6952 = vadd.f32 %v6818, %v6844
      %v6953 = vadd.f32 %v6819, %v6845
      %v6954 = vadd.f32 %v6820, %v6844
      %v6955 = vadd.f32 %v6821, %v6845
      %v6956 = vadd.f32 %v6822, %v6844
      %v6957 = vadd.f32 %v6823, %v6845
      %v6958 = vadd.f32 %v6824, %v6844
      %v6959 = vadd.f32 %v6825, %v6845
      %v6960 = vadd.f32 %v6826, %v6844
      %v6961 = vadd.f32 %v6827, %v6845
      %v6962 = vadd.f32 %v6828, %v6844
      %v6963 = vadd.f32 %v6829, %v6845
      %v6964 = vadd.f32 %v6830, %v6844
      %v6965 = vadd.f32 %v6831, %v6845
      %v6966 = vadd.f32 %v6832, %v6844
      %v6967 = vadd.f32 %v6833, %v6845
      %v6968 = vadd.f32 %v6834, %v6844
      %v6969 = vadd.f32 %v6835, %v6845
      %v6970 = vadd.f32 %v6836, %v6844
      %v6971 = vadd.f32 %v6837, %v6845
      %v6972 = vadd.f32 %v6838, %v6844
      %v6973 = vadd.f32 %v6839, %v6845
      %v6974 = vadd.f32 %v6840, %v6844
      %v6975 = vadd.f32 %v6841, %v6845
      %v6976 = vpack.c.bf16 %v6849, %v6848
      %v6977 = vpack.c.bf16 %v6851, %v6850
      %v6978 = vpack.c.bf16 %v6853, %v6852
      %v6979 = vpack.c.bf16 %v6855, %v6854
      %v6980 = vpack.c.bf16 %v6857, %v6856
      %v6981 = vpack.c.bf16 %v6859, %v6858
      %v6982 = vpack.c.bf16 %v6861, %v6860
      %v6983 = vpack.c.bf16 %v6863, %v6862
      %v6984 = vpack.c.bf16 %v6865, %v6864
      %v6985 = vpack.c.bf16 %v6867, %v6866
      %v6986 = vpack.c.bf16 %v6869, %v6868
      %v6987 = vpack.c.bf16 %v6871, %v6870
      %v6988 = vpack.c.bf16 %v6873, %v6872
      %v6989 = vpack.c.bf16 %v6875, %v6874
      %v6990 = vpack.c.bf16 %v6877, %v6876
      %v6991 = vpack.c.bf16 %v6879, %v6878
      %v6992 = vpack.c.bf16 %v6881, %v6880
      %v6993 = vpack.c.bf16 %v6883, %v6882
      %v6994 = vpack.c.bf16 %v6885, %v6884
      %v6995 = vpack.c.bf16 %v6887, %v6886
      %v6996 = vpack.c.bf16 %v6889, %v6888
      %v6997 = vpack.c.bf16 %v6891, %v6890
      %v6998 = vpack.c.bf16 %v6893, %v6892
      %v6999 = vpack.c.bf16 %v6895, %v6894
      %v7000 = vpack.c.bf16 %v6897, %v6896
      %v7001 = vpack.c.bf16 %v6899, %v6898
      %v7002 = vpack.c.bf16 %v6901, %v6900
      %v7003 = vpack.c.bf16 %v6903, %v6902
      %v7004 = vpack.c.bf16 %v6905, %v6904
      %v7005 = vpack.c.bf16 %v6907, %v6906
      %v7006 = vpack.c.bf16 %v6909, %v6908
      %v7007 = vpack.c.bf16 %v6911, %v6910
      %v7008 = vpack.c.bf16 %v6913, %v6912
      %v7009 = vpack.c.bf16 %v6915, %v6914
      %v7010 = vpack.c.bf16 %v6917, %v6916
      %v7011 = vpack.c.bf16 %v6919, %v6918
      %v7012 = vpack.c.bf16 %v6921, %v6920
      %v7013 = vpack.c.bf16 %v6923, %v6922
      %v7014 = vpack.c.bf16 %v6925, %v6924
      %v7015 = vpack.c.bf16 %v6927, %v6926
      %v7016 = vpack.c.bf16 %v6929, %v6928
      %v7017 = vpack.c.bf16 %v6931, %v6930
      %v7018 = vpack.c.bf16 %v6933, %v6932
      %v7019 = vpack.c.bf16 %v6935, %v6934
      %v7020 = vpack.c.bf16 %v6937, %v6936
      %v7021 = vpack.c.bf16 %v6939, %v6938
      %v7022 = vpack.c.bf16 %v6941, %v6940
      %v7023 = vpack.c.bf16 %v6943, %v6942
      %v7024 = vpack.c.bf16 %v6945, %v6944
      %v7025 = vpack.c.bf16 %v6947, %v6946
      %v7026 = vpack.c.bf16 %v6949, %v6948
      %v7027 = vpack.c.bf16 %v6951, %v6950
      %v7028 = vpack.c.bf16 %v6953, %v6952
      %v7029 = vpack.c.bf16 %v6955, %v6954
      %v7030 = vpack.c.bf16 %v6957, %v6956
      %v7031 = vpack.c.bf16 %v6959, %v6958
      %v7032 = vpack.c.bf16 %v6961, %v6960
      %v7033 = vpack.c.bf16 %v6963, %v6962
      %v7034 = vpack.c.bf16 %v6965, %v6964
      %v7035 = vpack.c.bf16 %v6967, %v6966
      %v7036 = vpack.c.bf16 %v6969, %v6968
      %v7037 = vpack.c.bf16 %v6971, %v6970
      %v7038 = vpack.c.bf16 %v6973, %v6972
      %v7039 = vpack.c.bf16 %v6975, %v6974
      %v7040 = vunpack.c.l.bf16 %v6976
      %v7041 = vunpack.c.h.bf16 %v6976
      %v7042 = vunpack.c.l.bf16 %v6977
      %v7043 = vunpack.c.h.bf16 %v6977
      %v7044 = vunpack.c.l.bf16 %v6978
      %v7045 = vunpack.c.h.bf16 %v6978
      %v7046 = vunpack.c.l.bf16 %v6979
      %v7047 = vunpack.c.h.bf16 %v6979
      %v7048 = vunpack.c.l.bf16 %v6980
      %v7049 = vunpack.c.h.bf16 %v6980
      %v7050 = vunpack.c.l.bf16 %v6981
      %v7051 = vunpack.c.h.bf16 %v6981
      %v7052 = vunpack.c.l.bf16 %v6982
      %v7053 = vunpack.c.h.bf16 %v6982
      %v7054 = vunpack.c.l.bf16 %v6983
      %v7055 = vunpack.c.h.bf16 %v6983
      %v7056 = vunpack.c.l.bf16 %v6984
      %v7057 = vunpack.c.h.bf16 %v6984
      %v7058 = vunpack.c.l.bf16 %v6985
      %v7059 = vunpack.c.h.bf16 %v6985
      %v7060 = vunpack.c.l.bf16 %v6986
      %v7061 = vunpack.c.h.bf16 %v6986
      %v7062 = vunpack.c.l.bf16 %v6987
      %v7063 = vunpack.c.h.bf16 %v6987
      %v7064 = vunpack.c.l.bf16 %v6988
      %v7065 = vunpack.c.h.bf16 %v6988
      %v7066 = vunpack.c.l.bf16 %v6989
      %v7067 = vunpack.c.h.bf16 %v6989
      %v7068 = vunpack.c.l.bf16 %v6990
      %v7069 = vunpack.c.h.bf16 %v6990
      %v7070 = vunpack.c.l.bf16 %v6991
      %v7071 = vunpack.c.h.bf16 %v6991
      %v7072 = vunpack.c.l.bf16 %v6992
      %v7073 = vunpack.c.h.bf16 %v6992
      %v7074 = vunpack.c.l.bf16 %v6993
      %v7075 = vunpack.c.h.bf16 %v6993
      %v7076 = vunpack.c.l.bf16 %v6994
      %v7077 = vunpack.c.h.bf16 %v6994
      %v7078 = vunpack.c.l.bf16 %v6995
      %v7079 = vunpack.c.h.bf16 %v6995
      %v7080 = vunpack.c.l.bf16 %v6996
      %v7081 = vunpack.c.h.bf16 %v6996
      %v7082 = vunpack.c.l.bf16 %v6997
      %v7083 = vunpack.c.h.bf16 %v6997
      %v7084 = vunpack.c.l.bf16 %v6998
      %v7085 = vunpack.c.h.bf16 %v6998
      %v7086 = vunpack.c.l.bf16 %v6999
      %v7087 = vunpack.c.h.bf16 %v6999
      %v7088 = vunpack.c.l.bf16 %v7000
      %v7089 = vunpack.c.h.bf16 %v7000
      %v7090 = vunpack.c.l.bf16 %v7001
      %v7091 = vunpack.c.h.bf16 %v7001
      %v7092 = vunpack.c.l.bf16 %v7002
      %v7093 = vunpack.c.h.bf16 %v7002
      %v7094 = vunpack.c.l.bf16 %v7003
      %v7095 = vunpack.c.h.bf16 %v7003
      %v7096 = vunpack.c.l.bf16 %v7004
      %v7097 = vunpack.c.h.bf16 %v7004
      %v7098 = vunpack.c.l.bf16 %v7005
      %v7099 = vunpack.c.h.bf16 %v7005
      %v7100 = vunpack.c.l.bf16 %v7006
      %v7101 = vunpack.c.h.bf16 %v7006
      %v7102 = vunpack.c.l.bf16 %v7007
      %v7103 = vunpack.c.h.bf16 %v7007
      %v7104 = vunpack.c.l.bf16 %v7008
      %v7105 = vunpack.c.h.bf16 %v7008
      %v7106 = vunpack.c.l.bf16 %v7009
      %v7107 = vunpack.c.h.bf16 %v7009
      %v7108 = vunpack.c.l.bf16 %v7010
      %v7109 = vunpack.c.h.bf16 %v7010
      %v7110 = vunpack.c.l.bf16 %v7011
      %v7111 = vunpack.c.h.bf16 %v7011
      %v7112 = vunpack.c.l.bf16 %v7012
      %v7113 = vunpack.c.h.bf16 %v7012
      %v7114 = vunpack.c.l.bf16 %v7013
      %v7115 = vunpack.c.h.bf16 %v7013
      %v7116 = vunpack.c.l.bf16 %v7014
      %v7117 = vunpack.c.h.bf16 %v7014
      %v7118 = vunpack.c.l.bf16 %v7015
      %v7119 = vunpack.c.h.bf16 %v7015
      %v7120 = vunpack.c.l.bf16 %v7016
      %v7121 = vunpack.c.h.bf16 %v7016
      %v7122 = vunpack.c.l.bf16 %v7017
      %v7123 = vunpack.c.h.bf16 %v7017
      %v7124 = vunpack.c.l.bf16 %v7018
      %v7125 = vunpack.c.h.bf16 %v7018
      %v7126 = vunpack.c.l.bf16 %v7019
      %v7127 = vunpack.c.h.bf16 %v7019
      %v7128 = vunpack.c.l.bf16 %v7020
      %v7129 = vunpack.c.h.bf16 %v7020
      %v7130 = vunpack.c.l.bf16 %v7021
      %v7131 = vunpack.c.h.bf16 %v7021
      %v7132 = vunpack.c.l.bf16 %v7022
      %v7133 = vunpack.c.h.bf16 %v7022
      %v7134 = vunpack.c.l.bf16 %v7023
      %v7135 = vunpack.c.h.bf16 %v7023
      %v7136 = vunpack.c.l.bf16 %v7024
      %v7137 = vunpack.c.h.bf16 %v7024
      %v7138 = vunpack.c.l.bf16 %v7025
      %v7139 = vunpack.c.h.bf16 %v7025
      %v7140 = vunpack.c.l.bf16 %v7026
      %v7141 = vunpack.c.h.bf16 %v7026
      %v7142 = vunpack.c.l.bf16 %v7027
      %v7143 = vunpack.c.h.bf16 %v7027
      %v7144 = vunpack.c.l.bf16 %v7028
      %v7145 = vunpack.c.h.bf16 %v7028
      %v7146 = vunpack.c.l.bf16 %v7029
      %v7147 = vunpack.c.h.bf16 %v7029
      %v7148 = vunpack.c.l.bf16 %v7030
      %v7149 = vunpack.c.h.bf16 %v7030
      %v7150 = vunpack.c.l.bf16 %v7031
      %v7151 = vunpack.c.h.bf16 %v7031
      %v7152 = vunpack.c.l.bf16 %v7032
      %v7153 = vunpack.c.h.bf16 %v7032
      %v7154 = vunpack.c.l.bf16 %v7033
      %v7155 = vunpack.c.h.bf16 %v7033
      %v7156 = vunpack.c.l.bf16 %v7034
      %v7157 = vunpack.c.h.bf16 %v7034
      %v7158 = vunpack.c.l.bf16 %v7035
      %v7159 = vunpack.c.h.bf16 %v7035
      %v7160 = vunpack.c.l.bf16 %v7036
      %v7161 = vunpack.c.h.bf16 %v7036
      %v7162 = vunpack.c.l.bf16 %v7037
      %v7163 = vunpack.c.h.bf16 %v7037
      %v7164 = vunpack.c.l.bf16 %v7038
      %v7165 = vunpack.c.h.bf16 %v7038
      %v7166 = vunpack.c.l.bf16 %v7039
      %v7167 = vunpack.c.h.bf16 %v7039
      %v7168 = vmul.f32 %v7040, 0.100097656
      %v7169 = vmul.f32 %v7041, 0.100097656
      %v7170 = vmul.f32 %v7042, 0.100097656
      %v7171 = vmul.f32 %v7043, 0.100097656
      %v7172 = vmul.f32 %v7044, 0.100097656
      %v7173 = vmul.f32 %v7045, 0.100097656
      %v7174 = vmul.f32 %v7046, 0.100097656
      %v7175 = vmul.f32 %v7047, 0.100097656
      %v7176 = vmul.f32 %v7048, 0.100097656
      %v7177 = vmul.f32 %v7049, 0.100097656
      %v7178 = vmul.f32 %v7050, 0.100097656
      %v7179 = vmul.f32 %v7051, 0.100097656
      %v7180 = vmul.f32 %v7052, 0.100097656
      %v7181 = vmul.f32 %v7053, 0.100097656
      %v7182 = vmul.f32 %v7054, 0.100097656
      %v7183 = vmul.f32 %v7055, 0.100097656
      %v7184 = vmul.f32 %v7056, 0.100097656
      %v7185 = vmul.f32 %v7057, 0.100097656
      %v7186 = vmul.f32 %v7058, 0.100097656
      %v7187 = vmul.f32 %v7059, 0.100097656
      %v7188 = vmul.f32 %v7060, 0.100097656
      %v7189 = vmul.f32 %v7061, 0.100097656
      %v7190 = vmul.f32 %v7062, 0.100097656
      %v7191 = vmul.f32 %v7063, 0.100097656
      %v7192 = vmul.f32 %v7064, 0.100097656
      %v7193 = vmul.f32 %v7065, 0.100097656
      %v7194 = vmul.f32 %v7066, 0.100097656
      %v7195 = vmul.f32 %v7067, 0.100097656
      %v7196 = vmul.f32 %v7068, 0.100097656
      %v7197 = vmul.f32 %v7069, 0.100097656
      %v7198 = vmul.f32 %v7070, 0.100097656
      %v7199 = vmul.f32 %v7071, 0.100097656
      %v7200 = vmul.f32 %v7072, 0.100097656
      %v7201 = vmul.f32 %v7073, 0.100097656
      %v7202 = vmul.f32 %v7074, 0.100097656
      %v7203 = vmul.f32 %v7075, 0.100097656
      %v7204 = vmul.f32 %v7076, 0.100097656
      %v7205 = vmul.f32 %v7077, 0.100097656
      %v7206 = vmul.f32 %v7078, 0.100097656
      %v7207 = vmul.f32 %v7079, 0.100097656
      %v7208 = vmul.f32 %v7080, 0.100097656
      %v7209 = vmul.f32 %v7081, 0.100097656
      %v7210 = vmul.f32 %v7082, 0.100097656
      %v7211 = vmul.f32 %v7083, 0.100097656
      %v7212 = vmul.f32 %v7084, 0.100097656
      %v7213 = vmul.f32 %v7085, 0.100097656
      %v7214 = vmul.f32 %v7086, 0.100097656
      %v7215 = vmul.f32 %v7087, 0.100097656
      %v7216 = vmul.f32 %v7088, 0.100097656
      %v7217 = vmul.f32 %v7089, 0.100097656
      %v7218 = vmul.f32 %v7090, 0.100097656
      %v7219 = vmul.f32 %v7091, 0.100097656
      %v7220 = vmul.f32 %v7092, 0.100097656
      %v7221 = vmul.f32 %v7093, 0.100097656
      %v7222 = vmul.f32 %v7094, 0.100097656
      %v7223 = vmul.f32 %v7095, 0.100097656
      %v7224 = vmul.f32 %v7096, 0.100097656
      %v7225 = vmul.f32 %v7097, 0.100097656
      %v7226 = vmul.f32 %v7098, 0.100097656
      %v7227 = vmul.f32 %v7099, 0.100097656
      %v7228 = vmul.f32 %v7100, 0.100097656
      %v7229 = vmul.f32 %v7101, 0.100097656
      %v7230 = vmul.f32 %v7102, 0.100097656
      %v7231 = vmul.f32 %v7103, 0.100097656
      %v7232 = vmul.f32 %v7104, 0.100097656
      %v7233 = vmul.f32 %v7105, 0.100097656
      %v7234 = vmul.f32 %v7106, 0.100097656
      %v7235 = vmul.f32 %v7107, 0.100097656
      %v7236 = vmul.f32 %v7108, 0.100097656
      %v7237 = vmul.f32 %v7109, 0.100097656
      %v7238 = vmul.f32 %v7110, 0.100097656
      %v7239 = vmul.f32 %v7111, 0.100097656
      %v7240 = vmul.f32 %v7112, 0.100097656
      %v7241 = vmul.f32 %v7113, 0.100097656
      %v7242 = vmul.f32 %v7114, 0.100097656
      %v7243 = vmul.f32 %v7115, 0.100097656
      %v7244 = vmul.f32 %v7116, 0.100097656
      %v7245 = vmul.f32 %v7117, 0.100097656
      %v7246 = vmul.f32 %v7118, 0.100097656
      %v7247 = vmul.f32 %v7119, 0.100097656
      %v7248 = vmul.f32 %v7120, 0.100097656
      %v7249 = vmul.f32 %v7121, 0.100097656
      %v7250 = vmul.f32 %v7122, 0.100097656
      %v7251 = vmul.f32 %v7123, 0.100097656
      %v7252 = vmul.f32 %v7124, 0.100097656
      %v7253 = vmul.f32 %v7125, 0.100097656
      %v7254 = vmul.f32 %v7126, 0.100097656
      %v7255 = vmul.f32 %v7127, 0.100097656
      %v7256 = vmul.f32 %v7128, 0.100097656
      %v7257 = vmul.f32 %v7129, 0.100097656
      %v7258 = vmul.f32 %v7130, 0.100097656
      %v7259 = vmul.f32 %v7131, 0.100097656
      %v7260 = vmul.f32 %v7132, 0.100097656
      %v7261 = vmul.f32 %v7133, 0.100097656
      %v7262 = vmul.f32 %v7134, 0.100097656
      %v7263 = vmul.f32 %v7135, 0.100097656
      %v7264 = vmul.f32 %v7136, 0.100097656
      %v7265 = vmul.f32 %v7137, 0.100097656
      %v7266 = vmul.f32 %v7138, 0.100097656
      %v7267 = vmul.f32 %v7139, 0.100097656
      %v7268 = vmul.f32 %v7140, 0.100097656
      %v7269 = vmul.f32 %v7141, 0.100097656
      %v7270 = vmul.f32 %v7142, 0.100097656
      %v7271 = vmul.f32 %v7143, 0.100097656
      %v7272 = vmul.f32 %v7144, 0.100097656
      %v7273 = vmul.f32 %v7145, 0.100097656
      %v7274 = vmul.f32 %v7146, 0.100097656
      %v7275 = vmul.f32 %v7147, 0.100097656
      %v7276 = vmul.f32 %v7148, 0.100097656
      %v7277 = vmul.f32 %v7149, 0.100097656
      %v7278 = vmul.f32 %v7150, 0.100097656
      %v7279 = vmul.f32 %v7151, 0.100097656
      %v7280 = vmul.f32 %v7152, 0.100097656
      %v7281 = vmul.f32 %v7153, 0.100097656
      %v7282 = vmul.f32 %v7154, 0.100097656
      %v7283 = vmul.f32 %v7155, 0.100097656
      %v7284 = vmul.f32 %v7156, 0.100097656
      %v7285 = vmul.f32 %v7157, 0.100097656
      %v7286 = vmul.f32 %v7158, 0.100097656
      %v7287 = vmul.f32 %v7159, 0.100097656
      %v7288 = vmul.f32 %v7160, 0.100097656
      %v7289 = vmul.f32 %v7161, 0.100097656
      %v7290 = vmul.f32 %v7162, 0.100097656
      %v7291 = vmul.f32 %v7163, 0.100097656
      %v7292 = vmul.f32 %v7164, 0.100097656
      %v7293 = vmul.f32 %v7165, 0.100097656
      %v7294 = vmul.f32 %v7166, 0.100097656
      %v7295 = vmul.f32 %v7167, 0.100097656
      %v7296 = vpack.c.bf16 %v7169, %v7168
      %v7297 = vpack.c.bf16 %v7171, %v7170
      %v7298 = vpack.c.bf16 %v7173, %v7172
      %v7299 = vpack.c.bf16 %v7175, %v7174
      %v7300 = vpack.c.bf16 %v7177, %v7176
      %v7301 = vpack.c.bf16 %v7179, %v7178
      %v7302 = vpack.c.bf16 %v7181, %v7180
      %v7303 = vpack.c.bf16 %v7183, %v7182
      %v7304 = vpack.c.bf16 %v7185, %v7184
      %v7305 = vpack.c.bf16 %v7187, %v7186
      %v7306 = vpack.c.bf16 %v7189, %v7188
      %v7307 = vpack.c.bf16 %v7191, %v7190
      %v7308 = vpack.c.bf16 %v7193, %v7192
      %v7309 = vpack.c.bf16 %v7195, %v7194
      %v7310 = vpack.c.bf16 %v7197, %v7196
      %v7311 = vpack.c.bf16 %v7199, %v7198
      %v7312 = vpack.c.bf16 %v7201, %v7200
      %v7313 = vpack.c.bf16 %v7203, %v7202
      %v7314 = vpack.c.bf16 %v7205, %v7204
      %v7315 = vpack.c.bf16 %v7207, %v7206
      %v7316 = vpack.c.bf16 %v7209, %v7208
      %v7317 = vpack.c.bf16 %v7211, %v7210
      %v7318 = vpack.c.bf16 %v7213, %v7212
      %v7319 = vpack.c.bf16 %v7215, %v7214
      %v7320 = vpack.c.bf16 %v7217, %v7216
      %v7321 = vpack.c.bf16 %v7219, %v7218
      %v7322 = vpack.c.bf16 %v7221, %v7220
      %v7323 = vpack.c.bf16 %v7223, %v7222
      %v7324 = vpack.c.bf16 %v7225, %v7224
      %v7325 = vpack.c.bf16 %v7227, %v7226
      %v7326 = vpack.c.bf16 %v7229, %v7228
      %v7327 = vpack.c.bf16 %v7231, %v7230
      %v7328 = vpack.c.bf16 %v7233, %v7232
      %v7329 = vpack.c.bf16 %v7235, %v7234
      %v7330 = vpack.c.bf16 %v7237, %v7236
      %v7331 = vpack.c.bf16 %v7239, %v7238
      %v7332 = vpack.c.bf16 %v7241, %v7240
      %v7333 = vpack.c.bf16 %v7243, %v7242
      %v7334 = vpack.c.bf16 %v7245, %v7244
      %v7335 = vpack.c.bf16 %v7247, %v7246
      %v7336 = vpack.c.bf16 %v7249, %v7248
      %v7337 = vpack.c.bf16 %v7251, %v7250
      %v7338 = vpack.c.bf16 %v7253, %v7252
      %v7339 = vpack.c.bf16 %v7255, %v7254
      %v7340 = vpack.c.bf16 %v7257, %v7256
      %v7341 = vpack.c.bf16 %v7259, %v7258
      %v7342 = vpack.c.bf16 %v7261, %v7260
      %v7343 = vpack.c.bf16 %v7263, %v7262
      %v7344 = vpack.c.bf16 %v7265, %v7264
      %v7345 = vpack.c.bf16 %v7267, %v7266
      %v7346 = vpack.c.bf16 %v7269, %v7268
      %v7347 = vpack.c.bf16 %v7271, %v7270
      %v7348 = vpack.c.bf16 %v7273, %v7272
      %v7349 = vpack.c.bf16 %v7275, %v7274
      %v7350 = vpack.c.bf16 %v7277, %v7276
      %v7351 = vpack.c.bf16 %v7279, %v7278
      %v7352 = vpack.c.bf16 %v7281, %v7280
      %v7353 = vpack.c.bf16 %v7283, %v7282
      %v7354 = vpack.c.bf16 %v7285, %v7284
      %v7355 = vpack.c.bf16 %v7287, %v7286
      %v7356 = vpack.c.bf16 %v7289, %v7288
      %v7357 = vpack.c.bf16 %v7291, %v7290
      %v7358 = vpack.c.bf16 %v7293, %v7292
      %v7359 = vpack.c.bf16 %v7295, %v7294
      %v7360 = vunpack.c.l.bf16 %v7296
      %v7361 = vunpack.c.h.bf16 %v7296
      %v7362 = vunpack.c.l.bf16 %v7297
      %v7363 = vunpack.c.h.bf16 %v7297
      %v7364 = vunpack.c.l.bf16 %v7298
      %v7365 = vunpack.c.h.bf16 %v7298
      %v7366 = vunpack.c.l.bf16 %v7299
      %v7367 = vunpack.c.h.bf16 %v7299
      %v7368 = vunpack.c.l.bf16 %v7300
      %v7369 = vunpack.c.h.bf16 %v7300
      %v7370 = vunpack.c.l.bf16 %v7301
      %v7371 = vunpack.c.h.bf16 %v7301
      %v7372 = vunpack.c.l.bf16 %v7302
      %v7373 = vunpack.c.h.bf16 %v7302
      %v7374 = vunpack.c.l.bf16 %v7303
      %v7375 = vunpack.c.h.bf16 %v7303
      %v7376 = vunpack.c.l.bf16 %v7304
      %v7377 = vunpack.c.h.bf16 %v7304
      %v7378 = vunpack.c.l.bf16 %v7305
      %v7379 = vunpack.c.h.bf16 %v7305
      %v7380 = vunpack.c.l.bf16 %v7306
      %v7381 = vunpack.c.h.bf16 %v7306
      %v7382 = vunpack.c.l.bf16 %v7307
      %v7383 = vunpack.c.h.bf16 %v7307
      %v7384 = vunpack.c.l.bf16 %v7308
      %v7385 = vunpack.c.h.bf16 %v7308
      %v7386 = vunpack.c.l.bf16 %v7309
      %v7387 = vunpack.c.h.bf16 %v7309
      %v7388 = vunpack.c.l.bf16 %v7310
      %v7389 = vunpack.c.h.bf16 %v7310
      %v7390 = vunpack.c.l.bf16 %v7311
      %v7391 = vunpack.c.h.bf16 %v7311
      %v7392 = vunpack.c.l.bf16 %v7312
      %v7393 = vunpack.c.h.bf16 %v7312
      %v7394 = vunpack.c.l.bf16 %v7313
      %v7395 = vunpack.c.h.bf16 %v7313
      %v7396 = vunpack.c.l.bf16 %v7314
      %v7397 = vunpack.c.h.bf16 %v7314
      %v7398 = vunpack.c.l.bf16 %v7315
      %v7399 = vunpack.c.h.bf16 %v7315
      %v7400 = vunpack.c.l.bf16 %v7316
      %v7401 = vunpack.c.h.bf16 %v7316
      %v7402 = vunpack.c.l.bf16 %v7317
      %v7403 = vunpack.c.h.bf16 %v7317
      %v7404 = vunpack.c.l.bf16 %v7318
      %v7405 = vunpack.c.h.bf16 %v7318
      %v7406 = vunpack.c.l.bf16 %v7319
      %v7407 = vunpack.c.h.bf16 %v7319
      %v7408 = vunpack.c.l.bf16 %v7320
      %v7409 = vunpack.c.h.bf16 %v7320
      %v7410 = vunpack.c.l.bf16 %v7321
      %v7411 = vunpack.c.h.bf16 %v7321
      %v7412 = vunpack.c.l.bf16 %v7322
      %v7413 = vunpack.c.h.bf16 %v7322
      %v7414 = vunpack.c.l.bf16 %v7323
      %v7415 = vunpack.c.h.bf16 %v7323
      %v7416 = vunpack.c.l.bf16 %v7324
      %v7417 = vunpack.c.h.bf16 %v7324
      %v7418 = vunpack.c.l.bf16 %v7325
      %v7419 = vunpack.c.h.bf16 %v7325
      %v7420 = vunpack.c.l.bf16 %v7326
      %v7421 = vunpack.c.h.bf16 %v7326
      %v7422 = vunpack.c.l.bf16 %v7327
      %v7423 = vunpack.c.h.bf16 %v7327
      %v7424 = vunpack.c.l.bf16 %v7328
      %v7425 = vunpack.c.h.bf16 %v7328
      %v7426 = vunpack.c.l.bf16 %v7329
      %v7427 = vunpack.c.h.bf16 %v7329
      %v7428 = vunpack.c.l.bf16 %v7330
      %v7429 = vunpack.c.h.bf16 %v7330
      %v7430 = vunpack.c.l.bf16 %v7331
      %v7431 = vunpack.c.h.bf16 %v7331
      %v7432 = vunpack.c.l.bf16 %v7332
      %v7433 = vunpack.c.h.bf16 %v7332
      %v7434 = vunpack.c.l.bf16 %v7333
      %v7435 = vunpack.c.h.bf16 %v7333
      %v7436 = vunpack.c.l.bf16 %v7334
      %v7437 = vunpack.c.h.bf16 %v7334
      %v7438 = vunpack.c.l.bf16 %v7335
      %v7439 = vunpack.c.h.bf16 %v7335
      %v7440 = vunpack.c.l.bf16 %v7336
      %v7441 = vunpack.c.h.bf16 %v7336
      %v7442 = vunpack.c.l.bf16 %v7337
      %v7443 = vunpack.c.h.bf16 %v7337
      %v7444 = vunpack.c.l.bf16 %v7338
      %v7445 = vunpack.c.h.bf16 %v7338
      %v7446 = vunpack.c.l.bf16 %v7339
      %v7447 = vunpack.c.h.bf16 %v7339
      %v7448 = vunpack.c.l.bf16 %v7340
      %v7449 = vunpack.c.h.bf16 %v7340
      %v7450 = vunpack.c.l.bf16 %v7341
      %v7451 = vunpack.c.h.bf16 %v7341
      %v7452 = vunpack.c.l.bf16 %v7342
      %v7453 = vunpack.c.h.bf16 %v7342
      %v7454 = vunpack.c.l.bf16 %v7343
      %v7455 = vunpack.c.h.bf16 %v7343
      %v7456 = vunpack.c.l.bf16 %v7344
      %v7457 = vunpack.c.h.bf16 %v7344
      %v7458 = vunpack.c.l.bf16 %v7345
      %v7459 = vunpack.c.h.bf16 %v7345
      %v7460 = vunpack.c.l.bf16 %v7346
      %v7461 = vunpack.c.h.bf16 %v7346
      %v7462 = vunpack.c.l.bf16 %v7347
      %v7463 = vunpack.c.h.bf16 %v7347
      %v7464 = vunpack.c.l.bf16 %v7348
      %v7465 = vunpack.c.h.bf16 %v7348
      %v7466 = vunpack.c.l.bf16 %v7349
      %v7467 = vunpack.c.h.bf16 %v7349
      %v7468 = vunpack.c.l.bf16 %v7350
      %v7469 = vunpack.c.h.bf16 %v7350
      %v7470 = vunpack.c.l.bf16 %v7351
      %v7471 = vunpack.c.h.bf16 %v7351
      %v7472 = vunpack.c.l.bf16 %v7352
      %v7473 = vunpack.c.h.bf16 %v7352
      %v7474 = vunpack.c.l.bf16 %v7353
      %v7475 = vunpack.c.h.bf16 %v7353
      %v7476 = vunpack.c.l.bf16 %v7354
      %v7477 = vunpack.c.h.bf16 %v7354
      %v7478 = vunpack.c.l.bf16 %v7355
      %v7479 = vunpack.c.h.bf16 %v7355
      %v7480 = vunpack.c.l.bf16 %v7356
      %v7481 = vunpack.c.h.bf16 %v7356
      %v7482 = vunpack.c.l.bf16 %v7357
      %v7483 = vunpack.c.h.bf16 %v7357
      %v7484 = vunpack.c.l.bf16 %v7358
      %v7485 = vunpack.c.h.bf16 %v7358
      %v7486 = vunpack.c.l.bf16 %v7359
      %v7487 = vunpack.c.h.bf16 %v7359
      %v7488 = vmax.f32 %v7040, %v7360
      %v7489 = vmax.f32 %v7041, %v7361
      %v7490 = vmax.f32 %v7042, %v7362
      %v7491 = vmax.f32 %v7043, %v7363
      %v7492 = vmax.f32 %v7044, %v7364
      %v7493 = vmax.f32 %v7045, %v7365
      %v7494 = vmax.f32 %v7046, %v7366
      %v7495 = vmax.f32 %v7047, %v7367
      %v7496 = vmax.f32 %v7048, %v7368
      %v7497 = vmax.f32 %v7049, %v7369
      %v7498 = vmax.f32 %v7050, %v7370
      %v7499 = vmax.f32 %v7051, %v7371
      %v7500 = vmax.f32 %v7052, %v7372
      %v7501 = vmax.f32 %v7053, %v7373
      %v7502 = vmax.f32 %v7054, %v7374
      %v7503 = vmax.f32 %v7055, %v7375
      %v7504 = vmax.f32 %v7056, %v7376
      %v7505 = vmax.f32 %v7057, %v7377
      %v7506 = vmax.f32 %v7058, %v7378
      %v7507 = vmax.f32 %v7059, %v7379
      %v7508 = vmax.f32 %v7060, %v7380
      %v7509 = vmax.f32 %v7061, %v7381
      %v7510 = vmax.f32 %v7062, %v7382
      %v7511 = vmax.f32 %v7063, %v7383
      %v7512 = vmax.f32 %v7064, %v7384
      %v7513 = vmax.f32 %v7065, %v7385
      %v7514 = vmax.f32 %v7066, %v7386
      %v7515 = vmax.f32 %v7067, %v7387
      %v7516 = vmax.f32 %v7068, %v7388
      %v7517 = vmax.f32 %v7069, %v7389
      %v7518 = vmax.f32 %v7070, %v7390
      %v7519 = vmax.f32 %v7071, %v7391
      %v7520 = vmax.f32 %v7072, %v7392
      %v7521 = vmax.f32 %v7073, %v7393
      %v7522 = vmax.f32 %v7074, %v7394
      %v7523 = vmax.f32 %v7075, %v7395
      %v7524 = vmax.f32 %v7076, %v7396
      %v7525 = vmax.f32 %v7077, %v7397
      %v7526 = vmax.f32 %v7078, %v7398
      %v7527 = vmax.f32 %v7079, %v7399
      %v7528 = vmax.f32 %v7080, %v7400
      %v7529 = vmax.f32 %v7081, %v7401
      %v7530 = vmax.f32 %v7082, %v7402
      %v7531 = vmax.f32 %v7083, %v7403
      %v7532 = vmax.f32 %v7084, %v7404
      %v7533 = vmax.f32 %v7085, %v7405
      %v7534 = vmax.f32 %v7086, %v7406
      %v7535 = vmax.f32 %v7087, %v7407
      %v7536 = vmax.f32 %v7088, %v7408
      %v7537 = vmax.f32 %v7089, %v7409
      %v7538 = vmax.f32 %v7090, %v7410
      %v7539 = vmax.f32 %v7091, %v7411
      %v7540 = vmax.f32 %v7092, %v7412
      %v7541 = vmax.f32 %v7093, %v7413
      %v7542 = vmax.f32 %v7094, %v7414
      %v7543 = vmax.f32 %v7095, %v7415
      %v7544 = vmax.f32 %v7096, %v7416
      %v7545 = vmax.f32 %v7097, %v7417
      %v7546 = vmax.f32 %v7098, %v7418
      %v7547 = vmax.f32 %v7099, %v7419
      %v7548 = vmax.f32 %v7100, %v7420
      %v7549 = vmax.f32 %v7101, %v7421
      %v7550 = vmax.f32 %v7102, %v7422
      %v7551 = vmax.f32 %v7103, %v7423
      %v7552 = vmax.f32 %v7104, %v7424
      %v7553 = vmax.f32 %v7105, %v7425
      %v7554 = vmax.f32 %v7106, %v7426
      %v7555 = vmax.f32 %v7107, %v7427
      %v7556 = vmax.f32 %v7108, %v7428
      %v7557 = vmax.f32 %v7109, %v7429
      %v7558 = vmax.f32 %v7110, %v7430
      %v7559 = vmax.f32 %v7111, %v7431
      %v7560 = vmax.f32 %v7112, %v7432
      %v7561 = vmax.f32 %v7113, %v7433
      %v7562 = vmax.f32 %v7114, %v7434
      %v7563 = vmax.f32 %v7115, %v7435
      %v7564 = vmax.f32 %v7116, %v7436
      %v7565 = vmax.f32 %v7117, %v7437
      %v7566 = vmax.f32 %v7118, %v7438
      %v7567 = vmax.f32 %v7119, %v7439
      %v7568 = vmax.f32 %v7120, %v7440
      %v7569 = vmax.f32 %v7121, %v7441
      %v7570 = vmax.f32 %v7122, %v7442
      %v7571 = vmax.f32 %v7123, %v7443
      %v7572 = vmax.f32 %v7124, %v7444
      %v7573 = vmax.f32 %v7125, %v7445
      %v7574 = vmax.f32 %v7126, %v7446
      %v7575 = vmax.f32 %v7127, %v7447
      %v7576 = vmax.f32 %v7128, %v7448
      %v7577 = vmax.f32 %v7129, %v7449
      %v7578 = vmax.f32 %v7130, %v7450
      %v7579 = vmax.f32 %v7131, %v7451
      %v7580 = vmax.f32 %v7132, %v7452
      %v7581 = vmax.f32 %v7133, %v7453
      %v7582 = vmax.f32 %v7134, %v7454
      %v7583 = vmax.f32 %v7135, %v7455
      %v7584 = vmax.f32 %v7136, %v7456
      %v7585 = vmax.f32 %v7137, %v7457
      %v7586 = vmax.f32 %v7138, %v7458
      %v7587 = vmax.f32 %v7139, %v7459
      %v7588 = vmax.f32 %v7140, %v7460
      %v7589 = vmax.f32 %v7141, %v7461
      %v7590 = vmax.f32 %v7142, %v7462
      %v7591 = vmax.f32 %v7143, %v7463
      %v7592 = vmax.f32 %v7144, %v7464
      %v7593 = vmax.f32 %v7145, %v7465
      %v7594 = vmax.f32 %v7146, %v7466
      %v7595 = vmax.f32 %v7147, %v7467
      %v7596 = vmax.f32 %v7148, %v7468
      %v7597 = vmax.f32 %v7149, %v7469
      %v7598 = vmax.f32 %v7150, %v7470
      %v7599 = vmax.f32 %v7151, %v7471
      %v7600 = vmax.f32 %v7152, %v7472
      %v7601 = vmax.f32 %v7153, %v7473
      %v7602 = vmax.f32 %v7154, %v7474
      %v7603 = vmax.f32 %v7155, %v7475
      %v7604 = vmax.f32 %v7156, %v7476
      %v7605 = vmax.f32 %v7157, %v7477
      %v7606 = vmax.f32 %v7158, %v7478
      %v7607 = vmax.f32 %v7159, %v7479
      %v7608 = vmax.f32 %v7160, %v7480
      %v7609 = vmax.f32 %v7161, %v7481
      %v7610 = vmax.f32 %v7162, %v7482
      %v7611 = vmax.f32 %v7163, %v7483
      %v7612 = vmax.f32 %v7164, %v7484
      %v7613 = vmax.f32 %v7165, %v7485
      %v7614 = vmax.f32 %v7166, %v7486
      %v7615 = vmax.f32 %v7167, %v7487
      %v7616 = vpack.c.bf16 %v7490, %v7488
      %v7617 = vpack.c.bf16 %v7491, %v7489
      %v7618 = vpack.c.bf16 %v7494, %v7492
      %v7619 = vpack.c.bf16 %v7495, %v7493
      %v7620 = vpack.c.bf16 %v7498, %v7496
      %v7621 = vpack.c.bf16 %v7499, %v7497
      %v7622 = vpack.c.bf16 %v7502, %v7500
      %v7623 = vpack.c.bf16 %v7503, %v7501
      %v7624 = vpack.c.bf16 %v7506, %v7504
      %v7625 = vpack.c.bf16 %v7507, %v7505
      %v7626 = vpack.c.bf16 %v7510, %v7508
      %v7627 = vpack.c.bf16 %v7511, %v7509
      %v7628 = vpack.c.bf16 %v7514, %v7512
      %v7629 = vpack.c.bf16 %v7515, %v7513
      %v7630 = vpack.c.bf16 %v7518, %v7516
      %v7631 = vpack.c.bf16 %v7519, %v7517
      %v7632 = vpack.c.bf16 %v7522, %v7520
      %v7633 = vpack.c.bf16 %v7523, %v7521
      %v7634 = vpack.c.bf16 %v7526, %v7524
      %v7635 = vpack.c.bf16 %v7527, %v7525
      %v7636 = vpack.c.bf16 %v7530, %v7528
      %v7637 = vpack.c.bf16 %v7531, %v7529
      %v7638 = vpack.c.bf16 %v7534, %v7532
      %v7639 = vpack.c.bf16 %v7535, %v7533
      %v7640 = vpack.c.bf16 %v7538, %v7536
      %v7641 = vpack.c.bf16 %v7539, %v7537
      %v7642 = vpack.c.bf16 %v7542, %v7540
      %v7643 = vpack.c.bf16 %v7543, %v7541
      %v7644 = vpack.c.bf16 %v7546, %v7544
      %v7645 = vpack.c.bf16 %v7547, %v7545
      %v7646 = vpack.c.bf16 %v7550, %v7548
      %v7647 = vpack.c.bf16 %v7551, %v7549
      %v7648 = vpack.c.bf16 %v7554, %v7552
      %v7649 = vpack.c.bf16 %v7555, %v7553
      %v7650 = vpack.c.bf16 %v7558, %v7556
      %v7651 = vpack.c.bf16 %v7559, %v7557
      %v7652 = vpack.c.bf16 %v7562, %v7560
      %v7653 = vpack.c.bf16 %v7563, %v7561
      %v7654 = vpack.c.bf16 %v7566, %v7564
      %v7655 = vpack.c.bf16 %v7567, %v7565
      %v7656 = vpack.c.bf16 %v7570, %v7568
      %v7657 = vpack.c.bf16 %v7571, %v7569
      %v7658 = vpack.c.bf16 %v7574, %v7572
      %v7659 = vpack.c.bf16 %v7575, %v7573
      %v7660 = vpack.c.bf16 %v7578, %v7576
      %v7661 = vpack.c.bf16 %v7579, %v7577
      %v7662 = vpack.c.bf16 %v7582, %v7580
      %v7663 = vpack.c.bf16 %v7583, %v7581
      %v7664 = vpack.c.bf16 %v7586, %v7584
      %v7665 = vpack.c.bf16 %v7587, %v7585
      %v7666 = vpack.c.bf16 %v7590, %v7588
      %v7667 = vpack.c.bf16 %v7591, %v7589
      %v7668 = vpack.c.bf16 %v7594, %v7592
      %v7669 = vpack.c.bf16 %v7595, %v7593
      %v7670 = vpack.c.bf16 %v7598, %v7596
      %v7671 = vpack.c.bf16 %v7599, %v7597
      %v7672 = vpack.c.bf16 %v7602, %v7600
      %v7673 = vpack.c.bf16 %v7603, %v7601
      %v7674 = vpack.c.bf16 %v7606, %v7604
      %v7675 = vpack.c.bf16 %v7607, %v7605
      %v7676 = vpack.c.bf16 %v7610, %v7608
      %v7677 = vpack.c.bf16 %v7611, %v7609
      %v7678 = vpack.c.bf16 %v7614, %v7612
      %v7679 = vpack.c.bf16 %v7615, %v7613
      %v7680 = vld [vmem:[%s3] sm:$0xf]
      %v7681 = vld [vmem:[%s3 + $0x4] sm:$0xf]
      %v7682 = vld [vmem:[%s3 + $0x8] sm:$0xf]
      %v7683 = vld [vmem:[%s3 + $0xc] sm:$0xf]
      %v7684 = vld [vmem:[%s3 + $0x10] sm:$0xf]
      %v7685 = vld [vmem:[%s3 + $0x14] sm:$0xf]
      %v7686 = vld [vmem:[%s3 + $0x18] sm:$0xf]
      %v7687 = vld [vmem:[%s3 + $0x1c] sm:$0xf]
      %v7688 = vld [vmem:[%s3 + $0x20] sm:$0xf]
      %v7689 = vld [vmem:[%s3 + $0x24] sm:$0xf]
      %v7690 = vld [vmem:[%s3 + $0x28] sm:$0xf]
      %v7691 = vld [vmem:[%s3 + $0x2c] sm:$0xf]
      %v7692 = vld [vmem:[%s3 + $0x30] sm:$0xf]
      %v7693 = vld [vmem:[%s3 + $0x34] sm:$0xf]
      %v7694 = vld [vmem:[%s3 + $0x38] sm:$0xf]
      %v7695 = vld [vmem:[%s3 + $0x3c] sm:$0xf]
      %v7696 = vld [vmem:[%s3 + $0x40] sm:$0xf]
      %v7697 = vld [vmem:[%s3 + $0x44] sm:$0xf]
      %v7698 = vld [vmem:[%s3 + $0x48] sm:$0xf]
      %v7699 = vld [vmem:[%s3 + $0x4c] sm:$0xf]
      %v7700 = vld [vmem:[%s3 + $0x50] sm:$0xf]
      %v7701 = vld [vmem:[%s3 + $0x54] sm:$0xf]
      %v7702 = vld [vmem:[%s3 + $0x58] sm:$0xf]
      %v7703 = vld [vmem:[%s3 + $0x5c] sm:$0xf]
      %v7704 = vld [vmem:[%s3 + $0x60] sm:$0xf]
      %v7705 = vld [vmem:[%s3 + $0x64] sm:$0xf]
      %v7706 = vld [vmem:[%s3 + $0x68] sm:$0xf]
      %v7707 = vld [vmem:[%s3 + $0x6c] sm:$0xf]
      %v7708 = vld [vmem:[%s3 + $0x70] sm:$0xf]
      %v7709 = vld [vmem:[%s3 + $0x74] sm:$0xf]
      %v7710 = vld [vmem:[%s3 + $0x78] sm:$0xf]
      %v7711 = vld [vmem:[%s3 + $0x7c] sm:$0xf]
      %v7712 = vld [vmem:[%s4] sm:$0x1]
      %v7714 = vperm.slane %v7712, 0
      %v7748 = vunpack.c.l.b16 %v7680
      %v7749 = vunpack.c.l.b16 %v7681
      %v7750 = vunpack.c.l.b16 %v7682
      %v7751 = vunpack.c.l.b16 %v7683
      %v7752 = vunpack.c.l.b16 %v7684
      %v7753 = vunpack.c.l.b16 %v7685
      %v7754 = vunpack.c.l.b16 %v7686
      %v7755 = vunpack.c.l.b16 %v7687
      %v7756 = vunpack.c.l.b16 %v7688
      %v7757 = vunpack.c.l.b16 %v7689
      %v7758 = vunpack.c.l.b16 %v7690
      %v7759 = vunpack.c.l.b16 %v7691
      %v7760 = vunpack.c.l.b16 %v7692
      %v7761 = vunpack.c.l.b16 %v7693
      %v7762 = vunpack.c.l.b16 %v7694
      %v7763 = vunpack.c.l.b16 %v7695
      %v7764 = vunpack.c.l.b16 %v7696
      %v7765 = vunpack.c.l.b16 %v7697
      %v7766 = vunpack.c.l.b16 %v7698
      %v7767 = vunpack.c.l.b16 %v7699
      %v7768 = vunpack.c.l.b16 %v7700
      %v7769 = vunpack.c.l.b16 %v7701
      %v7770 = vunpack.c.l.b16 %v7702
      %v7771 = vunpack.c.l.b16 %v7703
      %v7772 = vunpack.c.l.b16 %v7704
      %v7773 = vunpack.c.l.b16 %v7705
      %v7774 = vunpack.c.l.b16 %v7706
      %v7775 = vunpack.c.l.b16 %v7707
      %v7776 = vunpack.c.l.b16 %v7708
      %v7777 = vunpack.c.l.b16 %v7709
      %v7778 = vunpack.c.l.b16 %v7710
      %v7779 = vunpack.c.l.b16 %v7711
      %v7780 = vpack.c.b16 %v7749, %v7748
      %v7781 = vpack.c.b16 %v7751, %v7750
      %v7782 = vpack.c.b16 %v7753, %v7752
      %v7783 = vpack.c.b16 %v7755, %v7754
      %v7784 = vpack.c.b16 %v7757, %v7756
      %v7785 = vpack.c.b16 %v7759, %v7758
      %v7786 = vpack.c.b16 %v7761, %v7760
      %v7787 = vpack.c.b16 %v7763, %v7762
      %v7788 = vpack.c.b16 %v7765, %v7764
      %v7789 = vpack.c.b16 %v7767, %v7766
      %v7790 = vpack.c.b16 %v7769, %v7768
      %v7791 = vpack.c.b16 %v7771, %v7770
      %v7792 = vpack.c.b16 %v7773, %v7772
      %v7793 = vpack.c.b16 %v7775, %v7774
      %v7794 = vpack.c.b16 %v7777, %v7776
      %v7795 = vpack.c.b16 %v7779, %v7778
      %7812 = vmatpush.bf16.msra.mxu0 %v7787
      %7813 = vmatpush.bf16.msra.mxu0 %v7786
      %7814 = vmatpush.bf16.msra.mxu0 %v7785
      %7815 = vmatpush.bf16.msra.mxu0 %v7784
      %7816 = vmatpush.bf16.msra.mxu0 %v7783
      %7817 = vmatpush.bf16.msra.mxu0 %v7782
      %7818 = vmatpush.bf16.msra.mxu0 %v7781
      %7819 = vmatpush.bf16.msra.mxu0 %v7780
      %7820 = vmatmul.bf16.gmra.mxu0 %v7616
      %v7821 = vpop.f32.mrf.mxu0
      %v7822 = vadd.f32 %v7714, %v7821
      %v7823 = vpop.f32.mrf.mxu0
      %v7824 = vadd.f32 %v7714, %v7823
      %7825 = vmatmul.bf16.gmra.mxu0 %v7618
      %v7826 = vpop.f32.mrf.mxu0
      %v7827 = vadd.f32 %v7714, %v7826
      %v7828 = vpop.f32.mrf.mxu0
      %v7829 = vadd.f32 %v7714, %v7828
      %7830 = vmatmul.bf16.gmra.mxu0 %v7620
      %v7831 = vpop.f32.mrf.mxu0
      %v7832 = vadd.f32 %v7714, %v7831
      %v7833 = vpop.f32.mrf.mxu0
      %v7834 = vadd.f32 %v7714, %v7833
      %7835 = vmatmul.bf16.gmra.mxu0 %v7622
      %v7836 = vpop.f32.mrf.mxu0
      %v7837 = vadd.f32 %v7714, %v7836
      %v7838 = vpop.f32.mrf.mxu0
      %v7839 = vadd.f32 %v7714, %v7838
      %7840 = vmatmul.bf16.gmra.mxu0 %v7624
      %v7841 = vpop.f32.mrf.mxu0
      %v7842 = vadd.f32 %v7714, %v7841
      %v7843 = vpop.f32.mrf.mxu0
      %v7844 = vadd.f32 %v7714, %v7843
      %7845 = vmatmul.bf16.gmra.mxu0 %v7626
      %v7846 = vpop.f32.mrf.mxu0
      %v7847 = vadd.f32 %v7714, %v7846
      %v7848 = vpop.f32.mrf.mxu0
      %v7849 = vadd.f32 %v7714, %v7848
      %7850 = vmatmul.bf16.gmra.mxu0 %v7628
      %v7851 = vpop.f32.mrf.mxu0
      %v7852 = vadd.f32 %v7714, %v7851
      %v7853 = vpop.f32.mrf.mxu0
      %v7854 = vadd.f32 %v7714, %v7853
      %7855 = vmatmul.bf16.gmra.mxu0 %v7630
      %v7856 = vpop.f32.mrf.mxu0
      %v7857 = vadd.f32 %v7714, %v7856
      %v7858 = vpop.f32.mrf.mxu0
      %v7859 = vadd.f32 %v7714, %v7858
      %7860 = vmatmul.bf16.gmra.mxu0 %v7632
      %v7861 = vpop.f32.mrf.mxu0
      %v7862 = vadd.f32 %v7714, %v7861
      %v7863 = vpop.f32.mrf.mxu0
      %v7864 = vadd.f32 %v7714, %v7863
      %7865 = vmatmul.bf16.gmra.mxu0 %v7634
      %v7866 = vpop.f32.mrf.mxu0
      %v7867 = vadd.f32 %v7714, %v7866
      %v7868 = vpop.f32.mrf.mxu0
      %v7869 = vadd.f32 %v7714, %v7868
      %7870 = vmatmul.bf16.gmra.mxu0 %v7636
      %v7871 = vpop.f32.mrf.mxu0
      %v7872 = vadd.f32 %v7714, %v7871
      %v7873 = vpop.f32.mrf.mxu0
      %v7874 = vadd.f32 %v7714, %v7873
      %7875 = vmatmul.bf16.gmra.mxu0 %v7638
      %v7876 = vpop.f32.mrf.mxu0
      %v7877 = vadd.f32 %v7714, %v7876
      %v7878 = vpop.f32.mrf.mxu0
      %v7879 = vadd.f32 %v7714, %v7878
      %7880 = vmatmul.bf16.gmra.mxu0 %v7640
      %v7881 = vpop.f32.mrf.mxu0
      %v7882 = vadd.f32 %v7714, %v7881
      %v7883 = vpop.f32.mrf.mxu0
      %v7884 = vadd.f32 %v7714, %v7883
      %7885 = vmatmul.bf16.gmra.mxu0 %v7642
      %v7886 = vpop.f32.mrf.mxu0
      %v7887 = vadd.f32 %v7714, %v7886
      %v7888 = vpop.f32.mrf.mxu0
      %v7889 = vadd.f32 %v7714, %v7888
      %7890 = vmatmul.bf16.gmra.mxu0 %v7644
      %v7891 = vpop.f32.mrf.mxu0
      %v7892 = vadd.f32 %v7714, %v7891
      %v7893 = vpop.f32.mrf.mxu0
      %v7894 = vadd.f32 %v7714, %v7893
      %7895 = vmatmul.bf16.gmra.mxu0 %v7646
      %v7896 = vpop.f32.mrf.mxu0
      %v7897 = vadd.f32 %v7714, %v7896
      %v7898 = vpop.f32.mrf.mxu0
      %v7899 = vadd.f32 %v7714, %v7898
      %7900 = vmatmul.bf16.gmra.mxu0 %v7648
      %v7901 = vpop.f32.mrf.mxu0
      %v7902 = vadd.f32 %v7714, %v7901
      %v7903 = vpop.f32.mrf.mxu0
      %v7904 = vadd.f32 %v7714, %v7903
      %7905 = vmatmul.bf16.gmra.mxu0 %v7650
      %v7906 = vpop.f32.mrf.mxu0
      %v7907 = vadd.f32 %v7714, %v7906
      %v7908 = vpop.f32.mrf.mxu0
      %v7909 = vadd.f32 %v7714, %v7908
      %7910 = vmatmul.bf16.gmra.mxu0 %v7652
      %v7911 = vpop.f32.mrf.mxu0
      %v7912 = vadd.f32 %v7714, %v7911
      %v7913 = vpop.f32.mrf.mxu0
      %v7914 = vadd.f32 %v7714, %v7913
      %7915 = vmatmul.bf16.gmra.mxu0 %v7654
      %v7916 = vpop.f32.mrf.mxu0
      %v7917 = vadd.f32 %v7714, %v7916
      %v7918 = vpop.f32.mrf.mxu0
      %v7919 = vadd.f32 %v7714, %v7918
      %7920 = vmatmul.bf16.gmra.mxu0 %v7656
      %v7921 = vpop.f32.mrf.mxu0
      %v7922 = vadd.f32 %v7714, %v7921
      %v7923 = vpop.f32.mrf.mxu0
      %v7924 = vadd.f32 %v7714, %v7923
      %7925 = vmatmul.bf16.gmra.mxu0 %v7658
      %v7926 = vpop.f32.mrf.mxu0
      %v7927 = vadd.f32 %v7714, %v7926
      %v7928 = vpop.f32.mrf.mxu0
      %v7929 = vadd.f32 %v7714, %v7928
      %7930 = vmatmul.bf16.gmra.mxu0 %v7660
      %v7931 = vpop.f32.mrf.mxu0
      %v7932 = vadd.f32 %v7714, %v7931
      %v7933 = vpop.f32.mrf.mxu0
      %v7934 = vadd.f32 %v7714, %v7933
      %7935 = vmatmul.bf16.gmra.mxu0 %v7662
      %v7936 = vpop.f32.mrf.mxu0
      %v7937 = vadd.f32 %v7714, %v7936
      %v7938 = vpop.f32.mrf.mxu0
      %v7939 = vadd.f32 %v7714, %v7938
      %7940 = vmatmul.bf16.gmra.mxu0 %v7664
      %v7941 = vpop.f32.mrf.mxu0
      %v7942 = vadd.f32 %v7714, %v7941
      %v7943 = vpop.f32.mrf.mxu0
      %v7944 = vadd.f32 %v7714, %v7943
      %7945 = vmatmul.bf16.gmra.mxu0 %v7666
      %v7946 = vpop.f32.mrf.mxu0
      %v7947 = vadd.f32 %v7714, %v7946
      %v7948 = vpop.f32.mrf.mxu0
      %v7949 = vadd.f32 %v7714, %v7948
      %7950 = vmatmul.bf16.gmra.mxu0 %v7668
      %v7951 = vpop.f32.mrf.mxu0
      %v7952 = vadd.f32 %v7714, %v7951
      %v7953 = vpop.f32.mrf.mxu0
      %v7954 = vadd.f32 %v7714, %v7953
      %7955 = vmatmul.bf16.gmra.mxu0 %v7670
      %v7956 = vpop.f32.mrf.mxu0
      %v7957 = vadd.f32 %v7714, %v7956
      %v7958 = vpop.f32.mrf.mxu0
      %v7959 = vadd.f32 %v7714, %v7958
      %7960 = vmatmul.bf16.gmra.mxu0 %v7672
      %v7961 = vpop.f32.mrf.mxu0
      %v7962 = vadd.f32 %v7714, %v7961
      %v7963 = vpop.f32.mrf.mxu0
      %v7964 = vadd.f32 %v7714, %v7963
      %7965 = vmatmul.bf16.gmra.mxu0 %v7674
      %v7966 = vpop.f32.mrf.mxu0
      %v7967 = vadd.f32 %v7714, %v7966
      %v7968 = vpop.f32.mrf.mxu0
      %v7969 = vadd.f32 %v7714, %v7968
      %7970 = vmatmul.bf16.gmra.mxu0 %v7676
      %v7971 = vpop.f32.mrf.mxu0
      %v7972 = vadd.f32 %v7714, %v7971
      %v7973 = vpop.f32.mrf.mxu0
      %v7974 = vadd.f32 %v7714, %v7973
      %7975 = vmatmul.bf16.gmra.mxu0 %v7678
      %v7976 = vpop.f32.mrf.mxu0
      %v7977 = vadd.f32 %v7714, %v7976
      %v7978 = vpop.f32.mrf.mxu0
      %v7979 = vadd.f32 %v7714, %v7978
      %7980 = vdwg.mxu0
      %7981 = vmatpush.bf16.msra.mxu0 %v7795
      %7982 = vmatpush.bf16.msra.mxu0 %v7794
      %7983 = vmatpush.bf16.msra.mxu0 %v7793
      %7984 = vmatpush.bf16.msra.mxu0 %v7792
      %7985 = vmatpush.bf16.msra.mxu0 %v7791
      %7986 = vmatpush.bf16.msra.mxu0 %v7790
      %7987 = vmatpush.bf16.msra.mxu0 %v7789
      %7988 = vmatpush.bf16.msra.mxu0 %v7788
      %7989 = vmatmul.bf16.gmra.mxu0 %v7617
      %v7990 = vpop.f32.mrf.mxu0
      %v7991 = vadd.f32 %v7822, %v7990
      %v7992 = vpop.f32.mrf.mxu0
      %v7993 = vadd.f32 %v7824, %v7992
      %7994 = vmatmul.bf16.gmra.mxu0 %v7619
      %v7995 = vpop.f32.mrf.mxu0
      %v7996 = vadd.f32 %v7827, %v7995
      %v7997 = vpop.f32.mrf.mxu0
      %v7998 = vadd.f32 %v7829, %v7997
      %7999 = vmatmul.bf16.gmra.mxu0 %v7621
      %v8000 = vpop.f32.mrf.mxu0
      %v8001 = vadd.f32 %v7832, %v8000
      %v8002 = vpop.f32.mrf.mxu0
      %v8003 = vadd.f32 %v7834, %v8002
      %8004 = vmatmul.bf16.gmra.mxu0 %v7623
      %v8005 = vpop.f32.mrf.mxu0
      %v8006 = vadd.f32 %v7837, %v8005
      %v8007 = vpop.f32.mrf.mxu0
      %v8008 = vadd.f32 %v7839, %v8007
      %8009 = vmatmul.bf16.gmra.mxu0 %v7625
      %v8010 = vpop.f32.mrf.mxu0
      %v8011 = vadd.f32 %v7842, %v8010
      %v8012 = vpop.f32.mrf.mxu0
      %v8013 = vadd.f32 %v7844, %v8012
      %8014 = vmatmul.bf16.gmra.mxu0 %v7627
      %v8015 = vpop.f32.mrf.mxu0
      %v8016 = vadd.f32 %v7847, %v8015
      %v8017 = vpop.f32.mrf.mxu0
      %v8018 = vadd.f32 %v7849, %v8017
      %8019 = vmatmul.bf16.gmra.mxu0 %v7629
      %v8020 = vpop.f32.mrf.mxu0
      %v8021 = vadd.f32 %v7852, %v8020
      %v8022 = vpop.f32.mrf.mxu0
      %v8023 = vadd.f32 %v7854, %v8022
      %8024 = vmatmul.bf16.gmra.mxu0 %v7631
      %v8025 = vpop.f32.mrf.mxu0
      %v8026 = vadd.f32 %v7857, %v8025
      %v8027 = vpop.f32.mrf.mxu0
      %v8028 = vadd.f32 %v7859, %v8027
      %8029 = vmatmul.bf16.gmra.mxu0 %v7633
      %v8030 = vpop.f32.mrf.mxu0
      %v8031 = vadd.f32 %v7862, %v8030
      %v8032 = vpop.f32.mrf.mxu0
      %v8033 = vadd.f32 %v7864, %v8032
      %8034 = vmatmul.bf16.gmra.mxu0 %v7635
      %v8035 = vpop.f32.mrf.mxu0
      %v8036 = vadd.f32 %v7867, %v8035
      %v8037 = vpop.f32.mrf.mxu0
      %v8038 = vadd.f32 %v7869, %v8037
      %8039 = vmatmul.bf16.gmra.mxu0 %v7637
      %v8040 = vpop.f32.mrf.mxu0
      %v8041 = vadd.f32 %v7872, %v8040
      %v8042 = vpop.f32.mrf.mxu0
      %v8043 = vadd.f32 %v7874, %v8042
      %8044 = vmatmul.bf16.gmra.mxu0 %v7639
      %v8045 = vpop.f32.mrf.mxu0
      %v8046 = vadd.f32 %v7877, %v8045
      %v8047 = vpop.f32.mrf.mxu0
      %v8048 = vadd.f32 %v7879, %v8047
      %8049 = vmatmul.bf16.gmra.mxu0 %v7641
      %v8050 = vpop.f32.mrf.mxu0
      %v8051 = vadd.f32 %v7882, %v8050
      %v8052 = vpop.f32.mrf.mxu0
      %v8053 = vadd.f32 %v7884, %v8052
      %8054 = vmatmul.bf16.gmra.mxu0 %v7643
      %v8055 = vpop.f32.mrf.mxu0
      %v8056 = vadd.f32 %v7887, %v8055
      %v8057 = vpop.f32.mrf.mxu0
      %v8058 = vadd.f32 %v7889, %v8057
      %8059 = vmatmul.bf16.gmra.mxu0 %v7645
      %v8060 = vpop.f32.mrf.mxu0
      %v8061 = vadd.f32 %v7892, %v8060
      %v8062 = vpop.f32.mrf.mxu0
      %v8063 = vadd.f32 %v7894, %v8062
      %8064 = vmatmul.bf16.gmra.mxu0 %v7647
      %v8065 = vpop.f32.mrf.mxu0
      %v8066 = vadd.f32 %v7897, %v8065
      %v8067 = vpop.f32.mrf.mxu0
      %v8068 = vadd.f32 %v7899, %v8067
      %8069 = vmatmul.bf16.gmra.mxu0 %v7649
      %v8070 = vpop.f32.mrf.mxu0
      %v8071 = vadd.f32 %v7902, %v8070
      %v8072 = vpop.f32.mrf.mxu0
      %v8073 = vadd.f32 %v7904, %v8072
      %8074 = vmatmul.bf16.gmra.mxu0 %v7651
      %v8075 = vpop.f32.mrf.mxu0
      %v8076 = vadd.f32 %v7907, %v8075
      %v8077 = vpop.f32.mrf.mxu0
      %v8078 = vadd.f32 %v7909, %v8077
      %8079 = vmatmul.bf16.gmra.mxu0 %v7653
      %v8080 = vpop.f32.mrf.mxu0
      %v8081 = vadd.f32 %v7912, %v8080
      %v8082 = vpop.f32.mrf.mxu0
      %v8083 = vadd.f32 %v7914, %v8082
      %8084 = vmatmul.bf16.gmra.mxu0 %v7655
      %v8085 = vpop.f32.mrf.mxu0
      %v8086 = vadd.f32 %v7917, %v8085
      %v8087 = vpop.f32.mrf.mxu0
      %v8088 = vadd.f32 %v7919, %v8087
      %8089 = vmatmul.bf16.gmra.mxu0 %v7657
      %v8090 = vpop.f32.mrf.mxu0
      %v8091 = vadd.f32 %v7922, %v8090
      %v8092 = vpop.f32.mrf.mxu0
      %v8093 = vadd.f32 %v7924, %v8092
      %8094 = vmatmul.bf16.gmra.mxu0 %v7659
      %v8095 = vpop.f32.mrf.mxu0
      %v8096 = vadd.f32 %v7927, %v8095
      %v8097 = vpop.f32.mrf.mxu0
      %v8098 = vadd.f32 %v7929, %v8097
      %8099 = vmatmul.bf16.gmra.mxu0 %v7661
      %v8100 = vpop.f32.mrf.mxu0
      %v8101 = vadd.f32 %v7932, %v8100
      %v8102 = vpop.f32.mrf.mxu0
      %v8103 = vadd.f32 %v7934, %v8102
      %8104 = vmatmul.bf16.gmra.mxu0 %v7663
      %v8105 = vpop.f32.mrf.mxu0
      %v8106 = vadd.f32 %v7937, %v8105
      %v8107 = vpop.f32.mrf.mxu0
      %v8108 = vadd.f32 %v7939, %v8107
      %8109 = vmatmul.bf16.gmra.mxu0 %v7665
      %v8110 = vpop.f32.mrf.mxu0
      %v8111 = vadd.f32 %v7942, %v8110
      %v8112 = vpop.f32.mrf.mxu0
      %v8113 = vadd.f32 %v7944, %v8112
      %8114 = vmatmul.bf16.gmra.mxu0 %v7667
      %v8115 = vpop.f32.mrf.mxu0
      %v8116 = vadd.f32 %v7947, %v8115
      %v8117 = vpop.f32.mrf.mxu0
      %v8118 = vadd.f32 %v7949, %v8117
      %8119 = vmatmul.bf16.gmra.mxu0 %v7669
      %v8120 = vpop.f32.mrf.mxu0
      %v8121 = vadd.f32 %v7952, %v8120
      %v8122 = vpop.f32.mrf.mxu0
      %v8123 = vadd.f32 %v7954, %v8122
      %8124 = vmatmul.bf16.gmra.mxu0 %v7671
      %v8125 = vpop.f32.mrf.mxu0
      %v8126 = vadd.f32 %v7957, %v8125
      %v8127 = vpop.f32.mrf.mxu0
      %v8128 = vadd.f32 %v7959, %v8127
      %8129 = vmatmul.bf16.gmra.mxu0 %v7673
      %v8130 = vpop.f32.mrf.mxu0
      %v8131 = vadd.f32 %v7962, %v8130
      %v8132 = vpop.f32.mrf.mxu0
      %v8133 = vadd.f32 %v7964, %v8132
      %8134 = vmatmul.bf16.gmra.mxu0 %v7675
      %v8135 = vpop.f32.mrf.mxu0
      %v8136 = vadd.f32 %v7967, %v8135
      %v8137 = vpop.f32.mrf.mxu0
      %v8138 = vadd.f32 %v7969, %v8137
      %8139 = vmatmul.bf16.gmra.mxu0 %v7677
      %v8140 = vpop.f32.mrf.mxu0
      %v8141 = vadd.f32 %v7972, %v8140
      %v8142 = vpop.f32.mrf.mxu0
      %v8143 = vadd.f32 %v7974, %v8142
      %8144 = vmatmul.bf16.gmra.mxu0 %v7679
      %v8145 = vpop.f32.mrf.mxu0
      %v8146 = vadd.f32 %v7977, %v8145
      %v8147 = vpop.f32.mrf.mxu0
      %v8148 = vadd.f32 %v7979, %v8147
      %8149 = vdwg.mxu0
      %8150 = vst [vmem:[%s246] sm:$0xff] %v7991
      %8151 = vst [vmem:[%s246 + $0x8] sm:$0xff] %v7993
      %8152 = vst [vmem:[%s246 + $0x10] sm:$0xff] %v7996
      %8153 = vst [vmem:[%s246 + $0x18] sm:$0xff] %v7998
      %8154 = vst [vmem:[%s246 + $0x20] sm:$0xff] %v8001
      %8155 = vst [vmem:[%s246 + $0x28] sm:$0xff] %v8003
      %8156 = vst [vmem:[%s246 + $0x30] sm:$0xff] %v8006
      %8157 = vst [vmem:[%s246 + $0x38] sm:$0xff] %v8008
      %8158 = vst [vmem:[%s246 + $0x40] sm:$0xff] %v8011
      %8159 = vst [vmem:[%s246 + $0x48] sm:$0xff] %v8013
      %8160 = vst [vmem:[%s246 + $0x50] sm:$0xff] %v8016
      %8161 = vst [vmem:[%s246 + $0x58] sm:$0xff] %v8018
      %8162 = vst [vmem:[%s246 + $0x60] sm:$0xff] %v8021
      %8163 = vst [vmem:[%s246 + $0x68] sm:$0xff] %v8023
      %8164 = vst [vmem:[%s246 + $0x70] sm:$0xff] %v8026
      %8165 = vst [vmem:[%s246 + $0x78] sm:$0xff] %v8028
      %8166 = vst [vmem:[%s246 + $0x80] sm:$0xff] %v8031
      %8167 = vst [vmem:[%s246 + $0x88] sm:$0xff] %v8033
      %8168 = vst [vmem:[%s246 + $0x90] sm:$0xff] %v8036
      %8169 = vst [vmem:[%s246 + $0x98] sm:$0xff] %v8038
      %8170 = vst [vmem:[%s246 + $0xa0] sm:$0xff] %v8041
      %8171 = vst [vmem:[%s246 + $0xa8] sm:$0xff] %v8043
      %8172 = vst [vmem:[%s246 + $0xb0] sm:$0xff] %v8046
      %8173 = vst [vmem:[%s246 + $0xb8] sm:$0xff] %v8048
      %8174 = vst [vmem:[%s246 + $0xc0] sm:$0xff] %v8051
      %8175 = vst [vmem:[%s246 + $0xc8] sm:$0xff] %v8053
      %8176 = vst [vmem:[%s246 + $0xd0] sm:$0xff] %v8056
      %8177 = vst [vmem:[%s246 + $0xd8] sm:$0xff] %v8058
      %8178 = vst [vmem:[%s246 + $0xe0] sm:$0xff] %v8061
      %8179 = vst [vmem:[%s246 + $0xe8] sm:$0xff] %v8063
      %8180 = vst [vmem:[%s246 + $0xf0] sm:$0xff] %v8066
      %8181 = vst [vmem:[%s246 + $0xf8] sm:$0xff] %v8068
      %8182 = vst [vmem:[%s246 + $0x100] sm:$0xff] %v8071
      %8183 = vst [vmem:[%s246 + $0x108] sm:$0xff] %v8073
      %8184 = vst [vmem:[%s246 + $0x110] sm:$0xff] %v8076
      %8185 = vst [vmem:[%s246 + $0x118] sm:$0xff] %v8078
      %8186 = vst [vmem:[%s246 + $0x120] sm:$0xff] %v8081
      %8187 = vst [vmem:[%s246 + $0x128] sm:$0xff] %v8083
      %8188 = vst [vmem:[%s246 + $0x130] sm:$0xff] %v8086
      %8189 = vst [vmem:[%s246 + $0x138] sm:$0xff] %v8088
      %8190 = vst [vmem:[%s246 + $0x140] sm:$0xff] %v8091
      %8191 = vst [vmem:[%s246 + $0x148] sm:$0xff] %v8093
      %8192 = vst [vmem:[%s246 + $0x150] sm:$0xff] %v8096
      %8193 = vst [vmem:[%s246 + $0x158] sm:$0xff] %v8098
      %8194 = vst [vmem:[%s246 + $0x160] sm:$0xff] %v8101
      %8195 = vst [vmem:[%s246 + $0x168] sm:$0xff] %v8103
      %8196 = vst [vmem:[%s246 + $0x170] sm:$0xff] %v8106
      %8197 = vst [vmem:[%s246 + $0x178] sm:$0xff] %v8108
      %8198 = vst [vmem:[%s246 + $0x180] sm:$0xff] %v8111
      %8199 = vst [vmem:[%s246 + $0x188] sm:$0xff] %v8113
      %8200 = vst [vmem:[%s246 + $0x190] sm:$0xff] %v8116
      %8201 = vst [vmem:[%s246 + $0x198] sm:$0xff] %v8118
      %8202 = vst [vmem:[%s246 + $0x1a0] sm:$0xff] %v8121
      %8203 = vst [vmem:[%s246 + $0x1a8] sm:$0xff] %v8123
      %8204 = vst [vmem:[%s246 + $0x1b0] sm:$0xff] %v8126
      %8205 = vst [vmem:[%s246 + $0x1b8] sm:$0xff] %v8128
      %8206 = vst [vmem:[%s246 + $0x1c0] sm:$0xff] %v8131
      %8207 = vst [vmem:[%s246 + $0x1c8] sm:$0xff] %v8133
      %8208 = vst [vmem:[%s246 + $0x1d0] sm:$0xff] %v8136
      %8209 = vst [vmem:[%s246 + $0x1d8] sm:$0xff] %v8138
      %8210 = vst [vmem:[%s246 + $0x1e0] sm:$0xff] %v8141
      %8211 = vst [vmem:[%s246 + $0x1e8] sm:$0xff] %v8143
      %8212 = vst [vmem:[%s246 + $0x1f0] sm:$0xff] %v8146
      %8213 = vst [vmem:[%s246 + $0x1f8] sm:$0xff] %v8148
      %s8214 = smul.u32 64, %s21
      %p8215 = scmp.lt.s32.totalorder %s20, 3
      %s8216 = scalar_select %p8215, %s20, 3
      %p8217 = scmp.lt.s32.totalorder %s8214, 127
      %s8218 = scalar_select %p8217, %s8214, 127
      %s8219 = smul.addr %s8216, 128
      %s8220 = sadd.s32 %s8218, %s8219
      %s8221 = smul.addr %s8220, 8
      %s8222 = scalar_lea.vmem %s5, %s8221
      // Predicated region
      $region41: #{yolo_head_level.1} parent=39 // pred_check
        %p8223 = pneg %p158
      $region42: #{yolo_head_level.1} parent=39 // pred_check_branch
        %8225 = sbr.rel (%p8223) target = $region44
      $region43: #{yolo_head_level.1} parent=39 // pred_region
        %s8226 = smul.u32 64, %s21
      $region44: #{yolo_head_level.1} parent=39 // pred_fallthru
        _
    $region40: #{yolo_head_level.1} parent=5 // pred_fallthru
      _
    %p8227 = scmp.le.s32.totalorder 2, %s11
    // Predicated region
    $region45: #{yolo_head_level.1} parent=5 // pred_check
      %p8228 = pneg %p8227
    $region46: #{yolo_head_level.1} parent=5 // pred_check_branch
      %8230 = sbr.rel (%p8228) target = $region48
    $region47: #{yolo_head_level.1} parent=5 // pred_region
      %s8231 = ssub.s32 %s11, 2
      // Predicated region
      $region49: #{yolo_head_level.1} parent=47 // pred_check
        %p8232 = pneg %p164
      $region50: #{yolo_head_level.1} parent=47 // pred_check_branch
        %8234 = sbr.rel (%p8232) target = $region52
      $region51: #{yolo_head_level.1} parent=47 // pred_region
        %s8235 = smul.u32 64, %s23
        %p8236 = scmp.lt.s32.totalorder %s22, 3
        %s8237 = scalar_select %p8236, %s22, 3
        %p8238 = scmp.lt.s32.totalorder %s8235, 127
        %s8239 = scalar_select %p8238, %s8235, 127
        %s8240 = smul.addr %s8237, 128
        %s8241 = sadd.s32 %s8239, %s8240
        %s8242 = smul.addr %s8241, 8
        %s8243 = scalar_lea.vmem %s5, %s8242
      $region52: #{yolo_head_level.1} parent=47 // pred_fallthru
        _
    $region48: #{yolo_head_level.1} parent=5 // pred_fallthru
      _
  $region6: #{yolo_head_level.1} parent=0 // loop_footer
    %s15 = sadd.s32 1, %s11
  $region7: #{yolo_head_level.1} parent=0 // loop_footer_branch
    %10 = sbr.rel target = $region3
  $region8: #{yolo_head_level.1} parent=0 // loop_exit
    _

</llo_original>
